<compile_context>
chip_gen: v7x
topology: tpu7x:2x2x1
jax: 0.10.0
libtpu: 0.0.40
codegen_flags: <defaults>
</compile_context>

<pallas_src>
import math

import jax
import jax.numpy as jnp
from jax.experimental import pallas as pl
from jax.experimental.pallas import tpu as pltpu

# ---- model sizes (PyTorch defaults, small test sizes) ----
CHAR_EMBED = 16
NHID = 128
NLAYER = 2                      # hard-coded as two explicit layers in the kernel
VOCAB = 32                      # stands in for len(chars)
INPUT_SIZE = CHAR_EMBED + 4     # = 20, as in the module
FEAT = INPUT_SIZE + 1           # raw x_batch feature dim (feature 0 is sliced off)


def make_birnn_kernel(fuse_k256: bool):
    """fuse_k256=True: single K=256 old-state matmul (v6e/v7x, 256-deep MXU).
       fuse_k256=False: two K=128 dots via .at views (<=v5, 128-deep MXU)."""

    def kernel(x_ref, len_ref, wih0_ref, wold_ref, wcat1_ref, wlin_ref, bias_ref,
               out_ref, gi0_sc, hseq_sc):
        T, TB, F = x_ref.shape
        H = wlin_ref.shape[0]
        Vp = wlin_ref.shape[1]
        H3 = 3 * H

        # fused bias slab -> static lane-aligned slices (offsets are multiples of 128)
        bhoist0 = bias_ref[:, 0:H3]                         # bih0 + [bhh0_rz, 0]
        bhh0n = bias_ref[:, H3:H3 + H]
        bcat1 = bias_ref[:, H3 + H:2 * H3 + H]              # bih1 + [bhh1_rz, 0]
        bhh1n = bias_ref[:, 2 * H3 + H:2 * H3 + 2 * H]
        blin = bias_ref[:, 2 * H3 + 2 * H:2 * H3 + 2 * H + Vp]

        # ---- hoisted layer-0 input projection (one big bf16 matmul, f32 accumulation) ----
        x_flat = x_ref[...].reshape(T * TB, F)
        gi0_sc[...] = (jnp.dot(x_flat, wih0_ref[...],
                               preferred_element_type=jnp.float32)
                       + bhoist0).reshape(T, TB, H3)

        if not fuse_k256:
            # free ref views on the same fused weight array (no data movement)
            w_gh0 = wold_ref.at[0:H, 0:H3]                  # whh0
            w_ghn = wold_ref.at[H:2 * H, H3:H3 + H]         # whh1_n
            w_a0 = wcat1_ref.at[0:H, :]                     # wih1
            w_a1 = wcat1_ref.at[H:2 * H, :]                 # [whh1_rz | 0]

        def step(t, carry):
            h0, h1 = carry                                  # f32 (TB, H) each
            # ---- old-state recurrent matmul(s): only thing left on the serial chain ----
            if fuse_k256:
                hcat = jnp.concatenate([h0, h1], axis=-1).astype(jnp.bfloat16)
                ghcat = jnp.dot(hcat, wold_ref[...], preferred_element_type=jnp.float32)
                gh0 = ghcat[:, :H3]                         # h0 @ whh0
                ghn1 = ghcat[:, H3:]                        # h1 @ whh1_n (rides same pass)
            else:
                h0b = h0.astype(jnp.bfloat16)
                h1b = h1.astype(jnp.bfloat16)
                gh0 = jnp.dot(h0b, w_gh0[...], preferred_element_type=jnp.float32)
                ghn1 = jnp.dot(h1b, w_ghn[...], preferred_element_type=jnp.float32)

            # ---- layer 0 gates ----
            gi0 = gi0_sc[t]                                 # x@wih0 + bih0 + bhh0_rz
            r0 = jax.nn.sigmoid(gi0[:, :H] + gh0[:, :H])
            z0 = jax.nn.sigmoid(gi0[:, H:2 * H] + gh0[:, H:2 * H])
            n0 = jnp.tanh(gi0[:, 2 * H:] + r0 * (gh0[:, 2 * H:] + bhh0n))
            h0n = (1.0 - z0) * n0 + z0 * h0

            # ---- layer 1: fused [wih1 ; whh1_rz|0] projection ----
            if fuse_k256:
                xh = jnp.concatenate([h0n, h1], axis=-1).astype(jnp.bfloat16)
                a = jnp.dot(xh, wcat1_ref[...],
                            preferred_element_type=jnp.float32) + bcat1
            else:
                a = (jnp.dot(h0n.astype(jnp.bfloat16), w_a0[...],
                             preferred_element_type=jnp.float32)
                     + jnp.dot(h1b, w_a1[...], preferred_element_type=jnp.float32)
                     + bcat1)
            r1 = jax.nn.sigmoid(a[:, :H])
            z1 = jax.nn.sigmoid(a[:, H:2 * H])
            n1 = jnp.tanh(a[:, 2 * H:] + r1 * (ghn1 + bhh1n))
            h1n = (1.0 - z1) * n1 + z1 * h1

            hseq_sc[t] = h1n.astype(jnp.bfloat16)           # unmasked; mask hoisted out
            return (h0n, h1n)

        h_init = jnp.zeros((TB, H), jnp.float32)
        unroll = True if T <= 32 else 4                     # footprint guard for larger T
        jax.lax.fori_loop(0, T, step, (h_init, h_init), unroll=unroll)

        # ---- hoisted pack/pad_packed mask: zero h at t >= length, one vectorized pass ----
        t_idx = jax.lax.broadcasted_iota(jnp.int32, (T, TB, 1), 0)
        keep = len_ref[...][None, :, :] > t_idx             # (T, TB, 1) bool
        hvals = hseq_sc[...]
        hmask = jnp.where(keep, hvals, jnp.zeros_like(hvals))

        # ---- batched final Linear + one lane-dense bulk store ----
        logits = (jnp.dot(hmask.reshape(T * TB, H), wlin_ref[...],
                          preferred_element_type=jnp.float32) + blin)
        out_ref[...] = logits.reshape(T, TB, Vp).astype(out_ref.dtype)

    return kernel


def prepare_kernel_params(params, vpad):
    """Host-side weight fusion / bias folding / bf16 cast (gate order r, z, n)."""
    f32, bf16 = jnp.float32, jnp.bfloat16
    H = params["whh0"].shape[0]
    H3 = 3 * H
    zeros_1h = jnp.zeros((1, H), f32)

    # layer 0: fold bih0 + r/z halves of bhh0 into the hoisted input-projection bias
    bhoist0 = params["bih0"] + jnp.concatenate([params["bhh0"][:, :2 * H], zeros_1h], axis=1)
    bhh0n = params["bhh0"][:, 2 * H:]

    # fused old-state recurrent weight: [h0|h1] @ [[whh0, 0],[0, whh1_n]] -> [gh0 | ghn1]
    whh1n = params["whh1"][:, 2 * H:]
    wold = jnp.zeros((2 * H, H3 + H), f32)
    wold = wold.at[:H, :H3].set(params["whh0"])
    wold = wold.at[H:, H3:].set(whh1n)

    # layer 1: fuse wih1 with the r/z columns of whh1 into one (2H, 3H) weight
    wcat1 = jnp.concatenate(
        [params["wih1"],
         jnp.concatenate([params["whh1"][:, :2 * H], jnp.zeros((H, H), f32)], axis=1)],
        axis=0)
    bcat1 = params["bih1"] + jnp.concatenate([params["bhh1"][:, :2 * H], zeros_1h], axis=1)
    bhh1n = params["bhh1"][:, 2 * H:]

    # output Linear lane-padded to vpad columns (unmasked full-lane stores)
    V = params["wlin"].shape[1]
    wlin = jnp.pad(params["wlin"], ((0, 0), (0, vpad - V)))
    blin = jnp.pad(params["blin"], ((0, 0), (0, vpad - V)))

    # five small biases -> one lane-aligned slab (one DMA instead of five)
    bias_slab = jnp.concatenate([bhoist0, bhh0n, bcat1, bhh1n, blin], axis=1).astype(f32)

    # bf16 weights, f32 accumulation in-kernel: MXU-native on v5e/v6e/v7x
    return dict(wih0=params["wih0"].astype(bf16), wold=wold.astype(bf16),
                wcat1=wcat1.astype(bf16), wlin=wlin.astype(bf16), bias=bias_slab)


def birnn_forward(x_batch, input_len, params):
    """x_batch: (B, T, FEAT) float32, input_len: (B,) int.  Returns (B, VOCAB, T)."""
    rnn_in = x_batch[:, :, 1:].astype(jnp.float32)       # drop feature 0
    x_tbf = jnp.transpose(rnn_in, (1, 0, 2))             # (T, B, INPUT_SIZE)  time-major
    T, B, F = x_tbf.shape
    H = params["whh0"].shape[0]
    V = params["wlin"].shape[1]
    Vp = ((V + 127) // 128) * 128                         # lane-dense output width

    # Batch tiling: extra rows ride the same per-step latency almost for free on the MXU,
    # so pack the whole batch into one tile when small; for large batches use 64-row tiles
    # on a parallel grid so both v7x TensorCores (and DMA pipelining) get used.
    if B <= 64:
        Bp = max(8, ((B + 7) // 8) * 8)
        TB = Bp
    else:
        TB = 64
        Bp = ((B + TB - 1) // TB) * TB
    pad = Bp - B

    x_p = jnp.pad(x_tbf, ((0, 0), (0, pad), (0, 0))).astype(jnp.bfloat16)
    lens = jnp.pad(input_len.astype(jnp.int32), (0, pad)).reshape(Bp, 1)

    kp = prepare_kernel_params(params, Vp)
    H3 = 3 * H
    NB = kp["bias"].shape[1]

    # K=2H=256 old-state fusion only pays on the 256-deep MXU (v6e/v7x); on <=v5 keep the
    # separate K=128 dots so the serial chain doesn't gain extra MXU passes.
    dk = jax.devices()[0].device_kind.lower()
    fuse_k256 = not any(g in dk for g in ("v2", "v3", "v4", "v5"))

    # NOTE: pad_packed_sequence pads to max(input_len); we keep the static T and require
    # max(input_len) == T so the output time dimension matches PyTorch exactly.
    out_tbv = pl.pallas_call(
        make_birnn_kernel(fuse_k256),
        out_shape=jax.ShapeDtypeStruct((T, Bp, Vp), jnp.float32),
        grid_spec=pltpu.PrefetchScalarGridSpec(
            num_scalar_prefetch=0,
            grid=(Bp // TB,),
            in_specs=[
                pl.BlockSpec((T, TB, F), lambda b: (0, b, 0)),    # x (bf16)
                pl.BlockSpec((TB, 1), lambda b: (b, 0)),          # lengths (i32)
                pl.BlockSpec((F, H3), lambda b: (0, 0)),          # wih0
                pl.BlockSpec((2 * H, H3 + H), lambda b: (0, 0)),  # [[whh0,0],[0,whh1n]]
                pl.BlockSpec((2 * H, H3), lambda b: (0, 0)),      # [wih1 ; whh1_rz|0]
                pl.BlockSpec((H, Vp), lambda b: (0, 0)),          # wlin (lane-padded)
                pl.BlockSpec((1, NB), lambda b: (0, 0)),          # fused bias slab
            ],
            out_specs=pl.BlockSpec((T, TB, Vp), lambda b: (0, b, 0)),
            scratch_shapes=[pltpu.VMEM((T, TB, H3), jnp.float32),   # hoisted gi0
                            pltpu.VMEM((T, TB, H), jnp.bfloat16)]),  # top-layer h sequence
        compiler_params=pltpu.CompilerParams(dimension_semantics=("parallel",)),
    )(x_p, lens, kp["wih0"], kp["wold"], kp["wcat1"], kp["wlin"], kp["bias"])

    out_tbv = out_tbv[:, :B, :V]                          # drop batch/vocab padding
    return jnp.transpose(out_tbv, (1, 2, 0))              # (B, V, T) == output.permute(0,2,1)


# ---------------- deterministic parameter init (mirrors __init__ shapes) ----------------
def _xavier_uniform_t(key, out_dim, in_dim):
    """xavier_uniform_ on a (out, in) tensor, returned transposed as (in, out)."""
    bound = math.sqrt(6.0 / (in_dim + out_dim))
    w = jax.random.uniform(key, (out_dim, in_dim), jnp.float32, -bound, bound)
    return jnp.transpose(w)


def init_params(key):
    ks = jax.random.split(key, 12)
    bscale = 1.0 / math.sqrt(NHID)
    params = {
        # GRU layer 0: weight_ih_l0 (3H, INPUT_SIZE), weight_hh_l0 (3H, H)
        "wih0": _xavier_uniform_t(ks[0], 3 * NHID, INPUT_SIZE),           # (INPUT_SIZE, 3H)
        "whh0": _xavier_uniform_t(ks[1], 3 * NHID, NHID),                 # (H, 3H)
        "bih0": jax.random.uniform(ks[2], (1, 3 * NHID), jnp.float32, -bscale, bscale),
        "bhh0": jax.random.uniform(ks[3], (1, 3 * NHID), jnp.float32, -bscale, bscale),
        # GRU layer 1: weight_ih_l1 (3H, H), weight_hh_l1 (3H, H)
        "wih1": _xavier_uniform_t(ks[4], 3 * NHID, NHID),                 # (H, 3H)
        "whh1": _xavier_uniform_t(ks[5], 3 * NHID, NHID),                 # (H, 3H)
        "bih1": jax.random.uniform(ks[6], (1, 3 * NHID), jnp.float32, -bscale, bscale),
        "bhh1": jax.random.uniform(ks[7], (1, 3 * NHID), jnp.float32, -bscale, bscale),
        # output Linear(nhid, vocab) with xavier weight + default bias
        "wlin": _xavier_uniform_t(ks[8], VOCAB, NHID),                    # (H, V)
        "blin": jax.random.uniform(ks[9], (1, VOCAB), jnp.float32, -bscale, bscale),
        # char_embed exists in __init__ but is unused in forward; omitted on purpose.
    }
    return params


# ---------------- pure-JAX f32 reference (same math, no Pallas) for validation ----------------
def reference_forward(x_batch, input_len, params):
    rnn_in = x_batch[:, :, 1:].astype(jnp.float32)
    B, T, _ = rnn_in.shape
    H = params["whh0"].shape[0]

    def cell(x, h, wih, whh, bih, bhh):
        gi = x @ wih + bih
        gh = h @ whh + bhh
        r = jax.nn.sigmoid(gi[:, :H] + gh[:, :H])
        z = jax.nn.sigmoid(gi[:, H:2 * H] + gh[:, H:2 * H])
        n = jnp.tanh(gi[:, 2 * H:] + r * gh[:, 2 * H:])
        return (1.0 - z) * n + z * h

    h0 = jnp.zeros((B, H), jnp.float32)
    h1 = jnp.zeros((B, H), jnp.float32)
    outs = []
    for t in range(T):
        h0 = cell(rnn_in[:, t, :], h0, params["wih0"], params["whh0"],
                  params["bih0"], params["bhh0"])
        h1 = cell(h0, h1, params["wih1"], params["whh1"],
                  params["bih1"], params["bhh1"])
        mask = (input_len > t).reshape(B, 1)
        outs.append(jnp.where(mask, h1, 0.0))
    hseq = jnp.stack(outs, axis=1)                        # (B, T, H)
    logits = hseq @ params["wlin"] + params["blin"]       # (B, T, V)
    return jnp.transpose(logits, (0, 2, 1))               # (B, V, T)


if __name__ == "__main__":
    key = jax.random.PRNGKey(0)
    k_param, k_x = jax.random.split(key)

    B, T = 2, 8
    params = init_params(k_param)
    x_batch = jax.random.normal(k_x, (B, T, FEAT), jnp.float32)   # (2, 8, 21)
    input_len = jnp.array([T, T - 3], dtype=jnp.int32)            # max(len) == T

    out = birnn_forward(x_batch, input_len, params)
    out = jax.block_until_ready(out)

    ref = reference_forward(x_batch, input_len, params)
    assert out.shape == (B, VOCAB, T), out.shape
    # Tolerance reflects the intentional bf16 weight/activation cast (f32 accumulation).
    assert jnp.allclose(out, ref, atol=3e-2, rtol=3e-2), "mismatch vs JAX reference"

    # TODO(synk): output time dim is kept static at T; PyTorch's pad_packed_sequence would
    # shrink it to max(input_len) if that were < T (data-dependent shape, not expressible).
    print("KERNEL_OK")
</pallas_src>

<mosaic_0001>
module attributes {stable_mosaic.version = 11 : i64} {
  func.func @kernel(%arg0: i32, %arg1: memref<8x8x20xbf16, #tpu.memory_space<vmem>>, %arg2: memref<8x1xi32, #tpu.memory_space<vmem>>, %arg3: memref<20x384xbf16, #tpu.memory_space<vmem>>, %arg4: memref<256x512xbf16, #tpu.memory_space<vmem>>, %arg5: memref<256x384xbf16, #tpu.memory_space<vmem>>, %arg6: memref<128x128xbf16, #tpu.memory_space<vmem>>, %arg7: memref<1x1152xf32, #tpu.memory_space<vmem>>, %arg8: memref<8x8x128xf32, #tpu.memory_space<vmem>>, %arg9: memref<8x8x384xf32, #tpu.memory_space<vmem>>, %arg10: memref<8x8x128xbf16, #tpu.memory_space<vmem>>) attributes {dimension_semantics = [#tpu.dimension_semantics<parallel>], iteration_bounds = array<i64: 1>, scalar_prefetch = 0 : i64, scratch_operands = 2 : i64, tpu.core_type = #tpu.core_type<tc>, window_params = [{transform_indices = @transform_0, window_bounds = array<i64: 8, 8, 20>}, {transform_indices = @transform_1, window_bounds = array<i64: 8, 1>}, {pipeline_mode = #tpu.pipeline_mode<synchronous>, transform_indices = @transform_2, window_bounds = array<i64: 20, 384>}, {pipeline_mode = #tpu.pipeline_mode<synchronous>, transform_indices = @transform_3, window_bounds = array<i64: 256, 512>}, {pipeline_mode = #tpu.pipeline_mode<synchronous>, transform_indices = @transform_4, window_bounds = array<i64: 256, 384>}, {pipeline_mode = #tpu.pipeline_mode<synchronous>, transform_indices = @transform_5, window_bounds = array<i64: 128, 128>}, {pipeline_mode = #tpu.pipeline_mode<synchronous>, transform_indices = @transform_6, window_bounds = array<i64: 1, 1152>}, {transform_indices = @transform_7, window_bounds = array<i64: 8, 8, 128>}]} {
    %c0 = arith.constant 0 : index
    %c0_0 = arith.constant 0 : index
    %0 = vector.load %arg7[%c0, %c0_0] : memref<1x1152xf32, #tpu.memory_space<vmem>>, vector<1x384xf32>
    %c0_1 = arith.constant 0 : index
    %c384 = arith.constant 384 : index
    %1 = vector.load %arg7[%c0_1, %c384] : memref<1x1152xf32, #tpu.memory_space<vmem>>, vector<1x128xf32>
    %c0_2 = arith.constant 0 : index
    %c512 = arith.constant 512 : index
    %2 = vector.load %arg7[%c0_2, %c512] : memref<1x1152xf32, #tpu.memory_space<vmem>>, vector<1x384xf32>
    %c0_3 = arith.constant 0 : index
    %c896 = arith.constant 896 : index
    %3 = vector.load %arg7[%c0_3, %c896] : memref<1x1152xf32, #tpu.memory_space<vmem>>, vector<1x128xf32>
    %c0_4 = arith.constant 0 : index
    %c1024 = arith.constant 1024 : index
    %4 = vector.load %arg7[%c0_4, %c1024] : memref<1x1152xf32, #tpu.memory_space<vmem>>, vector<1x128xf32>
    %c0_5 = arith.constant 0 : index
    %c0_6 = arith.constant 0 : index
    %c0_7 = arith.constant 0 : index
    %5 = vector.load %arg1[%c0_5, %c0_6, %c0_7] : memref<8x8x20xbf16, #tpu.memory_space<vmem>>, vector<8x8x20xbf16>
    %6 = vector.shape_cast %5 : vector<8x8x20xbf16> to vector<64x20xbf16>
    %c0_8 = arith.constant 0 : index
    %c0_9 = arith.constant 0 : index
    %7 = vector.load %arg3[%c0_8, %c0_9] : memref<20x384xbf16, #tpu.memory_space<vmem>>, vector<20x384xbf16>
    %cst = arith.constant dense<0.000000e+00> : vector<64x384xf32>
    %8 = tpu.matmul %6, %7, %cst {dimension_numbers = #tpu.dot_dimension_numbers<[1], [0], [0], [1], [0, 0, 1, 1], [], []>} : vector<64x20xbf16>, vector<20x384xbf16>, vector<64x384xf32> -> vector<64x384xf32>
    %9 = vector.broadcast %0 : vector<1x384xf32> to vector<64x384xf32>
    %10 = arith.addf %8, %9 : vector<64x384xf32>
    %11 = vector.shape_cast %10 : vector<64x384xf32> to vector<8x8x384xf32>
    %c0_10 = arith.constant 0 : index
    %c0_11 = arith.constant 0 : index
    %c0_12 = arith.constant 0 : index
    %12 = vector.load %arg9[%c0_10, %c0_11, %c0_12] : memref<8x8x384xf32, #tpu.memory_space<vmem>>, vector<8x8x384xf32>
    tpu.vector_store %arg9[%c0_10, %c0_11, %c0_12], %11 {strides = array<i32>} : memref<8x8x384xf32, #tpu.memory_space<vmem>>, vector<8x8x384xf32>,
    %cst_13 = arith.constant 0.000000e+00 : f32
    %13 = vector.broadcast %cst_13 : f32 to vector<8x128xf32>
    %c0_i32 = arith.constant 0 : i32
    %14 = tpu.concatenate %13, %13 in 1 : vector<8x128xf32>, vector<8x128xf32> -> vector<8x256xf32>
    %15 = arith.truncf %14 : vector<8x256xf32> to vector<8x256xbf16>
    %c0_14 = arith.constant 0 : index
    %c0_15 = arith.constant 0 : index
    %16 = vector.load %arg4[%c0_14, %c0_15] : memref<256x512xbf16, #tpu.memory_space<vmem>>, vector<256x512xbf16>
    %cst_16 = arith.constant dense<0.000000e+00> : vector<8x512xf32>
    %17 = tpu.matmul %15, %16, %cst_16 {dimension_numbers = #tpu.dot_dimension_numbers<[1], [0], [0], [1], [0, 0, 1, 1], [], []>} : vector<8x256xbf16>, vector<256x512xbf16>, vector<8x512xf32> -> vector<8x512xf32>
    %18 = vector.extract_strided_slice %17 {offsets = [0, 0], sizes = [8, 384], strides = [1, 1]} : vector<8x512xf32> to vector<8x384xf32>
    %19 = vector.extract_strided_slice %17 {offsets = [0, 384], sizes = [8, 128], strides = [1, 1]} : vector<8x512xf32> to vector<8x128xf32>
    %20 = arith.index_cast %c0_i32 : i32 to index
    %c0_17 = arith.constant 0 : index
    %c0_18 = arith.constant 0 : index
    %21 = vector.load %arg9[%20, %c0_17, %c0_18] : memref<8x8x384xf32, #tpu.memory_space<vmem>>, vector<1x8x384xf32>
    %22 = vector.shape_cast %21 : vector<1x8x384xf32> to vector<8x384xf32>
    %23 = vector.extract_strided_slice %22 {offsets = [0, 0], sizes = [8, 128], strides = [1, 1]} : vector<8x384xf32> to vector<8x128xf32>
    %24 = vector.extract_strided_slice %18 {offsets = [0, 0], sizes = [8, 128], strides = [1, 1]} : vector<8x384xf32> to vector<8x128xf32>
    %25 = arith.addf %23, %24 : vector<8x128xf32>
    %26 = arith.negf %25 : vector<8x128xf32>
    %27 = math.exp %26 : vector<8x128xf32>
    %cst_19 = arith.constant 1.000000e+00 : f32
    %28 = vector.broadcast %cst_19 : f32 to vector<8x128xf32>
    %29 = arith.addf %28, %27 : vector<8x128xf32>
    %30 = arith.divf %28, %29 : vector<8x128xf32>
    %31 = vector.extract_strided_slice %22 {offsets = [0, 128], sizes = [8, 128], strides = [1, 1]} : vector<8x384xf32> to vector<8x128xf32>
    %32 = vector.extract_strided_slice %18 {offsets = [0, 128], sizes = [8, 128], strides = [1, 1]} : vector<8x384xf32> to vector<8x128xf32>
    %33 = arith.addf %31, %32 : vector<8x128xf32>
    %34 = arith.negf %33 : vector<8x128xf32>
    %35 = math.exp %34 : vector<8x128xf32>
    %cst_20 = arith.constant 1.000000e+00 : f32
    %36 = vector.broadcast %cst_20 : f32 to vector<8x128xf32>
    %37 = arith.addf %36, %35 : vector<8x128xf32>
    %38 = arith.divf %36, %37 : vector<8x128xf32>
    %39 = vector.extract_strided_slice %22 {offsets = [0, 256], sizes = [8, 128], strides = [1, 1]} : vector<8x384xf32> to vector<8x128xf32>
    %40 = vector.extract_strided_slice %18 {offsets = [0, 256], sizes = [8, 128], strides = [1, 1]} : vector<8x384xf32> to vector<8x128xf32>
    %41 = vector.broadcast %1 : vector<1x128xf32> to vector<8x128xf32>
    %42 = arith.addf %40, %41 : vector<8x128xf32>
    %43 = arith.mulf %30, %42 : vector<8x128xf32>
    %44 = arith.addf %39, %43 : vector<8x128xf32>
    %45 = math.tanh %44 : vector<8x128xf32>
    %cst_21 = arith.constant 1.000000e+00 : f32
    %46 = vector.broadcast %cst_21 : f32 to vector<8x128xf32>
    %47 = arith.subf %46, %38 : vector<8x128xf32>
    %48 = arith.mulf %47, %45 : vector<8x128xf32>
    %49 = arith.mulf %38, %13 : vector<8x128xf32>
    %50 = arith.addf %48, %49 : vector<8x128xf32>
    %51 = tpu.concatenate %50, %13 in 1 : vector<8x128xf32>, vector<8x128xf32> -> vector<8x256xf32>
    %52 = arith.truncf %51 : vector<8x256xf32> to vector<8x256xbf16>
    %c0_22 = arith.constant 0 : index
    %c0_23 = arith.constant 0 : index
    %53 = vector.load %arg5[%c0_22, %c0_23] : memref<256x384xbf16, #tpu.memory_space<vmem>>, vector<256x384xbf16>
    %cst_24 = arith.constant dense<0.000000e+00> : vector<8x384xf32>
    %54 = tpu.matmul %52, %53, %cst_24 {dimension_numbers = #tpu.dot_dimension_numbers<[1], [0], [0], [1], [0, 0, 1, 1], [], []>} : vector<8x256xbf16>, vector<256x384xbf16>, vector<8x384xf32> -> vector<8x384xf32>
    %55 = vector.broadcast %2 : vector<1x384xf32> to vector<8x384xf32>
    %56 = arith.addf %54, %55 : vector<8x384xf32>
    %57 = vector.extract_strided_slice %56 {offsets = [0, 0], sizes = [8, 128], strides = [1, 1]} : vector<8x384xf32> to vector<8x128xf32>
    %58 = arith.negf %57 : vector<8x128xf32>
    %59 = math.exp %58 : vector<8x128xf32>
    %cst_25 = arith.constant 1.000000e+00 : f32
    %60 = vector.broadcast %cst_25 : f32 to vector<8x128xf32>
    %61 = arith.addf %60, %59 : vector<8x128xf32>
    %62 = arith.divf %60, %61 : vector<8x128xf32>
    %63 = vector.extract_strided_slice %56 {offsets = [0, 128], sizes = [8, 128], strides = [1, 1]} : vector<8x384xf32> to vector<8x128xf32>
    %64 = arith.negf %63 : vector<8x128xf32>
    %65 = math.exp %64 : vector<8x128xf32>
    %cst_26 = arith.constant 1.000000e+00 : f32
    %66 = vector.broadcast %cst_26 : f32 to vector<8x128xf32>
    %67 = arith.addf %66, %65 : vector<8x128xf32>
    %68 = arith.divf %66, %67 : vector<8x128xf32>
    %69 = vector.extract_strided_slice %56 {offsets = [0, 256], sizes = [8, 128], strides = [1, 1]} : vector<8x384xf32> to vector<8x128xf32>
    %70 = vector.broadcast %3 : vector<1x128xf32> to vector<8x128xf32>
    %71 = arith.addf %19, %70 : vector<8x128xf32>
    %72 = arith.mulf %62, %71 : vector<8x128xf32>
    %73 = arith.addf %69, %72 : vector<8x128xf32>
    %74 = math.tanh %73 : vector<8x128xf32>
    %cst_27 = arith.constant 1.000000e+00 : f32
    %75 = vector.broadcast %cst_27 : f32 to vector<8x128xf32>
    %76 = arith.subf %75, %68 : vector<8x128xf32>
    %77 = arith.mulf %76, %74 : vector<8x128xf32>
    %78 = arith.mulf %68, %13 : vector<8x128xf32>
    %79 = arith.addf %77, %78 : vector<8x128xf32>
    %80 = arith.truncf %79 : vector<8x128xf32> to vector<8x128xbf16>
    %81 = arith.index_cast %c0_i32 : i32 to index
    %c0_28 = arith.constant 0 : index
    %c0_29 = arith.constant 0 : index
    %82 = vector.load %arg10[%81, %c0_28, %c0_29] : memref<8x8x128xbf16, #tpu.memory_space<vmem>>, vector<1x8x128xbf16>
    %83 = vector.shape_cast %82 : vector<1x8x128xbf16> to vector<8x128xbf16>
    %84 = vector.shape_cast %80 : vector<8x128xbf16> to vector<1x8x128xbf16>
    tpu.vector_store %arg10[%81, %c0_28, %c0_29], %84 {strides = array<i32>} : memref<8x8x128xbf16, #tpu.memory_space<vmem>>, vector<1x8x128xbf16>,
    %c1_i32 = arith.constant 1 : i32
    %85 = tpu.concatenate %50, %79 in 1 : vector<8x128xf32>, vector<8x128xf32> -> vector<8x256xf32>
    %86 = arith.truncf %85 : vector<8x256xf32> to vector<8x256xbf16>
    %c0_30 = arith.constant 0 : index
    %c0_31 = arith.constant 0 : index
    %87 = vector.load %arg4[%c0_30, %c0_31] : memref<256x512xbf16, #tpu.memory_space<vmem>>, vector<256x512xbf16>
    %cst_32 = arith.constant dense<0.000000e+00> : vector<8x512xf32>
    %88 = tpu.matmul %86, %87, %cst_32 {dimension_numbers = #tpu.dot_dimension_numbers<[1], [0], [0], [1], [0, 0, 1, 1], [], []>} : vector<8x256xbf16>, vector<256x512xbf16>, vector<8x512xf32> -> vector<8x512xf32>
    %89 = vector.extract_strided_slice %88 {offsets = [0, 0], sizes = [8, 384], strides = [1, 1]} : vector<8x512xf32> to vector<8x384xf32>
    %90 = vector.extract_strided_slice %88 {offsets = [0, 384], sizes = [8, 128], strides = [1, 1]} : vector<8x512xf32> to vector<8x128xf32>
    %91 = arith.index_cast %c1_i32 : i32 to index
    %c0_33 = arith.constant 0 : index
    %c0_34 = arith.constant 0 : index
    %92 = vector.load %arg9[%91, %c0_33, %c0_34] : memref<8x8x384xf32, #tpu.memory_space<vmem>>, vector<1x8x384xf32>
    %93 = vector.shape_cast %92 : vector<1x8x384xf32> to vector<8x384xf32>
    %94 = vector.extract_strided_slice %93 {offsets = [0, 0], sizes = [8, 128], strides = [1, 1]} : vector<8x384xf32> to vector<8x128xf32>
    %95 = vector.extract_strided_slice %89 {offsets = [0, 0], sizes = [8, 128], strides = [1, 1]} : vector<8x384xf32> to vector<8x128xf32>
    %96 = arith.addf %94, %95 : vector<8x128xf32>
    %97 = arith.negf %96 : vector<8x128xf32>
    %98 = math.exp %97 : vector<8x128xf32>
    %cst_35 = arith.constant 1.000000e+00 : f32
    %99 = vector.broadcast %cst_35 : f32 to vector<8x128xf32>
    %100 = arith.addf %99, %98 : vector<8x128xf32>
    %101 = arith.divf %99, %100 : vector<8x128xf32>
    %102 = vector.extract_strided_slice %93 {offsets = [0, 128], sizes = [8, 128], strides = [1, 1]} : vector<8x384xf32> to vector<8x128xf32>
    %103 = vector.extract_strided_slice %89 {offsets = [0, 128], sizes = [8, 128], strides = [1, 1]} : vector<8x384xf32> to vector<8x128xf32>
    %104 = arith.addf %102, %103 : vector<8x128xf32>
    %105 = arith.negf %104 : vector<8x128xf32>
    %106 = math.exp %105 : vector<8x128xf32>
    %cst_36 = arith.constant 1.000000e+00 : f32
    %107 = vector.broadcast %cst_36 : f32 to vector<8x128xf32>
    %108 = arith.addf %107, %106 : vector<8x128xf32>
    %109 = arith.divf %107, %108 : vector<8x128xf32>
    %110 = vector.extract_strided_slice %93 {offsets = [0, 256], sizes = [8, 128], strides = [1, 1]} : vector<8x384xf32> to vector<8x128xf32>
    %111 = vector.extract_strided_slice %89 {offsets = [0, 256], sizes = [8, 128], strides = [1, 1]} : vector<8x384xf32> to vector<8x128xf32>
    %112 = vector.broadcast %1 : vector<1x128xf32> to vector<8x128xf32>
    %113 = arith.addf %111, %112 : vector<8x128xf32>
    %114 = arith.mulf %101, %113 : vector<8x128xf32>
    %115 = arith.addf %110, %114 : vector<8x128xf32>
    %116 = math.tanh %115 : vector<8x128xf32>
    %cst_37 = arith.constant 1.000000e+00 : f32
    %117 = vector.broadcast %cst_37 : f32 to vector<8x128xf32>
    %118 = arith.subf %117, %109 : vector<8x128xf32>
    %119 = arith.mulf %118, %116 : vector<8x128xf32>
    %120 = arith.mulf %109, %50 : vector<8x128xf32>
    %121 = arith.addf %119, %120 : vector<8x128xf32>
    %122 = tpu.concatenate %121, %79 in 1 : vector<8x128xf32>, vector<8x128xf32> -> vector<8x256xf32>
    %123 = arith.truncf %122 : vector<8x256xf32> to vector<8x256xbf16>
    %c0_38 = arith.constant 0 : index
    %c0_39 = arith.constant 0 : index
    %124 = vector.load %arg5[%c0_38, %c0_39] : memref<256x384xbf16, #tpu.memory_space<vmem>>, vector<256x384xbf16>
    %cst_40 = arith.constant dense<0.000000e+00> : vector<8x384xf32>
    %125 = tpu.matmul %123, %124, %cst_40 {dimension_numbers = #tpu.dot_dimension_numbers<[1], [0], [0], [1], [0, 0, 1, 1], [], []>} : vector<8x256xbf16>, vector<256x384xbf16>, vector<8x384xf32> -> vector<8x384xf32>
    %126 = vector.broadcast %2 : vector<1x384xf32> to vector<8x384xf32>
    %127 = arith.addf %125, %126 : vector<8x384xf32>
    %128 = vector.extract_strided_slice %127 {offsets = [0, 0], sizes = [8, 128], strides = [1, 1]} : vector<8x384xf32> to vector<8x128xf32>
    %129 = arith.negf %128 : vector<8x128xf32>
    %130 = math.exp %129 : vector<8x128xf32>
    %cst_41 = arith.constant 1.000000e+00 : f32
    %131 = vector.broadcast %cst_41 : f32 to vector<8x128xf32>
    %132 = arith.addf %131, %130 : vector<8x128xf32>
    %133 = arith.divf %131, %132 : vector<8x128xf32>
    %134 = vector.extract_strided_slice %127 {offsets = [0, 128], sizes = [8, 128], strides = [1, 1]} : vector<8x384xf32> to vector<8x128xf32>
    %135 = arith.negf %134 : vector<8x128xf32>
    %136 = math.exp %135 : vector<8x128xf32>
    %cst_42 = arith.constant 1.000000e+00 : f32
    %137 = vector.broadcast %cst_42 : f32 to vector<8x128xf32>
    %138 = arith.addf %137, %136 : vector<8x128xf32>
    %139 = arith.divf %137, %138 : vector<8x128xf32>
    %140 = vector.extract_strided_slice %127 {offsets = [0, 256], sizes = [8, 128], strides = [1, 1]} : vector<8x384xf32> to vector<8x128xf32>
    %141 = vector.broadcast %3 : vector<1x128xf32> to vector<8x128xf32>
    %142 = arith.addf %90, %141 : vector<8x128xf32>
    %143 = arith.mulf %133, %142 : vector<8x128xf32>
    %144 = arith.addf %140, %143 : vector<8x128xf32>
    %145 = math.tanh %144 : vector<8x128xf32>
    %cst_43 = arith.constant 1.000000e+00 : f32
    %146 = vector.broadcast %cst_43 : f32 to vector<8x128xf32>
    %147 = arith.subf %146, %139 : vector<8x128xf32>
    %148 = arith.mulf %147, %145 : vector<8x128xf32>
    %149 = arith.mulf %139, %79 : vector<8x128xf32>
    %150 = arith.addf %148, %149 : vector<8x128xf32>
    %151 = arith.truncf %150 : vector<8x128xf32> to vector<8x128xbf16>
    %152 = arith.index_cast %c1_i32 : i32 to index
    %c0_44 = arith.constant 0 : index
    %c0_45 = arith.constant 0 : index
    %153 = vector.load %arg10[%152, %c0_44, %c0_45] : memref<8x8x128xbf16, #tpu.memory_space<vmem>>, vector<1x8x128xbf16>
    %154 = vector.shape_cast %153 : vector<1x8x128xbf16> to vector<8x128xbf16>
    %155 = vector.shape_cast %151 : vector<8x128xbf16> to vector<1x8x128xbf16>
    tpu.vector_store %arg10[%152, %c0_44, %c0_45], %155 {strides = array<i32>} : memref<8x8x128xbf16, #tpu.memory_space<vmem>>, vector<1x8x128xbf16>,
    %c2_i32 = arith.constant 2 : i32
    %156 = tpu.concatenate %121, %150 in 1 : vector<8x128xf32>, vector<8x128xf32> -> vector<8x256xf32>
    %157 = arith.truncf %156 : vector<8x256xf32> to vector<8x256xbf16>
    %c0_46 = arith.constant 0 : index
    %c0_47 = arith.constant 0 : index
    %158 = vector.load %arg4[%c0_46, %c0_47] : memref<256x512xbf16, #tpu.memory_space<vmem>>, vector<256x512xbf16>
    %cst_48 = arith.constant dense<0.000000e+00> : vector<8x512xf32>
    %159 = tpu.matmul %157, %158, %cst_48 {dimension_numbers = #tpu.dot_dimension_numbers<[1], [0], [0], [1], [0, 0, 1, 1], [], []>} : vector<8x256xbf16>, vector<256x512xbf16>, vector<8x512xf32> -> vector<8x512xf32>
    %160 = vector.extract_strided_slice %159 {offsets = [0, 0], sizes = [8, 384], strides = [1, 1]} : vector<8x512xf32> to vector<8x384xf32>
    %161 = vector.extract_strided_slice %159 {offsets = [0, 384], sizes = [8, 128], strides = [1, 1]} : vector<8x512xf32> to vector<8x128xf32>
    %162 = arith.index_cast %c2_i32 : i32 to index
    %c0_49 = arith.constant 0 : index
    %c0_50 = arith.constant 0 : index
    %163 = vector.load %arg9[%162, %c0_49, %c0_50] : memref<8x8x384xf32, #tpu.memory_space<vmem>>, vector<1x8x384xf32>
    %164 = vector.shape_cast %163 : vector<1x8x384xf32> to vector<8x384xf32>
    %165 = vector.extract_strided_slice %164 {offsets = [0, 0], sizes = [8, 128], strides = [1, 1]} : vector<8x384xf32> to vector<8x128xf32>
    %166 = vector.extract_strided_slice %160 {offsets = [0, 0], sizes = [8, 128], strides = [1, 1]} : vector<8x384xf32> to vector<8x128xf32>
    %167 = arith.addf %165, %166 : vector<8x128xf32>
    %168 = arith.negf %167 : vector<8x128xf32>
    %169 = math.exp %168 : vector<8x128xf32>
    %cst_51 = arith.constant 1.000000e+00 : f32
    %170 = vector.broadcast %cst_51 : f32 to vector<8x128xf32>
    %171 = arith.addf %170, %169 : vector<8x128xf32>
    %172 = arith.divf %170, %171 : vector<8x128xf32>
    %173 = vector.extract_strided_slice %164 {offsets = [0, 128], sizes = [8, 128], strides = [1, 1]} : vector<8x384xf32> to vector<8x128xf32>
    %174 = vector.extract_strided_slice %160 {offsets = [0, 128], sizes = [8, 128], strides = [1, 1]} : vector<8x384xf32> to vector<8x128xf32>
    %175 = arith.addf %173, %174 : vector<8x128xf32>
    %176 = arith.negf %175 : vector<8x128xf32>
    %177 = math.exp %176 : vector<8x128xf32>
    %cst_52 = arith.constant 1.000000e+00 : f32
    %178 = vector.broadcast %cst_52 : f32 to vector<8x128xf32>
    %179 = arith.addf %178, %177 : vector<8x128xf32>
    %180 = arith.divf %178, %179 : vector<8x128xf32>
    %181 = vector.extract_strided_slice %164 {offsets = [0, 256], sizes = [8, 128], strides = [1, 1]} : vector<8x384xf32> to vector<8x128xf32>
    %182 = vector.extract_strided_slice %160 {offsets = [0, 256], sizes = [8, 128], strides = [1, 1]} : vector<8x384xf32> to vector<8x128xf32>
    %183 = vector.broadcast %1 : vector<1x128xf32> to vector<8x128xf32>
    %184 = arith.addf %182, %183 : vector<8x128xf32>
    %185 = arith.mulf %172, %184 : vector<8x128xf32>
    %186 = arith.addf %181, %185 : vector<8x128xf32>
    %187 = math.tanh %186 : vector<8x128xf32>
    %cst_53 = arith.constant 1.000000e+00 : f32
    %188 = vector.broadcast %cst_53 : f32 to vector<8x128xf32>
    %189 = arith.subf %188, %180 : vector<8x128xf32>
    %190 = arith.mulf %189, %187 : vector<8x128xf32>
    %191 = arith.mulf %180, %121 : vector<8x128xf32>
    %192 = arith.addf %190, %191 : vector<8x128xf32>
    %193 = tpu.concatenate %192, %150 in 1 : vector<8x128xf32>, vector<8x128xf32> -> vector<8x256xf32>
    %194 = arith.truncf %193 : vector<8x256xf32> to vector<8x256xbf16>
    %c0_54 = arith.constant 0 : index
    %c0_55 = arith.constant 0 : index
    %195 = vector.load %arg5[%c0_54, %c0_55] : memref<256x384xbf16, #tpu.memory_space<vmem>>, vector<256x384xbf16>
    %cst_56 = arith.constant dense<0.000000e+00> : vector<8x384xf32>
    %196 = tpu.matmul %194, %195, %cst_56 {dimension_numbers = #tpu.dot_dimension_numbers<[1], [0], [0], [1], [0, 0, 1, 1], [], []>} : vector<8x256xbf16>, vector<256x384xbf16>, vector<8x384xf32> -> vector<8x384xf32>
    %197 = vector.broadcast %2 : vector<1x384xf32> to vector<8x384xf32>
    %198 = arith.addf %196, %197 : vector<8x384xf32>
    %199 = vector.extract_strided_slice %198 {offsets = [0, 0], sizes = [8, 128], strides = [1, 1]} : vector<8x384xf32> to vector<8x128xf32>
    %200 = arith.negf %199 : vector<8x128xf32>
    %201 = math.exp %200 : vector<8x128xf32>
    %cst_57 = arith.constant 1.000000e+00 : f32
    %202 = vector.broadcast %cst_57 : f32 to vector<8x128xf32>
    %203 = arith.addf %202, %201 : vector<8x128xf32>
    %204 = arith.divf %202, %203 : vector<8x128xf32>
    %205 = vector.extract_strided_slice %198 {offsets = [0, 128], sizes = [8, 128], strides = [1, 1]} : vector<8x384xf32> to vector<8x128xf32>
    %206 = arith.negf %205 : vector<8x128xf32>
    %207 = math.exp %206 : vector<8x128xf32>
    %cst_58 = arith.constant 1.000000e+00 : f32
    %208 = vector.broadcast %cst_58 : f32 to vector<8x128xf32>
    %209 = arith.addf %208, %207 : vector<8x128xf32>
    %210 = arith.divf %208, %209 : vector<8x128xf32>
    %211 = vector.extract_strided_slice %198 {offsets = [0, 256], sizes = [8, 128], strides = [1, 1]} : vector<8x384xf32> to vector<8x128xf32>
    %212 = vector.broadcast %3 : vector<1x128xf32> to vector<8x128xf32>
    %213 = arith.addf %161, %212 : vector<8x128xf32>
    %214 = arith.mulf %204, %213 : vector<8x128xf32>
    %215 = arith.addf %211, %214 : vector<8x128xf32>
    %216 = math.tanh %215 : vector<8x128xf32>
    %cst_59 = arith.constant 1.000000e+00 : f32
    %217 = vector.broadcast %cst_59 : f32 to vector<8x128xf32>
    %218 = arith.subf %217, %210 : vector<8x128xf32>
    %219 = arith.mulf %218, %216 : vector<8x128xf32>
    %220 = arith.mulf %210, %150 : vector<8x128xf32>
    %221 = arith.addf %219, %220 : vector<8x128xf32>
    %222 = arith.truncf %221 : vector<8x128xf32> to vector<8x128xbf16>
    %223 = arith.index_cast %c2_i32 : i32 to index
    %c0_60 = arith.constant 0 : index
    %c0_61 = arith.constant 0 : index
    %224 = vector.load %arg10[%223, %c0_60, %c0_61] : memref<8x8x128xbf16, #tpu.memory_space<vmem>>, vector<1x8x128xbf16>
    %225 = vector.shape_cast %224 : vector<1x8x128xbf16> to vector<8x128xbf16>
    %226 = vector.shape_cast %222 : vector<8x128xbf16> to vector<1x8x128xbf16>
    tpu.vector_store %arg10[%223, %c0_60, %c0_61], %226 {strides = array<i32>} : memref<8x8x128xbf16, #tpu.memory_space<vmem>>, vector<1x8x128xbf16>,
    %c3_i32 = arith.constant 3 : i32
    %227 = tpu.concatenate %192, %221 in 1 : vector<8x128xf32>, vector<8x128xf32> -> vector<8x256xf32>
    %228 = arith.truncf %227 : vector<8x256xf32> to vector<8x256xbf16>
    %c0_62 = arith.constant 0 : index
    %c0_63 = arith.constant 0 : index
    %229 = vector.load %arg4[%c0_62, %c0_63] : memref<256x512xbf16, #tpu.memory_space<vmem>>, vector<256x512xbf16>
    %cst_64 = arith.constant dense<0.000000e+00> : vector<8x512xf32>
    %230 = tpu.matmul %228, %229, %cst_64 {dimension_numbers = #tpu.dot_dimension_numbers<[1], [0], [0], [1], [0, 0, 1, 1], [], []>} : vector<8x256xbf16>, vector<256x512xbf16>, vector<8x512xf32> -> vector<8x512xf32>
    %231 = vector.extract_strided_slice %230 {offsets = [0, 0], sizes = [8, 384], strides = [1, 1]} : vector<8x512xf32> to vector<8x384xf32>
    %232 = vector.extract_strided_slice %230 {offsets = [0, 384], sizes = [8, 128], strides = [1, 1]} : vector<8x512xf32> to vector<8x128xf32>
    %233 = arith.index_cast %c3_i32 : i32 to index
    %c0_65 = arith.constant 0 : index
    %c0_66 = arith.constant 0 : index
    %234 = vector.load %arg9[%233, %c0_65, %c0_66] : memref<8x8x384xf32, #tpu.memory_space<vmem>>, vector<1x8x384xf32>
    %235 = vector.shape_cast %234 : vector<1x8x384xf32> to vector<8x384xf32>
    %236 = vector.extract_strided_slice %235 {offsets = [0, 0], sizes = [8, 128], strides = [1, 1]} : vector<8x384xf32> to vector<8x128xf32>
    %237 = vector.extract_strided_slice %231 {offsets = [0, 0], sizes = [8, 128], strides = [1, 1]} : vector<8x384xf32> to vector<8x128xf32>
    %238 = arith.addf %236, %237 : vector<8x128xf32>
    %239 = arith.negf %238 : vector<8x128xf32>
    %240 = math.exp %239 : vector<8x128xf32>
    %cst_67 = arith.constant 1.000000e+00 : f32
    %241 = vector.broadcast %cst_67 : f32 to vector<8x128xf32>
    %242 = arith.addf %241, %240 : vector<8x128xf32>
    %243 = arith.divf %241, %242 : vector<8x128xf32>
    %244 = vector.extract_strided_slice %235 {offsets = [0, 128], sizes = [8, 128], strides = [1, 1]} : vector<8x384xf32> to vector<8x128xf32>
    %245 = vector.extract_strided_slice %231 {offsets = [0, 128], sizes = [8, 128], strides = [1, 1]} : vector<8x384xf32> to vector<8x128xf32>
    %246 = arith.addf %244, %245 : vector<8x128xf32>
    %247 = arith.negf %246 : vector<8x128xf32>
    %248 = math.exp %247 : vector<8x128xf32>
    %cst_68 = arith.constant 1.000000e+00 : f32
    %249 = vector.broadcast %cst_68 : f32 to vector<8x128xf32>
    %250 = arith.addf %249, %248 : vector<8x128xf32>
    %251 = arith.divf %249, %250 : vector<8x128xf32>
    %252 = vector.extract_strided_slice %235 {offsets = [0, 256], sizes = [8, 128], strides = [1, 1]} : vector<8x384xf32> to vector<8x128xf32>
    %253 = vector.extract_strided_slice %231 {offsets = [0, 256], sizes = [8, 128], strides = [1, 1]} : vector<8x384xf32> to vector<8x128xf32>
    %254 = vector.broadcast %1 : vector<1x128xf32> to vector<8x128xf32>
    %255 = arith.addf %253, %254 : vector<8x128xf32>
    %256 = arith.mulf %243, %255 : vector<8x128xf32>
    %257 = arith.addf %252, %256 : vector<8x128xf32>
    %258 = math.tanh %257 : vector<8x128xf32>
    %cst_69 = arith.constant 1.000000e+00 : f32
    %259 = vector.broadcast %cst_69 : f32 to vector<8x128xf32>
    %260 = arith.subf %259, %251 : vector<8x128xf32>
    %261 = arith.mulf %260, %258 : vector<8x128xf32>
    %262 = arith.mulf %251, %192 : vector<8x128xf32>
    %263 = arith.addf %261, %262 : vector<8x128xf32>
    %264 = tpu.concatenate %263, %221 in 1 : vector<8x128xf32>, vector<8x128xf32> -> vector<8x256xf32>
    %265 = arith.truncf %264 : vector<8x256xf32> to vector<8x256xbf16>
    %c0_70 = arith.constant 0 : index
    %c0_71 = arith.constant 0 : index
    %266 = vector.load %arg5[%c0_70, %c0_71] : memref<256x384xbf16, #tpu.memory_space<vmem>>, vector<256x384xbf16>
    %cst_72 = arith.constant dense<0.000000e+00> : vector<8x384xf32>
    %267 = tpu.matmul %265, %266, %cst_72 {dimension_numbers = #tpu.dot_dimension_numbers<[1], [0], [0], [1], [0, 0, 1, 1], [], []>} : vector<8x256xbf16>, vector<256x384xbf16>, vector<8x384xf32> -> vector<8x384xf32>
    %268 = vector.broadcast %2 : vector<1x384xf32> to vector<8x384xf32>
    %269 = arith.addf %267, %268 : vector<8x384xf32>
    %270 = vector.extract_strided_slice %269 {offsets = [0, 0], sizes = [8, 128], strides = [1, 1]} : vector<8x384xf32> to vector<8x128xf32>
    %271 = arith.negf %270 : vector<8x128xf32>
    %272 = math.exp %271 : vector<8x128xf32>
    %cst_73 = arith.constant 1.000000e+00 : f32
    %273 = vector.broadcast %cst_73 : f32 to vector<8x128xf32>
    %274 = arith.addf %273, %272 : vector<8x128xf32>
    %275 = arith.divf %273, %274 : vector<8x128xf32>
    %276 = vector.extract_strided_slice %269 {offsets = [0, 128], sizes = [8, 128], strides = [1, 1]} : vector<8x384xf32> to vector<8x128xf32>
    %277 = arith.negf %276 : vector<8x128xf32>
    %278 = math.exp %277 : vector<8x128xf32>
    %cst_74 = arith.constant 1.000000e+00 : f32
    %279 = vector.broadcast %cst_74 : f32 to vector<8x128xf32>
    %280 = arith.addf %279, %278 : vector<8x128xf32>
    %281 = arith.divf %279, %280 : vector<8x128xf32>
    %282 = vector.extract_strided_slice %269 {offsets = [0, 256], sizes = [8, 128], strides = [1, 1]} : vector<8x384xf32> to vector<8x128xf32>
    %283 = vector.broadcast %3 : vector<1x128xf32> to vector<8x128xf32>
    %284 = arith.addf %232, %283 : vector<8x128xf32>
    %285 = arith.mulf %275, %284 : vector<8x128xf32>
    %286 = arith.addf %282, %285 : vector<8x128xf32>
    %287 = math.tanh %286 : vector<8x128xf32>
    %cst_75 = arith.constant 1.000000e+00 : f32
    %288 = vector.broadcast %cst_75 : f32 to vector<8x128xf32>
    %289 = arith.subf %288, %281 : vector<8x128xf32>
    %290 = arith.mulf %289, %287 : vector<8x128xf32>
    %291 = arith.mulf %281, %221 : vector<8x128xf32>
    %292 = arith.addf %290, %291 : vector<8x128xf32>
    %293 = arith.truncf %292 : vector<8x128xf32> to vector<8x128xbf16>
    %294 = arith.index_cast %c3_i32 : i32 to index
    %c0_76 = arith.constant 0 : index
    %c0_77 = arith.constant 0 : index
    %295 = vector.load %arg10[%294, %c0_76, %c0_77] : memref<8x8x128xbf16, #tpu.memory_space<vmem>>, vector<1x8x128xbf16>
    %296 = vector.shape_cast %295 : vector<1x8x128xbf16> to vector<8x128xbf16>
    %297 = vector.shape_cast %293 : vector<8x128xbf16> to vector<1x8x128xbf16>
    tpu.vector_store %arg10[%294, %c0_76, %c0_77], %297 {strides = array<i32>} : memref<8x8x128xbf16, #tpu.memory_space<vmem>>, vector<1x8x128xbf16>,
    %c4_i32 = arith.constant 4 : i32
    %298 = tpu.concatenate %263, %292 in 1 : vector<8x128xf32>, vector<8x128xf32> -> vector<8x256xf32>
    %299 = arith.truncf %298 : vector<8x256xf32> to vector<8x256xbf16>
    %c0_78 = arith.constant 0 : index
    %c0_79 = arith.constant 0 : index
    %300 = vector.load %arg4[%c0_78, %c0_79] : memref<256x512xbf16, #tpu.memory_space<vmem>>, vector<256x512xbf16>
    %cst_80 = arith.constant dense<0.000000e+00> : vector<8x512xf32>
    %301 = tpu.matmul %299, %300, %cst_80 {dimension_numbers = #tpu.dot_dimension_numbers<[1], [0], [0], [1], [0, 0, 1, 1], [], []>} : vector<8x256xbf16>, vector<256x512xbf16>, vector<8x512xf32> -> vector<8x512xf32>
    %302 = vector.extract_strided_slice %301 {offsets = [0, 0], sizes = [8, 384], strides = [1, 1]} : vector<8x512xf32> to vector<8x384xf32>
    %303 = vector.extract_strided_slice %301 {offsets = [0, 384], sizes = [8, 128], strides = [1, 1]} : vector<8x512xf32> to vector<8x128xf32>
    %304 = arith.index_cast %c4_i32 : i32 to index
    %c0_81 = arith.constant 0 : index
    %c0_82 = arith.constant 0 : index
    %305 = vector.load %arg9[%304, %c0_81, %c0_82] : memref<8x8x384xf32, #tpu.memory_space<vmem>>, vector<1x8x384xf32>
    %306 = vector.shape_cast %305 : vector<1x8x384xf32> to vector<8x384xf32>
    %307 = vector.extract_strided_slice %306 {offsets = [0, 0], sizes = [8, 128], strides = [1, 1]} : vector<8x384xf32> to vector<8x128xf32>
    %308 = vector.extract_strided_slice %302 {offsets = [0, 0], sizes = [8, 128], strides = [1, 1]} : vector<8x384xf32> to vector<8x128xf32>
    %309 = arith.addf %307, %308 : vector<8x128xf32>
    %310 = arith.negf %309 : vector<8x128xf32>
    %311 = math.exp %310 : vector<8x128xf32>
    %cst_83 = arith.constant 1.000000e+00 : f32
    %312 = vector.broadcast %cst_83 : f32 to vector<8x128xf32>
    %313 = arith.addf %312, %311 : vector<8x128xf32>
    %314 = arith.divf %312, %313 : vector<8x128xf32>
    %315 = vector.extract_strided_slice %306 {offsets = [0, 128], sizes = [8, 128], strides = [1, 1]} : vector<8x384xf32> to vector<8x128xf32>
    %316 = vector.extract_strided_slice %302 {offsets = [0, 128], sizes = [8, 128], strides = [1, 1]} : vector<8x384xf32> to vector<8x128xf32>
    %317 = arith.addf %315, %316 : vector<8x128xf32>
    %318 = arith.negf %317 : vector<8x128xf32>
    %319 = math.exp %318 : vector<8x128xf32>
    %cst_84 = arith.constant 1.000000e+00 : f32
    %320 = vector.broadcast %cst_84 : f32 to vector<8x128xf32>
    %321 = arith.addf %320, %319 : vector<8x128xf32>
    %322 = arith.divf %320, %321 : vector<8x128xf32>
    %323 = vector.extract_strided_slice %306 {offsets = [0, 256], sizes = [8, 128], strides = [1, 1]} : vector<8x384xf32> to vector<8x128xf32>
    %324 = vector.extract_strided_slice %302 {offsets = [0, 256], sizes = [8, 128], strides = [1, 1]} : vector<8x384xf32> to vector<8x128xf32>
    %325 = vector.broadcast %1 : vector<1x128xf32> to vector<8x128xf32>
    %326 = arith.addf %324, %325 : vector<8x128xf32>
    %327 = arith.mulf %314, %326 : vector<8x128xf32>
    %328 = arith.addf %323, %327 : vector<8x128xf32>
    %329 = math.tanh %328 : vector<8x128xf32>
    %cst_85 = arith.constant 1.000000e+00 : f32
    %330 = vector.broadcast %cst_85 : f32 to vector<8x128xf32>
    %331 = arith.subf %330, %322 : vector<8x128xf32>
    %332 = arith.mulf %331, %329 : vector<8x128xf32>
    %333 = arith.mulf %322, %263 : vector<8x128xf32>
    %334 = arith.addf %332, %333 : vector<8x128xf32>
    %335 = tpu.concatenate %334, %292 in 1 : vector<8x128xf32>, vector<8x128xf32> -> vector<8x256xf32>
    %336 = arith.truncf %335 : vector<8x256xf32> to vector<8x256xbf16>
    %c0_86 = arith.constant 0 : index
    %c0_87 = arith.constant 0 : index
    %337 = vector.load %arg5[%c0_86, %c0_87] : memref<256x384xbf16, #tpu.memory_space<vmem>>, vector<256x384xbf16>
    %cst_88 = arith.constant dense<0.000000e+00> : vector<8x384xf32>
    %338 = tpu.matmul %336, %337, %cst_88 {dimension_numbers = #tpu.dot_dimension_numbers<[1], [0], [0], [1], [0, 0, 1, 1], [], []>} : vector<8x256xbf16>, vector<256x384xbf16>, vector<8x384xf32> -> vector<8x384xf32>
    %339 = vector.broadcast %2 : vector<1x384xf32> to vector<8x384xf32>
    %340 = arith.addf %338, %339 : vector<8x384xf32>
    %341 = vector.extract_strided_slice %340 {offsets = [0, 0], sizes = [8, 128], strides = [1, 1]} : vector<8x384xf32> to vector<8x128xf32>
    %342 = arith.negf %341 : vector<8x128xf32>
    %343 = math.exp %342 : vector<8x128xf32>
    %cst_89 = arith.constant 1.000000e+00 : f32
    %344 = vector.broadcast %cst_89 : f32 to vector<8x128xf32>
    %345 = arith.addf %344, %343 : vector<8x128xf32>
    %346 = arith.divf %344, %345 : vector<8x128xf32>
    %347 = vector.extract_strided_slice %340 {offsets = [0, 128], sizes = [8, 128], strides = [1, 1]} : vector<8x384xf32> to vector<8x128xf32>
    %348 = arith.negf %347 : vector<8x128xf32>
    %349 = math.exp %348 : vector<8x128xf32>
    %cst_90 = arith.constant 1.000000e+00 : f32
    %350 = vector.broadcast %cst_90 : f32 to vector<8x128xf32>
    %351 = arith.addf %350, %349 : vector<8x128xf32>
    %352 = arith.divf %350, %351 : vector<8x128xf32>
    %353 = vector.extract_strided_slice %340 {offsets = [0, 256], sizes = [8, 128], strides = [1, 1]} : vector<8x384xf32> to vector<8x128xf32>
    %354 = vector.broadcast %3 : vector<1x128xf32> to vector<8x128xf32>
    %355 = arith.addf %303, %354 : vector<8x128xf32>
    %356 = arith.mulf %346, %355 : vector<8x128xf32>
    %357 = arith.addf %353, %356 : vector<8x128xf32>
    %358 = math.tanh %357 : vector<8x128xf32>
    %cst_91 = arith.constant 1.000000e+00 : f32
    %359 = vector.broadcast %cst_91 : f32 to vector<8x128xf32>
    %360 = arith.subf %359, %352 : vector<8x128xf32>
    %361 = arith.mulf %360, %358 : vector<8x128xf32>
    %362 = arith.mulf %352, %292 : vector<8x128xf32>
    %363 = arith.addf %361, %362 : vector<8x128xf32>
    %364 = arith.truncf %363 : vector<8x128xf32> to vector<8x128xbf16>
    %365 = arith.index_cast %c4_i32 : i32 to index
    %c0_92 = arith.constant 0 : index
    %c0_93 = arith.constant 0 : index
    %366 = vector.load %arg10[%365, %c0_92, %c0_93] : memref<8x8x128xbf16, #tpu.memory_space<vmem>>, vector<1x8x128xbf16>
    %367 = vector.shape_cast %366 : vector<1x8x128xbf16> to vector<8x128xbf16>
    %368 = vector.shape_cast %364 : vector<8x128xbf16> to vector<1x8x128xbf16>
    tpu.vector_store %arg10[%365, %c0_92, %c0_93], %368 {strides = array<i32>} : memref<8x8x128xbf16, #tpu.memory_space<vmem>>, vector<1x8x128xbf16>,
    %c5_i32 = arith.constant 5 : i32
    %369 = tpu.concatenate %334, %363 in 1 : vector<8x128xf32>, vector<8x128xf32> -> vector<8x256xf32>
    %370 = arith.truncf %369 : vector<8x256xf32> to vector<8x256xbf16>
    %c0_94 = arith.constant 0 : index
    %c0_95 = arith.constant 0 : index
    %371 = vector.load %arg4[%c0_94, %c0_95] : memref<256x512xbf16, #tpu.memory_space<vmem>>, vector<256x512xbf16>
    %cst_96 = arith.constant dense<0.000000e+00> : vector<8x512xf32>
    %372 = tpu.matmul %370, %371, %cst_96 {dimension_numbers = #tpu.dot_dimension_numbers<[1], [0], [0], [1], [0, 0, 1, 1], [], []>} : vector<8x256xbf16>, vector<256x512xbf16>, vector<8x512xf32> -> vector<8x512xf32>
    %373 = vector.extract_strided_slice %372 {offsets = [0, 0], sizes = [8, 384], strides = [1, 1]} : vector<8x512xf32> to vector<8x384xf32>
    %374 = vector.extract_strided_slice %372 {offsets = [0, 384], sizes = [8, 128], strides = [1, 1]} : vector<8x512xf32> to vector<8x128xf32>
    %375 = arith.index_cast %c5_i32 : i32 to index
    %c0_97 = arith.constant 0 : index
    %c0_98 = arith.constant 0 : index
    %376 = vector.load %arg9[%375, %c0_97, %c0_98] : memref<8x8x384xf32, #tpu.memory_space<vmem>>, vector<1x8x384xf32>
    %377 = vector.shape_cast %376 : vector<1x8x384xf32> to vector<8x384xf32>
    %378 = vector.extract_strided_slice %377 {offsets = [0, 0], sizes = [8, 128], strides = [1, 1]} : vector<8x384xf32> to vector<8x128xf32>
    %379 = vector.extract_strided_slice %373 {offsets = [0, 0], sizes = [8, 128], strides = [1, 1]} : vector<8x384xf32> to vector<8x128xf32>
    %380 = arith.addf %378, %379 : vector<8x128xf32>
    %381 = arith.negf %380 : vector<8x128xf32>
    %382 = math.exp %381 : vector<8x128xf32>
    %cst_99 = arith.constant 1.000000e+00 : f32
    %383 = vector.broadcast %cst_99 : f32 to vector<8x128xf32>
    %384 = arith.addf %383, %382 : vector<8x128xf32>
    %385 = arith.divf %383, %384 : vector<8x128xf32>
    %386 = vector.extract_strided_slice %377 {offsets = [0, 128], sizes = [8, 128], strides = [1, 1]} : vector<8x384xf32> to vector<8x128xf32>
    %387 = vector.extract_strided_slice %373 {offsets = [0, 128], sizes = [8, 128], strides = [1, 1]} : vector<8x384xf32> to vector<8x128xf32>
    %388 = arith.addf %386, %387 : vector<8x128xf32>
    %389 = arith.negf %388 : vector<8x128xf32>
    %390 = math.exp %389 : vector<8x128xf32>
    %cst_100 = arith.constant 1.000000e+00 : f32
    %391 = vector.broadcast %cst_100 : f32 to vector<8x128xf32>
    %392 = arith.addf %391, %390 : vector<8x128xf32>
    %393 = arith.divf %391, %392 : vector<8x128xf32>
    %394 = vector.extract_strided_slice %377 {offsets = [0, 256], sizes = [8, 128], strides = [1, 1]} : vector<8x384xf32> to vector<8x128xf32>
    %395 = vector.extract_strided_slice %373 {offsets = [0, 256], sizes = [8, 128], strides = [1, 1]} : vector<8x384xf32> to vector<8x128xf32>
    %396 = vector.broadcast %1 : vector<1x128xf32> to vector<8x128xf32>
    %397 = arith.addf %395, %396 : vector<8x128xf32>
    %398 = arith.mulf %385, %397 : vector<8x128xf32>
    %399 = arith.addf %394, %398 : vector<8x128xf32>
    %400 = math.tanh %399 : vector<8x128xf32>
    %cst_101 = arith.constant 1.000000e+00 : f32
    %401 = vector.broadcast %cst_101 : f32 to vector<8x128xf32>
    %402 = arith.subf %401, %393 : vector<8x128xf32>
    %403 = arith.mulf %402, %400 : vector<8x128xf32>
    %404 = arith.mulf %393, %334 : vector<8x128xf32>
    %405 = arith.addf %403, %404 : vector<8x128xf32>
    %406 = tpu.concatenate %405, %363 in 1 : vector<8x128xf32>, vector<8x128xf32> -> vector<8x256xf32>
    %407 = arith.truncf %406 : vector<8x256xf32> to vector<8x256xbf16>
    %c0_102 = arith.constant 0 : index
    %c0_103 = arith.constant 0 : index
    %408 = vector.load %arg5[%c0_102, %c0_103] : memref<256x384xbf16, #tpu.memory_space<vmem>>, vector<256x384xbf16>
    %cst_104 = arith.constant dense<0.000000e+00> : vector<8x384xf32>
    %409 = tpu.matmul %407, %408, %cst_104 {dimension_numbers = #tpu.dot_dimension_numbers<[1], [0], [0], [1], [0, 0, 1, 1], [], []>} : vector<8x256xbf16>, vector<256x384xbf16>, vector<8x384xf32> -> vector<8x384xf32>
    %410 = vector.broadcast %2 : vector<1x384xf32> to vector<8x384xf32>
    %411 = arith.addf %409, %410 : vector<8x384xf32>
    %412 = vector.extract_strided_slice %411 {offsets = [0, 0], sizes = [8, 128], strides = [1, 1]} : vector<8x384xf32> to vector<8x128xf32>
    %413 = arith.negf %412 : vector<8x128xf32>
    %414 = math.exp %413 : vector<8x128xf32>
    %cst_105 = arith.constant 1.000000e+00 : f32
    %415 = vector.broadcast %cst_105 : f32 to vector<8x128xf32>
    %416 = arith.addf %415, %414 : vector<8x128xf32>
    %417 = arith.divf %415, %416 : vector<8x128xf32>
    %418 = vector.extract_strided_slice %411 {offsets = [0, 128], sizes = [8, 128], strides = [1, 1]} : vector<8x384xf32> to vector<8x128xf32>
    %419 = arith.negf %418 : vector<8x128xf32>
    %420 = math.exp %419 : vector<8x128xf32>
    %cst_106 = arith.constant 1.000000e+00 : f32
    %421 = vector.broadcast %cst_106 : f32 to vector<8x128xf32>
    %422 = arith.addf %421, %420 : vector<8x128xf32>
    %423 = arith.divf %421, %422 : vector<8x128xf32>
    %424 = vector.extract_strided_slice %411 {offsets = [0, 256], sizes = [8, 128], strides = [1, 1]} : vector<8x384xf32> to vector<8x128xf32>
    %425 = vector.broadcast %3 : vector<1x128xf32> to vector<8x128xf32>
    %426 = arith.addf %374, %425 : vector<8x128xf32>
    %427 = arith.mulf %417, %426 : vector<8x128xf32>
    %428 = arith.addf %424, %427 : vector<8x128xf32>
    %429 = math.tanh %428 : vector<8x128xf32>
    %cst_107 = arith.constant 1.000000e+00 : f32
    %430 = vector.broadcast %cst_107 : f32 to vector<8x128xf32>
    %431 = arith.subf %430, %423 : vector<8x128xf32>
    %432 = arith.mulf %431, %429 : vector<8x128xf32>
    %433 = arith.mulf %423, %363 : vector<8x128xf32>
    %434 = arith.addf %432, %433 : vector<8x128xf32>
    %435 = arith.truncf %434 : vector<8x128xf32> to vector<8x128xbf16>
    %436 = arith.index_cast %c5_i32 : i32 to index
    %c0_108 = arith.constant 0 : index
    %c0_109 = arith.constant 0 : index
    %437 = vector.load %arg10[%436, %c0_108, %c0_109] : memref<8x8x128xbf16, #tpu.memory_space<vmem>>, vector<1x8x128xbf16>
    %438 = vector.shape_cast %437 : vector<1x8x128xbf16> to vector<8x128xbf16>
    %439 = vector.shape_cast %435 : vector<8x128xbf16> to vector<1x8x128xbf16>
    tpu.vector_store %arg10[%436, %c0_108, %c0_109], %439 {strides = array<i32>} : memref<8x8x128xbf16, #tpu.memory_space<vmem>>, vector<1x8x128xbf16>,
    %c6_i32 = arith.constant 6 : i32
    %440 = tpu.concatenate %405, %434 in 1 : vector<8x128xf32>, vector<8x128xf32> -> vector<8x256xf32>
    %441 = arith.truncf %440 : vector<8x256xf32> to vector<8x256xbf16>
    %c0_110 = arith.constant 0 : index
    %c0_111 = arith.constant 0 : index
    %442 = vector.load %arg4[%c0_110, %c0_111] : memref<256x512xbf16, #tpu.memory_space<vmem>>, vector<256x512xbf16>
    %cst_112 = arith.constant dense<0.000000e+00> : vector<8x512xf32>
    %443 = tpu.matmul %441, %442, %cst_112 {dimension_numbers = #tpu.dot_dimension_numbers<[1], [0], [0], [1], [0, 0, 1, 1], [], []>} : vector<8x256xbf16>, vector<256x512xbf16>, vector<8x512xf32> -> vector<8x512xf32>
    %444 = vector.extract_strided_slice %443 {offsets = [0, 0], sizes = [8, 384], strides = [1, 1]} : vector<8x512xf32> to vector<8x384xf32>
    %445 = vector.extract_strided_slice %443 {offsets = [0, 384], sizes = [8, 128], strides = [1, 1]} : vector<8x512xf32> to vector<8x128xf32>
    %446 = arith.index_cast %c6_i32 : i32 to index
    %c0_113 = arith.constant 0 : index
    %c0_114 = arith.constant 0 : index
    %447 = vector.load %arg9[%446, %c0_113, %c0_114] : memref<8x8x384xf32, #tpu.memory_space<vmem>>, vector<1x8x384xf32>
    %448 = vector.shape_cast %447 : vector<1x8x384xf32> to vector<8x384xf32>
    %449 = vector.extract_strided_slice %448 {offsets = [0, 0], sizes = [8, 128], strides = [1, 1]} : vector<8x384xf32> to vector<8x128xf32>
    %450 = vector.extract_strided_slice %444 {offsets = [0, 0], sizes = [8, 128], strides = [1, 1]} : vector<8x384xf32> to vector<8x128xf32>
    %451 = arith.addf %449, %450 : vector<8x128xf32>
    %452 = arith.negf %451 : vector<8x128xf32>
    %453 = math.exp %452 : vector<8x128xf32>
    %cst_115 = arith.constant 1.000000e+00 : f32
    %454 = vector.broadcast %cst_115 : f32 to vector<8x128xf32>
    %455 = arith.addf %454, %453 : vector<8x128xf32>
    %456 = arith.divf %454, %455 : vector<8x128xf32>
    %457 = vector.extract_strided_slice %448 {offsets = [0, 128], sizes = [8, 128], strides = [1, 1]} : vector<8x384xf32> to vector<8x128xf32>
    %458 = vector.extract_strided_slice %444 {offsets = [0, 128], sizes = [8, 128], strides = [1, 1]} : vector<8x384xf32> to vector<8x128xf32>
    %459 = arith.addf %457, %458 : vector<8x128xf32>
    %460 = arith.negf %459 : vector<8x128xf32>
    %461 = math.exp %460 : vector<8x128xf32>
    %cst_116 = arith.constant 1.000000e+00 : f32
    %462 = vector.broadcast %cst_116 : f32 to vector<8x128xf32>
    %463 = arith.addf %462, %461 : vector<8x128xf32>
    %464 = arith.divf %462, %463 : vector<8x128xf32>
    %465 = vector.extract_strided_slice %448 {offsets = [0, 256], sizes = [8, 128], strides = [1, 1]} : vector<8x384xf32> to vector<8x128xf32>
    %466 = vector.extract_strided_slice %444 {offsets = [0, 256], sizes = [8, 128], strides = [1, 1]} : vector<8x384xf32> to vector<8x128xf32>
    %467 = vector.broadcast %1 : vector<1x128xf32> to vector<8x128xf32>
    %468 = arith.addf %466, %467 : vector<8x128xf32>
    %469 = arith.mulf %456, %468 : vector<8x128xf32>
    %470 = arith.addf %465, %469 : vector<8x128xf32>
    %471 = math.tanh %470 : vector<8x128xf32>
    %cst_117 = arith.constant 1.000000e+00 : f32
    %472 = vector.broadcast %cst_117 : f32 to vector<8x128xf32>
    %473 = arith.subf %472, %464 : vector<8x128xf32>
    %474 = arith.mulf %473, %471 : vector<8x128xf32>
    %475 = arith.mulf %464, %405 : vector<8x128xf32>
    %476 = arith.addf %474, %475 : vector<8x128xf32>
    %477 = tpu.concatenate %476, %434 in 1 : vector<8x128xf32>, vector<8x128xf32> -> vector<8x256xf32>
    %478 = arith.truncf %477 : vector<8x256xf32> to vector<8x256xbf16>
    %c0_118 = arith.constant 0 : index
    %c0_119 = arith.constant 0 : index
    %479 = vector.load %arg5[%c0_118, %c0_119] : memref<256x384xbf16, #tpu.memory_space<vmem>>, vector<256x384xbf16>
    %cst_120 = arith.constant dense<0.000000e+00> : vector<8x384xf32>
    %480 = tpu.matmul %478, %479, %cst_120 {dimension_numbers = #tpu.dot_dimension_numbers<[1], [0], [0], [1], [0, 0, 1, 1], [], []>} : vector<8x256xbf16>, vector<256x384xbf16>, vector<8x384xf32> -> vector<8x384xf32>
    %481 = vector.broadcast %2 : vector<1x384xf32> to vector<8x384xf32>
    %482 = arith.addf %480, %481 : vector<8x384xf32>
    %483 = vector.extract_strided_slice %482 {offsets = [0, 0], sizes = [8, 128], strides = [1, 1]} : vector<8x384xf32> to vector<8x128xf32>
    %484 = arith.negf %483 : vector<8x128xf32>
    %485 = math.exp %484 : vector<8x128xf32>
    %cst_121 = arith.constant 1.000000e+00 : f32
    %486 = vector.broadcast %cst_121 : f32 to vector<8x128xf32>
    %487 = arith.addf %486, %485 : vector<8x128xf32>
    %488 = arith.divf %486, %487 : vector<8x128xf32>
    %489 = vector.extract_strided_slice %482 {offsets = [0, 128], sizes = [8, 128], strides = [1, 1]} : vector<8x384xf32> to vector<8x128xf32>
    %490 = arith.negf %489 : vector<8x128xf32>
    %491 = math.exp %490 : vector<8x128xf32>
    %cst_122 = arith.constant 1.000000e+00 : f32
    %492 = vector.broadcast %cst_122 : f32 to vector<8x128xf32>
    %493 = arith.addf %492, %491 : vector<8x128xf32>
    %494 = arith.divf %492, %493 : vector<8x128xf32>
    %495 = vector.extract_strided_slice %482 {offsets = [0, 256], sizes = [8, 128], strides = [1, 1]} : vector<8x384xf32> to vector<8x128xf32>
    %496 = vector.broadcast %3 : vector<1x128xf32> to vector<8x128xf32>
    %497 = arith.addf %445, %496 : vector<8x128xf32>
    %498 = arith.mulf %488, %497 : vector<8x128xf32>
    %499 = arith.addf %495, %498 : vector<8x128xf32>
    %500 = math.tanh %499 : vector<8x128xf32>
    %cst_123 = arith.constant 1.000000e+00 : f32
    %501 = vector.broadcast %cst_123 : f32 to vector<8x128xf32>
    %502 = arith.subf %501, %494 : vector<8x128xf32>
    %503 = arith.mulf %502, %500 : vector<8x128xf32>
    %504 = arith.mulf %494, %434 : vector<8x128xf32>
    %505 = arith.addf %503, %504 : vector<8x128xf32>
    %506 = arith.truncf %505 : vector<8x128xf32> to vector<8x128xbf16>
    %507 = arith.index_cast %c6_i32 : i32 to index
    %c0_124 = arith.constant 0 : index
    %c0_125 = arith.constant 0 : index
    %508 = vector.load %arg10[%507, %c0_124, %c0_125] : memref<8x8x128xbf16, #tpu.memory_space<vmem>>, vector<1x8x128xbf16>
    %509 = vector.shape_cast %508 : vector<1x8x128xbf16> to vector<8x128xbf16>
    %510 = vector.shape_cast %506 : vector<8x128xbf16> to vector<1x8x128xbf16>
    tpu.vector_store %arg10[%507, %c0_124, %c0_125], %510 {strides = array<i32>} : memref<8x8x128xbf16, #tpu.memory_space<vmem>>, vector<1x8x128xbf16>,
    %c7_i32 = arith.constant 7 : i32
    %511 = tpu.concatenate %476, %505 in 1 : vector<8x128xf32>, vector<8x128xf32> -> vector<8x256xf32>
    %512 = arith.truncf %511 : vector<8x256xf32> to vector<8x256xbf16>
    %c0_126 = arith.constant 0 : index
    %c0_127 = arith.constant 0 : index
    %513 = vector.load %arg4[%c0_126, %c0_127] : memref<256x512xbf16, #tpu.memory_space<vmem>>, vector<256x512xbf16>
    %cst_128 = arith.constant dense<0.000000e+00> : vector<8x512xf32>
    %514 = tpu.matmul %512, %513, %cst_128 {dimension_numbers = #tpu.dot_dimension_numbers<[1], [0], [0], [1], [0, 0, 1, 1], [], []>} : vector<8x256xbf16>, vector<256x512xbf16>, vector<8x512xf32> -> vector<8x512xf32>
    %515 = vector.extract_strided_slice %514 {offsets = [0, 0], sizes = [8, 384], strides = [1, 1]} : vector<8x512xf32> to vector<8x384xf32>
    %516 = vector.extract_strided_slice %514 {offsets = [0, 384], sizes = [8, 128], strides = [1, 1]} : vector<8x512xf32> to vector<8x128xf32>
    %517 = arith.index_cast %c7_i32 : i32 to index
    %c0_129 = arith.constant 0 : index
    %c0_130 = arith.constant 0 : index
    %518 = vector.load %arg9[%517, %c0_129, %c0_130] : memref<8x8x384xf32, #tpu.memory_space<vmem>>, vector<1x8x384xf32>
    %519 = vector.shape_cast %518 : vector<1x8x384xf32> to vector<8x384xf32>
    %520 = vector.extract_strided_slice %519 {offsets = [0, 0], sizes = [8, 128], strides = [1, 1]} : vector<8x384xf32> to vector<8x128xf32>
    %521 = vector.extract_strided_slice %515 {offsets = [0, 0], sizes = [8, 128], strides = [1, 1]} : vector<8x384xf32> to vector<8x128xf32>
    %522 = arith.addf %520, %521 : vector<8x128xf32>
    %523 = arith.negf %522 : vector<8x128xf32>
    %524 = math.exp %523 : vector<8x128xf32>
    %cst_131 = arith.constant 1.000000e+00 : f32
    %525 = vector.broadcast %cst_131 : f32 to vector<8x128xf32>
    %526 = arith.addf %525, %524 : vector<8x128xf32>
    %527 = arith.divf %525, %526 : vector<8x128xf32>
    %528 = vector.extract_strided_slice %519 {offsets = [0, 128], sizes = [8, 128], strides = [1, 1]} : vector<8x384xf32> to vector<8x128xf32>
    %529 = vector.extract_strided_slice %515 {offsets = [0, 128], sizes = [8, 128], strides = [1, 1]} : vector<8x384xf32> to vector<8x128xf32>
    %530 = arith.addf %528, %529 : vector<8x128xf32>
    %531 = arith.negf %530 : vector<8x128xf32>
    %532 = math.exp %531 : vector<8x128xf32>
    %cst_132 = arith.constant 1.000000e+00 : f32
    %533 = vector.broadcast %cst_132 : f32 to vector<8x128xf32>
    %534 = arith.addf %533, %532 : vector<8x128xf32>
    %535 = arith.divf %533, %534 : vector<8x128xf32>
    %536 = vector.extract_strided_slice %519 {offsets = [0, 256], sizes = [8, 128], strides = [1, 1]} : vector<8x384xf32> to vector<8x128xf32>
    %537 = vector.extract_strided_slice %515 {offsets = [0, 256], sizes = [8, 128], strides = [1, 1]} : vector<8x384xf32> to vector<8x128xf32>
    %538 = vector.broadcast %1 : vector<1x128xf32> to vector<8x128xf32>
    %539 = arith.addf %537, %538 : vector<8x128xf32>
    %540 = arith.mulf %527, %539 : vector<8x128xf32>
    %541 = arith.addf %536, %540 : vector<8x128xf32>
    %542 = math.tanh %541 : vector<8x128xf32>
    %cst_133 = arith.constant 1.000000e+00 : f32
    %543 = vector.broadcast %cst_133 : f32 to vector<8x128xf32>
    %544 = arith.subf %543, %535 : vector<8x128xf32>
    %545 = arith.mulf %544, %542 : vector<8x128xf32>
    %546 = arith.mulf %535, %476 : vector<8x128xf32>
    %547 = arith.addf %545, %546 : vector<8x128xf32>
    %548 = tpu.concatenate %547, %505 in 1 : vector<8x128xf32>, vector<8x128xf32> -> vector<8x256xf32>
    %549 = arith.truncf %548 : vector<8x256xf32> to vector<8x256xbf16>
    %c0_134 = arith.constant 0 : index
    %c0_135 = arith.constant 0 : index
    %550 = vector.load %arg5[%c0_134, %c0_135] : memref<256x384xbf16, #tpu.memory_space<vmem>>, vector<256x384xbf16>
    %cst_136 = arith.constant dense<0.000000e+00> : vector<8x384xf32>
    %551 = tpu.matmul %549, %550, %cst_136 {dimension_numbers = #tpu.dot_dimension_numbers<[1], [0], [0], [1], [0, 0, 1, 1], [], []>} : vector<8x256xbf16>, vector<256x384xbf16>, vector<8x384xf32> -> vector<8x384xf32>
    %552 = vector.broadcast %2 : vector<1x384xf32> to vector<8x384xf32>
    %553 = arith.addf %551, %552 : vector<8x384xf32>
    %554 = vector.extract_strided_slice %553 {offsets = [0, 0], sizes = [8, 128], strides = [1, 1]} : vector<8x384xf32> to vector<8x128xf32>
    %555 = arith.negf %554 : vector<8x128xf32>
    %556 = math.exp %555 : vector<8x128xf32>
    %cst_137 = arith.constant 1.000000e+00 : f32
    %557 = vector.broadcast %cst_137 : f32 to vector<8x128xf32>
    %558 = arith.addf %557, %556 : vector<8x128xf32>
    %559 = arith.divf %557, %558 : vector<8x128xf32>
    %560 = vector.extract_strided_slice %553 {offsets = [0, 128], sizes = [8, 128], strides = [1, 1]} : vector<8x384xf32> to vector<8x128xf32>
    %561 = arith.negf %560 : vector<8x128xf32>
    %562 = math.exp %561 : vector<8x128xf32>
    %cst_138 = arith.constant 1.000000e+00 : f32
    %563 = vector.broadcast %cst_138 : f32 to vector<8x128xf32>
    %564 = arith.addf %563, %562 : vector<8x128xf32>
    %565 = arith.divf %563, %564 : vector<8x128xf32>
    %566 = vector.extract_strided_slice %553 {offsets = [0, 256], sizes = [8, 128], strides = [1, 1]} : vector<8x384xf32> to vector<8x128xf32>
    %567 = vector.broadcast %3 : vector<1x128xf32> to vector<8x128xf32>
    %568 = arith.addf %516, %567 : vector<8x128xf32>
    %569 = arith.mulf %559, %568 : vector<8x128xf32>
    %570 = arith.addf %566, %569 : vector<8x128xf32>
    %571 = math.tanh %570 : vector<8x128xf32>
    %cst_139 = arith.constant 1.000000e+00 : f32
    %572 = vector.broadcast %cst_139 : f32 to vector<8x128xf32>
    %573 = arith.subf %572, %565 : vector<8x128xf32>
    %574 = arith.mulf %573, %571 : vector<8x128xf32>
    %575 = arith.mulf %565, %505 : vector<8x128xf32>
    %576 = arith.addf %574, %575 : vector<8x128xf32>
    %577 = arith.truncf %576 : vector<8x128xf32> to vector<8x128xbf16>
    %578 = arith.index_cast %c7_i32 : i32 to index
    %c0_140 = arith.constant 0 : index
    %c0_141 = arith.constant 0 : index
    %579 = vector.load %arg10[%578, %c0_140, %c0_141] : memref<8x8x128xbf16, #tpu.memory_space<vmem>>, vector<1x8x128xbf16>
    %580 = vector.shape_cast %579 : vector<1x8x128xbf16> to vector<8x128xbf16>
    %581 = vector.shape_cast %577 : vector<8x128xbf16> to vector<1x8x128xbf16>
    tpu.vector_store %arg10[%578, %c0_140, %c0_141], %581 {strides = array<i32>} : memref<8x8x128xbf16, #tpu.memory_space<vmem>>, vector<1x8x128xbf16>,
    %c8_i32 = arith.constant 8 : i32
    %582 = tpu.iota {dimensions = array<i32: 0>} : vector<8x8x1xi32>
    %c0_142 = arith.constant 0 : index
    %c0_143 = arith.constant 0 : index
    %583 = vector.load %arg2[%c0_142, %c0_143] : memref<8x1xi32, #tpu.memory_space<vmem>>, vector<8x1xi32>
    %584 = vector.shape_cast %583 : vector<8x1xi32> to vector<1x8x1xi32>
    %585 = vector.broadcast %584 : vector<1x8x1xi32> to vector<8x8x1xi32>
    %586 = arith.cmpi sgt, %585, %582 : vector<8x8x1xi32>
    %c0_144 = arith.constant 0 : index
    %c0_145 = arith.constant 0 : index
    %c0_146 = arith.constant 0 : index
    %587 = vector.load %arg10[%c0_144, %c0_145, %c0_146] : memref<8x8x128xbf16, #tpu.memory_space<vmem>>, vector<8x8x128xbf16>
    %cst_147 = arith.constant 0.000000e+00 : bf16
    %588 = vector.broadcast %cst_147 : bf16 to vector<8x8x128xbf16>
    %589 = vector.shape_cast %586 : vector<8x8x1xi1> to vector<8x8x1xi1>
    %590 = vector.broadcast %589 : vector<8x8x1xi1> to vector<8x8x128xi1>
    %591 = arith.select %590, %587, %588 : vector<8x8x128xi1>, vector<8x8x128xbf16>
    %592 = vector.shape_cast %591 : vector<8x8x128xbf16> to vector<64x128xbf16>
    %c0_148 = arith.constant 0 : index
    %c0_149 = arith.constant 0 : index
    %593 = vector.load %arg6[%c0_148, %c0_149] : memref<128x128xbf16, #tpu.memory_space<vmem>>, vector<128x128xbf16>
    %cst_150 = arith.constant dense<0.000000e+00> : vector<64x128xf32>
    %594 = tpu.matmul %592, %593, %cst_150 {dimension_numbers = #tpu.dot_dimension_numbers<[1], [0], [0], [1], [0, 0, 1, 1], [], []>} : vector<64x128xbf16>, vector<128x128xbf16>, vector<64x128xf32> -> vector<64x128xf32>
    %595 = vector.broadcast %4 : vector<1x128xf32> to vector<64x128xf32>
    %596 = arith.addf %594, %595 : vector<64x128xf32>
    %597 = vector.shape_cast %596 : vector<64x128xf32> to vector<8x8x128xf32>
    %c0_151 = arith.constant 0 : index
    %c0_152 = arith.constant 0 : index
    %c0_153 = arith.constant 0 : index
    %598 = vector.load %arg8[%c0_151, %c0_152, %c0_153] : memref<8x8x128xf32, #tpu.memory_space<vmem>>, vector<8x8x128xf32>
    tpu.vector_store %arg8[%c0_151, %c0_152, %c0_153], %597 {strides = array<i32>} : memref<8x8x128xf32, #tpu.memory_space<vmem>>, vector<8x8x128xf32>,
    return
  }
  func.func @transform_0(%arg0: i32) -> (i32, i32, i32) {
    %c0_i32 = arith.constant 0 : i32
    %c0_i32_0 = arith.constant 0 : i32
    %c0_i32_1 = arith.constant 0 : i32
    return %c0_i32, %arg0, %c0_i32_0 : i32, i32, i32
  }
  func.func @transform_1(%arg0: i32) -> (i32, i32) {
    %c0_i32 = arith.constant 0 : i32
    %c0_i32_0 = arith.constant 0 : i32
    return %arg0, %c0_i32 : i32, i32
  }
  func.func @transform_2(%arg0: i32) -> (i32, i32) {
    %c0_i32 = arith.constant 0 : i32
    %c0_i32_0 = arith.constant 0 : i32
    %c0_i32_1 = arith.constant 0 : i32
    return %c0_i32, %c0_i32_0 : i32, i32
  }
  func.func @transform_3(%arg0: i32) -> (i32, i32) {
    %c0_i32 = arith.constant 0 : i32
    %c0_i32_0 = arith.constant 0 : i32
    %c0_i32_1 = arith.constant 0 : i32
    return %c0_i32, %c0_i32_0 : i32, i32
  }
  func.func @transform_4(%arg0: i32) -> (i32, i32) {
    %c0_i32 = arith.constant 0 : i32
    %c0_i32_0 = arith.constant 0 : i32
    %c0_i32_1 = arith.constant 0 : i32
    return %c0_i32, %c0_i32_0 : i32, i32
  }
  func.func @transform_5(%arg0: i32) -> (i32, i32) {
    %c0_i32 = arith.constant 0 : i32
    %c0_i32_0 = arith.constant 0 : i32
    %c0_i32_1 = arith.constant 0 : i32
    return %c0_i32, %c0_i32_0 : i32, i32
  }
  func.func @transform_6(%arg0: i32) -> (i32, i32) {
    %c0_i32 = arith.constant 0 : i32
    %c0_i32_0 = arith.constant 0 : i32
    %c0_i32_1 = arith.constant 0 : i32
    return %c0_i32, %c0_i32_0 : i32, i32
  }
  func.func @transform_7(%arg0: i32) -> (i32, i32, i32) {
    %c0_i32 = arith.constant 0 : i32
    %c0_i32_0 = arith.constant 0 : i32
    %c0_i32_1 = arith.constant 0 : i32
    return %c0_i32, %arg0, %c0_i32_0 : i32, i32, i32
  }
}

</mosaic_0001>

<llo_original>
// kernel: tpu_custom_call.1
$region0: #{tpu_custom_call.1}
  #allocation0 [shape = 'u32[]', space=smem, size = 0x4, offset = 0x4, fixed_abs, tag = 'smem constant byte address 0x4 - core index']
  #allocation1 [shape = 'u32[144,128]{1,0:T(1,128)}', space=vmem, size = 0x12000, scoped, tag = 'internal scratch']
  #allocation2 [shape = 'f32[8,8,384]{2,1,0:T(8,128)}', space=vmem, size = 0x18000, scoped, tag = 'scratch operand']
  #allocation3 [shape = 'bf16[8,8,128]{2,1,0:T(8,128)(2,1)}', space=vmem, size = 0x4000, scoped, tag = 'scratch operand']
  %s0 = inlined_call_operand.hbm [shape: bf16[8,8,20], index: 0, kind: input, shape index: {}]
  %s1 = inlined_call_operand.vmem [shape: s32[8,1], index: 1, kind: input, shape index: {}]
  %s2 = inlined_call_operand.hbm [shape: bf16[20,384], index: 2, kind: input, shape index: {}]
  %s3 = inlined_call_operand.hbm [shape: bf16[256,512], index: 3, kind: input, shape index: {}]
  %s4 = inlined_call_operand.hbm [shape: bf16[256,384], index: 4, kind: input, shape index: {}]
  %s5 = inlined_call_operand.hbm [shape: bf16[128,128], index: 5, kind: input, shape index: {}]
  %s6 = inlined_call_operand.vmem [shape: f32[1,1152], index: 6, kind: input, shape index: {}]
  %s7 = inlined_call_operand.hbm [shape: f32[8,8,128], index: 7, kind: output, shape index: {}]
  %s8 = sld [smem:[#allocation0]]
  $region58: #{tpu_custom_call.1} parent=0
    _
  %s10 = ssub.s32 1, %s8
  %s11 = scalar_select 0, %s10, %s8
  $region1: #{tpu_custom_call.1} parent=0
    #allocation4 [shape = 'u8[16384]{0}', space=vmem, size = 0x4000, scoped, tag = 'input window, operand 0, single buffered']
    #allocation5 [shape = 's32[1]{0}', space=sflag, size = 0x4, scoped, tag = 'scoped memory for tpu_custom_call.1']
    #allocation6 [shape = 's32[1]{0}', space=sflag, size = 0x4, scoped, tag = 'scoped memory for tpu_custom_call.1']
    #allocation7 [shape = 'u8[18432]{0}', space=vmem, size = 0x4800, scoped, tag = 'input window, operand 2, single buffered']
    #allocation8 [shape = 's32[1]{0}', space=sflag, size = 0x4, scoped, tag = 'scoped memory for tpu_custom_call.1']
    #allocation9 [shape = 'u8[262144]{0}', space=vmem, size = 0x40000, scoped, tag = 'input window, operand 3, single buffered']
    #allocation10 [shape = 'u8[196608]{0}', space=vmem, size = 0x30000, scoped, tag = 'input window, operand 4, single buffered']
    #allocation11 [shape = 's32[1]{0}', space=sflag, size = 0x4, scoped, tag = 'scoped memory for tpu_custom_call.1']
    #allocation12 [shape = 'u8[32768]{0}', space=vmem, size = 0x8000, scoped, tag = 'input window, operand 5, single buffered']
    #allocation13 [shape = 'u8[32768]{0}', space=vmem, size = 0x8000, scoped, tag = 'output window, operand 0, single buffered']
    %12 = vsyncpa [#allocation5], 0
    %13 = vsyncpa [#allocation8], 0
    %14 = vsyncpa [#allocation11], 0
    %15 = vsyncpa [#allocation6], 0
    // Predicated region
    $region2: #{tpu_custom_call.1} parent=1 // pred_check
      _
    $region3: #{tpu_custom_call.1} parent=1 // pred_check_branch
      %17 = sbr.rel (0) target = $region5
    $region4: #{tpu_custom_call.1} parent=1 // pred_region
      %s19 = ssub.s32 512, 512
      %20 = vsyncadd [#allocation5], %s19
      %s21 = sshll.u32 [#allocation4], 4
      %s22 = int_to_ptr.vmem [resolvable:$true] %s21
      %27 = dma.hbm_to_vmem [thread:$0]  %s0, 512, %s22, [#allocation5], 64, 64, 4
    $region5: #{tpu_custom_call.1} parent=1 // pred_fallthru
      _
    // Predicated region
    $region6: #{tpu_custom_call.1} parent=1 // pred_check
      _
    $region7: #{tpu_custom_call.1} parent=1 // pred_check_branch
      %29 = sbr.rel (0) target = $region9
    $region8: #{tpu_custom_call.1} parent=1 // pred_region
      _
    $region9: #{tpu_custom_call.1} parent=1 // pred_fallthru
      _
    // Predicated region
    $region10: #{tpu_custom_call.1} parent=1 // pred_check
      _
    $region11: #{tpu_custom_call.1} parent=1 // pred_check_branch
      %31 = sbr.rel (0) target = $region13
    $region12: #{tpu_custom_call.1} parent=1 // pred_region
      %s33 = ssub.s32 576, 576
      %34 = vsyncadd [#allocation8], %s33
      %s35 = sshll.u32 [#allocation7], 4
      %s36 = int_to_ptr.vmem [resolvable:$true] %s35
      %41 = dma.hbm_to_vmem [thread:$0]  %s2, 576, %s36, [#allocation8], 192, 192, 12
    $region13: #{tpu_custom_call.1} parent=1 // pred_fallthru
      _
    // Predicated region
    $region14: #{tpu_custom_call.1} parent=1 // pred_check
      _
    $region15: #{tpu_custom_call.1} parent=1 // pred_check_branch
      %43 = sbr.rel (0) target = $region17
    $region16: #{tpu_custom_call.1} parent=1 // pred_region
      %s45 = ssub.s32 8192, 8192
      %46 = vsyncadd [#allocation8], %s45
      %s47 = sshll.u32 [#allocation9], 4
      %s48 = int_to_ptr.vmem [resolvable:$true] %s47
      %53 = dma.hbm_to_vmem [thread:$0]  %s3, 8192, %s48, [#allocation8], 256, 256, 16
    $region17: #{tpu_custom_call.1} parent=1 // pred_fallthru
      _
    // Predicated region
    $region18: #{tpu_custom_call.1} parent=1 // pred_check
      _
    $region19: #{tpu_custom_call.1} parent=1 // pred_check_branch
      %55 = sbr.rel (0) target = $region21
    $region20: #{tpu_custom_call.1} parent=1 // pred_region
      %s57 = ssub.s32 6144, 6144
      %58 = vsyncadd [#allocation11], %s57
      %s59 = sshll.u32 [#allocation10], 4
      %s60 = int_to_ptr.vmem [resolvable:$true] %s59
      %65 = dma.hbm_to_vmem [thread:$0]  %s4, 6144, %s60, [#allocation11], 192, 192, 12
    $region21: #{tpu_custom_call.1} parent=1 // pred_fallthru
      _
    // Predicated region
    $region22: #{tpu_custom_call.1} parent=1 // pred_check
      _
    $region23: #{tpu_custom_call.1} parent=1 // pred_check_branch
      %67 = sbr.rel (0) target = $region25
    $region24: #{tpu_custom_call.1} parent=1 // pred_region
      %s69 = ssub.s32 1024, 1024
      %70 = vsyncadd [#allocation11], %s69
      %s71 = sshll.u32 [#allocation12], 4
      %s72 = int_to_ptr.vmem [resolvable:$true] %s71
      %77 = dma.hbm_to_vmem [thread:$0]  %s5, 1024, %s72, [#allocation11], 64, 64, 4
    $region25: #{tpu_custom_call.1} parent=1 // pred_fallthru
      _
    // Predicated region
    $region26: #{tpu_custom_call.1} parent=1 // pred_check
      _
    $region27: #{tpu_custom_call.1} parent=1 // pred_check_branch
      %79 = sbr.rel (0) target = $region29
    $region28: #{tpu_custom_call.1} parent=1 // pred_region
      _
    $region29: #{tpu_custom_call.1} parent=1 // pred_fallthru
      _
    // Predicated region
    $region30: #{tpu_custom_call.1} parent=1 // pred_check
      _
    $region31: #{tpu_custom_call.1} parent=1 // pred_check_branch
      %81 = sbr.rel (0) target = $region33
    $region32: #{tpu_custom_call.1} parent=1 // pred_region
      %82 = dma.done [#allocation5], 512
    $region33: #{tpu_custom_call.1} parent=1 // pred_fallthru
      _
    // Predicated region
    $region34: #{tpu_custom_call.1} parent=1 // pred_check
      _
    $region35: #{tpu_custom_call.1} parent=1 // pred_check_branch
      %84 = sbr.rel (0) target = $region37
    $region36: #{tpu_custom_call.1} parent=1 // pred_region
      %85 = dma.done [#allocation8], 576
    $region37: #{tpu_custom_call.1} parent=1 // pred_fallthru
      _
    // Predicated region
    $region38: #{tpu_custom_call.1} parent=1 // pred_check
      _
    $region39: #{tpu_custom_call.1} parent=1 // pred_check_branch
      %87 = sbr.rel (0) target = $region41
    $region40: #{tpu_custom_call.1} parent=1 // pred_region
      %88 = dma.done [#allocation8], 8192
    $region41: #{tpu_custom_call.1} parent=1 // pred_fallthru
      _
    // Predicated region
    $region42: #{tpu_custom_call.1} parent=1 // pred_check
      _
    $region43: #{tpu_custom_call.1} parent=1 // pred_check_branch
      %90 = sbr.rel (0) target = $region45
    $region44: #{tpu_custom_call.1} parent=1 // pred_region
      %91 = dma.done [#allocation11], 6144
    $region45: #{tpu_custom_call.1} parent=1 // pred_fallthru
      _
    // Predicated region
    $region46: #{tpu_custom_call.1} parent=1 // pred_check
      _
    $region47: #{tpu_custom_call.1} parent=1 // pred_check_branch
      %93 = sbr.rel (0) target = $region49
    $region48: #{tpu_custom_call.1} parent=1 // pred_region
      %94 = dma.done [#allocation11], 1024
    $region49: #{tpu_custom_call.1} parent=1 // pred_fallthru
      _
    %v96 = vld [vmem:[%s6] sm:$0x7]
    %v97 = vld [vmem:[%s6 + $0x3] sm:$0x1]
    %v98 = vld [vmem:[%s6 + $0x4] sm:$0x7]
    %v99 = vld [vmem:[%s6 + $0x7] sm:$0x1]
    %v100 = vld [vmem:[%s6 + $0x8] sm:$0x1]
    %v101 = vld [vmem:[#allocation4] sm:$0xf]
    %v102 = vld [vmem:[#allocation4 + $0x4] sm:$0xf]
    %v103 = vld [vmem:[#allocation4 + $0x8] sm:$0xf]
    %v104 = vld [vmem:[#allocation4 + $0xc] sm:$0xf]
    %v105 = vld [vmem:[#allocation4 + $0x10] sm:$0xf]
    %v106 = vld [vmem:[#allocation4 + $0x14] sm:$0xf]
    %v107 = vld [vmem:[#allocation4 + $0x18] sm:$0xf]
    %v108 = vld [vmem:[#allocation4 + $0x1c] sm:$0xf]
    %v109 = vld [vmem:[#allocation7] sm:$0xff]
    %v110 = vld [vmem:[#allocation7 + $0x8] sm:$0xf]
    %v111 = vld [vmem:[#allocation7 + $0xc] sm:$0xff]
    %v112 = vld [vmem:[#allocation7 + $0x14] sm:$0xf]
    %v113 = vld [vmem:[#allocation7 + $0x18] sm:$0x33]
    %v114 = vld [vmem:[#allocation7 + $0x20] sm:$0x3]
    %v116 = vlaneseq
    %v117 = vshrl.u32 %v116, 7
    %v118 = vsub.s32 0, %v117
    %v119 = vrot.slane %v96, %v118
    %v120 = vlaneseq
    %v121 = vshrl.u32 %v120, 7
    %v122 = vsub.s32 1, %v121
    %v123 = vrot.slane %v96, %v122
    %v124 = vlaneseq
    %v125 = vshrl.u32 %v124, 7
    %v126 = vsub.s32 2, %v125
    %v127 = vrot.slane %v96, %v126
    %v139 = vunpack.c.l.b16 %v101
    %v140 = vunpack.c.l.b16 %v102
    %v141 = vunpack.c.l.b16 %v103
    %v142 = vunpack.c.l.b16 %v104
    %v143 = vunpack.c.l.b16 %v105
    %v144 = vunpack.c.l.b16 %v106
    %v145 = vunpack.c.l.b16 %v107
    %v146 = vunpack.c.l.b16 %v108
    %v147 = vpack.c.b16 %v140, %v139
    %v148 = vpack.c.b16 %v142, %v141
    %v149 = vpack.c.b16 %v144, %v143
    %v150 = vpack.c.b16 %v146, %v145
    %v157 = vunpack.c.l.b16 %v109
    %v158 = vunpack.c.h.b16 %v109
    %v159 = vunpack.c.l.b16 %v110
    %v160 = vunpack.c.l.b16 %v111
    %v161 = vunpack.c.h.b16 %v111
    %v162 = vunpack.c.l.b16 %v112
    %v163 = vunpack.c.l.b16 %v113
    %v164 = vunpack.c.h.b16 %v113
    %v165 = vunpack.c.l.b16 %v114
    %v166 = vpack.c.b16 %v160, %v157
    %v167 = vpack.c.b16 %v161, %v158
    %v168 = vpack.c.b16 %v162, %v159
    %v169 = vpack.c.b16 %v163, %v163
    %v170 = vpack.c.b16 %v164, %v164
    %v171 = vpack.c.b16 %v165, %v165
    %vm175 = vcmask 162816
    %v177 = vsel %vm175, %v147, 0
    %v180 = vsel %vm175, %v148, 0
    %v183 = vsel %vm175, %v149, 0
    %v186 = vsel %vm175, %v150, 0
    %vm188 = vcmask 1041408
    %v190 = vsel %vm188, %v169, 0
    %v193 = vsel %vm188, %v170, 0
    %v196 = vsel %vm188, %v171, 0
    %198 = vmatprep.subr.bf16.mxu0 %v167
    %199 = vmatpush1.bf16.msra.mxu0 %v166
    %200 = vmatprep.subr.bf16.mxu0 %v193
    %201 = vmatpush1.bf16.msra.mxu0 %v190
    %202 = vmatprep.subr.bf16.mxu0 0
    %203 = vmatpush1.bf16.msra.mxu0 0
    %204 = vmatprep.subr.bf16.mxu0 0
    %205 = vmatpush1.bf16.msra.mxu0 0
    %206 = vmatprep.subr.bf16.mxu0 0
    %207 = vmatpush1.bf16.msra.mxu0 0
    %208 = vmatprep.subr.bf16.mxu0 0
    %209 = vmatpush1.bf16.msra.mxu0 0
    %210 = vmatprep.subr.bf16.mxu0 0
    %211 = vmatpush1.bf16.msra.mxu0 0
    %212 = vmatprep.subr.bf16.mxu0 0
    %213 = vmatpush1.bf16.msra.mxu0 0
    %214 = vmatprep.subr.bf16.mxu0 0
    %215 = vmatpush1.bf16.msra.mxu0 0
    %216 = vmatprep.subr.bf16.mxu0 0
    %217 = vmatpush1.bf16.msra.mxu0 0
    %218 = vmatprep.subr.bf16.mxu0 0
    %219 = vmatpush1.bf16.msra.mxu0 0
    %220 = vmatprep.subr.bf16.mxu0 0
    %221 = vmatpush1.bf16.msra.mxu0 0
    %222 = vmatprep.subr.bf16.mxu0 0
    %223 = vmatpush1.bf16.msra.mxu0 0
    %224 = vmatprep.subr.bf16.mxu0 0
    %225 = vmatpush1.bf16.msra.mxu0 0
    %226 = vmatprep.subr.bf16.mxu0 0
    %227 = vmatpush1.bf16.msra.mxu0 0
    %228 = vmatprep.subr.bf16.mxu0 0
    %229 = vmatpush1.bf16.msra.mxu0 0
    %230 = vmatprep.mubr.bf16.mxu0 0
    %231 = vmatmul.mubr.bf16.gmra.mrb[0].mxu0 %v177
    %v232 = vpop.f32.mrb[0].mxu0
    %v233 = vadd.f32 %v119, %v232
    %v234 = vpop.f32.mrb[0].mxu0
    %v235 = vadd.f32 %v123, %v234
    %v236 = vpop.f32.mrb[0].mxu0
    %v237 = vadd.f32 %v119, %v236
    %v238 = vpop.f32.mrb[0].mxu0
    %v239 = vadd.f32 %v123, %v238
    %240 = vmatprep.mubr.bf16.mxu0 0
    %241 = vmatmul.mubr.bf16.gmra.mrb[0].mxu0 %v180
    %v242 = vpop.f32.mrb[0].mxu0
    %v243 = vadd.f32 %v119, %v242
    %v244 = vpop.f32.mrb[0].mxu0
    %v245 = vadd.f32 %v123, %v244
    %v246 = vpop.f32.mrb[0].mxu0
    %v247 = vadd.f32 %v119, %v246
    %v248 = vpop.f32.mrb[0].mxu0
    %v249 = vadd.f32 %v123, %v248
    %250 = vmatprep.mubr.bf16.mxu0 0
    %251 = vmatmul.mubr.bf16.gmra.mrb[0].mxu0 %v183
    %v252 = vpop.f32.mrb[0].mxu0
    %v253 = vadd.f32 %v119, %v252
    %v254 = vpop.f32.mrb[0].mxu0
    %v255 = vadd.f32 %v123, %v254
    %v256 = vpop.f32.mrb[0].mxu0
    %v257 = vadd.f32 %v119, %v256
    %v258 = vpop.f32.mrb[0].mxu0
    %v259 = vadd.f32 %v123, %v258
    %260 = vmatprep.mubr.bf16.mxu0 0
    %261 = vmatmul.mubr.bf16.gmra.mrb[0].mxu0 %v186
    %v262 = vpop.f32.mrb[0].mxu0
    %v263 = vadd.f32 %v119, %v262
    %v264 = vpop.f32.mrb[0].mxu0
    %v265 = vadd.f32 %v123, %v264
    %v266 = vpop.f32.mrb[0].mxu0
    %v267 = vadd.f32 %v119, %v266
    %v268 = vpop.f32.mrb[0].mxu0
    %v269 = vadd.f32 %v123, %v268
    %270 = vdwg.mxu0
    %271 = vmatprep.subr.bf16.mxu0 0
    %272 = vmatpush1.bf16.msra.mxu0 %v168
    %273 = vmatprep.subr.bf16.mxu0 0
    %274 = vmatpush1.bf16.msra.mxu0 %v196
    %275 = vmatprep.subr.bf16.mxu0 0
    %276 = vmatpush1.bf16.msra.mxu0 0
    %277 = vmatprep.subr.bf16.mxu0 0
    %278 = vmatpush1.bf16.msra.mxu0 0
    %279 = vmatprep.subr.bf16.mxu0 0
    %280 = vmatpush1.bf16.msra.mxu0 0
    %281 = vmatprep.subr.bf16.mxu0 0
    %282 = vmatpush1.bf16.msra.mxu0 0
    %283 = vmatprep.subr.bf16.mxu0 0
    %284 = vmatpush1.bf16.msra.mxu0 0
    %285 = vmatprep.subr.bf16.mxu0 0
    %286 = vmatpush1.bf16.msra.mxu0 0
    %287 = vmatprep.subr.bf16.mxu0 0
    %288 = vmatpush1.bf16.msra.mxu0 0
    %289 = vmatprep.subr.bf16.mxu0 0
    %290 = vmatpush1.bf16.msra.mxu0 0
    %291 = vmatprep.subr.bf16.mxu0 0
    %292 = vmatpush1.bf16.msra.mxu0 0
    %293 = vmatprep.subr.bf16.mxu0 0
    %294 = vmatpush1.bf16.msra.mxu0 0
    %295 = vmatprep.subr.bf16.mxu0 0
    %296 = vmatpush1.bf16.msra.mxu0 0
    %297 = vmatprep.subr.bf16.mxu0 0
    %298 = vmatpush1.bf16.msra.mxu0 0
    %299 = vmatprep.subr.bf16.mxu0 0
    %300 = vmatpush1.bf16.msra.mxu0 0
    %301 = vmatprep.subr.bf16.mxu0 0
    %302 = vmatpush1.bf16.msra.mxu0 0
    %303 = vmatprep.mubr.bf16.mxu0 0
    %304 = vmatmul.mubr.bf16.gmra.mrb[0].mxu0 %v177
    %v305 = vpop.f32.mrb[0].mxu0
    %v306 = vadd.f32 %v127, %v305
    %v307 = vpop.f32.mrb[0].mxu0
    %v308 = vpop.f32.mrb[0].mxu0
    %v309 = vadd.f32 %v127, %v308
    %v310 = vpop.f32.mrb[0].mxu0
    %311 = vmatprep.mubr.bf16.mxu0 0
    %312 = vmatmul.mubr.bf16.gmra.mrb[0].mxu0 %v180
    %v313 = vpop.f32.mrb[0].mxu0
    %v314 = vadd.f32 %v127, %v313
    %v315 = vpop.f32.mrb[0].mxu0
    %v316 = vpop.f32.mrb[0].mxu0
    %v317 = vadd.f32 %v127, %v316
    %v318 = vpop.f32.mrb[0].mxu0
    %319 = vmatprep.mubr.bf16.mxu0 0
    %320 = vmatmul.mubr.bf16.gmra.mrb[0].mxu0 %v183
    %v321 = vpop.f32.mrb[0].mxu0
    %v322 = vadd.f32 %v127, %v321
    %v323 = vpop.f32.mrb[0].mxu0
    %v324 = vpop.f32.mrb[0].mxu0
    %v325 = vadd.f32 %v127, %v324
    %v326 = vpop.f32.mrb[0].mxu0
    %327 = vmatprep.mubr.bf16.mxu0 0
    %328 = vmatmul.mubr.bf16.gmra.mrb[0].mxu0 %v186
    %v329 = vpop.f32.mrb[0].mxu0
    %v330 = vadd.f32 %v127, %v329
    %v331 = vpop.f32.mrb[0].mxu0
    %v332 = vpop.f32.mrb[0].mxu0
    %v333 = vadd.f32 %v127, %v332
    %v334 = vpop.f32.mrb[0].mxu0
    %335 = vdwg.mxu0
    %336 = vst [vmem:[#allocation2] sm:$0xff] %v233
    %337 = vst [vmem:[#allocation2 + $0x8] sm:$0xff] %v235
    %338 = vst [vmem:[#allocation2 + $0x10] sm:$0xff] %v306
    %339 = vst [vmem:[#allocation2 + $0x18] sm:$0xff] %v237
    %340 = vst [vmem:[#allocation2 + $0x20] sm:$0xff] %v239
    %341 = vst [vmem:[#allocation2 + $0x28] sm:$0xff] %v309
    %342 = vst [vmem:[#allocation2 + $0x30] sm:$0xff] %v243
    %343 = vst [vmem:[#allocation2 + $0x38] sm:$0xff] %v245
    %344 = vst [vmem:[#allocation2 + $0x40] sm:$0xff] %v314
    %345 = vst [vmem:[#allocation2 + $0x48] sm:$0xff] %v247
    %346 = vst [vmem:[#allocation2 + $0x50] sm:$0xff] %v249
    %347 = vst [vmem:[#allocation2 + $0x58] sm:$0xff] %v317
    %348 = vst [vmem:[#allocation2 + $0x60] sm:$0xff] %v253
    %349 = vst [vmem:[#allocation2 + $0x68] sm:$0xff] %v255
    %350 = vst [vmem:[#allocation2 + $0x70] sm:$0xff] %v322
    %351 = vst [vmem:[#allocation2 + $0x78] sm:$0xff] %v257
    %352 = vst [vmem:[#allocation2 + $0x80] sm:$0xff] %v259
    %353 = vst [vmem:[#allocation2 + $0x88] sm:$0xff] %v325
    %354 = vst [vmem:[#allocation2 + $0x90] sm:$0xff] %v263
    %355 = vst [vmem:[#allocation2 + $0x98] sm:$0xff] %v265
    %356 = vst [vmem:[#allocation2 + $0xa0] sm:$0xff] %v330
    %357 = vst [vmem:[#allocation2 + $0xa8] sm:$0xff] %v267
    %358 = vst [vmem:[#allocation2 + $0xb0] sm:$0xff] %v269
    %359 = vst [vmem:[#allocation2 + $0xb8] sm:$0xff] %v333
    %v360 = vpack.c.bf16 0.0, 0.0
    %v361 = vld [vmem:[#allocation9] sm:$0xff]
    %v362 = vld [vmem:[#allocation9 + $0x8] sm:$0xff]
    %v363 = vld [vmem:[#allocation9 + $0x10] sm:$0xff]
    %v364 = vld [vmem:[#allocation9 + $0x18] sm:$0xff]
    %v365 = vld [vmem:[#allocation9 + $0x20] sm:$0xff]
    %v366 = vld [vmem:[#allocation9 + $0x28] sm:$0xff]
    %v367 = vld [vmem:[#allocation9 + $0x30] sm:$0xff]
    %v368 = vld [vmem:[#allocation9 + $0x38] sm:$0xff]
    %v369 = vld [vmem:[#allocation9 + $0x40] sm:$0xff]
    %v370 = vld [vmem:[#allocation9 + $0x48] sm:$0xff]
    %v371 = vld [vmem:[#allocation9 + $0x50] sm:$0xff]
    %v372 = vld [vmem:[#allocation9 + $0x58] sm:$0xff]
    %v373 = vld [vmem:[#allocation9 + $0x60] sm:$0xff]
    %v374 = vld [vmem:[#allocation9 + $0x68] sm:$0xff]
    %v375 = vld [vmem:[#allocation9 + $0x70] sm:$0xff]
    %v376 = vld [vmem:[#allocation9 + $0x78] sm:$0xff]
    %v377 = vld [vmem:[#allocation9 + $0x80] sm:$0xff]
    %v378 = vld [vmem:[#allocation9 + $0x88] sm:$0xff]
    %v379 = vld [vmem:[#allocation9 + $0x90] sm:$0xff]
    %v380 = vld [vmem:[#allocation9 + $0x98] sm:$0xff]
    %v381 = vld [vmem:[#allocation9 + $0xa0] sm:$0xff]
    %v382 = vld [vmem:[#allocation9 + $0xa8] sm:$0xff]
    %v383 = vld [vmem:[#allocation9 + $0xb0] sm:$0xff]
    %v384 = vld [vmem:[#allocation9 + $0xb8] sm:$0xff]
    %v385 = vld [vmem:[#allocation9 + $0xc0] sm:$0xff]
    %v386 = vld [vmem:[#allocation9 + $0xc8] sm:$0xff]
    %v387 = vld [vmem:[#allocation9 + $0xd0] sm:$0xff]
    %v388 = vld [vmem:[#allocation9 + $0xd8] sm:$0xff]
    %v389 = vld [vmem:[#allocation9 + $0xe0] sm:$0xff]
    %v390 = vld [vmem:[#allocation9 + $0xe8] sm:$0xff]
    %v391 = vld [vmem:[#allocation9 + $0xf0] sm:$0xff]
    %v392 = vld [vmem:[#allocation9 + $0xf8] sm:$0xff]
    %v393 = vld [vmem:[#allocation9 + $0x100] sm:$0xff]
    %v394 = vld [vmem:[#allocation9 + $0x108] sm:$0xff]
    %v395 = vld [vmem:[#allocation9 + $0x110] sm:$0xff]
    %v396 = vld [vmem:[#allocation9 + $0x118] sm:$0xff]
    %v397 = vld [vmem:[#allocation9 + $0x120] sm:$0xff]
    %v398 = vld [vmem:[#allocation9 + $0x128] sm:$0xff]
    %v399 = vld [vmem:[#allocation9 + $0x130] sm:$0xff]
    %v400 = vld [vmem:[#allocation9 + $0x138] sm:$0xff]
    %v401 = vld [vmem:[#allocation9 + $0x140] sm:$0xff]
    %v402 = vld [vmem:[#allocation9 + $0x148] sm:$0xff]
    %v403 = vld [vmem:[#allocation9 + $0x150] sm:$0xff]
    %v404 = vld [vmem:[#allocation9 + $0x158] sm:$0xff]
    %v405 = vld [vmem:[#allocation9 + $0x160] sm:$0xff]
    %v406 = vld [vmem:[#allocation9 + $0x168] sm:$0xff]
    %v407 = vld [vmem:[#allocation9 + $0x170] sm:$0xff]
    %v408 = vld [vmem:[#allocation9 + $0x178] sm:$0xff]
    %v409 = vld [vmem:[#allocation9 + $0x180] sm:$0xff]
    %v410 = vld [vmem:[#allocation9 + $0x188] sm:$0xff]
    %v411 = vld [vmem:[#allocation9 + $0x190] sm:$0xff]
    %v412 = vld [vmem:[#allocation9 + $0x198] sm:$0xff]
    %v413 = vld [vmem:[#allocation9 + $0x1a0] sm:$0xff]
    %v414 = vld [vmem:[#allocation9 + $0x1a8] sm:$0xff]
    %v415 = vld [vmem:[#allocation9 + $0x1b0] sm:$0xff]
    %v416 = vld [vmem:[#allocation9 + $0x1b8] sm:$0xff]
    %v417 = vld [vmem:[#allocation9 + $0x1c0] sm:$0xff]
    %v418 = vld [vmem:[#allocation9 + $0x1c8] sm:$0xff]
    %v419 = vld [vmem:[#allocation9 + $0x1d0] sm:$0xff]
    %v420 = vld [vmem:[#allocation9 + $0x1d8] sm:$0xff]
    %v421 = vld [vmem:[#allocation9 + $0x1e0] sm:$0xff]
    %v422 = vld [vmem:[#allocation9 + $0x1e8] sm:$0xff]
    %v423 = vld [vmem:[#allocation9 + $0x1f0] sm:$0xff]
    %v424 = vld [vmem:[#allocation9 + $0x1f8] sm:$0xff]
    %v489 = vunpack.c.l.b16 %v361
    %v490 = vunpack.c.h.b16 %v361
    %v491 = vunpack.c.l.b16 %v362
    %v492 = vunpack.c.h.b16 %v362
    %v493 = vunpack.c.l.b16 %v363
    %v494 = vunpack.c.h.b16 %v363
    %v495 = vunpack.c.l.b16 %v364
    %v496 = vunpack.c.h.b16 %v364
    %v497 = vunpack.c.l.b16 %v365
    %v498 = vunpack.c.h.b16 %v365
    %v499 = vunpack.c.l.b16 %v366
    %v500 = vunpack.c.h.b16 %v366
    %v501 = vunpack.c.l.b16 %v367
    %v502 = vunpack.c.h.b16 %v367
    %v503 = vunpack.c.l.b16 %v368
    %v504 = vunpack.c.h.b16 %v368
    %v505 = vunpack.c.l.b16 %v369
    %v506 = vunpack.c.h.b16 %v369
    %v507 = vunpack.c.l.b16 %v370
    %v508 = vunpack.c.h.b16 %v370
    %v509 = vunpack.c.l.b16 %v371
    %v510 = vunpack.c.h.b16 %v371
    %v511 = vunpack.c.l.b16 %v372
    %v512 = vunpack.c.h.b16 %v372
    %v513 = vunpack.c.l.b16 %v373
    %v514 = vunpack.c.h.b16 %v373
    %v515 = vunpack.c.l.b16 %v374
    %v516 = vunpack.c.h.b16 %v374
    %v517 = vunpack.c.l.b16 %v375
    %v518 = vunpack.c.h.b16 %v375
    %v519 = vunpack.c.l.b16 %v376
    %v520 = vunpack.c.h.b16 %v376
    %v521 = vunpack.c.l.b16 %v377
    %v522 = vunpack.c.h.b16 %v377
    %v523 = vunpack.c.l.b16 %v378
    %v524 = vunpack.c.h.b16 %v378
    %v525 = vunpack.c.l.b16 %v379
    %v526 = vunpack.c.h.b16 %v379
    %v527 = vunpack.c.l.b16 %v380
    %v528 = vunpack.c.h.b16 %v380
    %v529 = vunpack.c.l.b16 %v381
    %v530 = vunpack.c.h.b16 %v381
    %v531 = vunpack.c.l.b16 %v382
    %v532 = vunpack.c.h.b16 %v382
    %v533 = vunpack.c.l.b16 %v383
    %v534 = vunpack.c.h.b16 %v383
    %v535 = vunpack.c.l.b16 %v384
    %v536 = vunpack.c.h.b16 %v384
    %v537 = vunpack.c.l.b16 %v385
    %v538 = vunpack.c.h.b16 %v385
    %v539 = vunpack.c.l.b16 %v386
    %v540 = vunpack.c.h.b16 %v386
    %v541 = vunpack.c.l.b16 %v387
    %v542 = vunpack.c.h.b16 %v387
    %v543 = vunpack.c.l.b16 %v388
    %v544 = vunpack.c.h.b16 %v388
    %v545 = vunpack.c.l.b16 %v389
    %v546 = vunpack.c.h.b16 %v389
    %v547 = vunpack.c.l.b16 %v390
    %v548 = vunpack.c.h.b16 %v390
    %v549 = vunpack.c.l.b16 %v391
    %v550 = vunpack.c.h.b16 %v391
    %v551 = vunpack.c.l.b16 %v392
    %v552 = vunpack.c.h.b16 %v392
    %v553 = vunpack.c.l.b16 %v393
    %v554 = vunpack.c.h.b16 %v393
    %v555 = vunpack.c.l.b16 %v394
    %v556 = vunpack.c.h.b16 %v394
    %v557 = vunpack.c.l.b16 %v395
    %v558 = vunpack.c.h.b16 %v395
    %v559 = vunpack.c.l.b16 %v396
    %v560 = vunpack.c.h.b16 %v396
    %v561 = vunpack.c.l.b16 %v397
    %v562 = vunpack.c.h.b16 %v397
    %v563 = vunpack.c.l.b16 %v398
    %v564 = vunpack.c.h.b16 %v398
    %v565 = vunpack.c.l.b16 %v399
    %v566 = vunpack.c.h.b16 %v399
    %v567 = vunpack.c.l.b16 %v400
    %v568 = vunpack.c.h.b16 %v400
    %v569 = vunpack.c.l.b16 %v401
    %v570 = vunpack.c.h.b16 %v401
    %v571 = vunpack.c.l.b16 %v402
    %v572 = vunpack.c.h.b16 %v402
    %v573 = vunpack.c.l.b16 %v403
    %v574 = vunpack.c.h.b16 %v403
    %v575 = vunpack.c.l.b16 %v404
    %v576 = vunpack.c.h.b16 %v404
    %v577 = vunpack.c.l.b16 %v405
    %v578 = vunpack.c.h.b16 %v405
    %v579 = vunpack.c.l.b16 %v406
    %v580 = vunpack.c.h.b16 %v406
    %v581 = vunpack.c.l.b16 %v407
    %v582 = vunpack.c.h.b16 %v407
    %v583 = vunpack.c.l.b16 %v408
    %v584 = vunpack.c.h.b16 %v408
    %v585 = vunpack.c.l.b16 %v409
    %v586 = vunpack.c.h.b16 %v409
    %v587 = vunpack.c.l.b16 %v410
    %v588 = vunpack.c.h.b16 %v410
    %v589 = vunpack.c.l.b16 %v411
    %v590 = vunpack.c.h.b16 %v411
    %v591 = vunpack.c.l.b16 %v412
    %v592 = vunpack.c.h.b16 %v412
    %v593 = vunpack.c.l.b16 %v413
    %v594 = vunpack.c.h.b16 %v413
    %v595 = vunpack.c.l.b16 %v414
    %v596 = vunpack.c.h.b16 %v414
    %v597 = vunpack.c.l.b16 %v415
    %v598 = vunpack.c.h.b16 %v415
    %v599 = vunpack.c.l.b16 %v416
    %v600 = vunpack.c.h.b16 %v416
    %v601 = vunpack.c.l.b16 %v417
    %v602 = vunpack.c.h.b16 %v417
    %v603 = vunpack.c.l.b16 %v418
    %v604 = vunpack.c.h.b16 %v418
    %v605 = vunpack.c.l.b16 %v419
    %v606 = vunpack.c.h.b16 %v419
    %v607 = vunpack.c.l.b16 %v420
    %v608 = vunpack.c.h.b16 %v420
    %v609 = vunpack.c.l.b16 %v421
    %v610 = vunpack.c.h.b16 %v421
    %v611 = vunpack.c.l.b16 %v422
    %v612 = vunpack.c.h.b16 %v422
    %v613 = vunpack.c.l.b16 %v423
    %v614 = vunpack.c.h.b16 %v423
    %v615 = vunpack.c.l.b16 %v424
    %v616 = vunpack.c.h.b16 %v424
    %v617 = vpack.c.b16 %v493, %v489
    %v618 = vpack.c.b16 %v494, %v490
    %v619 = vpack.c.b16 %v495, %v491
    %v620 = vpack.c.b16 %v496, %v492
    %v621 = vpack.c.b16 %v501, %v497
    %v622 = vpack.c.b16 %v502, %v498
    %v623 = vpack.c.b16 %v503, %v499
    %v624 = vpack.c.b16 %v504, %v500
    %v625 = vpack.c.b16 %v509, %v505
    %v626 = vpack.c.b16 %v510, %v506
    %v627 = vpack.c.b16 %v511, %v507
    %v628 = vpack.c.b16 %v512, %v508
    %v629 = vpack.c.b16 %v517, %v513
    %v630 = vpack.c.b16 %v518, %v514
    %v631 = vpack.c.b16 %v519, %v515
    %v632 = vpack.c.b16 %v520, %v516
    %v633 = vpack.c.b16 %v525, %v521
    %v634 = vpack.c.b16 %v526, %v522
    %v635 = vpack.c.b16 %v527, %v523
    %v636 = vpack.c.b16 %v528, %v524
    %v637 = vpack.c.b16 %v533, %v529
    %v638 = vpack.c.b16 %v534, %v530
    %v639 = vpack.c.b16 %v535, %v531
    %v640 = vpack.c.b16 %v536, %v532
    %v641 = vpack.c.b16 %v541, %v537
    %v642 = vpack.c.b16 %v542, %v538
    %v643 = vpack.c.b16 %v543, %v539
    %v644 = vpack.c.b16 %v544, %v540
    %v645 = vpack.c.b16 %v549, %v545
    %v646 = vpack.c.b16 %v550, %v546
    %v647 = vpack.c.b16 %v551, %v547
    %v648 = vpack.c.b16 %v552, %v548
    %v649 = vpack.c.b16 %v557, %v553
    %v650 = vpack.c.b16 %v558, %v554
    %v651 = vpack.c.b16 %v559, %v555
    %v652 = vpack.c.b16 %v560, %v556
    %v653 = vpack.c.b16 %v565, %v561
    %v654 = vpack.c.b16 %v566, %v562
    %v655 = vpack.c.b16 %v567, %v563
    %v656 = vpack.c.b16 %v568, %v564
    %v657 = vpack.c.b16 %v573, %v569
    %v658 = vpack.c.b16 %v574, %v570
    %v659 = vpack.c.b16 %v575, %v571
    %v660 = vpack.c.b16 %v576, %v572
    %v661 = vpack.c.b16 %v581, %v577
    %v662 = vpack.c.b16 %v582, %v578
    %v663 = vpack.c.b16 %v583, %v579
    %v664 = vpack.c.b16 %v584, %v580
    %v665 = vpack.c.b16 %v589, %v585
    %v666 = vpack.c.b16 %v590, %v586
    %v667 = vpack.c.b16 %v591, %v587
    %v668 = vpack.c.b16 %v592, %v588
    %v669 = vpack.c.b16 %v597, %v593
    %v670 = vpack.c.b16 %v598, %v594
    %v671 = vpack.c.b16 %v599, %v595
    %v672 = vpack.c.b16 %v600, %v596
    %v673 = vpack.c.b16 %v605, %v601
    %v674 = vpack.c.b16 %v606, %v602
    %v675 = vpack.c.b16 %v607, %v603
    %v676 = vpack.c.b16 %v608, %v604
    %v677 = vpack.c.b16 %v613, %v609
    %v678 = vpack.c.b16 %v614, %v610
    %v679 = vpack.c.b16 %v615, %v611
    %v680 = vpack.c.b16 %v616, %v612
    %745 = vmatprep.subr.bf16.mxu0 %v618
    %746 = vmatpush1.bf16.msra.mxu0 %v617
    %747 = vmatprep.subr.bf16.mxu0 %v622
    %748 = vmatpush1.bf16.msra.mxu0 %v621
    %749 = vmatprep.subr.bf16.mxu0 %v626
    %750 = vmatpush1.bf16.msra.mxu0 %v625
    %751 = vmatprep.subr.bf16.mxu0 %v630
    %752 = vmatpush1.bf16.msra.mxu0 %v629
    %753 = vmatprep.subr.bf16.mxu0 %v634
    %754 = vmatpush1.bf16.msra.mxu0 %v633
    %755 = vmatprep.subr.bf16.mxu0 %v638
    %756 = vmatpush1.bf16.msra.mxu0 %v637
    %757 = vmatprep.subr.bf16.mxu0 %v642
    %758 = vmatpush1.bf16.msra.mxu0 %v641
    %759 = vmatprep.subr.bf16.mxu0 %v646
    %760 = vmatpush1.bf16.msra.mxu0 %v645
    %761 = vmatprep.subr.bf16.mxu0 %v650
    %762 = vmatpush1.bf16.msra.mxu0 %v649
    %763 = vmatprep.subr.bf16.mxu0 %v654
    %764 = vmatpush1.bf16.msra.mxu0 %v653
    %765 = vmatprep.subr.bf16.mxu0 %v658
    %766 = vmatpush1.bf16.msra.mxu0 %v657
    %767 = vmatprep.subr.bf16.mxu0 %v662
    %768 = vmatpush1.bf16.msra.mxu0 %v661
    %769 = vmatprep.subr.bf16.mxu0 %v666
    %770 = vmatpush1.bf16.msra.mxu0 %v665
    %771 = vmatprep.subr.bf16.mxu0 %v670
    %772 = vmatpush1.bf16.msra.mxu0 %v669
    %773 = vmatprep.subr.bf16.mxu0 %v674
    %774 = vmatpush1.bf16.msra.mxu0 %v673
    %775 = vmatprep.subr.bf16.mxu0 %v678
    %776 = vmatpush1.bf16.msra.mxu0 %v677
    %777 = vmatprep.mubr.bf16.mxu0 %v360
    %778 = vmatmul.mubr.bf16.gmra.mrb[0].mxu0 %v360
    %v779 = vpop.f32.mrb[0].mxu0
    %v780 = vadd.f32 0.0, %v779
    %v781 = vpop.f32.mrb[0].mxu0
    %v782 = vadd.f32 0.0, %v781
    %v783 = vpop.f32.mrb[0].mxu0
    %v784 = vpop.f32.mrb[0].mxu0
    %785 = vdwg.mxu0
    %786 = vmatprep.subr.bf16.mxu0 %v620
    %787 = vmatpush1.bf16.msra.mxu0 %v619
    %788 = vmatprep.subr.bf16.mxu0 %v624
    %789 = vmatpush1.bf16.msra.mxu0 %v623
    %790 = vmatprep.subr.bf16.mxu0 %v628
    %791 = vmatpush1.bf16.msra.mxu0 %v627
    %792 = vmatprep.subr.bf16.mxu0 %v632
    %793 = vmatpush1.bf16.msra.mxu0 %v631
    %794 = vmatprep.subr.bf16.mxu0 %v636
    %795 = vmatpush1.bf16.msra.mxu0 %v635
    %796 = vmatprep.subr.bf16.mxu0 %v640
    %797 = vmatpush1.bf16.msra.mxu0 %v639
    %798 = vmatprep.subr.bf16.mxu0 %v644
    %799 = vmatpush1.bf16.msra.mxu0 %v643
    %800 = vmatprep.subr.bf16.mxu0 %v648
    %801 = vmatpush1.bf16.msra.mxu0 %v647
    %802 = vmatprep.subr.bf16.mxu0 %v652
    %803 = vmatpush1.bf16.msra.mxu0 %v651
    %804 = vmatprep.subr.bf16.mxu0 %v656
    %805 = vmatpush1.bf16.msra.mxu0 %v655
    %806 = vmatprep.subr.bf16.mxu0 %v660
    %807 = vmatpush1.bf16.msra.mxu0 %v659
    %808 = vmatprep.subr.bf16.mxu0 %v664
    %809 = vmatpush1.bf16.msra.mxu0 %v663
    %810 = vmatprep.subr.bf16.mxu0 %v668
    %811 = vmatpush1.bf16.msra.mxu0 %v667
    %812 = vmatprep.subr.bf16.mxu0 %v672
    %813 = vmatpush1.bf16.msra.mxu0 %v671
    %814 = vmatprep.subr.bf16.mxu0 %v676
    %815 = vmatpush1.bf16.msra.mxu0 %v675
    %816 = vmatprep.subr.bf16.mxu0 %v680
    %817 = vmatpush1.bf16.msra.mxu0 %v679
    %818 = vmatprep.mubr.bf16.mxu0 %v360
    %819 = vmatmul.mubr.bf16.gmra.mrb[0].mxu0 %v360
    %v820 = vpop.f32.mrb[0].mxu0
    %v821 = vadd.f32 0.0, %v820
    %v822 = vpop.f32.mrb[0].mxu0
    %v823 = vadd.f32 0.0, %v822
    %v824 = vpop.f32.mrb[0].mxu0
    %v825 = vpop.f32.mrb[0].mxu0
    %826 = vdwg.mxu0
    %v827 = vld [vmem:[#allocation2] sm:$0xff]
    %v828 = vld [vmem:[#allocation2 + $0x8] sm:$0xff]
    %v829 = vld [vmem:[#allocation2 + $0x10] sm:$0xff]
    %v830 = vadd.f32 %v827, %v780
    %v831 = vxor.u32 %v830, 2147483648
    %v832 = vmul.f32 %v831, 1.442695
    %v833 = vpow.pop %v832
    %v834 = vadd.f32 %v833, 1.0
    %v835 = vrcp.pop %v834
    %v836 = vmul.f32 1.0, %v835
    %v837 = vadd.f32 %v828, %v782
    %v838 = vxor.u32 %v837, 2147483648
    %v839 = vmul.f32 %v838, 1.442695
    %v840 = vpow.pop %v839
    %v841 = vadd.f32 %v840, 1.0
    %v842 = vrcp.pop %v841
    %v843 = vmul.f32 1.0, %v842
    %v845 = vlaneseq
    %v846 = vshrl.u32 %v845, 7
    %v847 = vsub.s32 0, %v846
    %v848 = vrot.slane %v97, %v847
    %v850 = vadd.f32 %v821, %v848
    %v851 = vmul.f32 %v836, %v850
    %v852 = vadd.f32 %v829, %v851
    %v853 = vtanh.pop %v852
    %v854 = vsub.f32 1.0, %v843
    %v855 = vmul.f32 %v854, %v853
    %v856 = vmul.f32 %v843, 0.0
    %v857 = vadd.f32 %v855, %v856
    %v858 = vpack.c.bf16 %v857, %v857
    %v859 = vld [vmem:[#allocation10] sm:$0xff]
    %v860 = vld [vmem:[#allocation10 + $0x8] sm:$0xf]
    %v861 = vld [vmem:[#allocation10 + $0xc] sm:$0xff]
    %v862 = vld [vmem:[#allocation10 + $0x14] sm:$0xf]
    %v863 = vld [vmem:[#allocation10 + $0x18] sm:$0xff]
    %v864 = vld [vmem:[#allocation10 + $0x20] sm:$0xf]
    %v865 = vld [vmem:[#allocation10 + $0x24] sm:$0xff]
    %v866 = vld [vmem:[#allocation10 + $0x2c] sm:$0xf]
    %v867 = vld [vmem:[#allocation10 + $0x30] sm:$0xff]
    %v868 = vld [vmem:[#allocation10 + $0x38] sm:$0xf]
    %v869 = vld [vmem:[#allocation10 + $0x3c] sm:$0xff]
    %v870 = vld [vmem:[#allocation10 + $0x44] sm:$0xf]
    %v871 = vld [vmem:[#allocation10 + $0x48] sm:$0xff]
    %v872 = vld [vmem:[#allocation10 + $0x50] sm:$0xf]
    %v873 = vld [vmem:[#allocation10 + $0x54] sm:$0xff]
    %v874 = vld [vmem:[#allocation10 + $0x5c] sm:$0xf]
    %v875 = vld [vmem:[#allocation10 + $0x60] sm:$0xff]
    %v876 = vld [vmem:[#allocation10 + $0x68] sm:$0xf]
    %v877 = vld [vmem:[#allocation10 + $0x6c] sm:$0xff]
    %v878 = vld [vmem:[#allocation10 + $0x74] sm:$0xf]
    %v879 = vld [vmem:[#allocation10 + $0x78] sm:$0xff]
    %v880 = vld [vmem:[#allocation10 + $0x80] sm:$0xf]
    %v881 = vld [vmem:[#allocation10 + $0x84] sm:$0xff]
    %v882 = vld [vmem:[#allocation10 + $0x8c] sm:$0xf]
    %v883 = vld [vmem:[#allocation10 + $0x90] sm:$0xff]
    %v884 = vld [vmem:[#allocation10 + $0x98] sm:$0xf]
    %v885 = vld [vmem:[#allocation10 + $0x9c] sm:$0xff]
    %v886 = vld [vmem:[#allocation10 + $0xa4] sm:$0xf]
    %v887 = vld [vmem:[#allocation10 + $0xa8] sm:$0xff]
    %v888 = vld [vmem:[#allocation10 + $0xb0] sm:$0xf]
    %v889 = vld [vmem:[#allocation10 + $0xb4] sm:$0xff]
    %v890 = vld [vmem:[#allocation10 + $0xbc] sm:$0xf]
    %v891 = vld [vmem:[#allocation10 + $0xc0] sm:$0xff]
    %v892 = vld [vmem:[#allocation10 + $0xc8] sm:$0xf]
    %v893 = vld [vmem:[#allocation10 + $0xcc] sm:$0xff]
    %v894 = vld [vmem:[#allocation10 + $0xd4] sm:$0xf]
    %v895 = vld [vmem:[#allocation10 + $0xd8] sm:$0xff]
    %v896 = vld [vmem:[#allocation10 + $0xe0] sm:$0xf]
    %v897 = vld [vmem:[#allocation10 + $0xe4] sm:$0xff]
    %v898 = vld [vmem:[#allocation10 + $0xec] sm:$0xf]
    %v899 = vld [vmem:[#allocation10 + $0xf0] sm:$0xff]
    %v900 = vld [vmem:[#allocation10 + $0xf8] sm:$0xf]
    %v901 = vld [vmem:[#allocation10 + $0xfc] sm:$0xff]
    %v902 = vld [vmem:[#allocation10 + $0x104] sm:$0xf]
    %v903 = vld [vmem:[#allocation10 + $0x108] sm:$0xff]
    %v904 = vld [vmem:[#allocation10 + $0x110] sm:$0xf]
    %v905 = vld [vmem:[#allocation10 + $0x114] sm:$0xff]
    %v906 = vld [vmem:[#allocation10 + $0x11c] sm:$0xf]
    %v907 = vld [vmem:[#allocation10 + $0x120] sm:$0xff]
    %v908 = vld [vmem:[#allocation10 + $0x128] sm:$0xf]
    %v909 = vld [vmem:[#allocation10 + $0x12c] sm:$0xff]
    %v910 = vld [vmem:[#allocation10 + $0x134] sm:$0xf]
    %v911 = vld [vmem:[#allocation10 + $0x138] sm:$0xff]
    %v912 = vld [vmem:[#allocation10 + $0x140] sm:$0xf]
    %v913 = vld [vmem:[#allocation10 + $0x144] sm:$0xff]
    %v914 = vld [vmem:[#allocation10 + $0x14c] sm:$0xf]
    %v915 = vld [vmem:[#allocation10 + $0x150] sm:$0xff]
    %v916 = vld [vmem:[#allocation10 + $0x158] sm:$0xf]
    %v917 = vld [vmem:[#allocation10 + $0x15c] sm:$0xff]
    %v918 = vld [vmem:[#allocation10 + $0x164] sm:$0xf]
    %v919 = vld [vmem:[#allocation10 + $0x168] sm:$0xff]
    %v920 = vld [vmem:[#allocation10 + $0x170] sm:$0xf]
    %v921 = vld [vmem:[#allocation10 + $0x174] sm:$0xff]
    %v922 = vld [vmem:[#allocation10 + $0x17c] sm:$0xf]
    %v924 = vlaneseq
    %v925 = vshrl.u32 %v924, 7
    %v926 = vsub.s32 0, %v925
    %v927 = vrot.slane %v98, %v926
    %v928 = vlaneseq
    %v929 = vshrl.u32 %v928, 7
    %v930 = vsub.s32 1, %v929
    %v931 = vrot.slane %v98, %v930
    %v932 = vlaneseq
    %v933 = vshrl.u32 %v932, 7
    %v934 = vsub.s32 2, %v933
    %v935 = vrot.slane %v98, %v934
    %v1003 = vunpack.c.l.b16 %v859
    %v1004 = vunpack.c.h.b16 %v859
    %v1005 = vunpack.c.l.b16 %v860
    %v1006 = vunpack.c.l.b16 %v861
    %v1007 = vunpack.c.h.b16 %v861
    %v1008 = vunpack.c.l.b16 %v862
    %v1009 = vunpack.c.l.b16 %v863
    %v1010 = vunpack.c.h.b16 %v863
    %v1011 = vunpack.c.l.b16 %v864
    %v1012 = vunpack.c.l.b16 %v865
    %v1013 = vunpack.c.h.b16 %v865
    %v1014 = vunpack.c.l.b16 %v866
    %v1015 = vunpack.c.l.b16 %v867
    %v1016 = vunpack.c.h.b16 %v867
    %v1017 = vunpack.c.l.b16 %v868
    %v1018 = vunpack.c.l.b16 %v869
    %v1019 = vunpack.c.h.b16 %v869
    %v1020 = vunpack.c.l.b16 %v870
    %v1021 = vunpack.c.l.b16 %v871
    %v1022 = vunpack.c.h.b16 %v871
    %v1023 = vunpack.c.l.b16 %v872
    %v1024 = vunpack.c.l.b16 %v873
    %v1025 = vunpack.c.h.b16 %v873
    %v1026 = vunpack.c.l.b16 %v874
    %v1027 = vunpack.c.l.b16 %v875
    %v1028 = vunpack.c.h.b16 %v875
    %v1029 = vunpack.c.l.b16 %v876
    %v1030 = vunpack.c.l.b16 %v877
    %v1031 = vunpack.c.h.b16 %v877
    %v1032 = vunpack.c.l.b16 %v878
    %v1033 = vunpack.c.l.b16 %v879
    %v1034 = vunpack.c.h.b16 %v879
    %v1035 = vunpack.c.l.b16 %v880
    %v1036 = vunpack.c.l.b16 %v881
    %v1037 = vunpack.c.h.b16 %v881
    %v1038 = vunpack.c.l.b16 %v882
    %v1039 = vunpack.c.l.b16 %v883
    %v1040 = vunpack.c.h.b16 %v883
    %v1041 = vunpack.c.l.b16 %v884
    %v1042 = vunpack.c.l.b16 %v885
    %v1043 = vunpack.c.h.b16 %v885
    %v1044 = vunpack.c.l.b16 %v886
    %v1045 = vunpack.c.l.b16 %v887
    %v1046 = vunpack.c.h.b16 %v887
    %v1047 = vunpack.c.l.b16 %v888
    %v1048 = vunpack.c.l.b16 %v889
    %v1049 = vunpack.c.h.b16 %v889
    %v1050 = vunpack.c.l.b16 %v890
    %v1051 = vunpack.c.l.b16 %v891
    %v1052 = vunpack.c.h.b16 %v891
    %v1053 = vunpack.c.l.b16 %v892
    %v1054 = vunpack.c.l.b16 %v893
    %v1055 = vunpack.c.h.b16 %v893
    %v1056 = vunpack.c.l.b16 %v894
    %v1057 = vunpack.c.l.b16 %v895
    %v1058 = vunpack.c.h.b16 %v895
    %v1059 = vunpack.c.l.b16 %v896
    %v1060 = vunpack.c.l.b16 %v897
    %v1061 = vunpack.c.h.b16 %v897
    %v1062 = vunpack.c.l.b16 %v898
    %v1063 = vunpack.c.l.b16 %v899
    %v1064 = vunpack.c.h.b16 %v899
    %v1065 = vunpack.c.l.b16 %v900
    %v1066 = vunpack.c.l.b16 %v901
    %v1067 = vunpack.c.h.b16 %v901
    %v1068 = vunpack.c.l.b16 %v902
    %v1069 = vunpack.c.l.b16 %v903
    %v1070 = vunpack.c.h.b16 %v903
    %v1071 = vunpack.c.l.b16 %v904
    %v1072 = vunpack.c.l.b16 %v905
    %v1073 = vunpack.c.h.b16 %v905
    %v1074 = vunpack.c.l.b16 %v906
    %v1075 = vunpack.c.l.b16 %v907
    %v1076 = vunpack.c.h.b16 %v907
    %v1077 = vunpack.c.l.b16 %v908
    %v1078 = vunpack.c.l.b16 %v909
    %v1079 = vunpack.c.h.b16 %v909
    %v1080 = vunpack.c.l.b16 %v910
    %v1081 = vunpack.c.l.b16 %v911
    %v1082 = vunpack.c.h.b16 %v911
    %v1083 = vunpack.c.l.b16 %v912
    %v1084 = vunpack.c.l.b16 %v913
    %v1085 = vunpack.c.h.b16 %v913
    %v1086 = vunpack.c.l.b16 %v914
    %v1087 = vunpack.c.l.b16 %v915
    %v1088 = vunpack.c.h.b16 %v915
    %v1089 = vunpack.c.l.b16 %v916
    %v1090 = vunpack.c.l.b16 %v917
    %v1091 = vunpack.c.h.b16 %v917
    %v1092 = vunpack.c.l.b16 %v918
    %v1093 = vunpack.c.l.b16 %v919
    %v1094 = vunpack.c.h.b16 %v919
    %v1095 = vunpack.c.l.b16 %v920
    %v1096 = vunpack.c.l.b16 %v921
    %v1097 = vunpack.c.h.b16 %v921
    %v1098 = vunpack.c.l.b16 %v922
    %v1099 = vpack.c.b16 %v1006, %v1003
    %v1100 = vpack.c.b16 %v1007, %v1004
    %v1101 = vpack.c.b16 %v1008, %v1005
    %v1102 = vpack.c.b16 %v1012, %v1009
    %v1103 = vpack.c.b16 %v1013, %v1010
    %v1104 = vpack.c.b16 %v1014, %v1011
    %v1105 = vpack.c.b16 %v1018, %v1015
    %v1106 = vpack.c.b16 %v1019, %v1016
    %v1107 = vpack.c.b16 %v1020, %v1017
    %v1108 = vpack.c.b16 %v1024, %v1021
    %v1109 = vpack.c.b16 %v1025, %v1022
    %v1110 = vpack.c.b16 %v1026, %v1023
    %v1111 = vpack.c.b16 %v1030, %v1027
    %v1112 = vpack.c.b16 %v1031, %v1028
    %v1113 = vpack.c.b16 %v1032, %v1029
    %v1114 = vpack.c.b16 %v1036, %v1033
    %v1115 = vpack.c.b16 %v1037, %v1034
    %v1116 = vpack.c.b16 %v1038, %v1035
    %v1117 = vpack.c.b16 %v1042, %v1039
    %v1118 = vpack.c.b16 %v1043, %v1040
    %v1119 = vpack.c.b16 %v1044, %v1041
    %v1120 = vpack.c.b16 %v1048, %v1045
    %v1121 = vpack.c.b16 %v1049, %v1046
    %v1122 = vpack.c.b16 %v1050, %v1047
    %v1123 = vpack.c.b16 %v1054, %v1051
    %v1124 = vpack.c.b16 %v1055, %v1052
    %v1125 = vpack.c.b16 %v1056, %v1053
    %v1126 = vpack.c.b16 %v1060, %v1057
    %v1127 = vpack.c.b16 %v1061, %v1058
    %v1128 = vpack.c.b16 %v1062, %v1059
    %v1129 = vpack.c.b16 %v1066, %v1063
    %v1130 = vpack.c.b16 %v1067, %v1064
    %v1131 = vpack.c.b16 %v1068, %v1065
    %v1132 = vpack.c.b16 %v1072, %v1069
    %v1133 = vpack.c.b16 %v1073, %v1070
    %v1134 = vpack.c.b16 %v1074, %v1071
    %v1135 = vpack.c.b16 %v1078, %v1075
    %v1136 = vpack.c.b16 %v1079, %v1076
    %v1137 = vpack.c.b16 %v1080, %v1077
    %v1138 = vpack.c.b16 %v1084, %v1081
    %v1139 = vpack.c.b16 %v1085, %v1082
    %v1140 = vpack.c.b16 %v1086, %v1083
    %v1141 = vpack.c.b16 %v1090, %v1087
    %v1142 = vpack.c.b16 %v1091, %v1088
    %v1143 = vpack.c.b16 %v1092, %v1089
    %v1144 = vpack.c.b16 %v1096, %v1093
    %v1145 = vpack.c.b16 %v1097, %v1094
    %v1146 = vpack.c.b16 %v1098, %v1095
    %1195 = vmatprep.subr.bf16.mxu0 %v1100
    %1196 = vmatpush1.bf16.msra.mxu0 %v1099
    %1197 = vmatprep.subr.bf16.mxu0 %v1103
    %1198 = vmatpush1.bf16.msra.mxu0 %v1102
    %1199 = vmatprep.subr.bf16.mxu0 %v1106
    %1200 = vmatpush1.bf16.msra.mxu0 %v1105
    %1201 = vmatprep.subr.bf16.mxu0 %v1109
    %1202 = vmatpush1.bf16.msra.mxu0 %v1108
    %1203 = vmatprep.subr.bf16.mxu0 %v1112
    %1204 = vmatpush1.bf16.msra.mxu0 %v1111
    %1205 = vmatprep.subr.bf16.mxu0 %v1115
    %1206 = vmatpush1.bf16.msra.mxu0 %v1114
    %1207 = vmatprep.subr.bf16.mxu0 %v1118
    %1208 = vmatpush1.bf16.msra.mxu0 %v1117
    %1209 = vmatprep.subr.bf16.mxu0 %v1121
    %1210 = vmatpush1.bf16.msra.mxu0 %v1120
    %1211 = vmatprep.subr.bf16.mxu0 %v1124
    %1212 = vmatpush1.bf16.msra.mxu0 %v1123
    %1213 = vmatprep.subr.bf16.mxu0 %v1127
    %1214 = vmatpush1.bf16.msra.mxu0 %v1126
    %1215 = vmatprep.subr.bf16.mxu0 %v1130
    %1216 = vmatpush1.bf16.msra.mxu0 %v1129
    %1217 = vmatprep.subr.bf16.mxu0 %v1133
    %1218 = vmatpush1.bf16.msra.mxu0 %v1132
    %1219 = vmatprep.subr.bf16.mxu0 %v1136
    %1220 = vmatpush1.bf16.msra.mxu0 %v1135
    %1221 = vmatprep.subr.bf16.mxu0 %v1139
    %1222 = vmatpush1.bf16.msra.mxu0 %v1138
    %1223 = vmatprep.subr.bf16.mxu0 %v1142
    %1224 = vmatpush1.bf16.msra.mxu0 %v1141
    %1225 = vmatprep.subr.bf16.mxu0 %v1145
    %1226 = vmatpush1.bf16.msra.mxu0 %v1144
    %1227 = vmatprep.mubr.bf16.mxu0 %v360
    %1228 = vmatmul.mubr.bf16.gmra.mrb[0].mxu0 %v858
    %v1229 = vpop.f32.mrb[0].mxu0
    %v1230 = vadd.f32 %v927, %v1229
    %v1231 = vpop.f32.mrb[0].mxu0
    %v1232 = vadd.f32 %v931, %v1231
    %v1233 = vpop.f32.mrb[0].mxu0
    %v1234 = vpop.f32.mrb[0].mxu0
    %1235 = vdwg.mxu0
    %1236 = vmatprep.subr.bf16.mxu0 0
    %1237 = vmatpush1.bf16.msra.mxu0 %v1101
    %1238 = vmatprep.subr.bf16.mxu0 0
    %1239 = vmatpush1.bf16.msra.mxu0 %v1104
    %1240 = vmatprep.subr.bf16.mxu0 0
    %1241 = vmatpush1.bf16.msra.mxu0 %v1107
    %1242 = vmatprep.subr.bf16.mxu0 0
    %1243 = vmatpush1.bf16.msra.mxu0 %v1110
    %1244 = vmatprep.subr.bf16.mxu0 0
    %1245 = vmatpush1.bf16.msra.mxu0 %v1113
    %1246 = vmatprep.subr.bf16.mxu0 0
    %1247 = vmatpush1.bf16.msra.mxu0 %v1116
    %1248 = vmatprep.subr.bf16.mxu0 0
    %1249 = vmatpush1.bf16.msra.mxu0 %v1119
    %1250 = vmatprep.subr.bf16.mxu0 0
    %1251 = vmatpush1.bf16.msra.mxu0 %v1122
    %1252 = vmatprep.subr.bf16.mxu0 0
    %1253 = vmatpush1.bf16.msra.mxu0 %v1125
    %1254 = vmatprep.subr.bf16.mxu0 0
    %1255 = vmatpush1.bf16.msra.mxu0 %v1128
    %1256 = vmatprep.subr.bf16.mxu0 0
    %1257 = vmatpush1.bf16.msra.mxu0 %v1131
    %1258 = vmatprep.subr.bf16.mxu0 0
    %1259 = vmatpush1.bf16.msra.mxu0 %v1134
    %1260 = vmatprep.subr.bf16.mxu0 0
    %1261 = vmatpush1.bf16.msra.mxu0 %v1137
    %1262 = vmatprep.subr.bf16.mxu0 0
    %1263 = vmatpush1.bf16.msra.mxu0 %v1140
    %1264 = vmatprep.subr.bf16.mxu0 0
    %1265 = vmatpush1.bf16.msra.mxu0 %v1143
    %1266 = vmatprep.subr.bf16.mxu0 0
    %1267 = vmatpush1.bf16.msra.mxu0 %v1146
    %1268 = vmatprep.mubr.bf16.mxu0 %v360
    %1269 = vmatmul.mubr.bf16.gmra.mrb[0].mxu0 %v858
    %v1270 = vpop.f32.mrb[0].mxu0
    %v1271 = vadd.f32 %v935, %v1270
    %v1272 = vpop.f32.mrb[0].mxu0
    %v1273 = vpop.f32.mrb[0].mxu0
    %v1274 = vpop.f32.mrb[0].mxu0
    %1275 = vdwg.mxu0
    %v1276 = vxor.u32 %v1230, 2147483648
    %v1277 = vmul.f32 %v1276, 1.442695
    %v1278 = vpow.pop %v1277
    %v1279 = vadd.f32 %v1278, 1.0
    %v1280 = vrcp.pop %v1279
    %v1281 = vmul.f32 1.0, %v1280
    %v1282 = vxor.u32 %v1232, 2147483648
    %v1283 = vmul.f32 %v1282, 1.442695
    %v1284 = vpow.pop %v1283
    %v1285 = vadd.f32 %v1284, 1.0
    %v1286 = vrcp.pop %v1285
    %v1287 = vmul.f32 1.0, %v1286
    %v1289 = vlaneseq
    %v1290 = vshrl.u32 %v1289, 7
    %v1291 = vsub.s32 0, %v1290
    %v1292 = vrot.slane %v99, %v1291
    %v1294 = vadd.f32 %v823, %v1292
    %v1295 = vmul.f32 %v1281, %v1294
    %v1296 = vadd.f32 %v1271, %v1295
    %v1297 = vtanh.pop %v1296
    %v1298 = vsub.f32 1.0, %v1287
    %v1299 = vmul.f32 %v1298, %v1297
    %v1300 = vmul.f32 %v1287, 0.0
    %v1301 = vadd.f32 %v1299, %v1300
    %v1302 = vpack.c.bf16 %v1301, %v1301
    %1303 = vst [vmem:[#allocation3] sm:$0xf] %v1302
    %v1304 = vld [vmem:[#allocation9] sm:$0xff]
    %v1305 = vld [vmem:[#allocation9 + $0x8] sm:$0xff]
    %v1306 = vld [vmem:[#allocation9 + $0x10] sm:$0xff]
    %v1307 = vld [vmem:[#allocation9 + $0x18] sm:$0xff]
    %v1308 = vld [vmem:[#allocation9 + $0x20] sm:$0xff]
    %v1309 = vld [vmem:[#allocation9 + $0x28] sm:$0xff]
    %v1310 = vld [vmem:[#allocation9 + $0x30] sm:$0xff]
    %v1311 = vld [vmem:[#allocation9 + $0x38] sm:$0xff]
    %v1312 = vld [vmem:[#allocation9 + $0x40] sm:$0xff]
    %v1313 = vld [vmem:[#allocation9 + $0x48] sm:$0xff]
    %v1314 = vld [vmem:[#allocation9 + $0x50] sm:$0xff]
    %v1315 = vld [vmem:[#allocation9 + $0x58] sm:$0xff]
    %v1316 = vld [vmem:[#allocation9 + $0x60] sm:$0xff]
    %v1317 = vld [vmem:[#allocation9 + $0x68] sm:$0xff]
    %v1318 = vld [vmem:[#allocation9 + $0x70] sm:$0xff]
    %v1319 = vld [vmem:[#allocation9 + $0x78] sm:$0xff]
    %v1320 = vld [vmem:[#allocation9 + $0x80] sm:$0xff]
    %v1321 = vld [vmem:[#allocation9 + $0x88] sm:$0xff]
    %v1322 = vld [vmem:[#allocation9 + $0x90] sm:$0xff]
    %v1323 = vld [vmem:[#allocation9 + $0x98] sm:$0xff]
    %v1324 = vld [vmem:[#allocation9 + $0xa0] sm:$0xff]
    %v1325 = vld [vmem:[#allocation9 + $0xa8] sm:$0xff]
    %v1326 = vld [vmem:[#allocation9 + $0xb0] sm:$0xff]
    %v1327 = vld [vmem:[#allocation9 + $0xb8] sm:$0xff]
    %v1328 = vld [vmem:[#allocation9 + $0xc0] sm:$0xff]
    %v1329 = vld [vmem:[#allocation9 + $0xc8] sm:$0xff]
    %v1330 = vld [vmem:[#allocation9 + $0xd0] sm:$0xff]
    %v1331 = vld [vmem:[#allocation9 + $0xd8] sm:$0xff]
    %v1332 = vld [vmem:[#allocation9 + $0xe0] sm:$0xff]
    %v1333 = vld [vmem:[#allocation9 + $0xe8] sm:$0xff]
    %v1334 = vld [vmem:[#allocation9 + $0xf0] sm:$0xff]
    %v1335 = vld [vmem:[#allocation9 + $0xf8] sm:$0xff]
    %v1336 = vld [vmem:[#allocation9 + $0x100] sm:$0xff]
    %v1337 = vld [vmem:[#allocation9 + $0x108] sm:$0xff]
    %v1338 = vld [vmem:[#allocation9 + $0x110] sm:$0xff]
    %v1339 = vld [vmem:[#allocation9 + $0x118] sm:$0xff]
    %v1340 = vld [vmem:[#allocation9 + $0x120] sm:$0xff]
    %v1341 = vld [vmem:[#allocation9 + $0x128] sm:$0xff]
    %v1342 = vld [vmem:[#allocation9 + $0x130] sm:$0xff]
    %v1343 = vld [vmem:[#allocation9 + $0x138] sm:$0xff]
    %v1344 = vld [vmem:[#allocation9 + $0x140] sm:$0xff]
    %v1345 = vld [vmem:[#allocation9 + $0x148] sm:$0xff]
    %v1346 = vld [vmem:[#allocation9 + $0x150] sm:$0xff]
    %v1347 = vld [vmem:[#allocation9 + $0x158] sm:$0xff]
    %v1348 = vld [vmem:[#allocation9 + $0x160] sm:$0xff]
    %v1349 = vld [vmem:[#allocation9 + $0x168] sm:$0xff]
    %v1350 = vld [vmem:[#allocation9 + $0x170] sm:$0xff]
    %v1351 = vld [vmem:[#allocation9 + $0x178] sm:$0xff]
    %v1352 = vld [vmem:[#allocation9 + $0x180] sm:$0xff]
    %v1353 = vld [vmem:[#allocation9 + $0x188] sm:$0xff]
    %v1354 = vld [vmem:[#allocation9 + $0x190] sm:$0xff]
    %v1355 = vld [vmem:[#allocation9 + $0x198] sm:$0xff]
    %v1356 = vld [vmem:[#allocation9 + $0x1a0] sm:$0xff]
    %v1357 = vld [vmem:[#allocation9 + $0x1a8] sm:$0xff]
    %v1358 = vld [vmem:[#allocation9 + $0x1b0] sm:$0xff]
    %v1359 = vld [vmem:[#allocation9 + $0x1b8] sm:$0xff]
    %v1360 = vld [vmem:[#allocation9 + $0x1c0] sm:$0xff]
    %v1361 = vld [vmem:[#allocation9 + $0x1c8] sm:$0xff]
    %v1362 = vld [vmem:[#allocation9 + $0x1d0] sm:$0xff]
    %v1363 = vld [vmem:[#allocation9 + $0x1d8] sm:$0xff]
    %v1364 = vld [vmem:[#allocation9 + $0x1e0] sm:$0xff]
    %v1365 = vld [vmem:[#allocation9 + $0x1e8] sm:$0xff]
    %v1366 = vld [vmem:[#allocation9 + $0x1f0] sm:$0xff]
    %v1367 = vld [vmem:[#allocation9 + $0x1f8] sm:$0xff]
    %v1432 = vunpack.c.l.b16 %v1304
    %v1433 = vunpack.c.h.b16 %v1304
    %v1434 = vunpack.c.l.b16 %v1305
    %v1435 = vunpack.c.h.b16 %v1305
    %v1436 = vunpack.c.l.b16 %v1306
    %v1437 = vunpack.c.h.b16 %v1306
    %v1438 = vunpack.c.l.b16 %v1307
    %v1439 = vunpack.c.h.b16 %v1307
    %v1440 = vunpack.c.l.b16 %v1308
    %v1441 = vunpack.c.h.b16 %v1308
    %v1442 = vunpack.c.l.b16 %v1309
    %v1443 = vunpack.c.h.b16 %v1309
    %v1444 = vunpack.c.l.b16 %v1310
    %v1445 = vunpack.c.h.b16 %v1310
    %v1446 = vunpack.c.l.b16 %v1311
    %v1447 = vunpack.c.h.b16 %v1311
    %v1448 = vunpack.c.l.b16 %v1312
    %v1449 = vunpack.c.h.b16 %v1312
    %v1450 = vunpack.c.l.b16 %v1313
    %v1451 = vunpack.c.h.b16 %v1313
    %v1452 = vunpack.c.l.b16 %v1314
    %v1453 = vunpack.c.h.b16 %v1314
    %v1454 = vunpack.c.l.b16 %v1315
    %v1455 = vunpack.c.h.b16 %v1315
    %v1456 = vunpack.c.l.b16 %v1316
    %v1457 = vunpack.c.h.b16 %v1316
    %v1458 = vunpack.c.l.b16 %v1317
    %v1459 = vunpack.c.h.b16 %v1317
    %v1460 = vunpack.c.l.b16 %v1318
    %v1461 = vunpack.c.h.b16 %v1318
    %v1462 = vunpack.c.l.b16 %v1319
    %v1463 = vunpack.c.h.b16 %v1319
    %v1464 = vunpack.c.l.b16 %v1320
    %v1465 = vunpack.c.h.b16 %v1320
    %v1466 = vunpack.c.l.b16 %v1321
    %v1467 = vunpack.c.h.b16 %v1321
    %v1468 = vunpack.c.l.b16 %v1322
    %v1469 = vunpack.c.h.b16 %v1322
    %v1470 = vunpack.c.l.b16 %v1323
    %v1471 = vunpack.c.h.b16 %v1323
    %v1472 = vunpack.c.l.b16 %v1324
    %v1473 = vunpack.c.h.b16 %v1324
    %v1474 = vunpack.c.l.b16 %v1325
    %v1475 = vunpack.c.h.b16 %v1325
    %v1476 = vunpack.c.l.b16 %v1326
    %v1477 = vunpack.c.h.b16 %v1326
    %v1478 = vunpack.c.l.b16 %v1327
    %v1479 = vunpack.c.h.b16 %v1327
    %v1480 = vunpack.c.l.b16 %v1328
    %v1481 = vunpack.c.h.b16 %v1328
    %v1482 = vunpack.c.l.b16 %v1329
    %v1483 = vunpack.c.h.b16 %v1329
    %v1484 = vunpack.c.l.b16 %v1330
    %v1485 = vunpack.c.h.b16 %v1330
    %v1486 = vunpack.c.l.b16 %v1331
    %v1487 = vunpack.c.h.b16 %v1331
    %v1488 = vunpack.c.l.b16 %v1332
    %v1489 = vunpack.c.h.b16 %v1332
    %v1490 = vunpack.c.l.b16 %v1333
    %v1491 = vunpack.c.h.b16 %v1333
    %v1492 = vunpack.c.l.b16 %v1334
    %v1493 = vunpack.c.h.b16 %v1334
    %v1494 = vunpack.c.l.b16 %v1335
    %v1495 = vunpack.c.h.b16 %v1335
    %v1496 = vunpack.c.l.b16 %v1336
    %v1497 = vunpack.c.h.b16 %v1336
    %v1498 = vunpack.c.l.b16 %v1337
    %v1499 = vunpack.c.h.b16 %v1337
    %v1500 = vunpack.c.l.b16 %v1338
    %v1501 = vunpack.c.h.b16 %v1338
    %v1502 = vunpack.c.l.b16 %v1339
    %v1503 = vunpack.c.h.b16 %v1339
    %v1504 = vunpack.c.l.b16 %v1340
    %v1505 = vunpack.c.h.b16 %v1340
    %v1506 = vunpack.c.l.b16 %v1341
    %v1507 = vunpack.c.h.b16 %v1341
    %v1508 = vunpack.c.l.b16 %v1342
    %v1509 = vunpack.c.h.b16 %v1342
    %v1510 = vunpack.c.l.b16 %v1343
    %v1511 = vunpack.c.h.b16 %v1343
    %v1512 = vunpack.c.l.b16 %v1344
    %v1513 = vunpack.c.h.b16 %v1344
    %v1514 = vunpack.c.l.b16 %v1345
    %v1515 = vunpack.c.h.b16 %v1345
    %v1516 = vunpack.c.l.b16 %v1346
    %v1517 = vunpack.c.h.b16 %v1346
    %v1518 = vunpack.c.l.b16 %v1347
    %v1519 = vunpack.c.h.b16 %v1347
    %v1520 = vunpack.c.l.b16 %v1348
    %v1521 = vunpack.c.h.b16 %v1348
    %v1522 = vunpack.c.l.b16 %v1349
    %v1523 = vunpack.c.h.b16 %v1349
    %v1524 = vunpack.c.l.b16 %v1350
    %v1525 = vunpack.c.h.b16 %v1350
    %v1526 = vunpack.c.l.b16 %v1351
    %v1527 = vunpack.c.h.b16 %v1351
    %v1528 = vunpack.c.l.b16 %v1352
    %v1529 = vunpack.c.h.b16 %v1352
    %v1530 = vunpack.c.l.b16 %v1353
    %v1531 = vunpack.c.h.b16 %v1353
    %v1532 = vunpack.c.l.b16 %v1354
    %v1533 = vunpack.c.h.b16 %v1354
    %v1534 = vunpack.c.l.b16 %v1355
    %v1535 = vunpack.c.h.b16 %v1355
    %v1536 = vunpack.c.l.b16 %v1356
    %v1537 = vunpack.c.h.b16 %v1356
    %v1538 = vunpack.c.l.b16 %v1357
    %v1539 = vunpack.c.h.b16 %v1357
    %v1540 = vunpack.c.l.b16 %v1358
    %v1541 = vunpack.c.h.b16 %v1358
    %v1542 = vunpack.c.l.b16 %v1359
    %v1543 = vunpack.c.h.b16 %v1359
    %v1544 = vunpack.c.l.b16 %v1360
    %v1545 = vunpack.c.h.b16 %v1360
    %v1546 = vunpack.c.l.b16 %v1361
    %v1547 = vunpack.c.h.b16 %v1361
    %v1548 = vunpack.c.l.b16 %v1362
    %v1549 = vunpack.c.h.b16 %v1362
    %v1550 = vunpack.c.l.b16 %v1363
    %v1551 = vunpack.c.h.b16 %v1363
    %v1552 = vunpack.c.l.b16 %v1364
    %v1553 = vunpack.c.h.b16 %v1364
    %v1554 = vunpack.c.l.b16 %v1365
    %v1555 = vunpack.c.h.b16 %v1365
    %v1556 = vunpack.c.l.b16 %v1366
    %v1557 = vunpack.c.h.b16 %v1366
    %v1558 = vunpack.c.l.b16 %v1367
    %v1559 = vunpack.c.h.b16 %v1367
    %v1560 = vpack.c.b16 %v1436, %v1432
    %v1561 = vpack.c.b16 %v1437, %v1433
    %v1562 = vpack.c.b16 %v1438, %v1434
    %v1563 = vpack.c.b16 %v1439, %v1435
    %v1564 = vpack.c.b16 %v1444, %v1440
    %v1565 = vpack.c.b16 %v1445, %v1441
    %v1566 = vpack.c.b16 %v1446, %v1442
    %v1567 = vpack.c.b16 %v1447, %v1443
    %v1568 = vpack.c.b16 %v1452, %v1448
    %v1569 = vpack.c.b16 %v1453, %v1449
    %v1570 = vpack.c.b16 %v1454, %v1450
    %v1571 = vpack.c.b16 %v1455, %v1451
    %v1572 = vpack.c.b16 %v1460, %v1456
    %v1573 = vpack.c.b16 %v1461, %v1457
    %v1574 = vpack.c.b16 %v1462, %v1458
    %v1575 = vpack.c.b16 %v1463, %v1459
    %v1576 = vpack.c.b16 %v1468, %v1464
    %v1577 = vpack.c.b16 %v1469, %v1465
    %v1578 = vpack.c.b16 %v1470, %v1466
    %v1579 = vpack.c.b16 %v1471, %v1467
    %v1580 = vpack.c.b16 %v1476, %v1472
    %v1581 = vpack.c.b16 %v1477, %v1473
    %v1582 = vpack.c.b16 %v1478, %v1474
    %v1583 = vpack.c.b16 %v1479, %v1475
    %v1584 = vpack.c.b16 %v1484, %v1480
    %v1585 = vpack.c.b16 %v1485, %v1481
    %v1586 = vpack.c.b16 %v1486, %v1482
    %v1587 = vpack.c.b16 %v1487, %v1483
    %v1588 = vpack.c.b16 %v1492, %v1488
    %v1589 = vpack.c.b16 %v1493, %v1489
    %v1590 = vpack.c.b16 %v1494, %v1490
    %v1591 = vpack.c.b16 %v1495, %v1491
    %v1592 = vpack.c.b16 %v1500, %v1496
    %v1593 = vpack.c.b16 %v1501, %v1497
    %v1594 = vpack.c.b16 %v1502, %v1498
    %v1595 = vpack.c.b16 %v1503, %v1499
    %v1596 = vpack.c.b16 %v1508, %v1504
    %v1597 = vpack.c.b16 %v1509, %v1505
    %v1598 = vpack.c.b16 %v1510, %v1506
    %v1599 = vpack.c.b16 %v1511, %v1507
    %v1600 = vpack.c.b16 %v1516, %v1512
    %v1601 = vpack.c.b16 %v1517, %v1513
    %v1602 = vpack.c.b16 %v1518, %v1514
    %v1603 = vpack.c.b16 %v1519, %v1515
    %v1604 = vpack.c.b16 %v1524, %v1520
    %v1605 = vpack.c.b16 %v1525, %v1521
    %v1606 = vpack.c.b16 %v1526, %v1522
    %v1607 = vpack.c.b16 %v1527, %v1523
    %v1608 = vpack.c.b16 %v1532, %v1528
    %v1609 = vpack.c.b16 %v1533, %v1529
    %v1610 = vpack.c.b16 %v1534, %v1530
    %v1611 = vpack.c.b16 %v1535, %v1531
    %v1612 = vpack.c.b16 %v1540, %v1536
    %v1613 = vpack.c.b16 %v1541, %v1537
    %v1614 = vpack.c.b16 %v1542, %v1538
    %v1615 = vpack.c.b16 %v1543, %v1539
    %v1616 = vpack.c.b16 %v1548, %v1544
    %v1617 = vpack.c.b16 %v1549, %v1545
    %v1618 = vpack.c.b16 %v1550, %v1546
    %v1619 = vpack.c.b16 %v1551, %v1547
    %v1620 = vpack.c.b16 %v1556, %v1552
    %v1621 = vpack.c.b16 %v1557, %v1553
    %v1622 = vpack.c.b16 %v1558, %v1554
    %v1623 = vpack.c.b16 %v1559, %v1555
    %1688 = vmatprep.subr.bf16.mxu0 %v1561
    %1689 = vmatpush1.bf16.msra.mxu0 %v1560
    %1690 = vmatprep.subr.bf16.mxu0 %v1565
    %1691 = vmatpush1.bf16.msra.mxu0 %v1564
    %1692 = vmatprep.subr.bf16.mxu0 %v1569
    %1693 = vmatpush1.bf16.msra.mxu0 %v1568
    %1694 = vmatprep.subr.bf16.mxu0 %v1573
    %1695 = vmatpush1.bf16.msra.mxu0 %v1572
    %1696 = vmatprep.subr.bf16.mxu0 %v1577
    %1697 = vmatpush1.bf16.msra.mxu0 %v1576
    %1698 = vmatprep.subr.bf16.mxu0 %v1581
    %1699 = vmatpush1.bf16.msra.mxu0 %v1580
    %1700 = vmatprep.subr.bf16.mxu0 %v1585
    %1701 = vmatpush1.bf16.msra.mxu0 %v1584
    %1702 = vmatprep.subr.bf16.mxu0 %v1589
    %1703 = vmatpush1.bf16.msra.mxu0 %v1588
    %1704 = vmatprep.subr.bf16.mxu0 %v1593
    %1705 = vmatpush1.bf16.msra.mxu0 %v1592
    %1706 = vmatprep.subr.bf16.mxu0 %v1597
    %1707 = vmatpush1.bf16.msra.mxu0 %v1596
    %1708 = vmatprep.subr.bf16.mxu0 %v1601
    %1709 = vmatpush1.bf16.msra.mxu0 %v1600
    %1710 = vmatprep.subr.bf16.mxu0 %v1605
    %1711 = vmatpush1.bf16.msra.mxu0 %v1604
    %1712 = vmatprep.subr.bf16.mxu0 %v1609
    %1713 = vmatpush1.bf16.msra.mxu0 %v1608
    %1714 = vmatprep.subr.bf16.mxu0 %v1613
    %1715 = vmatpush1.bf16.msra.mxu0 %v1612
    %1716 = vmatprep.subr.bf16.mxu0 %v1617
    %1717 = vmatpush1.bf16.msra.mxu0 %v1616
    %1718 = vmatprep.subr.bf16.mxu0 %v1621
    %1719 = vmatpush1.bf16.msra.mxu0 %v1620
    %1720 = vmatprep.mubr.bf16.mxu0 %v1302
    %1721 = vmatmul.mubr.bf16.gmra.mrb[0].mxu0 %v858
    %v1722 = vpop.f32.mrb[0].mxu0
    %v1723 = vadd.f32 0.0, %v1722
    %v1724 = vpop.f32.mrb[0].mxu0
    %v1725 = vadd.f32 0.0, %v1724
    %v1726 = vpop.f32.mrb[0].mxu0
    %v1727 = vpop.f32.mrb[0].mxu0
    %1728 = vdwg.mxu0
    %1729 = vmatprep.subr.bf16.mxu0 %v1563
    %1730 = vmatpush1.bf16.msra.mxu0 %v1562
    %1731 = vmatprep.subr.bf16.mxu0 %v1567
    %1732 = vmatpush1.bf16.msra.mxu0 %v1566
    %1733 = vmatprep.subr.bf16.mxu0 %v1571
    %1734 = vmatpush1.bf16.msra.mxu0 %v1570
    %1735 = vmatprep.subr.bf16.mxu0 %v1575
    %1736 = vmatpush1.bf16.msra.mxu0 %v1574
    %1737 = vmatprep.subr.bf16.mxu0 %v1579
    %1738 = vmatpush1.bf16.msra.mxu0 %v1578
    %1739 = vmatprep.subr.bf16.mxu0 %v1583
    %1740 = vmatpush1.bf16.msra.mxu0 %v1582
    %1741 = vmatprep.subr.bf16.mxu0 %v1587
    %1742 = vmatpush1.bf16.msra.mxu0 %v1586
    %1743 = vmatprep.subr.bf16.mxu0 %v1591
    %1744 = vmatpush1.bf16.msra.mxu0 %v1590
    %1745 = vmatprep.subr.bf16.mxu0 %v1595
    %1746 = vmatpush1.bf16.msra.mxu0 %v1594
    %1747 = vmatprep.subr.bf16.mxu0 %v1599
    %1748 = vmatpush1.bf16.msra.mxu0 %v1598
    %1749 = vmatprep.subr.bf16.mxu0 %v1603
    %1750 = vmatpush1.bf16.msra.mxu0 %v1602
    %1751 = vmatprep.subr.bf16.mxu0 %v1607
    %1752 = vmatpush1.bf16.msra.mxu0 %v1606
    %1753 = vmatprep.subr.bf16.mxu0 %v1611
    %1754 = vmatpush1.bf16.msra.mxu0 %v1610
    %1755 = vmatprep.subr.bf16.mxu0 %v1615
    %1756 = vmatpush1.bf16.msra.mxu0 %v1614
    %1757 = vmatprep.subr.bf16.mxu0 %v1619
    %1758 = vmatpush1.bf16.msra.mxu0 %v1618
    %1759 = vmatprep.subr.bf16.mxu0 %v1623
    %1760 = vmatpush1.bf16.msra.mxu0 %v1622
    %1761 = vmatprep.mubr.bf16.mxu0 %v1302
    %1762 = vmatmul.mubr.bf16.gmra.mrb[0].mxu0 %v858
    %v1763 = vpop.f32.mrb[0].mxu0
    %v1764 = vadd.f32 0.0, %v1763
    %v1765 = vpop.f32.mrb[0].mxu0
    %v1766 = vadd.f32 0.0, %v1765
    %v1767 = vpop.f32.mrb[0].mxu0
    %v1768 = vpop.f32.mrb[0].mxu0
    %1769 = vdwg.mxu0
    %s1770 = scalar_lea.vmem [#allocation2], 24
    %v1771 = vld [vmem:[%s1770] sm:$0xff]
    %v1772 = vld [vmem:[%s1770 + $0x8] sm:$0xff]
    %v1773 = vld [vmem:[%s1770 + $0x10] sm:$0xff]
    %v1774 = vadd.f32 %v1771, %v1723
    %v1775 = vxor.u32 %v1774, 2147483648
    %v1776 = vmul.f32 %v1775, 1.442695
    %v1777 = vpow.pop %v1776
    %v1778 = vadd.f32 %v1777, 1.0
    %v1779 = vrcp.pop %v1778
    %v1780 = vmul.f32 1.0, %v1779
    %v1781 = vadd.f32 %v1772, %v1725
    %v1782 = vxor.u32 %v1781, 2147483648
    %v1783 = vmul.f32 %v1782, 1.442695
    %v1784 = vpow.pop %v1783
    %v1785 = vadd.f32 %v1784, 1.0
    %v1786 = vrcp.pop %v1785
    %v1787 = vmul.f32 1.0, %v1786
    %v1788 = vadd.f32 %v1764, %v848
    %v1789 = vmul.f32 %v1780, %v1788
    %v1790 = vadd.f32 %v1773, %v1789
    %v1791 = vtanh.pop %v1790
    %v1792 = vsub.f32 1.0, %v1787
    %v1793 = vmul.f32 %v1792, %v1791
    %v1794 = vmul.f32 %v1787, %v857
    %v1795 = vadd.f32 %v1793, %v1794
    %v1796 = vpack.c.bf16 %v1795, %v1795
    %v1797 = vld [vmem:[#allocation10] sm:$0xff]
    %v1798 = vld [vmem:[#allocation10 + $0x8] sm:$0xf]
    %v1799 = vld [vmem:[#allocation10 + $0xc] sm:$0xff]
    %v1800 = vld [vmem:[#allocation10 + $0x14] sm:$0xf]
    %v1801 = vld [vmem:[#allocation10 + $0x18] sm:$0xff]
    %v1802 = vld [vmem:[#allocation10 + $0x20] sm:$0xf]
    %v1803 = vld [vmem:[#allocation10 + $0x24] sm:$0xff]
    %v1804 = vld [vmem:[#allocation10 + $0x2c] sm:$0xf]
    %v1805 = vld [vmem:[#allocation10 + $0x30] sm:$0xff]
    %v1806 = vld [vmem:[#allocation10 + $0x38] sm:$0xf]
    %v1807 = vld [vmem:[#allocation10 + $0x3c] sm:$0xff]
    %v1808 = vld [vmem:[#allocation10 + $0x44] sm:$0xf]
    %v1809 = vld [vmem:[#allocation10 + $0x48] sm:$0xff]
    %v1810 = vld [vmem:[#allocation10 + $0x50] sm:$0xf]
    %v1811 = vld [vmem:[#allocation10 + $0x54] sm:$0xff]
    %v1812 = vld [vmem:[#allocation10 + $0x5c] sm:$0xf]
    %v1813 = vld [vmem:[#allocation10 + $0x60] sm:$0xff]
    %v1814 = vld [vmem:[#allocation10 + $0x68] sm:$0xf]
    %v1815 = vld [vmem:[#allocation10 + $0x6c] sm:$0xff]
    %v1816 = vld [vmem:[#allocation10 + $0x74] sm:$0xf]
    %v1817 = vld [vmem:[#allocation10 + $0x78] sm:$0xff]
    %v1818 = vld [vmem:[#allocation10 + $0x80] sm:$0xf]
    %v1819 = vld [vmem:[#allocation10 + $0x84] sm:$0xff]
    %v1820 = vld [vmem:[#allocation10 + $0x8c] sm:$0xf]
    %v1821 = vld [vmem:[#allocation10 + $0x90] sm:$0xff]
    %v1822 = vld [vmem:[#allocation10 + $0x98] sm:$0xf]
    %v1823 = vld [vmem:[#allocation10 + $0x9c] sm:$0xff]
    %v1824 = vld [vmem:[#allocation10 + $0xa4] sm:$0xf]
    %v1825 = vld [vmem:[#allocation10 + $0xa8] sm:$0xff]
    %v1826 = vld [vmem:[#allocation10 + $0xb0] sm:$0xf]
    %v1827 = vld [vmem:[#allocation10 + $0xb4] sm:$0xff]
    %v1828 = vld [vmem:[#allocation10 + $0xbc] sm:$0xf]
    %v1829 = vld [vmem:[#allocation10 + $0xc0] sm:$0xff]
    %v1830 = vld [vmem:[#allocation10 + $0xc8] sm:$0xf]
    %v1831 = vld [vmem:[#allocation10 + $0xcc] sm:$0xff]
    %v1832 = vld [vmem:[#allocation10 + $0xd4] sm:$0xf]
    %v1833 = vld [vmem:[#allocation10 + $0xd8] sm:$0xff]
    %v1834 = vld [vmem:[#allocation10 + $0xe0] sm:$0xf]
    %v1835 = vld [vmem:[#allocation10 + $0xe4] sm:$0xff]
    %v1836 = vld [vmem:[#allocation10 + $0xec] sm:$0xf]
    %v1837 = vld [vmem:[#allocation10 + $0xf0] sm:$0xff]
    %v1838 = vld [vmem:[#allocation10 + $0xf8] sm:$0xf]
    %v1839 = vld [vmem:[#allocation10 + $0xfc] sm:$0xff]
    %v1840 = vld [vmem:[#allocation10 + $0x104] sm:$0xf]
    %v1841 = vld [vmem:[#allocation10 + $0x108] sm:$0xff]
    %v1842 = vld [vmem:[#allocation10 + $0x110] sm:$0xf]
    %v1843 = vld [vmem:[#allocation10 + $0x114] sm:$0xff]
    %v1844 = vld [vmem:[#allocation10 + $0x11c] sm:$0xf]
    %v1845 = vld [vmem:[#allocation10 + $0x120] sm:$0xff]
    %v1846 = vld [vmem:[#allocation10 + $0x128] sm:$0xf]
    %v1847 = vld [vmem:[#allocation10 + $0x12c] sm:$0xff]
    %v1848 = vld [vmem:[#allocation10 + $0x134] sm:$0xf]
    %v1849 = vld [vmem:[#allocation10 + $0x138] sm:$0xff]
    %v1850 = vld [vmem:[#allocation10 + $0x140] sm:$0xf]
    %v1851 = vld [vmem:[#allocation10 + $0x144] sm:$0xff]
    %v1852 = vld [vmem:[#allocation10 + $0x14c] sm:$0xf]
    %v1853 = vld [vmem:[#allocation10 + $0x150] sm:$0xff]
    %v1854 = vld [vmem:[#allocation10 + $0x158] sm:$0xf]
    %v1855 = vld [vmem:[#allocation10 + $0x15c] sm:$0xff]
    %v1856 = vld [vmem:[#allocation10 + $0x164] sm:$0xf]
    %v1857 = vld [vmem:[#allocation10 + $0x168] sm:$0xff]
    %v1858 = vld [vmem:[#allocation10 + $0x170] sm:$0xf]
    %v1859 = vld [vmem:[#allocation10 + $0x174] sm:$0xff]
    %v1860 = vld [vmem:[#allocation10 + $0x17c] sm:$0xf]
    %v1925 = vunpack.c.l.b16 %v1797
    %v1926 = vunpack.c.h.b16 %v1797
    %v1927 = vunpack.c.l.b16 %v1798
    %v1928 = vunpack.c.l.b16 %v1799
    %v1929 = vunpack.c.h.b16 %v1799
    %v1930 = vunpack.c.l.b16 %v1800
    %v1931 = vunpack.c.l.b16 %v1801
    %v1932 = vunpack.c.h.b16 %v1801
    %v1933 = vunpack.c.l.b16 %v1802
    %v1934 = vunpack.c.l.b16 %v1803
    %v1935 = vunpack.c.h.b16 %v1803
    %v1936 = vunpack.c.l.b16 %v1804
    %v1937 = vunpack.c.l.b16 %v1805
    %v1938 = vunpack.c.h.b16 %v1805
    %v1939 = vunpack.c.l.b16 %v1806
    %v1940 = vunpack.c.l.b16 %v1807
    %v1941 = vunpack.c.h.b16 %v1807
    %v1942 = vunpack.c.l.b16 %v1808
    %v1943 = vunpack.c.l.b16 %v1809
    %v1944 = vunpack.c.h.b16 %v1809
    %v1945 = vunpack.c.l.b16 %v1810
    %v1946 = vunpack.c.l.b16 %v1811
    %v1947 = vunpack.c.h.b16 %v1811
    %v1948 = vunpack.c.l.b16 %v1812
    %v1949 = vunpack.c.l.b16 %v1813
    %v1950 = vunpack.c.h.b16 %v1813
    %v1951 = vunpack.c.l.b16 %v1814
    %v1952 = vunpack.c.l.b16 %v1815
    %v1953 = vunpack.c.h.b16 %v1815
    %v1954 = vunpack.c.l.b16 %v1816
    %v1955 = vunpack.c.l.b16 %v1817
    %v1956 = vunpack.c.h.b16 %v1817
    %v1957 = vunpack.c.l.b16 %v1818
    %v1958 = vunpack.c.l.b16 %v1819
    %v1959 = vunpack.c.h.b16 %v1819
    %v1960 = vunpack.c.l.b16 %v1820
    %v1961 = vunpack.c.l.b16 %v1821
    %v1962 = vunpack.c.h.b16 %v1821
    %v1963 = vunpack.c.l.b16 %v1822
    %v1964 = vunpack.c.l.b16 %v1823
    %v1965 = vunpack.c.h.b16 %v1823
    %v1966 = vunpack.c.l.b16 %v1824
    %v1967 = vunpack.c.l.b16 %v1825
    %v1968 = vunpack.c.h.b16 %v1825
    %v1969 = vunpack.c.l.b16 %v1826
    %v1970 = vunpack.c.l.b16 %v1827
    %v1971 = vunpack.c.h.b16 %v1827
    %v1972 = vunpack.c.l.b16 %v1828
    %v1973 = vunpack.c.l.b16 %v1829
    %v1974 = vunpack.c.h.b16 %v1829
    %v1975 = vunpack.c.l.b16 %v1830
    %v1976 = vunpack.c.l.b16 %v1831
    %v1977 = vunpack.c.h.b16 %v1831
    %v1978 = vunpack.c.l.b16 %v1832
    %v1979 = vunpack.c.l.b16 %v1833
    %v1980 = vunpack.c.h.b16 %v1833
    %v1981 = vunpack.c.l.b16 %v1834
    %v1982 = vunpack.c.l.b16 %v1835
    %v1983 = vunpack.c.h.b16 %v1835
    %v1984 = vunpack.c.l.b16 %v1836
    %v1985 = vunpack.c.l.b16 %v1837
    %v1986 = vunpack.c.h.b16 %v1837
    %v1987 = vunpack.c.l.b16 %v1838
    %v1988 = vunpack.c.l.b16 %v1839
    %v1989 = vunpack.c.h.b16 %v1839
    %v1990 = vunpack.c.l.b16 %v1840
    %v1991 = vunpack.c.l.b16 %v1841
    %v1992 = vunpack.c.h.b16 %v1841
    %v1993 = vunpack.c.l.b16 %v1842
    %v1994 = vunpack.c.l.b16 %v1843
    %v1995 = vunpack.c.h.b16 %v1843
    %v1996 = vunpack.c.l.b16 %v1844
    %v1997 = vunpack.c.l.b16 %v1845
    %v1998 = vunpack.c.h.b16 %v1845
    %v1999 = vunpack.c.l.b16 %v1846
    %v2000 = vunpack.c.l.b16 %v1847
    %v2001 = vunpack.c.h.b16 %v1847
    %v2002 = vunpack.c.l.b16 %v1848
    %v2003 = vunpack.c.l.b16 %v1849
    %v2004 = vunpack.c.h.b16 %v1849
    %v2005 = vunpack.c.l.b16 %v1850
    %v2006 = vunpack.c.l.b16 %v1851
    %v2007 = vunpack.c.h.b16 %v1851
    %v2008 = vunpack.c.l.b16 %v1852
    %v2009 = vunpack.c.l.b16 %v1853
    %v2010 = vunpack.c.h.b16 %v1853
    %v2011 = vunpack.c.l.b16 %v1854
    %v2012 = vunpack.c.l.b16 %v1855
    %v2013 = vunpack.c.h.b16 %v1855
    %v2014 = vunpack.c.l.b16 %v1856
    %v2015 = vunpack.c.l.b16 %v1857
    %v2016 = vunpack.c.h.b16 %v1857
    %v2017 = vunpack.c.l.b16 %v1858
    %v2018 = vunpack.c.l.b16 %v1859
    %v2019 = vunpack.c.h.b16 %v1859
    %v2020 = vunpack.c.l.b16 %v1860
    %v2021 = vpack.c.b16 %v1928, %v1925
    %v2022 = vpack.c.b16 %v1929, %v1926
    %v2023 = vpack.c.b16 %v1930, %v1927
    %v2024 = vpack.c.b16 %v1934, %v1931
    %v2025 = vpack.c.b16 %v1935, %v1932
    %v2026 = vpack.c.b16 %v1936, %v1933
    %v2027 = vpack.c.b16 %v1940, %v1937
    %v2028 = vpack.c.b16 %v1941, %v1938
    %v2029 = vpack.c.b16 %v1942, %v1939
    %v2030 = vpack.c.b16 %v1946, %v1943
    %v2031 = vpack.c.b16 %v1947, %v1944
    %v2032 = vpack.c.b16 %v1948, %v1945
    %v2033 = vpack.c.b16 %v1952, %v1949
    %v2034 = vpack.c.b16 %v1953, %v1950
    %v2035 = vpack.c.b16 %v1954, %v1951
    %v2036 = vpack.c.b16 %v1958, %v1955
    %v2037 = vpack.c.b16 %v1959, %v1956
    %v2038 = vpack.c.b16 %v1960, %v1957
    %v2039 = vpack.c.b16 %v1964, %v1961
    %v2040 = vpack.c.b16 %v1965, %v1962
    %v2041 = vpack.c.b16 %v1966, %v1963
    %v2042 = vpack.c.b16 %v1970, %v1967
    %v2043 = vpack.c.b16 %v1971, %v1968
    %v2044 = vpack.c.b16 %v1972, %v1969
    %v2045 = vpack.c.b16 %v1976, %v1973
    %v2046 = vpack.c.b16 %v1977, %v1974
    %v2047 = vpack.c.b16 %v1978, %v1975
    %v2048 = vpack.c.b16 %v1982, %v1979
    %v2049 = vpack.c.b16 %v1983, %v1980
    %v2050 = vpack.c.b16 %v1984, %v1981
    %v2051 = vpack.c.b16 %v1988, %v1985
    %v2052 = vpack.c.b16 %v1989, %v1986
    %v2053 = vpack.c.b16 %v1990, %v1987
    %v2054 = vpack.c.b16 %v1994, %v1991
    %v2055 = vpack.c.b16 %v1995, %v1992
    %v2056 = vpack.c.b16 %v1996, %v1993
    %v2057 = vpack.c.b16 %v2000, %v1997
    %v2058 = vpack.c.b16 %v2001, %v1998
    %v2059 = vpack.c.b16 %v2002, %v1999
    %v2060 = vpack.c.b16 %v2006, %v2003
    %v2061 = vpack.c.b16 %v2007, %v2004
    %v2062 = vpack.c.b16 %v2008, %v2005
    %v2063 = vpack.c.b16 %v2012, %v2009
    %v2064 = vpack.c.b16 %v2013, %v2010
    %v2065 = vpack.c.b16 %v2014, %v2011
    %v2066 = vpack.c.b16 %v2018, %v2015
    %v2067 = vpack.c.b16 %v2019, %v2016
    %v2068 = vpack.c.b16 %v2020, %v2017
    %2117 = vmatprep.subr.bf16.mxu0 %v2022
    %2118 = vmatpush1.bf16.msra.mxu0 %v2021
    %2119 = vmatprep.subr.bf16.mxu0 %v2025
    %2120 = vmatpush1.bf16.msra.mxu0 %v2024
    %2121 = vmatprep.subr.bf16.mxu0 %v2028
    %2122 = vmatpush1.bf16.msra.mxu0 %v2027
    %2123 = vmatprep.subr.bf16.mxu0 %v2031
    %2124 = vmatpush1.bf16.msra.mxu0 %v2030
    %2125 = vmatprep.subr.bf16.mxu0 %v2034
    %2126 = vmatpush1.bf16.msra.mxu0 %v2033
    %2127 = vmatprep.subr.bf16.mxu0 %v2037
    %2128 = vmatpush1.bf16.msra.mxu0 %v2036
    %2129 = vmatprep.subr.bf16.mxu0 %v2040
    %2130 = vmatpush1.bf16.msra.mxu0 %v2039
    %2131 = vmatprep.subr.bf16.mxu0 %v2043
    %2132 = vmatpush1.bf16.msra.mxu0 %v2042
    %2133 = vmatprep.subr.bf16.mxu0 %v2046
    %2134 = vmatpush1.bf16.msra.mxu0 %v2045
    %2135 = vmatprep.subr.bf16.mxu0 %v2049
    %2136 = vmatpush1.bf16.msra.mxu0 %v2048
    %2137 = vmatprep.subr.bf16.mxu0 %v2052
    %2138 = vmatpush1.bf16.msra.mxu0 %v2051
    %2139 = vmatprep.subr.bf16.mxu0 %v2055
    %2140 = vmatpush1.bf16.msra.mxu0 %v2054
    %2141 = vmatprep.subr.bf16.mxu0 %v2058
    %2142 = vmatpush1.bf16.msra.mxu0 %v2057
    %2143 = vmatprep.subr.bf16.mxu0 %v2061
    %2144 = vmatpush1.bf16.msra.mxu0 %v2060
    %2145 = vmatprep.subr.bf16.mxu0 %v2064
    %2146 = vmatpush1.bf16.msra.mxu0 %v2063
    %2147 = vmatprep.subr.bf16.mxu0 %v2067
    %2148 = vmatpush1.bf16.msra.mxu0 %v2066
    %2149 = vmatprep.mubr.bf16.mxu0 %v1302
    %2150 = vmatmul.mubr.bf16.gmra.mrb[0].mxu0 %v1796
    %v2151 = vpop.f32.mrb[0].mxu0
    %v2152 = vadd.f32 %v927, %v2151
    %v2153 = vpop.f32.mrb[0].mxu0
    %v2154 = vadd.f32 %v931, %v2153
    %v2155 = vpop.f32.mrb[0].mxu0
    %v2156 = vpop.f32.mrb[0].mxu0
    %2157 = vdwg.mxu0
    %2158 = vmatprep.subr.bf16.mxu0 0
    %2159 = vmatpush1.bf16.msra.mxu0 %v2023
    %2160 = vmatprep.subr.bf16.mxu0 0
    %2161 = vmatpush1.bf16.msra.mxu0 %v2026
    %2162 = vmatprep.subr.bf16.mxu0 0
    %2163 = vmatpush1.bf16.msra.mxu0 %v2029
    %2164 = vmatprep.subr.bf16.mxu0 0
    %2165 = vmatpush1.bf16.msra.mxu0 %v2032
    %2166 = vmatprep.subr.bf16.mxu0 0
    %2167 = vmatpush1.bf16.msra.mxu0 %v2035
    %2168 = vmatprep.subr.bf16.mxu0 0
    %2169 = vmatpush1.bf16.msra.mxu0 %v2038
    %2170 = vmatprep.subr.bf16.mxu0 0
    %2171 = vmatpush1.bf16.msra.mxu0 %v2041
    %2172 = vmatprep.subr.bf16.mxu0 0
    %2173 = vmatpush1.bf16.msra.mxu0 %v2044
    %2174 = vmatprep.subr.bf16.mxu0 0
    %2175 = vmatpush1.bf16.msra.mxu0 %v2047
    %2176 = vmatprep.subr.bf16.mxu0 0
    %2177 = vmatpush1.bf16.msra.mxu0 %v2050
    %2178 = vmatprep.subr.bf16.mxu0 0
    %2179 = vmatpush1.bf16.msra.mxu0 %v2053
    %2180 = vmatprep.subr.bf16.mxu0 0
    %2181 = vmatpush1.bf16.msra.mxu0 %v2056
    %2182 = vmatprep.subr.bf16.mxu0 0
    %2183 = vmatpush1.bf16.msra.mxu0 %v2059
    %2184 = vmatprep.subr.bf16.mxu0 0
    %2185 = vmatpush1.bf16.msra.mxu0 %v2062
    %2186 = vmatprep.subr.bf16.mxu0 0
    %2187 = vmatpush1.bf16.msra.mxu0 %v2065
    %2188 = vmatprep.subr.bf16.mxu0 0
    %2189 = vmatpush1.bf16.msra.mxu0 %v2068
    %2190 = vmatprep.mubr.bf16.mxu0 %v1302
    %2191 = vmatmul.mubr.bf16.gmra.mrb[0].mxu0 %v1796
    %v2192 = vpop.f32.mrb[0].mxu0
    %v2193 = vadd.f32 %v935, %v2192
    %v2194 = vpop.f32.mrb[0].mxu0
    %v2195 = vpop.f32.mrb[0].mxu0
    %v2196 = vpop.f32.mrb[0].mxu0
    %2197 = vdwg.mxu0
    %v2198 = vxor.u32 %v2152, 2147483648
    %v2199 = vmul.f32 %v2198, 1.442695
    %v2200 = vpow.pop %v2199
    %v2201 = vadd.f32 %v2200, 1.0
    %v2202 = vrcp.pop %v2201
    %v2203 = vmul.f32 1.0, %v2202
    %v2204 = vxor.u32 %v2154, 2147483648
    %v2205 = vmul.f32 %v2204, 1.442695
    %v2206 = vpow.pop %v2205
    %v2207 = vadd.f32 %v2206, 1.0
    %v2208 = vrcp.pop %v2207
    %v2209 = vmul.f32 1.0, %v2208
    %v2210 = vadd.f32 %v1766, %v1292
    %v2211 = vmul.f32 %v2203, %v2210
    %v2212 = vadd.f32 %v2193, %v2211
    %v2213 = vtanh.pop %v2212
    %v2214 = vsub.f32 1.0, %v2209
    %v2215 = vmul.f32 %v2214, %v2213
    %v2216 = vmul.f32 %v2209, %v1301
    %v2217 = vadd.f32 %v2215, %v2216
    %v2218 = vpack.c.bf16 %v2217, %v2217
    %s2219 = scalar_lea.vmem [#allocation3], 4
    %2220 = vst [vmem:[%s2219] sm:$0xf] %v2218
    %v2221 = vld [vmem:[#allocation9] sm:$0xff]
    %v2222 = vld [vmem:[#allocation9 + $0x8] sm:$0xff]
    %v2223 = vld [vmem:[#allocation9 + $0x10] sm:$0xff]
    %v2224 = vld [vmem:[#allocation9 + $0x18] sm:$0xff]
    %v2225 = vld [vmem:[#allocation9 + $0x20] sm:$0xff]
    %v2226 = vld [vmem:[#allocation9 + $0x28] sm:$0xff]
    %v2227 = vld [vmem:[#allocation9 + $0x30] sm:$0xff]
    %v2228 = vld [vmem:[#allocation9 + $0x38] sm:$0xff]
    %v2229 = vld [vmem:[#allocation9 + $0x40] sm:$0xff]
    %v2230 = vld [vmem:[#allocation9 + $0x48] sm:$0xff]
    %v2231 = vld [vmem:[#allocation9 + $0x50] sm:$0xff]
    %v2232 = vld [vmem:[#allocation9 + $0x58] sm:$0xff]
    %v2233 = vld [vmem:[#allocation9 + $0x60] sm:$0xff]
    %v2234 = vld [vmem:[#allocation9 + $0x68] sm:$0xff]
    %v2235 = vld [vmem:[#allocation9 + $0x70] sm:$0xff]
    %v2236 = vld [vmem:[#allocation9 + $0x78] sm:$0xff]
    %v2237 = vld [vmem:[#allocation9 + $0x80] sm:$0xff]
    %v2238 = vld [vmem:[#allocation9 + $0x88] sm:$0xff]
    %v2239 = vld [vmem:[#allocation9 + $0x90] sm:$0xff]
    %v2240 = vld [vmem:[#allocation9 + $0x98] sm:$0xff]
    %v2241 = vld [vmem:[#allocation9 + $0xa0] sm:$0xff]
    %v2242 = vld [vmem:[#allocation9 + $0xa8] sm:$0xff]
    %v2243 = vld [vmem:[#allocation9 + $0xb0] sm:$0xff]
    %v2244 = vld [vmem:[#allocation9 + $0xb8] sm:$0xff]
    %v2245 = vld [vmem:[#allocation9 + $0xc0] sm:$0xff]
    %v2246 = vld [vmem:[#allocation9 + $0xc8] sm:$0xff]
    %v2247 = vld [vmem:[#allocation9 + $0xd0] sm:$0xff]
    %v2248 = vld [vmem:[#allocation9 + $0xd8] sm:$0xff]
    %v2249 = vld [vmem:[#allocation9 + $0xe0] sm:$0xff]
    %v2250 = vld [vmem:[#allocation9 + $0xe8] sm:$0xff]
    %v2251 = vld [vmem:[#allocation9 + $0xf0] sm:$0xff]
    %v2252 = vld [vmem:[#allocation9 + $0xf8] sm:$0xff]
    %v2253 = vld [vmem:[#allocation9 + $0x100] sm:$0xff]
    %v2254 = vld [vmem:[#allocation9 + $0x108] sm:$0xff]
    %v2255 = vld [vmem:[#allocation9 + $0x110] sm:$0xff]
    %v2256 = vld [vmem:[#allocation9 + $0x118] sm:$0xff]
    %v2257 = vld [vmem:[#allocation9 + $0x120] sm:$0xff]
    %v2258 = vld [vmem:[#allocation9 + $0x128] sm:$0xff]
    %v2259 = vld [vmem:[#allocation9 + $0x130] sm:$0xff]
    %v2260 = vld [vmem:[#allocation9 + $0x138] sm:$0xff]
    %v2261 = vld [vmem:[#allocation9 + $0x140] sm:$0xff]
    %v2262 = vld [vmem:[#allocation9 + $0x148] sm:$0xff]
    %v2263 = vld [vmem:[#allocation9 + $0x150] sm:$0xff]
    %v2264 = vld [vmem:[#allocation9 + $0x158] sm:$0xff]
    %v2265 = vld [vmem:[#allocation9 + $0x160] sm:$0xff]
    %v2266 = vld [vmem:[#allocation9 + $0x168] sm:$0xff]
    %v2267 = vld [vmem:[#allocation9 + $0x170] sm:$0xff]
    %v2268 = vld [vmem:[#allocation9 + $0x178] sm:$0xff]
    %v2269 = vld [vmem:[#allocation9 + $0x180] sm:$0xff]
    %v2270 = vld [vmem:[#allocation9 + $0x188] sm:$0xff]
    %v2271 = vld [vmem:[#allocation9 + $0x190] sm:$0xff]
    %v2272 = vld [vmem:[#allocation9 + $0x198] sm:$0xff]
    %v2273 = vld [vmem:[#allocation9 + $0x1a0] sm:$0xff]
    %v2274 = vld [vmem:[#allocation9 + $0x1a8] sm:$0xff]
    %v2275 = vld [vmem:[#allocation9 + $0x1b0] sm:$0xff]
    %v2276 = vld [vmem:[#allocation9 + $0x1b8] sm:$0xff]
    %v2277 = vld [vmem:[#allocation9 + $0x1c0] sm:$0xff]
    %v2278 = vld [vmem:[#allocation9 + $0x1c8] sm:$0xff]
    %v2279 = vld [vmem:[#allocation9 + $0x1d0] sm:$0xff]
    %v2280 = vld [vmem:[#allocation9 + $0x1d8] sm:$0xff]
    %v2281 = vld [vmem:[#allocation9 + $0x1e0] sm:$0xff]
    %v2282 = vld [vmem:[#allocation9 + $0x1e8] sm:$0xff]
    %v2283 = vld [vmem:[#allocation9 + $0x1f0] sm:$0xff]
    %v2284 = vld [vmem:[#allocation9 + $0x1f8] sm:$0xff]
    %v2349 = vunpack.c.l.b16 %v2221
    %v2350 = vunpack.c.h.b16 %v2221
    %v2351 = vunpack.c.l.b16 %v2222
    %v2352 = vunpack.c.h.b16 %v2222
    %v2353 = vunpack.c.l.b16 %v2223
    %v2354 = vunpack.c.h.b16 %v2223
    %v2355 = vunpack.c.l.b16 %v2224
    %v2356 = vunpack.c.h.b16 %v2224
    %v2357 = vunpack.c.l.b16 %v2225
    %v2358 = vunpack.c.h.b16 %v2225
    %v2359 = vunpack.c.l.b16 %v2226
    %v2360 = vunpack.c.h.b16 %v2226
    %v2361 = vunpack.c.l.b16 %v2227
    %v2362 = vunpack.c.h.b16 %v2227
    %v2363 = vunpack.c.l.b16 %v2228
    %v2364 = vunpack.c.h.b16 %v2228
    %v2365 = vunpack.c.l.b16 %v2229
    %v2366 = vunpack.c.h.b16 %v2229
    %v2367 = vunpack.c.l.b16 %v2230
    %v2368 = vunpack.c.h.b16 %v2230
    %v2369 = vunpack.c.l.b16 %v2231
    %v2370 = vunpack.c.h.b16 %v2231
    %v2371 = vunpack.c.l.b16 %v2232
    %v2372 = vunpack.c.h.b16 %v2232
    %v2373 = vunpack.c.l.b16 %v2233
    %v2374 = vunpack.c.h.b16 %v2233
    %v2375 = vunpack.c.l.b16 %v2234
    %v2376 = vunpack.c.h.b16 %v2234
    %v2377 = vunpack.c.l.b16 %v2235
    %v2378 = vunpack.c.h.b16 %v2235
    %v2379 = vunpack.c.l.b16 %v2236
    %v2380 = vunpack.c.h.b16 %v2236
    %v2381 = vunpack.c.l.b16 %v2237
    %v2382 = vunpack.c.h.b16 %v2237
    %v2383 = vunpack.c.l.b16 %v2238
    %v2384 = vunpack.c.h.b16 %v2238
    %v2385 = vunpack.c.l.b16 %v2239
    %v2386 = vunpack.c.h.b16 %v2239
    %v2387 = vunpack.c.l.b16 %v2240
    %v2388 = vunpack.c.h.b16 %v2240
    %v2389 = vunpack.c.l.b16 %v2241
    %v2390 = vunpack.c.h.b16 %v2241
    %v2391 = vunpack.c.l.b16 %v2242
    %v2392 = vunpack.c.h.b16 %v2242
    %v2393 = vunpack.c.l.b16 %v2243
    %v2394 = vunpack.c.h.b16 %v2243
    %v2395 = vunpack.c.l.b16 %v2244
    %v2396 = vunpack.c.h.b16 %v2244
    %v2397 = vunpack.c.l.b16 %v2245
    %v2398 = vunpack.c.h.b16 %v2245
    %v2399 = vunpack.c.l.b16 %v2246
    %v2400 = vunpack.c.h.b16 %v2246
    %v2401 = vunpack.c.l.b16 %v2247
    %v2402 = vunpack.c.h.b16 %v2247
    %v2403 = vunpack.c.l.b16 %v2248
    %v2404 = vunpack.c.h.b16 %v2248
    %v2405 = vunpack.c.l.b16 %v2249
    %v2406 = vunpack.c.h.b16 %v2249
    %v2407 = vunpack.c.l.b16 %v2250
    %v2408 = vunpack.c.h.b16 %v2250
    %v2409 = vunpack.c.l.b16 %v2251
    %v2410 = vunpack.c.h.b16 %v2251
    %v2411 = vunpack.c.l.b16 %v2252
    %v2412 = vunpack.c.h.b16 %v2252
    %v2413 = vunpack.c.l.b16 %v2253
    %v2414 = vunpack.c.h.b16 %v2253
    %v2415 = vunpack.c.l.b16 %v2254
    %v2416 = vunpack.c.h.b16 %v2254
    %v2417 = vunpack.c.l.b16 %v2255
    %v2418 = vunpack.c.h.b16 %v2255
    %v2419 = vunpack.c.l.b16 %v2256
    %v2420 = vunpack.c.h.b16 %v2256
    %v2421 = vunpack.c.l.b16 %v2257
    %v2422 = vunpack.c.h.b16 %v2257
    %v2423 = vunpack.c.l.b16 %v2258
    %v2424 = vunpack.c.h.b16 %v2258
    %v2425 = vunpack.c.l.b16 %v2259
    %v2426 = vunpack.c.h.b16 %v2259
    %v2427 = vunpack.c.l.b16 %v2260
    %v2428 = vunpack.c.h.b16 %v2260
    %v2429 = vunpack.c.l.b16 %v2261
    %v2430 = vunpack.c.h.b16 %v2261
    %v2431 = vunpack.c.l.b16 %v2262
    %v2432 = vunpack.c.h.b16 %v2262
    %v2433 = vunpack.c.l.b16 %v2263
    %v2434 = vunpack.c.h.b16 %v2263
    %v2435 = vunpack.c.l.b16 %v2264
    %v2436 = vunpack.c.h.b16 %v2264
    %v2437 = vunpack.c.l.b16 %v2265
    %v2438 = vunpack.c.h.b16 %v2265
    %v2439 = vunpack.c.l.b16 %v2266
    %v2440 = vunpack.c.h.b16 %v2266
    %v2441 = vunpack.c.l.b16 %v2267
    %v2442 = vunpack.c.h.b16 %v2267
    %v2443 = vunpack.c.l.b16 %v2268
    %v2444 = vunpack.c.h.b16 %v2268
    %v2445 = vunpack.c.l.b16 %v2269
    %v2446 = vunpack.c.h.b16 %v2269
    %v2447 = vunpack.c.l.b16 %v2270
    %v2448 = vunpack.c.h.b16 %v2270
    %v2449 = vunpack.c.l.b16 %v2271
    %v2450 = vunpack.c.h.b16 %v2271
    %v2451 = vunpack.c.l.b16 %v2272
    %v2452 = vunpack.c.h.b16 %v2272
    %v2453 = vunpack.c.l.b16 %v2273
    %v2454 = vunpack.c.h.b16 %v2273
    %v2455 = vunpack.c.l.b16 %v2274
    %v2456 = vunpack.c.h.b16 %v2274
    %v2457 = vunpack.c.l.b16 %v2275
    %v2458 = vunpack.c.h.b16 %v2275
    %v2459 = vunpack.c.l.b16 %v2276
    %v2460 = vunpack.c.h.b16 %v2276
    %v2461 = vunpack.c.l.b16 %v2277
    %v2462 = vunpack.c.h.b16 %v2277
    %v2463 = vunpack.c.l.b16 %v2278
    %v2464 = vunpack.c.h.b16 %v2278
    %v2465 = vunpack.c.l.b16 %v2279
    %v2466 = vunpack.c.h.b16 %v2279
    %v2467 = vunpack.c.l.b16 %v2280
    %v2468 = vunpack.c.h.b16 %v2280
    %v2469 = vunpack.c.l.b16 %v2281
    %v2470 = vunpack.c.h.b16 %v2281
    %v2471 = vunpack.c.l.b16 %v2282
    %v2472 = vunpack.c.h.b16 %v2282
    %v2473 = vunpack.c.l.b16 %v2283
    %v2474 = vunpack.c.h.b16 %v2283
    %v2475 = vunpack.c.l.b16 %v2284
    %v2476 = vunpack.c.h.b16 %v2284
    %v2477 = vpack.c.b16 %v2353, %v2349
    %v2478 = vpack.c.b16 %v2354, %v2350
    %v2479 = vpack.c.b16 %v2355, %v2351
    %v2480 = vpack.c.b16 %v2356, %v2352
    %v2481 = vpack.c.b16 %v2361, %v2357
    %v2482 = vpack.c.b16 %v2362, %v2358
    %v2483 = vpack.c.b16 %v2363, %v2359
    %v2484 = vpack.c.b16 %v2364, %v2360
    %v2485 = vpack.c.b16 %v2369, %v2365
    %v2486 = vpack.c.b16 %v2370, %v2366
    %v2487 = vpack.c.b16 %v2371, %v2367
    %v2488 = vpack.c.b16 %v2372, %v2368
    %v2489 = vpack.c.b16 %v2377, %v2373
    %v2490 = vpack.c.b16 %v2378, %v2374
    %v2491 = vpack.c.b16 %v2379, %v2375
    %v2492 = vpack.c.b16 %v2380, %v2376
    %v2493 = vpack.c.b16 %v2385, %v2381
    %v2494 = vpack.c.b16 %v2386, %v2382
    %v2495 = vpack.c.b16 %v2387, %v2383
    %v2496 = vpack.c.b16 %v2388, %v2384
    %v2497 = vpack.c.b16 %v2393, %v2389
    %v2498 = vpack.c.b16 %v2394, %v2390
    %v2499 = vpack.c.b16 %v2395, %v2391
    %v2500 = vpack.c.b16 %v2396, %v2392
    %v2501 = vpack.c.b16 %v2401, %v2397
    %v2502 = vpack.c.b16 %v2402, %v2398
    %v2503 = vpack.c.b16 %v2403, %v2399
    %v2504 = vpack.c.b16 %v2404, %v2400
    %v2505 = vpack.c.b16 %v2409, %v2405
    %v2506 = vpack.c.b16 %v2410, %v2406
    %v2507 = vpack.c.b16 %v2411, %v2407
    %v2508 = vpack.c.b16 %v2412, %v2408
    %v2509 = vpack.c.b16 %v2417, %v2413
    %v2510 = vpack.c.b16 %v2418, %v2414
    %v2511 = vpack.c.b16 %v2419, %v2415
    %v2512 = vpack.c.b16 %v2420, %v2416
    %v2513 = vpack.c.b16 %v2425, %v2421
    %v2514 = vpack.c.b16 %v2426, %v2422
    %v2515 = vpack.c.b16 %v2427, %v2423
    %v2516 = vpack.c.b16 %v2428, %v2424
    %v2517 = vpack.c.b16 %v2433, %v2429
    %v2518 = vpack.c.b16 %v2434, %v2430
    %v2519 = vpack.c.b16 %v2435, %v2431
    %v2520 = vpack.c.b16 %v2436, %v2432
    %v2521 = vpack.c.b16 %v2441, %v2437
    %v2522 = vpack.c.b16 %v2442, %v2438
    %v2523 = vpack.c.b16 %v2443, %v2439
    %v2524 = vpack.c.b16 %v2444, %v2440
    %v2525 = vpack.c.b16 %v2449, %v2445
    %v2526 = vpack.c.b16 %v2450, %v2446
    %v2527 = vpack.c.b16 %v2451, %v2447
    %v2528 = vpack.c.b16 %v2452, %v2448
    %v2529 = vpack.c.b16 %v2457, %v2453
    %v2530 = vpack.c.b16 %v2458, %v2454
    %v2531 = vpack.c.b16 %v2459, %v2455
    %v2532 = vpack.c.b16 %v2460, %v2456
    %v2533 = vpack.c.b16 %v2465, %v2461
    %v2534 = vpack.c.b16 %v2466, %v2462
    %v2535 = vpack.c.b16 %v2467, %v2463
    %v2536 = vpack.c.b16 %v2468, %v2464
    %v2537 = vpack.c.b16 %v2473, %v2469
    %v2538 = vpack.c.b16 %v2474, %v2470
    %v2539 = vpack.c.b16 %v2475, %v2471
    %v2540 = vpack.c.b16 %v2476, %v2472
    %2605 = vmatprep.subr.bf16.mxu0 %v2478
    %2606 = vmatpush1.bf16.msra.mxu0 %v2477
    %2607 = vmatprep.subr.bf16.mxu0 %v2482
    %2608 = vmatpush1.bf16.msra.mxu0 %v2481
    %2609 = vmatprep.subr.bf16.mxu0 %v2486
    %2610 = vmatpush1.bf16.msra.mxu0 %v2485
    %2611 = vmatprep.subr.bf16.mxu0 %v2490
    %2612 = vmatpush1.bf16.msra.mxu0 %v2489
    %2613 = vmatprep.subr.bf16.mxu0 %v2494
    %2614 = vmatpush1.bf16.msra.mxu0 %v2493
    %2615 = vmatprep.subr.bf16.mxu0 %v2498
    %2616 = vmatpush1.bf16.msra.mxu0 %v2497
    %2617 = vmatprep.subr.bf16.mxu0 %v2502
    %2618 = vmatpush1.bf16.msra.mxu0 %v2501
    %2619 = vmatprep.subr.bf16.mxu0 %v2506
    %2620 = vmatpush1.bf16.msra.mxu0 %v2505
    %2621 = vmatprep.subr.bf16.mxu0 %v2510
    %2622 = vmatpush1.bf16.msra.mxu0 %v2509
    %2623 = vmatprep.subr.bf16.mxu0 %v2514
    %2624 = vmatpush1.bf16.msra.mxu0 %v2513
    %2625 = vmatprep.subr.bf16.mxu0 %v2518
    %2626 = vmatpush1.bf16.msra.mxu0 %v2517
    %2627 = vmatprep.subr.bf16.mxu0 %v2522
    %2628 = vmatpush1.bf16.msra.mxu0 %v2521
    %2629 = vmatprep.subr.bf16.mxu0 %v2526
    %2630 = vmatpush1.bf16.msra.mxu0 %v2525
    %2631 = vmatprep.subr.bf16.mxu0 %v2530
    %2632 = vmatpush1.bf16.msra.mxu0 %v2529
    %2633 = vmatprep.subr.bf16.mxu0 %v2534
    %2634 = vmatpush1.bf16.msra.mxu0 %v2533
    %2635 = vmatprep.subr.bf16.mxu0 %v2538
    %2636 = vmatpush1.bf16.msra.mxu0 %v2537
    %2637 = vmatprep.mubr.bf16.mxu0 %v2218
    %2638 = vmatmul.mubr.bf16.gmra.mrb[0].mxu0 %v1796
    %v2639 = vpop.f32.mrb[0].mxu0
    %v2640 = vadd.f32 0.0, %v2639
    %v2641 = vpop.f32.mrb[0].mxu0
    %v2642 = vadd.f32 0.0, %v2641
    %v2643 = vpop.f32.mrb[0].mxu0
    %v2644 = vpop.f32.mrb[0].mxu0
    %2645 = vdwg.mxu0
    %2646 = vmatprep.subr.bf16.mxu0 %v2480
    %2647 = vmatpush1.bf16.msra.mxu0 %v2479
    %2648 = vmatprep.subr.bf16.mxu0 %v2484
    %2649 = vmatpush1.bf16.msra.mxu0 %v2483
    %2650 = vmatprep.subr.bf16.mxu0 %v2488
    %2651 = vmatpush1.bf16.msra.mxu0 %v2487
    %2652 = vmatprep.subr.bf16.mxu0 %v2492
    %2653 = vmatpush1.bf16.msra.mxu0 %v2491
    %2654 = vmatprep.subr.bf16.mxu0 %v2496
    %2655 = vmatpush1.bf16.msra.mxu0 %v2495
    %2656 = vmatprep.subr.bf16.mxu0 %v2500
    %2657 = vmatpush1.bf16.msra.mxu0 %v2499
    %2658 = vmatprep.subr.bf16.mxu0 %v2504
    %2659 = vmatpush1.bf16.msra.mxu0 %v2503
    %2660 = vmatprep.subr.bf16.mxu0 %v2508
    %2661 = vmatpush1.bf16.msra.mxu0 %v2507
    %2662 = vmatprep.subr.bf16.mxu0 %v2512
    %2663 = vmatpush1.bf16.msra.mxu0 %v2511
    %2664 = vmatprep.subr.bf16.mxu0 %v2516
    %2665 = vmatpush1.bf16.msra.mxu0 %v2515
    %2666 = vmatprep.subr.bf16.mxu0 %v2520
    %2667 = vmatpush1.bf16.msra.mxu0 %v2519
    %2668 = vmatprep.subr.bf16.mxu0 %v2524
    %2669 = vmatpush1.bf16.msra.mxu0 %v2523
    %2670 = vmatprep.subr.bf16.mxu0 %v2528
    %2671 = vmatpush1.bf16.msra.mxu0 %v2527
    %2672 = vmatprep.subr.bf16.mxu0 %v2532
    %2673 = vmatpush1.bf16.msra.mxu0 %v2531
    %2674 = vmatprep.subr.bf16.mxu0 %v2536
    %2675 = vmatpush1.bf16.msra.mxu0 %v2535
    %2676 = vmatprep.subr.bf16.mxu0 %v2540
    %2677 = vmatpush1.bf16.msra.mxu0 %v2539
    %2678 = vmatprep.mubr.bf16.mxu0 %v2218
    %2679 = vmatmul.mubr.bf16.gmra.mrb[0].mxu0 %v1796
    %v2680 = vpop.f32.mrb[0].mxu0
    %v2681 = vadd.f32 0.0, %v2680
    %v2682 = vpop.f32.mrb[0].mxu0
    %v2683 = vadd.f32 0.0, %v2682
    %v2684 = vpop.f32.mrb[0].mxu0
    %v2685 = vpop.f32.mrb[0].mxu0
    %2686 = vdwg.mxu0
    %s2687 = scalar_lea.vmem [#allocation2], 48
    %v2688 = vld [vmem:[%s2687] sm:$0xff]
    %v2689 = vld [vmem:[%s2687 + $0x8] sm:$0xff]
    %v2690 = vld [vmem:[%s2687 + $0x10] sm:$0xff]
    %v2691 = vadd.f32 %v2688, %v2640
    %v2692 = vxor.u32 %v2691, 2147483648
    %v2693 = vmul.f32 %v2692, 1.442695
    %v2694 = vpow.pop %v2693
    %v2695 = vadd.f32 %v2694, 1.0
    %v2696 = vrcp.pop %v2695
    %v2697 = vmul.f32 1.0, %v2696
    %v2698 = vadd.f32 %v2689, %v2642
    %v2699 = vxor.u32 %v2698, 2147483648
    %v2700 = vmul.f32 %v2699, 1.442695
    %v2701 = vpow.pop %v2700
    %v2702 = vadd.f32 %v2701, 1.0
    %v2703 = vrcp.pop %v2702
    %v2704 = vmul.f32 1.0, %v2703
    %v2705 = vadd.f32 %v2681, %v848
    %v2706 = vmul.f32 %v2697, %v2705
    %v2707 = vadd.f32 %v2690, %v2706
    %v2708 = vtanh.pop %v2707
    %v2709 = vsub.f32 1.0, %v2704
    %v2710 = vmul.f32 %v2709, %v2708
    %v2711 = vmul.f32 %v2704, %v1795
    %v2712 = vadd.f32 %v2710, %v2711
    %v2713 = vpack.c.bf16 %v2712, %v2712
    %v2714 = vld [vmem:[#allocation10] sm:$0xff]
    %v2715 = vld [vmem:[#allocation10 + $0x8] sm:$0xf]
    %v2716 = vld [vmem:[#allocation10 + $0xc] sm:$0xff]
    %v2717 = vld [vmem:[#allocation10 + $0x14] sm:$0xf]
    %v2718 = vld [vmem:[#allocation10 + $0x18] sm:$0xff]
    %v2719 = vld [vmem:[#allocation10 + $0x20] sm:$0xf]
    %v2720 = vld [vmem:[#allocation10 + $0x24] sm:$0xff]
    %v2721 = vld [vmem:[#allocation10 + $0x2c] sm:$0xf]
    %v2722 = vld [vmem:[#allocation10 + $0x30] sm:$0xff]
    %v2723 = vld [vmem:[#allocation10 + $0x38] sm:$0xf]
    %v2724 = vld [vmem:[#allocation10 + $0x3c] sm:$0xff]
    %v2725 = vld [vmem:[#allocation10 + $0x44] sm:$0xf]
    %v2726 = vld [vmem:[#allocation10 + $0x48] sm:$0xff]
    %v2727 = vld [vmem:[#allocation10 + $0x50] sm:$0xf]
    %v2728 = vld [vmem:[#allocation10 + $0x54] sm:$0xff]
    %v2729 = vld [vmem:[#allocation10 + $0x5c] sm:$0xf]
    %v2730 = vld [vmem:[#allocation10 + $0x60] sm:$0xff]
    %v2731 = vld [vmem:[#allocation10 + $0x68] sm:$0xf]
    %v2732 = vld [vmem:[#allocation10 + $0x6c] sm:$0xff]
    %v2733 = vld [vmem:[#allocation10 + $0x74] sm:$0xf]
    %v2734 = vld [vmem:[#allocation10 + $0x78] sm:$0xff]
    %v2735 = vld [vmem:[#allocation10 + $0x80] sm:$0xf]
    %v2736 = vld [vmem:[#allocation10 + $0x84] sm:$0xff]
    %v2737 = vld [vmem:[#allocation10 + $0x8c] sm:$0xf]
    %v2738 = vld [vmem:[#allocation10 + $0x90] sm:$0xff]
    %v2739 = vld [vmem:[#allocation10 + $0x98] sm:$0xf]
    %v2740 = vld [vmem:[#allocation10 + $0x9c] sm:$0xff]
    %v2741 = vld [vmem:[#allocation10 + $0xa4] sm:$0xf]
    %v2742 = vld [vmem:[#allocation10 + $0xa8] sm:$0xff]
    %v2743 = vld [vmem:[#allocation10 + $0xb0] sm:$0xf]
    %v2744 = vld [vmem:[#allocation10 + $0xb4] sm:$0xff]
    %v2745 = vld [vmem:[#allocation10 + $0xbc] sm:$0xf]
    %v2746 = vld [vmem:[#allocation10 + $0xc0] sm:$0xff]
    %v2747 = vld [vmem:[#allocation10 + $0xc8] sm:$0xf]
    %v2748 = vld [vmem:[#allocation10 + $0xcc] sm:$0xff]
    %v2749 = vld [vmem:[#allocation10 + $0xd4] sm:$0xf]
    %v2750 = vld [vmem:[#allocation10 + $0xd8] sm:$0xff]
    %v2751 = vld [vmem:[#allocation10 + $0xe0] sm:$0xf]
    %v2752 = vld [vmem:[#allocation10 + $0xe4] sm:$0xff]
    %v2753 = vld [vmem:[#allocation10 + $0xec] sm:$0xf]
    %v2754 = vld [vmem:[#allocation10 + $0xf0] sm:$0xff]
    %v2755 = vld [vmem:[#allocation10 + $0xf8] sm:$0xf]
    %v2756 = vld [vmem:[#allocation10 + $0xfc] sm:$0xff]
    %v2757 = vld [vmem:[#allocation10 + $0x104] sm:$0xf]
    %v2758 = vld [vmem:[#allocation10 + $0x108] sm:$0xff]
    %v2759 = vld [vmem:[#allocation10 + $0x110] sm:$0xf]
    %v2760 = vld [vmem:[#allocation10 + $0x114] sm:$0xff]
    %v2761 = vld [vmem:[#allocation10 + $0x11c] sm:$0xf]
    %v2762 = vld [vmem:[#allocation10 + $0x120] sm:$0xff]
    %v2763 = vld [vmem:[#allocation10 + $0x128] sm:$0xf]
    %v2764 = vld [vmem:[#allocation10 + $0x12c] sm:$0xff]
    %v2765 = vld [vmem:[#allocation10 + $0x134] sm:$0xf]
    %v2766 = vld [vmem:[#allocation10 + $0x138] sm:$0xff]
    %v2767 = vld [vmem:[#allocation10 + $0x140] sm:$0xf]
    %v2768 = vld [vmem:[#allocation10 + $0x144] sm:$0xff]
    %v2769 = vld [vmem:[#allocation10 + $0x14c] sm:$0xf]
    %v2770 = vld [vmem:[#allocation10 + $0x150] sm:$0xff]
    %v2771 = vld [vmem:[#allocation10 + $0x158] sm:$0xf]
    %v2772 = vld [vmem:[#allocation10 + $0x15c] sm:$0xff]
    %v2773 = vld [vmem:[#allocation10 + $0x164] sm:$0xf]
    %v2774 = vld [vmem:[#allocation10 + $0x168] sm:$0xff]
    %v2775 = vld [vmem:[#allocation10 + $0x170] sm:$0xf]
    %v2776 = vld [vmem:[#allocation10 + $0x174] sm:$0xff]
    %v2777 = vld [vmem:[#allocation10 + $0x17c] sm:$0xf]
    %v2842 = vunpack.c.l.b16 %v2714
    %v2843 = vunpack.c.h.b16 %v2714
    %v2844 = vunpack.c.l.b16 %v2715
    %v2845 = vunpack.c.l.b16 %v2716
    %v2846 = vunpack.c.h.b16 %v2716
    %v2847 = vunpack.c.l.b16 %v2717
    %v2848 = vunpack.c.l.b16 %v2718
    %v2849 = vunpack.c.h.b16 %v2718
    %v2850 = vunpack.c.l.b16 %v2719
    %v2851 = vunpack.c.l.b16 %v2720
    %v2852 = vunpack.c.h.b16 %v2720
    %v2853 = vunpack.c.l.b16 %v2721
    %v2854 = vunpack.c.l.b16 %v2722
    %v2855 = vunpack.c.h.b16 %v2722
    %v2856 = vunpack.c.l.b16 %v2723
    %v2857 = vunpack.c.l.b16 %v2724
    %v2858 = vunpack.c.h.b16 %v2724
    %v2859 = vunpack.c.l.b16 %v2725
    %v2860 = vunpack.c.l.b16 %v2726
    %v2861 = vunpack.c.h.b16 %v2726
    %v2862 = vunpack.c.l.b16 %v2727
    %v2863 = vunpack.c.l.b16 %v2728
    %v2864 = vunpack.c.h.b16 %v2728
    %v2865 = vunpack.c.l.b16 %v2729
    %v2866 = vunpack.c.l.b16 %v2730
    %v2867 = vunpack.c.h.b16 %v2730
    %v2868 = vunpack.c.l.b16 %v2731
    %v2869 = vunpack.c.l.b16 %v2732
    %v2870 = vunpack.c.h.b16 %v2732
    %v2871 = vunpack.c.l.b16 %v2733
    %v2872 = vunpack.c.l.b16 %v2734
    %v2873 = vunpack.c.h.b16 %v2734
    %v2874 = vunpack.c.l.b16 %v2735
    %v2875 = vunpack.c.l.b16 %v2736
    %v2876 = vunpack.c.h.b16 %v2736
    %v2877 = vunpack.c.l.b16 %v2737
    %v2878 = vunpack.c.l.b16 %v2738
    %v2879 = vunpack.c.h.b16 %v2738
    %v2880 = vunpack.c.l.b16 %v2739
    %v2881 = vunpack.c.l.b16 %v2740
    %v2882 = vunpack.c.h.b16 %v2740
    %v2883 = vunpack.c.l.b16 %v2741
    %v2884 = vunpack.c.l.b16 %v2742
    %v2885 = vunpack.c.h.b16 %v2742
    %v2886 = vunpack.c.l.b16 %v2743
    %v2887 = vunpack.c.l.b16 %v2744
    %v2888 = vunpack.c.h.b16 %v2744
    %v2889 = vunpack.c.l.b16 %v2745
    %v2890 = vunpack.c.l.b16 %v2746
    %v2891 = vunpack.c.h.b16 %v2746
    %v2892 = vunpack.c.l.b16 %v2747
    %v2893 = vunpack.c.l.b16 %v2748
    %v2894 = vunpack.c.h.b16 %v2748
    %v2895 = vunpack.c.l.b16 %v2749
    %v2896 = vunpack.c.l.b16 %v2750
    %v2897 = vunpack.c.h.b16 %v2750
    %v2898 = vunpack.c.l.b16 %v2751
    %v2899 = vunpack.c.l.b16 %v2752
    %v2900 = vunpack.c.h.b16 %v2752
    %v2901 = vunpack.c.l.b16 %v2753
    %v2902 = vunpack.c.l.b16 %v2754
    %v2903 = vunpack.c.h.b16 %v2754
    %v2904 = vunpack.c.l.b16 %v2755
    %v2905 = vunpack.c.l.b16 %v2756
    %v2906 = vunpack.c.h.b16 %v2756
    %v2907 = vunpack.c.l.b16 %v2757
    %v2908 = vunpack.c.l.b16 %v2758
    %v2909 = vunpack.c.h.b16 %v2758
    %v2910 = vunpack.c.l.b16 %v2759
    %v2911 = vunpack.c.l.b16 %v2760
    %v2912 = vunpack.c.h.b16 %v2760
    %v2913 = vunpack.c.l.b16 %v2761
    %v2914 = vunpack.c.l.b16 %v2762
    %v2915 = vunpack.c.h.b16 %v2762
    %v2916 = vunpack.c.l.b16 %v2763
    %v2917 = vunpack.c.l.b16 %v2764
    %v2918 = vunpack.c.h.b16 %v2764
    %v2919 = vunpack.c.l.b16 %v2765
    %v2920 = vunpack.c.l.b16 %v2766
    %v2921 = vunpack.c.h.b16 %v2766
    %v2922 = vunpack.c.l.b16 %v2767
    %v2923 = vunpack.c.l.b16 %v2768
    %v2924 = vunpack.c.h.b16 %v2768
    %v2925 = vunpack.c.l.b16 %v2769
    %v2926 = vunpack.c.l.b16 %v2770
    %v2927 = vunpack.c.h.b16 %v2770
    %v2928 = vunpack.c.l.b16 %v2771
    %v2929 = vunpack.c.l.b16 %v2772
    %v2930 = vunpack.c.h.b16 %v2772
    %v2931 = vunpack.c.l.b16 %v2773
    %v2932 = vunpack.c.l.b16 %v2774
    %v2933 = vunpack.c.h.b16 %v2774
    %v2934 = vunpack.c.l.b16 %v2775
    %v2935 = vunpack.c.l.b16 %v2776
    %v2936 = vunpack.c.h.b16 %v2776
    %v2937 = vunpack.c.l.b16 %v2777
    %v2938 = vpack.c.b16 %v2845, %v2842
    %v2939 = vpack.c.b16 %v2846, %v2843
    %v2940 = vpack.c.b16 %v2847, %v2844
    %v2941 = vpack.c.b16 %v2851, %v2848
    %v2942 = vpack.c.b16 %v2852, %v2849
    %v2943 = vpack.c.b16 %v2853, %v2850
    %v2944 = vpack.c.b16 %v2857, %v2854
    %v2945 = vpack.c.b16 %v2858, %v2855
    %v2946 = vpack.c.b16 %v2859, %v2856
    %v2947 = vpack.c.b16 %v2863, %v2860
    %v2948 = vpack.c.b16 %v2864, %v2861
    %v2949 = vpack.c.b16 %v2865, %v2862
    %v2950 = vpack.c.b16 %v2869, %v2866
    %v2951 = vpack.c.b16 %v2870, %v2867
    %v2952 = vpack.c.b16 %v2871, %v2868
    %v2953 = vpack.c.b16 %v2875, %v2872
    %v2954 = vpack.c.b16 %v2876, %v2873
    %v2955 = vpack.c.b16 %v2877, %v2874
    %v2956 = vpack.c.b16 %v2881, %v2878
    %v2957 = vpack.c.b16 %v2882, %v2879
    %v2958 = vpack.c.b16 %v2883, %v2880
    %v2959 = vpack.c.b16 %v2887, %v2884
    %v2960 = vpack.c.b16 %v2888, %v2885
    %v2961 = vpack.c.b16 %v2889, %v2886
    %v2962 = vpack.c.b16 %v2893, %v2890
    %v2963 = vpack.c.b16 %v2894, %v2891
    %v2964 = vpack.c.b16 %v2895, %v2892
    %v2965 = vpack.c.b16 %v2899, %v2896
    %v2966 = vpack.c.b16 %v2900, %v2897
    %v2967 = vpack.c.b16 %v2901, %v2898
    %v2968 = vpack.c.b16 %v2905, %v2902
    %v2969 = vpack.c.b16 %v2906, %v2903
    %v2970 = vpack.c.b16 %v2907, %v2904
    %v2971 = vpack.c.b16 %v2911, %v2908
    %v2972 = vpack.c.b16 %v2912, %v2909
    %v2973 = vpack.c.b16 %v2913, %v2910
    %v2974 = vpack.c.b16 %v2917, %v2914
    %v2975 = vpack.c.b16 %v2918, %v2915
    %v2976 = vpack.c.b16 %v2919, %v2916
    %v2977 = vpack.c.b16 %v2923, %v2920
    %v2978 = vpack.c.b16 %v2924, %v2921
    %v2979 = vpack.c.b16 %v2925, %v2922
    %v2980 = vpack.c.b16 %v2929, %v2926
    %v2981 = vpack.c.b16 %v2930, %v2927
    %v2982 = vpack.c.b16 %v2931, %v2928
    %v2983 = vpack.c.b16 %v2935, %v2932
    %v2984 = vpack.c.b16 %v2936, %v2933
    %v2985 = vpack.c.b16 %v2937, %v2934
    %3034 = vmatprep.subr.bf16.mxu0 %v2939
    %3035 = vmatpush1.bf16.msra.mxu0 %v2938
    %3036 = vmatprep.subr.bf16.mxu0 %v2942
    %3037 = vmatpush1.bf16.msra.mxu0 %v2941
    %3038 = vmatprep.subr.bf16.mxu0 %v2945
    %3039 = vmatpush1.bf16.msra.mxu0 %v2944
    %3040 = vmatprep.subr.bf16.mxu0 %v2948
    %3041 = vmatpush1.bf16.msra.mxu0 %v2947
    %3042 = vmatprep.subr.bf16.mxu0 %v2951
    %3043 = vmatpush1.bf16.msra.mxu0 %v2950
    %3044 = vmatprep.subr.bf16.mxu0 %v2954
    %3045 = vmatpush1.bf16.msra.mxu0 %v2953
    %3046 = vmatprep.subr.bf16.mxu0 %v2957
    %3047 = vmatpush1.bf16.msra.mxu0 %v2956
    %3048 = vmatprep.subr.bf16.mxu0 %v2960
    %3049 = vmatpush1.bf16.msra.mxu0 %v2959
    %3050 = vmatprep.subr.bf16.mxu0 %v2963
    %3051 = vmatpush1.bf16.msra.mxu0 %v2962
    %3052 = vmatprep.subr.bf16.mxu0 %v2966
    %3053 = vmatpush1.bf16.msra.mxu0 %v2965
    %3054 = vmatprep.subr.bf16.mxu0 %v2969
    %3055 = vmatpush1.bf16.msra.mxu0 %v2968
    %3056 = vmatprep.subr.bf16.mxu0 %v2972
    %3057 = vmatpush1.bf16.msra.mxu0 %v2971
    %3058 = vmatprep.subr.bf16.mxu0 %v2975
    %3059 = vmatpush1.bf16.msra.mxu0 %v2974
    %3060 = vmatprep.subr.bf16.mxu0 %v2978
    %3061 = vmatpush1.bf16.msra.mxu0 %v2977
    %3062 = vmatprep.subr.bf16.mxu0 %v2981
    %3063 = vmatpush1.bf16.msra.mxu0 %v2980
    %3064 = vmatprep.subr.bf16.mxu0 %v2984
    %3065 = vmatpush1.bf16.msra.mxu0 %v2983
    %3066 = vmatprep.mubr.bf16.mxu0 %v2218
    %3067 = vmatmul.mubr.bf16.gmra.mrb[0].mxu0 %v2713
    %v3068 = vpop.f32.mrb[0].mxu0
    %v3069 = vadd.f32 %v927, %v3068
    %v3070 = vpop.f32.mrb[0].mxu0
    %v3071 = vadd.f32 %v931, %v3070
    %v3072 = vpop.f32.mrb[0].mxu0
    %v3073 = vpop.f32.mrb[0].mxu0
    %3074 = vdwg.mxu0
    %3075 = vmatprep.subr.bf16.mxu0 0
    %3076 = vmatpush1.bf16.msra.mxu0 %v2940
    %3077 = vmatprep.subr.bf16.mxu0 0
    %3078 = vmatpush1.bf16.msra.mxu0 %v2943
    %3079 = vmatprep.subr.bf16.mxu0 0
    %3080 = vmatpush1.bf16.msra.mxu0 %v2946
    %3081 = vmatprep.subr.bf16.mxu0 0
    %3082 = vmatpush1.bf16.msra.mxu0 %v2949
    %3083 = vmatprep.subr.bf16.mxu0 0
    %3084 = vmatpush1.bf16.msra.mxu0 %v2952
    %3085 = vmatprep.subr.bf16.mxu0 0
    %3086 = vmatpush1.bf16.msra.mxu0 %v2955
    %3087 = vmatprep.subr.bf16.mxu0 0
    %3088 = vmatpush1.bf16.msra.mxu0 %v2958
    %3089 = vmatprep.subr.bf16.mxu0 0
    %3090 = vmatpush1.bf16.msra.mxu0 %v2961
    %3091 = vmatprep.subr.bf16.mxu0 0
    %3092 = vmatpush1.bf16.msra.mxu0 %v2964
    %3093 = vmatprep.subr.bf16.mxu0 0
    %3094 = vmatpush1.bf16.msra.mxu0 %v2967
    %3095 = vmatprep.subr.bf16.mxu0 0
    %3096 = vmatpush1.bf16.msra.mxu0 %v2970
    %3097 = vmatprep.subr.bf16.mxu0 0
    %3098 = vmatpush1.bf16.msra.mxu0 %v2973
    %3099 = vmatprep.subr.bf16.mxu0 0
    %3100 = vmatpush1.bf16.msra.mxu0 %v2976
    %3101 = vmatprep.subr.bf16.mxu0 0
    %3102 = vmatpush1.bf16.msra.mxu0 %v2979
    %3103 = vmatprep.subr.bf16.mxu0 0
    %3104 = vmatpush1.bf16.msra.mxu0 %v2982
    %3105 = vmatprep.subr.bf16.mxu0 0
    %3106 = vmatpush1.bf16.msra.mxu0 %v2985
    %3107 = vmatprep.mubr.bf16.mxu0 %v2218
    %3108 = vmatmul.mubr.bf16.gmra.mrb[0].mxu0 %v2713
    %v3109 = vpop.f32.mrb[0].mxu0
    %v3110 = vadd.f32 %v935, %v3109
    %v3111 = vpop.f32.mrb[0].mxu0
    %v3112 = vpop.f32.mrb[0].mxu0
    %v3113 = vpop.f32.mrb[0].mxu0
    %3114 = vdwg.mxu0
    %v3115 = vxor.u32 %v3069, 2147483648
    %v3116 = vmul.f32 %v3115, 1.442695
    %v3117 = vpow.pop %v3116
    %v3118 = vadd.f32 %v3117, 1.0
    %v3119 = vrcp.pop %v3118
    %v3120 = vmul.f32 1.0, %v3119
    %v3121 = vxor.u32 %v3071, 2147483648
    %v3122 = vmul.f32 %v3121, 1.442695
    %v3123 = vpow.pop %v3122
    %v3124 = vadd.f32 %v3123, 1.0
    %v3125 = vrcp.pop %v3124
    %v3126 = vmul.f32 1.0, %v3125
    %v3127 = vadd.f32 %v2683, %v1292
    %v3128 = vmul.f32 %v3120, %v3127
    %v3129 = vadd.f32 %v3110, %v3128
    %v3130 = vtanh.pop %v3129
    %v3131 = vsub.f32 1.0, %v3126
    %v3132 = vmul.f32 %v3131, %v3130
    %v3133 = vmul.f32 %v3126, %v2217
    %v3134 = vadd.f32 %v3132, %v3133
    %v3135 = vpack.c.bf16 %v3134, %v3134
    %s3136 = scalar_lea.vmem [#allocation3], 8
    %3137 = vst [vmem:[%s3136] sm:$0xf] %v3135
    %v3138 = vld [vmem:[#allocation9] sm:$0xff]
    %v3139 = vld [vmem:[#allocation9 + $0x8] sm:$0xff]
    %v3140 = vld [vmem:[#allocation9 + $0x10] sm:$0xff]
    %v3141 = vld [vmem:[#allocation9 + $0x18] sm:$0xff]
    %v3142 = vld [vmem:[#allocation9 + $0x20] sm:$0xff]
    %v3143 = vld [vmem:[#allocation9 + $0x28] sm:$0xff]
    %v3144 = vld [vmem:[#allocation9 + $0x30] sm:$0xff]
    %v3145 = vld [vmem:[#allocation9 + $0x38] sm:$0xff]
    %v3146 = vld [vmem:[#allocation9 + $0x40] sm:$0xff]
    %v3147 = vld [vmem:[#allocation9 + $0x48] sm:$0xff]
    %v3148 = vld [vmem:[#allocation9 + $0x50] sm:$0xff]
    %v3149 = vld [vmem:[#allocation9 + $0x58] sm:$0xff]
    %v3150 = vld [vmem:[#allocation9 + $0x60] sm:$0xff]
    %v3151 = vld [vmem:[#allocation9 + $0x68] sm:$0xff]
    %v3152 = vld [vmem:[#allocation9 + $0x70] sm:$0xff]
    %v3153 = vld [vmem:[#allocation9 + $0x78] sm:$0xff]
    %v3154 = vld [vmem:[#allocation9 + $0x80] sm:$0xff]
    %v3155 = vld [vmem:[#allocation9 + $0x88] sm:$0xff]
    %v3156 = vld [vmem:[#allocation9 + $0x90] sm:$0xff]
    %v3157 = vld [vmem:[#allocation9 + $0x98] sm:$0xff]
    %v3158 = vld [vmem:[#allocation9 + $0xa0] sm:$0xff]
    %v3159 = vld [vmem:[#allocation9 + $0xa8] sm:$0xff]
    %v3160 = vld [vmem:[#allocation9 + $0xb0] sm:$0xff]
    %v3161 = vld [vmem:[#allocation9 + $0xb8] sm:$0xff]
    %v3162 = vld [vmem:[#allocation9 + $0xc0] sm:$0xff]
    %v3163 = vld [vmem:[#allocation9 + $0xc8] sm:$0xff]
    %v3164 = vld [vmem:[#allocation9 + $0xd0] sm:$0xff]
    %v3165 = vld [vmem:[#allocation9 + $0xd8] sm:$0xff]
    %v3166 = vld [vmem:[#allocation9 + $0xe0] sm:$0xff]
    %v3167 = vld [vmem:[#allocation9 + $0xe8] sm:$0xff]
    %v3168 = vld [vmem:[#allocation9 + $0xf0] sm:$0xff]
    %v3169 = vld [vmem:[#allocation9 + $0xf8] sm:$0xff]
    %v3170 = vld [vmem:[#allocation9 + $0x100] sm:$0xff]
    %v3171 = vld [vmem:[#allocation9 + $0x108] sm:$0xff]
    %v3172 = vld [vmem:[#allocation9 + $0x110] sm:$0xff]
    %v3173 = vld [vmem:[#allocation9 + $0x118] sm:$0xff]
    %v3174 = vld [vmem:[#allocation9 + $0x120] sm:$0xff]
    %v3175 = vld [vmem:[#allocation9 + $0x128] sm:$0xff]
    %v3176 = vld [vmem:[#allocation9 + $0x130] sm:$0xff]
    %v3177 = vld [vmem:[#allocation9 + $0x138] sm:$0xff]
    %v3178 = vld [vmem:[#allocation9 + $0x140] sm:$0xff]
    %v3179 = vld [vmem:[#allocation9 + $0x148] sm:$0xff]
    %v3180 = vld [vmem:[#allocation9 + $0x150] sm:$0xff]
    %v3181 = vld [vmem:[#allocation9 + $0x158] sm:$0xff]
    %v3182 = vld [vmem:[#allocation9 + $0x160] sm:$0xff]
    %v3183 = vld [vmem:[#allocation9 + $0x168] sm:$0xff]
    %v3184 = vld [vmem:[#allocation9 + $0x170] sm:$0xff]
    %v3185 = vld [vmem:[#allocation9 + $0x178] sm:$0xff]
    %v3186 = vld [vmem:[#allocation9 + $0x180] sm:$0xff]
    %v3187 = vld [vmem:[#allocation9 + $0x188] sm:$0xff]
    %v3188 = vld [vmem:[#allocation9 + $0x190] sm:$0xff]
    %v3189 = vld [vmem:[#allocation9 + $0x198] sm:$0xff]
    %v3190 = vld [vmem:[#allocation9 + $0x1a0] sm:$0xff]
    %v3191 = vld [vmem:[#allocation9 + $0x1a8] sm:$0xff]
    %v3192 = vld [vmem:[#allocation9 + $0x1b0] sm:$0xff]
    %v3193 = vld [vmem:[#allocation9 + $0x1b8] sm:$0xff]
    %v3194 = vld [vmem:[#allocation9 + $0x1c0] sm:$0xff]
    %v3195 = vld [vmem:[#allocation9 + $0x1c8] sm:$0xff]
    %v3196 = vld [vmem:[#allocation9 + $0x1d0] sm:$0xff]
    %v3197 = vld [vmem:[#allocation9 + $0x1d8] sm:$0xff]
    %v3198 = vld [vmem:[#allocation9 + $0x1e0] sm:$0xff]
    %v3199 = vld [vmem:[#allocation9 + $0x1e8] sm:$0xff]
    %v3200 = vld [vmem:[#allocation9 + $0x1f0] sm:$0xff]
    %v3201 = vld [vmem:[#allocation9 + $0x1f8] sm:$0xff]
    %v3266 = vunpack.c.l.b16 %v3138
    %v3267 = vunpack.c.h.b16 %v3138
    %v3268 = vunpack.c.l.b16 %v3139
    %v3269 = vunpack.c.h.b16 %v3139
    %v3270 = vunpack.c.l.b16 %v3140
    %v3271 = vunpack.c.h.b16 %v3140
    %v3272 = vunpack.c.l.b16 %v3141
    %v3273 = vunpack.c.h.b16 %v3141
    %v3274 = vunpack.c.l.b16 %v3142
    %v3275 = vunpack.c.h.b16 %v3142
    %v3276 = vunpack.c.l.b16 %v3143
    %v3277 = vunpack.c.h.b16 %v3143
    %v3278 = vunpack.c.l.b16 %v3144
    %v3279 = vunpack.c.h.b16 %v3144
    %v3280 = vunpack.c.l.b16 %v3145
    %v3281 = vunpack.c.h.b16 %v3145
    %v3282 = vunpack.c.l.b16 %v3146
    %v3283 = vunpack.c.h.b16 %v3146
    %v3284 = vunpack.c.l.b16 %v3147
    %v3285 = vunpack.c.h.b16 %v3147
    %v3286 = vunpack.c.l.b16 %v3148
    %v3287 = vunpack.c.h.b16 %v3148
    %v3288 = vunpack.c.l.b16 %v3149
    %v3289 = vunpack.c.h.b16 %v3149
    %v3290 = vunpack.c.l.b16 %v3150
    %v3291 = vunpack.c.h.b16 %v3150
    %v3292 = vunpack.c.l.b16 %v3151
    %v3293 = vunpack.c.h.b16 %v3151
    %v3294 = vunpack.c.l.b16 %v3152
    %v3295 = vunpack.c.h.b16 %v3152
    %v3296 = vunpack.c.l.b16 %v3153
    %v3297 = vunpack.c.h.b16 %v3153
    %v3298 = vunpack.c.l.b16 %v3154
    %v3299 = vunpack.c.h.b16 %v3154
    %v3300 = vunpack.c.l.b16 %v3155
    %v3301 = vunpack.c.h.b16 %v3155
    %v3302 = vunpack.c.l.b16 %v3156
    %v3303 = vunpack.c.h.b16 %v3156
    %v3304 = vunpack.c.l.b16 %v3157
    %v3305 = vunpack.c.h.b16 %v3157
    %v3306 = vunpack.c.l.b16 %v3158
    %v3307 = vunpack.c.h.b16 %v3158
    %v3308 = vunpack.c.l.b16 %v3159
    %v3309 = vunpack.c.h.b16 %v3159
    %v3310 = vunpack.c.l.b16 %v3160
    %v3311 = vunpack.c.h.b16 %v3160
    %v3312 = vunpack.c.l.b16 %v3161
    %v3313 = vunpack.c.h.b16 %v3161
    %v3314 = vunpack.c.l.b16 %v3162
    %v3315 = vunpack.c.h.b16 %v3162
    %v3316 = vunpack.c.l.b16 %v3163
    %v3317 = vunpack.c.h.b16 %v3163
    %v3318 = vunpack.c.l.b16 %v3164
    %v3319 = vunpack.c.h.b16 %v3164
    %v3320 = vunpack.c.l.b16 %v3165
    %v3321 = vunpack.c.h.b16 %v3165
    %v3322 = vunpack.c.l.b16 %v3166
    %v3323 = vunpack.c.h.b16 %v3166
    %v3324 = vunpack.c.l.b16 %v3167
    %v3325 = vunpack.c.h.b16 %v3167
    %v3326 = vunpack.c.l.b16 %v3168
    %v3327 = vunpack.c.h.b16 %v3168
    %v3328 = vunpack.c.l.b16 %v3169
    %v3329 = vunpack.c.h.b16 %v3169
    %v3330 = vunpack.c.l.b16 %v3170
    %v3331 = vunpack.c.h.b16 %v3170
    %v3332 = vunpack.c.l.b16 %v3171
    %v3333 = vunpack.c.h.b16 %v3171
    %v3334 = vunpack.c.l.b16 %v3172
    %v3335 = vunpack.c.h.b16 %v3172
    %v3336 = vunpack.c.l.b16 %v3173
    %v3337 = vunpack.c.h.b16 %v3173
    %v3338 = vunpack.c.l.b16 %v3174
    %v3339 = vunpack.c.h.b16 %v3174
    %v3340 = vunpack.c.l.b16 %v3175
    %v3341 = vunpack.c.h.b16 %v3175
    %v3342 = vunpack.c.l.b16 %v3176
    %v3343 = vunpack.c.h.b16 %v3176
    %v3344 = vunpack.c.l.b16 %v3177
    %v3345 = vunpack.c.h.b16 %v3177
    %v3346 = vunpack.c.l.b16 %v3178
    %v3347 = vunpack.c.h.b16 %v3178
    %v3348 = vunpack.c.l.b16 %v3179
    %v3349 = vunpack.c.h.b16 %v3179
    %v3350 = vunpack.c.l.b16 %v3180
    %v3351 = vunpack.c.h.b16 %v3180
    %v3352 = vunpack.c.l.b16 %v3181
    %v3353 = vunpack.c.h.b16 %v3181
    %v3354 = vunpack.c.l.b16 %v3182
    %v3355 = vunpack.c.h.b16 %v3182
    %v3356 = vunpack.c.l.b16 %v3183
    %v3357 = vunpack.c.h.b16 %v3183
    %v3358 = vunpack.c.l.b16 %v3184
    %v3359 = vunpack.c.h.b16 %v3184
    %v3360 = vunpack.c.l.b16 %v3185
    %v3361 = vunpack.c.h.b16 %v3185
    %v3362 = vunpack.c.l.b16 %v3186
    %v3363 = vunpack.c.h.b16 %v3186
    %v3364 = vunpack.c.l.b16 %v3187
    %v3365 = vunpack.c.h.b16 %v3187
    %v3366 = vunpack.c.l.b16 %v3188
    %v3367 = vunpack.c.h.b16 %v3188
    %v3368 = vunpack.c.l.b16 %v3189
    %v3369 = vunpack.c.h.b16 %v3189
    %v3370 = vunpack.c.l.b16 %v3190
    %v3371 = vunpack.c.h.b16 %v3190
    %v3372 = vunpack.c.l.b16 %v3191
    %v3373 = vunpack.c.h.b16 %v3191
    %v3374 = vunpack.c.l.b16 %v3192
    %v3375 = vunpack.c.h.b16 %v3192
    %v3376 = vunpack.c.l.b16 %v3193
    %v3377 = vunpack.c.h.b16 %v3193
    %v3378 = vunpack.c.l.b16 %v3194
    %v3379 = vunpack.c.h.b16 %v3194
    %v3380 = vunpack.c.l.b16 %v3195
    %v3381 = vunpack.c.h.b16 %v3195
    %v3382 = vunpack.c.l.b16 %v3196
    %v3383 = vunpack.c.h.b16 %v3196
    %v3384 = vunpack.c.l.b16 %v3197
    %v3385 = vunpack.c.h.b16 %v3197
    %v3386 = vunpack.c.l.b16 %v3198
    %v3387 = vunpack.c.h.b16 %v3198
    %v3388 = vunpack.c.l.b16 %v3199
    %v3389 = vunpack.c.h.b16 %v3199
    %v3390 = vunpack.c.l.b16 %v3200
    %v3391 = vunpack.c.h.b16 %v3200
    %v3392 = vunpack.c.l.b16 %v3201
    %v3393 = vunpack.c.h.b16 %v3201
    %v3394 = vpack.c.b16 %v3270, %v3266
    %v3395 = vpack.c.b16 %v3271, %v3267
    %v3396 = vpack.c.b16 %v3272, %v3268
    %v3397 = vpack.c.b16 %v3273, %v3269
    %v3398 = vpack.c.b16 %v3278, %v3274
    %v3399 = vpack.c.b16 %v3279, %v3275
    %v3400 = vpack.c.b16 %v3280, %v3276
    %v3401 = vpack.c.b16 %v3281, %v3277
    %v3402 = vpack.c.b16 %v3286, %v3282
    %v3403 = vpack.c.b16 %v3287, %v3283
    %v3404 = vpack.c.b16 %v3288, %v3284
    %v3405 = vpack.c.b16 %v3289, %v3285
    %v3406 = vpack.c.b16 %v3294, %v3290
    %v3407 = vpack.c.b16 %v3295, %v3291
    %v3408 = vpack.c.b16 %v3296, %v3292
    %v3409 = vpack.c.b16 %v3297, %v3293
    %v3410 = vpack.c.b16 %v3302, %v3298
    %v3411 = vpack.c.b16 %v3303, %v3299
    %v3412 = vpack.c.b16 %v3304, %v3300
    %v3413 = vpack.c.b16 %v3305, %v3301
    %v3414 = vpack.c.b16 %v3310, %v3306
    %v3415 = vpack.c.b16 %v3311, %v3307
    %v3416 = vpack.c.b16 %v3312, %v3308
    %v3417 = vpack.c.b16 %v3313, %v3309
    %v3418 = vpack.c.b16 %v3318, %v3314
    %v3419 = vpack.c.b16 %v3319, %v3315
    %v3420 = vpack.c.b16 %v3320, %v3316
    %v3421 = vpack.c.b16 %v3321, %v3317
    %v3422 = vpack.c.b16 %v3326, %v3322
    %v3423 = vpack.c.b16 %v3327, %v3323
    %v3424 = vpack.c.b16 %v3328, %v3324
    %v3425 = vpack.c.b16 %v3329, %v3325
    %v3426 = vpack.c.b16 %v3334, %v3330
    %v3427 = vpack.c.b16 %v3335, %v3331
    %v3428 = vpack.c.b16 %v3336, %v3332
    %v3429 = vpack.c.b16 %v3337, %v3333
    %v3430 = vpack.c.b16 %v3342, %v3338
    %v3431 = vpack.c.b16 %v3343, %v3339
    %v3432 = vpack.c.b16 %v3344, %v3340
    %v3433 = vpack.c.b16 %v3345, %v3341
    %v3434 = vpack.c.b16 %v3350, %v3346
    %v3435 = vpack.c.b16 %v3351, %v3347
    %v3436 = vpack.c.b16 %v3352, %v3348
    %v3437 = vpack.c.b16 %v3353, %v3349
    %v3438 = vpack.c.b16 %v3358, %v3354
    %v3439 = vpack.c.b16 %v3359, %v3355
    %v3440 = vpack.c.b16 %v3360, %v3356
    %v3441 = vpack.c.b16 %v3361, %v3357
    %v3442 = vpack.c.b16 %v3366, %v3362
    %v3443 = vpack.c.b16 %v3367, %v3363
    %v3444 = vpack.c.b16 %v3368, %v3364
    %v3445 = vpack.c.b16 %v3369, %v3365
    %v3446 = vpack.c.b16 %v3374, %v3370
    %v3447 = vpack.c.b16 %v3375, %v3371
    %v3448 = vpack.c.b16 %v3376, %v3372
    %v3449 = vpack.c.b16 %v3377, %v3373
    %v3450 = vpack.c.b16 %v3382, %v3378
    %v3451 = vpack.c.b16 %v3383, %v3379
    %v3452 = vpack.c.b16 %v3384, %v3380
    %v3453 = vpack.c.b16 %v3385, %v3381
    %v3454 = vpack.c.b16 %v3390, %v3386
    %v3455 = vpack.c.b16 %v3391, %v3387
    %v3456 = vpack.c.b16 %v3392, %v3388
    %v3457 = vpack.c.b16 %v3393, %v3389
    %3522 = vmatprep.subr.bf16.mxu0 %v3395
    %3523 = vmatpush1.bf16.msra.mxu0 %v3394
    %3524 = vmatprep.subr.bf16.mxu0 %v3399
    %3525 = vmatpush1.bf16.msra.mxu0 %v3398
    %3526 = vmatprep.subr.bf16.mxu0 %v3403
    %3527 = vmatpush1.bf16.msra.mxu0 %v3402
    %3528 = vmatprep.subr.bf16.mxu0 %v3407
    %3529 = vmatpush1.bf16.msra.mxu0 %v3406
    %3530 = vmatprep.subr.bf16.mxu0 %v3411
    %3531 = vmatpush1.bf16.msra.mxu0 %v3410
    %3532 = vmatprep.subr.bf16.mxu0 %v3415
    %3533 = vmatpush1.bf16.msra.mxu0 %v3414
    %3534 = vmatprep.subr.bf16.mxu0 %v3419
    %3535 = vmatpush1.bf16.msra.mxu0 %v3418
    %3536 = vmatprep.subr.bf16.mxu0 %v3423
    %3537 = vmatpush1.bf16.msra.mxu0 %v3422
    %3538 = vmatprep.subr.bf16.mxu0 %v3427
    %3539 = vmatpush1.bf16.msra.mxu0 %v3426
    %3540 = vmatprep.subr.bf16.mxu0 %v3431
    %3541 = vmatpush1.bf16.msra.mxu0 %v3430
    %3542 = vmatprep.subr.bf16.mxu0 %v3435
    %3543 = vmatpush1.bf16.msra.mxu0 %v3434
    %3544 = vmatprep.subr.bf16.mxu0 %v3439
    %3545 = vmatpush1.bf16.msra.mxu0 %v3438
    %3546 = vmatprep.subr.bf16.mxu0 %v3443
    %3547 = vmatpush1.bf16.msra.mxu0 %v3442
    %3548 = vmatprep.subr.bf16.mxu0 %v3447
    %3549 = vmatpush1.bf16.msra.mxu0 %v3446
    %3550 = vmatprep.subr.bf16.mxu0 %v3451
    %3551 = vmatpush1.bf16.msra.mxu0 %v3450
    %3552 = vmatprep.subr.bf16.mxu0 %v3455
    %3553 = vmatpush1.bf16.msra.mxu0 %v3454
    %3554 = vmatprep.mubr.bf16.mxu0 %v3135
    %3555 = vmatmul.mubr.bf16.gmra.mrb[0].mxu0 %v2713
    %v3556 = vpop.f32.mrb[0].mxu0
    %v3557 = vadd.f32 0.0, %v3556
    %v3558 = vpop.f32.mrb[0].mxu0
    %v3559 = vadd.f32 0.0, %v3558
    %v3560 = vpop.f32.mrb[0].mxu0
    %v3561 = vpop.f32.mrb[0].mxu0
    %3562 = vdwg.mxu0
    %3563 = vmatprep.subr.bf16.mxu0 %v3397
    %3564 = vmatpush1.bf16.msra.mxu0 %v3396
    %3565 = vmatprep.subr.bf16.mxu0 %v3401
    %3566 = vmatpush1.bf16.msra.mxu0 %v3400
    %3567 = vmatprep.subr.bf16.mxu0 %v3405
    %3568 = vmatpush1.bf16.msra.mxu0 %v3404
    %3569 = vmatprep.subr.bf16.mxu0 %v3409
    %3570 = vmatpush1.bf16.msra.mxu0 %v3408
    %3571 = vmatprep.subr.bf16.mxu0 %v3413
    %3572 = vmatpush1.bf16.msra.mxu0 %v3412
    %3573 = vmatprep.subr.bf16.mxu0 %v3417
    %3574 = vmatpush1.bf16.msra.mxu0 %v3416
    %3575 = vmatprep.subr.bf16.mxu0 %v3421
    %3576 = vmatpush1.bf16.msra.mxu0 %v3420
    %3577 = vmatprep.subr.bf16.mxu0 %v3425
    %3578 = vmatpush1.bf16.msra.mxu0 %v3424
    %3579 = vmatprep.subr.bf16.mxu0 %v3429
    %3580 = vmatpush1.bf16.msra.mxu0 %v3428
    %3581 = vmatprep.subr.bf16.mxu0 %v3433
    %3582 = vmatpush1.bf16.msra.mxu0 %v3432
    %3583 = vmatprep.subr.bf16.mxu0 %v3437
    %3584 = vmatpush1.bf16.msra.mxu0 %v3436
    %3585 = vmatprep.subr.bf16.mxu0 %v3441
    %3586 = vmatpush1.bf16.msra.mxu0 %v3440
    %3587 = vmatprep.subr.bf16.mxu0 %v3445
    %3588 = vmatpush1.bf16.msra.mxu0 %v3444
    %3589 = vmatprep.subr.bf16.mxu0 %v3449
    %3590 = vmatpush1.bf16.msra.mxu0 %v3448
    %3591 = vmatprep.subr.bf16.mxu0 %v3453
    %3592 = vmatpush1.bf16.msra.mxu0 %v3452
    %3593 = vmatprep.subr.bf16.mxu0 %v3457
    %3594 = vmatpush1.bf16.msra.mxu0 %v3456
    %3595 = vmatprep.mubr.bf16.mxu0 %v3135
    %3596 = vmatmul.mubr.bf16.gmra.mrb[0].mxu0 %v2713
    %v3597 = vpop.f32.mrb[0].mxu0
    %v3598 = vadd.f32 0.0, %v3597
    %v3599 = vpop.f32.mrb[0].mxu0
    %v3600 = vadd.f32 0.0, %v3599
    %v3601 = vpop.f32.mrb[0].mxu0
    %v3602 = vpop.f32.mrb[0].mxu0
    %3603 = vdwg.mxu0
    %s3604 = scalar_lea.vmem [#allocation2], 72
    %v3605 = vld [vmem:[%s3604] sm:$0xff]
    %v3606 = vld [vmem:[%s3604 + $0x8] sm:$0xff]
    %v3607 = vld [vmem:[%s3604 + $0x10] sm:$0xff]
    %v3608 = vadd.f32 %v3605, %v3557
    %v3609 = vxor.u32 %v3608, 2147483648
    %v3610 = vmul.f32 %v3609, 1.442695
    %v3611 = vpow.pop %v3610
    %v3612 = vadd.f32 %v3611, 1.0
    %v3613 = vrcp.pop %v3612
    %v3614 = vmul.f32 1.0, %v3613
    %v3615 = vadd.f32 %v3606, %v3559
    %v3616 = vxor.u32 %v3615, 2147483648
    %v3617 = vmul.f32 %v3616, 1.442695
    %v3618 = vpow.pop %v3617
    %v3619 = vadd.f32 %v3618, 1.0
    %v3620 = vrcp.pop %v3619
    %v3621 = vmul.f32 1.0, %v3620
    %v3622 = vadd.f32 %v3598, %v848
    %v3623 = vmul.f32 %v3614, %v3622
    %v3624 = vadd.f32 %v3607, %v3623
    %v3625 = vtanh.pop %v3624
    %v3626 = vsub.f32 1.0, %v3621
    %v3627 = vmul.f32 %v3626, %v3625
    %v3628 = vmul.f32 %v3621, %v2712
    %v3629 = vadd.f32 %v3627, %v3628
    %v3630 = vpack.c.bf16 %v3629, %v3629
    %v3631 = vld [vmem:[#allocation10] sm:$0xff]
    %v3632 = vld [vmem:[#allocation10 + $0x8] sm:$0xf]
    %v3633 = vld [vmem:[#allocation10 + $0xc] sm:$0xff]
    %v3634 = vld [vmem:[#allocation10 + $0x14] sm:$0xf]
    %v3635 = vld [vmem:[#allocation10 + $0x18] sm:$0xff]
    %v3636 = vld [vmem:[#allocation10 + $0x20] sm:$0xf]
    %v3637 = vld [vmem:[#allocation10 + $0x24] sm:$0xff]
    %v3638 = vld [vmem:[#allocation10 + $0x2c] sm:$0xf]
    %v3639 = vld [vmem:[#allocation10 + $0x30] sm:$0xff]
    %v3640 = vld [vmem:[#allocation10 + $0x38] sm:$0xf]
    %v3641 = vld [vmem:[#allocation10 + $0x3c] sm:$0xff]
    %v3642 = vld [vmem:[#allocation10 + $0x44] sm:$0xf]
    %v3643 = vld [vmem:[#allocation10 + $0x48] sm:$0xff]
    %v3644 = vld [vmem:[#allocation10 + $0x50] sm:$0xf]
    %v3645 = vld [vmem:[#allocation10 + $0x54] sm:$0xff]
    %v3646 = vld [vmem:[#allocation10 + $0x5c] sm:$0xf]
    %v3647 = vld [vmem:[#allocation10 + $0x60] sm:$0xff]
    %v3648 = vld [vmem:[#allocation10 + $0x68] sm:$0xf]
    %v3649 = vld [vmem:[#allocation10 + $0x6c] sm:$0xff]
    %v3650 = vld [vmem:[#allocation10 + $0x74] sm:$0xf]
    %v3651 = vld [vmem:[#allocation10 + $0x78] sm:$0xff]
    %v3652 = vld [vmem:[#allocation10 + $0x80] sm:$0xf]
    %v3653 = vld [vmem:[#allocation10 + $0x84] sm:$0xff]
    %v3654 = vld [vmem:[#allocation10 + $0x8c] sm:$0xf]
    %v3655 = vld [vmem:[#allocation10 + $0x90] sm:$0xff]
    %v3656 = vld [vmem:[#allocation10 + $0x98] sm:$0xf]
    %v3657 = vld [vmem:[#allocation10 + $0x9c] sm:$0xff]
    %v3658 = vld [vmem:[#allocation10 + $0xa4] sm:$0xf]
    %v3659 = vld [vmem:[#allocation10 + $0xa8] sm:$0xff]
    %v3660 = vld [vmem:[#allocation10 + $0xb0] sm:$0xf]
    %v3661 = vld [vmem:[#allocation10 + $0xb4] sm:$0xff]
    %v3662 = vld [vmem:[#allocation10 + $0xbc] sm:$0xf]
    %v3663 = vld [vmem:[#allocation10 + $0xc0] sm:$0xff]
    %v3664 = vld [vmem:[#allocation10 + $0xc8] sm:$0xf]
    %v3665 = vld [vmem:[#allocation10 + $0xcc] sm:$0xff]
    %v3666 = vld [vmem:[#allocation10 + $0xd4] sm:$0xf]
    %v3667 = vld [vmem:[#allocation10 + $0xd8] sm:$0xff]
    %v3668 = vld [vmem:[#allocation10 + $0xe0] sm:$0xf]
    %v3669 = vld [vmem:[#allocation10 + $0xe4] sm:$0xff]
    %v3670 = vld [vmem:[#allocation10 + $0xec] sm:$0xf]
    %v3671 = vld [vmem:[#allocation10 + $0xf0] sm:$0xff]
    %v3672 = vld [vmem:[#allocation10 + $0xf8] sm:$0xf]
    %v3673 = vld [vmem:[#allocation10 + $0xfc] sm:$0xff]
    %v3674 = vld [vmem:[#allocation10 + $0x104] sm:$0xf]
    %v3675 = vld [vmem:[#allocation10 + $0x108] sm:$0xff]
    %v3676 = vld [vmem:[#allocation10 + $0x110] sm:$0xf]
    %v3677 = vld [vmem:[#allocation10 + $0x114] sm:$0xff]
    %v3678 = vld [vmem:[#allocation10 + $0x11c] sm:$0xf]
    %v3679 = vld [vmem:[#allocation10 + $0x120] sm:$0xff]
    %v3680 = vld [vmem:[#allocation10 + $0x128] sm:$0xf]
    %v3681 = vld [vmem:[#allocation10 + $0x12c] sm:$0xff]
    %v3682 = vld [vmem:[#allocation10 + $0x134] sm:$0xf]
    %v3683 = vld [vmem:[#allocation10 + $0x138] sm:$0xff]
    %v3684 = vld [vmem:[#allocation10 + $0x140] sm:$0xf]
    %v3685 = vld [vmem:[#allocation10 + $0x144] sm:$0xff]
    %v3686 = vld [vmem:[#allocation10 + $0x14c] sm:$0xf]
    %v3687 = vld [vmem:[#allocation10 + $0x150] sm:$0xff]
    %v3688 = vld [vmem:[#allocation10 + $0x158] sm:$0xf]
    %v3689 = vld [vmem:[#allocation10 + $0x15c] sm:$0xff]
    %v3690 = vld [vmem:[#allocation10 + $0x164] sm:$0xf]
    %v3691 = vld [vmem:[#allocation10 + $0x168] sm:$0xff]
    %v3692 = vld [vmem:[#allocation10 + $0x170] sm:$0xf]
    %v3693 = vld [vmem:[#allocation10 + $0x174] sm:$0xff]
    %v3694 = vld [vmem:[#allocation10 + $0x17c] sm:$0xf]
    %v3759 = vunpack.c.l.b16 %v3631
    %v3760 = vunpack.c.h.b16 %v3631
    %v3761 = vunpack.c.l.b16 %v3632
    %v3762 = vunpack.c.l.b16 %v3633
    %v3763 = vunpack.c.h.b16 %v3633
    %v3764 = vunpack.c.l.b16 %v3634
    %v3765 = vunpack.c.l.b16 %v3635
    %v3766 = vunpack.c.h.b16 %v3635
    %v3767 = vunpack.c.l.b16 %v3636
    %v3768 = vunpack.c.l.b16 %v3637
    %v3769 = vunpack.c.h.b16 %v3637
    %v3770 = vunpack.c.l.b16 %v3638
    %v3771 = vunpack.c.l.b16 %v3639
    %v3772 = vunpack.c.h.b16 %v3639
    %v3773 = vunpack.c.l.b16 %v3640
    %v3774 = vunpack.c.l.b16 %v3641
    %v3775 = vunpack.c.h.b16 %v3641
    %v3776 = vunpack.c.l.b16 %v3642
    %v3777 = vunpack.c.l.b16 %v3643
    %v3778 = vunpack.c.h.b16 %v3643
    %v3779 = vunpack.c.l.b16 %v3644
    %v3780 = vunpack.c.l.b16 %v3645
    %v3781 = vunpack.c.h.b16 %v3645
    %v3782 = vunpack.c.l.b16 %v3646
    %v3783 = vunpack.c.l.b16 %v3647
    %v3784 = vunpack.c.h.b16 %v3647
    %v3785 = vunpack.c.l.b16 %v3648
    %v3786 = vunpack.c.l.b16 %v3649
    %v3787 = vunpack.c.h.b16 %v3649
    %v3788 = vunpack.c.l.b16 %v3650
    %v3789 = vunpack.c.l.b16 %v3651
    %v3790 = vunpack.c.h.b16 %v3651
    %v3791 = vunpack.c.l.b16 %v3652
    %v3792 = vunpack.c.l.b16 %v3653
    %v3793 = vunpack.c.h.b16 %v3653
    %v3794 = vunpack.c.l.b16 %v3654
    %v3795 = vunpack.c.l.b16 %v3655
    %v3796 = vunpack.c.h.b16 %v3655
    %v3797 = vunpack.c.l.b16 %v3656
    %v3798 = vunpack.c.l.b16 %v3657
    %v3799 = vunpack.c.h.b16 %v3657
    %v3800 = vunpack.c.l.b16 %v3658
    %v3801 = vunpack.c.l.b16 %v3659
    %v3802 = vunpack.c.h.b16 %v3659
    %v3803 = vunpack.c.l.b16 %v3660
    %v3804 = vunpack.c.l.b16 %v3661
    %v3805 = vunpack.c.h.b16 %v3661
    %v3806 = vunpack.c.l.b16 %v3662
    %v3807 = vunpack.c.l.b16 %v3663
    %v3808 = vunpack.c.h.b16 %v3663
    %v3809 = vunpack.c.l.b16 %v3664
    %v3810 = vunpack.c.l.b16 %v3665
    %v3811 = vunpack.c.h.b16 %v3665
    %v3812 = vunpack.c.l.b16 %v3666
    %v3813 = vunpack.c.l.b16 %v3667
    %v3814 = vunpack.c.h.b16 %v3667
    %v3815 = vunpack.c.l.b16 %v3668
    %v3816 = vunpack.c.l.b16 %v3669
    %v3817 = vunpack.c.h.b16 %v3669
    %v3818 = vunpack.c.l.b16 %v3670
    %v3819 = vunpack.c.l.b16 %v3671
    %v3820 = vunpack.c.h.b16 %v3671
    %v3821 = vunpack.c.l.b16 %v3672
    %v3822 = vunpack.c.l.b16 %v3673
    %v3823 = vunpack.c.h.b16 %v3673
    %v3824 = vunpack.c.l.b16 %v3674
    %v3825 = vunpack.c.l.b16 %v3675
    %v3826 = vunpack.c.h.b16 %v3675
    %v3827 = vunpack.c.l.b16 %v3676
    %v3828 = vunpack.c.l.b16 %v3677
    %v3829 = vunpack.c.h.b16 %v3677
    %v3830 = vunpack.c.l.b16 %v3678
    %v3831 = vunpack.c.l.b16 %v3679
    %v3832 = vunpack.c.h.b16 %v3679
    %v3833 = vunpack.c.l.b16 %v3680
    %v3834 = vunpack.c.l.b16 %v3681
    %v3835 = vunpack.c.h.b16 %v3681
    %v3836 = vunpack.c.l.b16 %v3682
    %v3837 = vunpack.c.l.b16 %v3683
    %v3838 = vunpack.c.h.b16 %v3683
    %v3839 = vunpack.c.l.b16 %v3684
    %v3840 = vunpack.c.l.b16 %v3685
    %v3841 = vunpack.c.h.b16 %v3685
    %v3842 = vunpack.c.l.b16 %v3686
    %v3843 = vunpack.c.l.b16 %v3687
    %v3844 = vunpack.c.h.b16 %v3687
    %v3845 = vunpack.c.l.b16 %v3688
    %v3846 = vunpack.c.l.b16 %v3689
    %v3847 = vunpack.c.h.b16 %v3689
    %v3848 = vunpack.c.l.b16 %v3690
    %v3849 = vunpack.c.l.b16 %v3691
    %v3850 = vunpack.c.h.b16 %v3691
    %v3851 = vunpack.c.l.b16 %v3692
    %v3852 = vunpack.c.l.b16 %v3693
    %v3853 = vunpack.c.h.b16 %v3693
    %v3854 = vunpack.c.l.b16 %v3694
    %v3855 = vpack.c.b16 %v3762, %v3759
    %v3856 = vpack.c.b16 %v3763, %v3760
    %v3857 = vpack.c.b16 %v3764, %v3761
    %v3858 = vpack.c.b16 %v3768, %v3765
    %v3859 = vpack.c.b16 %v3769, %v3766
    %v3860 = vpack.c.b16 %v3770, %v3767
    %v3861 = vpack.c.b16 %v3774, %v3771
    %v3862 = vpack.c.b16 %v3775, %v3772
    %v3863 = vpack.c.b16 %v3776, %v3773
    %v3864 = vpack.c.b16 %v3780, %v3777
    %v3865 = vpack.c.b16 %v3781, %v3778
    %v3866 = vpack.c.b16 %v3782, %v3779
    %v3867 = vpack.c.b16 %v3786, %v3783
    %v3868 = vpack.c.b16 %v3787, %v3784
    %v3869 = vpack.c.b16 %v3788, %v3785
    %v3870 = vpack.c.b16 %v3792, %v3789
    %v3871 = vpack.c.b16 %v3793, %v3790
    %v3872 = vpack.c.b16 %v3794, %v3791
    %v3873 = vpack.c.b16 %v3798, %v3795
    %v3874 = vpack.c.b16 %v3799, %v3796
    %v3875 = vpack.c.b16 %v3800, %v3797
    %v3876 = vpack.c.b16 %v3804, %v3801
    %v3877 = vpack.c.b16 %v3805, %v3802
    %v3878 = vpack.c.b16 %v3806, %v3803
    %v3879 = vpack.c.b16 %v3810, %v3807
    %v3880 = vpack.c.b16 %v3811, %v3808
    %v3881 = vpack.c.b16 %v3812, %v3809
    %v3882 = vpack.c.b16 %v3816, %v3813
    %v3883 = vpack.c.b16 %v3817, %v3814
    %v3884 = vpack.c.b16 %v3818, %v3815
    %v3885 = vpack.c.b16 %v3822, %v3819
    %v3886 = vpack.c.b16 %v3823, %v3820
    %v3887 = vpack.c.b16 %v3824, %v3821
    %v3888 = vpack.c.b16 %v3828, %v3825
    %v3889 = vpack.c.b16 %v3829, %v3826
    %v3890 = vpack.c.b16 %v3830, %v3827
    %v3891 = vpack.c.b16 %v3834, %v3831
    %v3892 = vpack.c.b16 %v3835, %v3832
    %v3893 = vpack.c.b16 %v3836, %v3833
    %v3894 = vpack.c.b16 %v3840, %v3837
    %v3895 = vpack.c.b16 %v3841, %v3838
    %v3896 = vpack.c.b16 %v3842, %v3839
    %v3897 = vpack.c.b16 %v3846, %v3843
    %v3898 = vpack.c.b16 %v3847, %v3844
    %v3899 = vpack.c.b16 %v3848, %v3845
    %v3900 = vpack.c.b16 %v3852, %v3849
    %v3901 = vpack.c.b16 %v3853, %v3850
    %v3902 = vpack.c.b16 %v3854, %v3851
    %3951 = vmatprep.subr.bf16.mxu0 %v3856
    %3952 = vmatpush1.bf16.msra.mxu0 %v3855
    %3953 = vmatprep.subr.bf16.mxu0 %v3859
    %3954 = vmatpush1.bf16.msra.mxu0 %v3858
    %3955 = vmatprep.subr.bf16.mxu0 %v3862
    %3956 = vmatpush1.bf16.msra.mxu0 %v3861
    %3957 = vmatprep.subr.bf16.mxu0 %v3865
    %3958 = vmatpush1.bf16.msra.mxu0 %v3864
    %3959 = vmatprep.subr.bf16.mxu0 %v3868
    %3960 = vmatpush1.bf16.msra.mxu0 %v3867
    %3961 = vmatprep.subr.bf16.mxu0 %v3871
    %3962 = vmatpush1.bf16.msra.mxu0 %v3870
    %3963 = vmatprep.subr.bf16.mxu0 %v3874
    %3964 = vmatpush1.bf16.msra.mxu0 %v3873
    %3965 = vmatprep.subr.bf16.mxu0 %v3877
    %3966 = vmatpush1.bf16.msra.mxu0 %v3876
    %3967 = vmatprep.subr.bf16.mxu0 %v3880
    %3968 = vmatpush1.bf16.msra.mxu0 %v3879
    %3969 = vmatprep.subr.bf16.mxu0 %v3883
    %3970 = vmatpush1.bf16.msra.mxu0 %v3882
    %3971 = vmatprep.subr.bf16.mxu0 %v3886
    %3972 = vmatpush1.bf16.msra.mxu0 %v3885
    %3973 = vmatprep.subr.bf16.mxu0 %v3889
    %3974 = vmatpush1.bf16.msra.mxu0 %v3888
    %3975 = vmatprep.subr.bf16.mxu0 %v3892
    %3976 = vmatpush1.bf16.msra.mxu0 %v3891
    %3977 = vmatprep.subr.bf16.mxu0 %v3895
    %3978 = vmatpush1.bf16.msra.mxu0 %v3894
    %3979 = vmatprep.subr.bf16.mxu0 %v3898
    %3980 = vmatpush1.bf16.msra.mxu0 %v3897
    %3981 = vmatprep.subr.bf16.mxu0 %v3901
    %3982 = vmatpush1.bf16.msra.mxu0 %v3900
    %3983 = vmatprep.mubr.bf16.mxu0 %v3135
    %3984 = vmatmul.mubr.bf16.gmra.mrb[0].mxu0 %v3630
    %v3985 = vpop.f32.mrb[0].mxu0
    %v3986 = vadd.f32 %v927, %v3985
    %v3987 = vpop.f32.mrb[0].mxu0
    %v3988 = vadd.f32 %v931, %v3987
    %v3989 = vpop.f32.mrb[0].mxu0
    %v3990 = vpop.f32.mrb[0].mxu0
    %3991 = vdwg.mxu0
    %3992 = vmatprep.subr.bf16.mxu0 0
    %3993 = vmatpush1.bf16.msra.mxu0 %v3857
    %3994 = vmatprep.subr.bf16.mxu0 0
    %3995 = vmatpush1.bf16.msra.mxu0 %v3860
    %3996 = vmatprep.subr.bf16.mxu0 0
    %3997 = vmatpush1.bf16.msra.mxu0 %v3863
    %3998 = vmatprep.subr.bf16.mxu0 0
    %3999 = vmatpush1.bf16.msra.mxu0 %v3866
    %4000 = vmatprep.subr.bf16.mxu0 0
    %4001 = vmatpush1.bf16.msra.mxu0 %v3869
    %4002 = vmatprep.subr.bf16.mxu0 0
    %4003 = vmatpush1.bf16.msra.mxu0 %v3872
    %4004 = vmatprep.subr.bf16.mxu0 0
    %4005 = vmatpush1.bf16.msra.mxu0 %v3875
    %4006 = vmatprep.subr.bf16.mxu0 0
    %4007 = vmatpush1.bf16.msra.mxu0 %v3878
    %4008 = vmatprep.subr.bf16.mxu0 0
    %4009 = vmatpush1.bf16.msra.mxu0 %v3881
    %4010 = vmatprep.subr.bf16.mxu0 0
    %4011 = vmatpush1.bf16.msra.mxu0 %v3884
    %4012 = vmatprep.subr.bf16.mxu0 0
    %4013 = vmatpush1.bf16.msra.mxu0 %v3887
    %4014 = vmatprep.subr.bf16.mxu0 0
    %4015 = vmatpush1.bf16.msra.mxu0 %v3890
    %4016 = vmatprep.subr.bf16.mxu0 0
    %4017 = vmatpush1.bf16.msra.mxu0 %v3893
    %4018 = vmatprep.subr.bf16.mxu0 0
    %4019 = vmatpush1.bf16.msra.mxu0 %v3896
    %4020 = vmatprep.subr.bf16.mxu0 0
    %4021 = vmatpush1.bf16.msra.mxu0 %v3899
    %4022 = vmatprep.subr.bf16.mxu0 0
    %4023 = vmatpush1.bf16.msra.mxu0 %v3902
    %4024 = vmatprep.mubr.bf16.mxu0 %v3135
    %4025 = vmatmul.mubr.bf16.gmra.mrb[0].mxu0 %v3630
    %v4026 = vpop.f32.mrb[0].mxu0
    %v4027 = vadd.f32 %v935, %v4026
    %v4028 = vpop.f32.mrb[0].mxu0
    %v4029 = vpop.f32.mrb[0].mxu0
    %v4030 = vpop.f32.mrb[0].mxu0
    %4031 = vdwg.mxu0
    %v4032 = vxor.u32 %v3986, 2147483648
    %v4033 = vmul.f32 %v4032, 1.442695
    %v4034 = vpow.pop %v4033
    %v4035 = vadd.f32 %v4034, 1.0
    %v4036 = vrcp.pop %v4035
    %v4037 = vmul.f32 1.0, %v4036
    %v4038 = vxor.u32 %v3988, 2147483648
    %v4039 = vmul.f32 %v4038, 1.442695
    %v4040 = vpow.pop %v4039
    %v4041 = vadd.f32 %v4040, 1.0
    %v4042 = vrcp.pop %v4041
    %v4043 = vmul.f32 1.0, %v4042
    %v4044 = vadd.f32 %v3600, %v1292
    %v4045 = vmul.f32 %v4037, %v4044
    %v4046 = vadd.f32 %v4027, %v4045
    %v4047 = vtanh.pop %v4046
    %v4048 = vsub.f32 1.0, %v4043
    %v4049 = vmul.f32 %v4048, %v4047
    %v4050 = vmul.f32 %v4043, %v3134
    %v4051 = vadd.f32 %v4049, %v4050
    %v4052 = vpack.c.bf16 %v4051, %v4051
    %s4053 = scalar_lea.vmem [#allocation3], 12
    %4054 = vst [vmem:[%s4053] sm:$0xf] %v4052
    %v4055 = vld [vmem:[#allocation9] sm:$0xff]
    %v4056 = vld [vmem:[#allocation9 + $0x8] sm:$0xff]
    %v4057 = vld [vmem:[#allocation9 + $0x10] sm:$0xff]
    %v4058 = vld [vmem:[#allocation9 + $0x18] sm:$0xff]
    %v4059 = vld [vmem:[#allocation9 + $0x20] sm:$0xff]
    %v4060 = vld [vmem:[#allocation9 + $0x28] sm:$0xff]
    %v4061 = vld [vmem:[#allocation9 + $0x30] sm:$0xff]
    %v4062 = vld [vmem:[#allocation9 + $0x38] sm:$0xff]
    %v4063 = vld [vmem:[#allocation9 + $0x40] sm:$0xff]
    %v4064 = vld [vmem:[#allocation9 + $0x48] sm:$0xff]
    %v4065 = vld [vmem:[#allocation9 + $0x50] sm:$0xff]
    %v4066 = vld [vmem:[#allocation9 + $0x58] sm:$0xff]
    %v4067 = vld [vmem:[#allocation9 + $0x60] sm:$0xff]
    %v4068 = vld [vmem:[#allocation9 + $0x68] sm:$0xff]
    %v4069 = vld [vmem:[#allocation9 + $0x70] sm:$0xff]
    %v4070 = vld [vmem:[#allocation9 + $0x78] sm:$0xff]
    %v4071 = vld [vmem:[#allocation9 + $0x80] sm:$0xff]
    %v4072 = vld [vmem:[#allocation9 + $0x88] sm:$0xff]
    %v4073 = vld [vmem:[#allocation9 + $0x90] sm:$0xff]
    %v4074 = vld [vmem:[#allocation9 + $0x98] sm:$0xff]
    %v4075 = vld [vmem:[#allocation9 + $0xa0] sm:$0xff]
    %v4076 = vld [vmem:[#allocation9 + $0xa8] sm:$0xff]
    %v4077 = vld [vmem:[#allocation9 + $0xb0] sm:$0xff]
    %v4078 = vld [vmem:[#allocation9 + $0xb8] sm:$0xff]
    %v4079 = vld [vmem:[#allocation9 + $0xc0] sm:$0xff]
    %v4080 = vld [vmem:[#allocation9 + $0xc8] sm:$0xff]
    %v4081 = vld [vmem:[#allocation9 + $0xd0] sm:$0xff]
    %v4082 = vld [vmem:[#allocation9 + $0xd8] sm:$0xff]
    %v4083 = vld [vmem:[#allocation9 + $0xe0] sm:$0xff]
    %v4084 = vld [vmem:[#allocation9 + $0xe8] sm:$0xff]
    %v4085 = vld [vmem:[#allocation9 + $0xf0] sm:$0xff]
    %v4086 = vld [vmem:[#allocation9 + $0xf8] sm:$0xff]
    %v4087 = vld [vmem:[#allocation9 + $0x100] sm:$0xff]
    %v4088 = vld [vmem:[#allocation9 + $0x108] sm:$0xff]
    %v4089 = vld [vmem:[#allocation9 + $0x110] sm:$0xff]
    %v4090 = vld [vmem:[#allocation9 + $0x118] sm:$0xff]
    %v4091 = vld [vmem:[#allocation9 + $0x120] sm:$0xff]
    %v4092 = vld [vmem:[#allocation9 + $0x128] sm:$0xff]
    %v4093 = vld [vmem:[#allocation9 + $0x130] sm:$0xff]
    %v4094 = vld [vmem:[#allocation9 + $0x138] sm:$0xff]
    %v4095 = vld [vmem:[#allocation9 + $0x140] sm:$0xff]
    %v4096 = vld [vmem:[#allocation9 + $0x148] sm:$0xff]
    %v4097 = vld [vmem:[#allocation9 + $0x150] sm:$0xff]
    %v4098 = vld [vmem:[#allocation9 + $0x158] sm:$0xff]
    %v4099 = vld [vmem:[#allocation9 + $0x160] sm:$0xff]
    %v4100 = vld [vmem:[#allocation9 + $0x168] sm:$0xff]
    %v4101 = vld [vmem:[#allocation9 + $0x170] sm:$0xff]
    %v4102 = vld [vmem:[#allocation9 + $0x178] sm:$0xff]
    %v4103 = vld [vmem:[#allocation9 + $0x180] sm:$0xff]
    %v4104 = vld [vmem:[#allocation9 + $0x188] sm:$0xff]
    %v4105 = vld [vmem:[#allocation9 + $0x190] sm:$0xff]
    %v4106 = vld [vmem:[#allocation9 + $0x198] sm:$0xff]
    %v4107 = vld [vmem:[#allocation9 + $0x1a0] sm:$0xff]
    %v4108 = vld [vmem:[#allocation9 + $0x1a8] sm:$0xff]
    %v4109 = vld [vmem:[#allocation9 + $0x1b0] sm:$0xff]
    %v4110 = vld [vmem:[#allocation9 + $0x1b8] sm:$0xff]
    %v4111 = vld [vmem:[#allocation9 + $0x1c0] sm:$0xff]
    %v4112 = vld [vmem:[#allocation9 + $0x1c8] sm:$0xff]
    %v4113 = vld [vmem:[#allocation9 + $0x1d0] sm:$0xff]
    %v4114 = vld [vmem:[#allocation9 + $0x1d8] sm:$0xff]
    %v4115 = vld [vmem:[#allocation9 + $0x1e0] sm:$0xff]
    %v4116 = vld [vmem:[#allocation9 + $0x1e8] sm:$0xff]
    %v4117 = vld [vmem:[#allocation9 + $0x1f0] sm:$0xff]
    %v4118 = vld [vmem:[#allocation9 + $0x1f8] sm:$0xff]
    %v4183 = vunpack.c.l.b16 %v4055
    %v4184 = vunpack.c.h.b16 %v4055
    %v4185 = vunpack.c.l.b16 %v4056
    %v4186 = vunpack.c.h.b16 %v4056
    %v4187 = vunpack.c.l.b16 %v4057
    %v4188 = vunpack.c.h.b16 %v4057
    %v4189 = vunpack.c.l.b16 %v4058
    %v4190 = vunpack.c.h.b16 %v4058
    %v4191 = vunpack.c.l.b16 %v4059
    %v4192 = vunpack.c.h.b16 %v4059
    %v4193 = vunpack.c.l.b16 %v4060
    %v4194 = vunpack.c.h.b16 %v4060
    %v4195 = vunpack.c.l.b16 %v4061
    %v4196 = vunpack.c.h.b16 %v4061
    %v4197 = vunpack.c.l.b16 %v4062
    %v4198 = vunpack.c.h.b16 %v4062
    %v4199 = vunpack.c.l.b16 %v4063
    %v4200 = vunpack.c.h.b16 %v4063
    %v4201 = vunpack.c.l.b16 %v4064
    %v4202 = vunpack.c.h.b16 %v4064
    %v4203 = vunpack.c.l.b16 %v4065
    %v4204 = vunpack.c.h.b16 %v4065
    %v4205 = vunpack.c.l.b16 %v4066
    %v4206 = vunpack.c.h.b16 %v4066
    %v4207 = vunpack.c.l.b16 %v4067
    %v4208 = vunpack.c.h.b16 %v4067
    %v4209 = vunpack.c.l.b16 %v4068
    %v4210 = vunpack.c.h.b16 %v4068
    %v4211 = vunpack.c.l.b16 %v4069
    %v4212 = vunpack.c.h.b16 %v4069
    %v4213 = vunpack.c.l.b16 %v4070
    %v4214 = vunpack.c.h.b16 %v4070
    %v4215 = vunpack.c.l.b16 %v4071
    %v4216 = vunpack.c.h.b16 %v4071
    %v4217 = vunpack.c.l.b16 %v4072
    %v4218 = vunpack.c.h.b16 %v4072
    %v4219 = vunpack.c.l.b16 %v4073
    %v4220 = vunpack.c.h.b16 %v4073
    %v4221 = vunpack.c.l.b16 %v4074
    %v4222 = vunpack.c.h.b16 %v4074
    %v4223 = vunpack.c.l.b16 %v4075
    %v4224 = vunpack.c.h.b16 %v4075
    %v4225 = vunpack.c.l.b16 %v4076
    %v4226 = vunpack.c.h.b16 %v4076
    %v4227 = vunpack.c.l.b16 %v4077
    %v4228 = vunpack.c.h.b16 %v4077
    %v4229 = vunpack.c.l.b16 %v4078
    %v4230 = vunpack.c.h.b16 %v4078
    %v4231 = vunpack.c.l.b16 %v4079
    %v4232 = vunpack.c.h.b16 %v4079
    %v4233 = vunpack.c.l.b16 %v4080
    %v4234 = vunpack.c.h.b16 %v4080
    %v4235 = vunpack.c.l.b16 %v4081
    %v4236 = vunpack.c.h.b16 %v4081
    %v4237 = vunpack.c.l.b16 %v4082
    %v4238 = vunpack.c.h.b16 %v4082
    %v4239 = vunpack.c.l.b16 %v4083
    %v4240 = vunpack.c.h.b16 %v4083
    %v4241 = vunpack.c.l.b16 %v4084
    %v4242 = vunpack.c.h.b16 %v4084
    %v4243 = vunpack.c.l.b16 %v4085
    %v4244 = vunpack.c.h.b16 %v4085
    %v4245 = vunpack.c.l.b16 %v4086
    %v4246 = vunpack.c.h.b16 %v4086
    %v4247 = vunpack.c.l.b16 %v4087
    %v4248 = vunpack.c.h.b16 %v4087
    %v4249 = vunpack.c.l.b16 %v4088
    %v4250 = vunpack.c.h.b16 %v4088
    %v4251 = vunpack.c.l.b16 %v4089
    %v4252 = vunpack.c.h.b16 %v4089
    %v4253 = vunpack.c.l.b16 %v4090
    %v4254 = vunpack.c.h.b16 %v4090
    %v4255 = vunpack.c.l.b16 %v4091
    %v4256 = vunpack.c.h.b16 %v4091
    %v4257 = vunpack.c.l.b16 %v4092
    %v4258 = vunpack.c.h.b16 %v4092
    %v4259 = vunpack.c.l.b16 %v4093
    %v4260 = vunpack.c.h.b16 %v4093
    %v4261 = vunpack.c.l.b16 %v4094
    %v4262 = vunpack.c.h.b16 %v4094
    %v4263 = vunpack.c.l.b16 %v4095
    %v4264 = vunpack.c.h.b16 %v4095
    %v4265 = vunpack.c.l.b16 %v4096
    %v4266 = vunpack.c.h.b16 %v4096
    %v4267 = vunpack.c.l.b16 %v4097
    %v4268 = vunpack.c.h.b16 %v4097
    %v4269 = vunpack.c.l.b16 %v4098
    %v4270 = vunpack.c.h.b16 %v4098
    %v4271 = vunpack.c.l.b16 %v4099
    %v4272 = vunpack.c.h.b16 %v4099
    %v4273 = vunpack.c.l.b16 %v4100
    %v4274 = vunpack.c.h.b16 %v4100
    %v4275 = vunpack.c.l.b16 %v4101
    %v4276 = vunpack.c.h.b16 %v4101
    %v4277 = vunpack.c.l.b16 %v4102
    %v4278 = vunpack.c.h.b16 %v4102
    %v4279 = vunpack.c.l.b16 %v4103
    %v4280 = vunpack.c.h.b16 %v4103
    %v4281 = vunpack.c.l.b16 %v4104
    %v4282 = vunpack.c.h.b16 %v4104
    %v4283 = vunpack.c.l.b16 %v4105
    %v4284 = vunpack.c.h.b16 %v4105
    %v4285 = vunpack.c.l.b16 %v4106
    %v4286 = vunpack.c.h.b16 %v4106
    %v4287 = vunpack.c.l.b16 %v4107
    %v4288 = vunpack.c.h.b16 %v4107
    %v4289 = vunpack.c.l.b16 %v4108
    %v4290 = vunpack.c.h.b16 %v4108
    %v4291 = vunpack.c.l.b16 %v4109
    %v4292 = vunpack.c.h.b16 %v4109
    %v4293 = vunpack.c.l.b16 %v4110
    %v4294 = vunpack.c.h.b16 %v4110
    %v4295 = vunpack.c.l.b16 %v4111
    %v4296 = vunpack.c.h.b16 %v4111
    %v4297 = vunpack.c.l.b16 %v4112
    %v4298 = vunpack.c.h.b16 %v4112
    %v4299 = vunpack.c.l.b16 %v4113
    %v4300 = vunpack.c.h.b16 %v4113
    %v4301 = vunpack.c.l.b16 %v4114
    %v4302 = vunpack.c.h.b16 %v4114
    %v4303 = vunpack.c.l.b16 %v4115
    %v4304 = vunpack.c.h.b16 %v4115
    %v4305 = vunpack.c.l.b16 %v4116
    %v4306 = vunpack.c.h.b16 %v4116
    %v4307 = vunpack.c.l.b16 %v4117
    %v4308 = vunpack.c.h.b16 %v4117
    %v4309 = vunpack.c.l.b16 %v4118
    %v4310 = vunpack.c.h.b16 %v4118
    %v4311 = vpack.c.b16 %v4187, %v4183
    %v4312 = vpack.c.b16 %v4188, %v4184
    %v4313 = vpack.c.b16 %v4189, %v4185
    %v4314 = vpack.c.b16 %v4190, %v4186
    %v4315 = vpack.c.b16 %v4195, %v4191
    %v4316 = vpack.c.b16 %v4196, %v4192
    %v4317 = vpack.c.b16 %v4197, %v4193
    %v4318 = vpack.c.b16 %v4198, %v4194
    %v4319 = vpack.c.b16 %v4203, %v4199
    %v4320 = vpack.c.b16 %v4204, %v4200
    %v4321 = vpack.c.b16 %v4205, %v4201
    %v4322 = vpack.c.b16 %v4206, %v4202
    %v4323 = vpack.c.b16 %v4211, %v4207
    %v4324 = vpack.c.b16 %v4212, %v4208
    %v4325 = vpack.c.b16 %v4213, %v4209
    %v4326 = vpack.c.b16 %v4214, %v4210
    %v4327 = vpack.c.b16 %v4219, %v4215
    %v4328 = vpack.c.b16 %v4220, %v4216
    %v4329 = vpack.c.b16 %v4221, %v4217
    %v4330 = vpack.c.b16 %v4222, %v4218
    %v4331 = vpack.c.b16 %v4227, %v4223
    %v4332 = vpack.c.b16 %v4228, %v4224
    %v4333 = vpack.c.b16 %v4229, %v4225
    %v4334 = vpack.c.b16 %v4230, %v4226
    %v4335 = vpack.c.b16 %v4235, %v4231
    %v4336 = vpack.c.b16 %v4236, %v4232
    %v4337 = vpack.c.b16 %v4237, %v4233
    %v4338 = vpack.c.b16 %v4238, %v4234
    %v4339 = vpack.c.b16 %v4243, %v4239
    %v4340 = vpack.c.b16 %v4244, %v4240
    %v4341 = vpack.c.b16 %v4245, %v4241
    %v4342 = vpack.c.b16 %v4246, %v4242
    %v4343 = vpack.c.b16 %v4251, %v4247
    %v4344 = vpack.c.b16 %v4252, %v4248
    %v4345 = vpack.c.b16 %v4253, %v4249
    %v4346 = vpack.c.b16 %v4254, %v4250
    %v4347 = vpack.c.b16 %v4259, %v4255
    %v4348 = vpack.c.b16 %v4260, %v4256
    %v4349 = vpack.c.b16 %v4261, %v4257
    %v4350 = vpack.c.b16 %v4262, %v4258
    %v4351 = vpack.c.b16 %v4267, %v4263
    %v4352 = vpack.c.b16 %v4268, %v4264
    %v4353 = vpack.c.b16 %v4269, %v4265
    %v4354 = vpack.c.b16 %v4270, %v4266
    %v4355 = vpack.c.b16 %v4275, %v4271
    %v4356 = vpack.c.b16 %v4276, %v4272
    %v4357 = vpack.c.b16 %v4277, %v4273
    %v4358 = vpack.c.b16 %v4278, %v4274
    %v4359 = vpack.c.b16 %v4283, %v4279
    %v4360 = vpack.c.b16 %v4284, %v4280
    %v4361 = vpack.c.b16 %v4285, %v4281
    %v4362 = vpack.c.b16 %v4286, %v4282
    %v4363 = vpack.c.b16 %v4291, %v4287
    %v4364 = vpack.c.b16 %v4292, %v4288
    %v4365 = vpack.c.b16 %v4293, %v4289
    %v4366 = vpack.c.b16 %v4294, %v4290
    %v4367 = vpack.c.b16 %v4299, %v4295
    %v4368 = vpack.c.b16 %v4300, %v4296
    %v4369 = vpack.c.b16 %v4301, %v4297
    %v4370 = vpack.c.b16 %v4302, %v4298
    %v4371 = vpack.c.b16 %v4307, %v4303
    %v4372 = vpack.c.b16 %v4308, %v4304
    %v4373 = vpack.c.b16 %v4309, %v4305
    %v4374 = vpack.c.b16 %v4310, %v4306
    %4439 = vmatprep.subr.bf16.mxu0 %v4312
    %4440 = vmatpush1.bf16.msra.mxu0 %v4311
    %4441 = vmatprep.subr.bf16.mxu0 %v4316
    %4442 = vmatpush1.bf16.msra.mxu0 %v4315
    %4443 = vmatprep.subr.bf16.mxu0 %v4320
    %4444 = vmatpush1.bf16.msra.mxu0 %v4319
    %4445 = vmatprep.subr.bf16.mxu0 %v4324
    %4446 = vmatpush1.bf16.msra.mxu0 %v4323
    %4447 = vmatprep.subr.bf16.mxu0 %v4328
    %4448 = vmatpush1.bf16.msra.mxu0 %v4327
    %4449 = vmatprep.subr.bf16.mxu0 %v4332
    %4450 = vmatpush1.bf16.msra.mxu0 %v4331
    %4451 = vmatprep.subr.bf16.mxu0 %v4336
    %4452 = vmatpush1.bf16.msra.mxu0 %v4335
    %4453 = vmatprep.subr.bf16.mxu0 %v4340
    %4454 = vmatpush1.bf16.msra.mxu0 %v4339
    %4455 = vmatprep.subr.bf16.mxu0 %v4344
    %4456 = vmatpush1.bf16.msra.mxu0 %v4343
    %4457 = vmatprep.subr.bf16.mxu0 %v4348
    %4458 = vmatpush1.bf16.msra.mxu0 %v4347
    %4459 = vmatprep.subr.bf16.mxu0 %v4352
    %4460 = vmatpush1.bf16.msra.mxu0 %v4351
    %4461 = vmatprep.subr.bf16.mxu0 %v4356
    %4462 = vmatpush1.bf16.msra.mxu0 %v4355
    %4463 = vmatprep.subr.bf16.mxu0 %v4360
    %4464 = vmatpush1.bf16.msra.mxu0 %v4359
    %4465 = vmatprep.subr.bf16.mxu0 %v4364
    %4466 = vmatpush1.bf16.msra.mxu0 %v4363
    %4467 = vmatprep.subr.bf16.mxu0 %v4368
    %4468 = vmatpush1.bf16.msra.mxu0 %v4367
    %4469 = vmatprep.subr.bf16.mxu0 %v4372
    %4470 = vmatpush1.bf16.msra.mxu0 %v4371
    %4471 = vmatprep.mubr.bf16.mxu0 %v4052
    %4472 = vmatmul.mubr.bf16.gmra.mrb[0].mxu0 %v3630
    %v4473 = vpop.f32.mrb[0].mxu0
    %v4474 = vadd.f32 0.0, %v4473
    %v4475 = vpop.f32.mrb[0].mxu0
    %v4476 = vadd.f32 0.0, %v4475
    %v4477 = vpop.f32.mrb[0].mxu0
    %v4478 = vpop.f32.mrb[0].mxu0
    %4479 = vdwg.mxu0
    %4480 = vmatprep.subr.bf16.mxu0 %v4314
    %4481 = vmatpush1.bf16.msra.mxu0 %v4313
    %4482 = vmatprep.subr.bf16.mxu0 %v4318
    %4483 = vmatpush1.bf16.msra.mxu0 %v4317
    %4484 = vmatprep.subr.bf16.mxu0 %v4322
    %4485 = vmatpush1.bf16.msra.mxu0 %v4321
    %4486 = vmatprep.subr.bf16.mxu0 %v4326
    %4487 = vmatpush1.bf16.msra.mxu0 %v4325
    %4488 = vmatprep.subr.bf16.mxu0 %v4330
    %4489 = vmatpush1.bf16.msra.mxu0 %v4329
    %4490 = vmatprep.subr.bf16.mxu0 %v4334
    %4491 = vmatpush1.bf16.msra.mxu0 %v4333
    %4492 = vmatprep.subr.bf16.mxu0 %v4338
    %4493 = vmatpush1.bf16.msra.mxu0 %v4337
    %4494 = vmatprep.subr.bf16.mxu0 %v4342
    %4495 = vmatpush1.bf16.msra.mxu0 %v4341
    %4496 = vmatprep.subr.bf16.mxu0 %v4346
    %4497 = vmatpush1.bf16.msra.mxu0 %v4345
    %4498 = vmatprep.subr.bf16.mxu0 %v4350
    %4499 = vmatpush1.bf16.msra.mxu0 %v4349
    %4500 = vmatprep.subr.bf16.mxu0 %v4354
    %4501 = vmatpush1.bf16.msra.mxu0 %v4353
    %4502 = vmatprep.subr.bf16.mxu0 %v4358
    %4503 = vmatpush1.bf16.msra.mxu0 %v4357
    %4504 = vmatprep.subr.bf16.mxu0 %v4362
    %4505 = vmatpush1.bf16.msra.mxu0 %v4361
    %4506 = vmatprep.subr.bf16.mxu0 %v4366
    %4507 = vmatpush1.bf16.msra.mxu0 %v4365
    %4508 = vmatprep.subr.bf16.mxu0 %v4370
    %4509 = vmatpush1.bf16.msra.mxu0 %v4369
    %4510 = vmatprep.subr.bf16.mxu0 %v4374
    %4511 = vmatpush1.bf16.msra.mxu0 %v4373
    %4512 = vmatprep.mubr.bf16.mxu0 %v4052
    %4513 = vmatmul.mubr.bf16.gmra.mrb[0].mxu0 %v3630
    %v4514 = vpop.f32.mrb[0].mxu0
    %v4515 = vadd.f32 0.0, %v4514
    %v4516 = vpop.f32.mrb[0].mxu0
    %v4517 = vadd.f32 0.0, %v4516
    %v4518 = vpop.f32.mrb[0].mxu0
    %v4519 = vpop.f32.mrb[0].mxu0
    %4520 = vdwg.mxu0
    %s4521 = scalar_lea.vmem [#allocation2], 96
    %v4522 = vld [vmem:[%s4521] sm:$0xff]
    %v4523 = vld [vmem:[%s4521 + $0x8] sm:$0xff]
    %v4524 = vld [vmem:[%s4521 + $0x10] sm:$0xff]
    %v4525 = vadd.f32 %v4522, %v4474
    %v4526 = vxor.u32 %v4525, 2147483648
    %v4527 = vmul.f32 %v4526, 1.442695
    %v4528 = vpow.pop %v4527
    %v4529 = vadd.f32 %v4528, 1.0
    %v4530 = vrcp.pop %v4529
    %v4531 = vmul.f32 1.0, %v4530
    %v4532 = vadd.f32 %v4523, %v4476
    %v4533 = vxor.u32 %v4532, 2147483648
    %v4534 = vmul.f32 %v4533, 1.442695
    %v4535 = vpow.pop %v4534
    %v4536 = vadd.f32 %v4535, 1.0
    %v4537 = vrcp.pop %v4536
    %v4538 = vmul.f32 1.0, %v4537
    %v4539 = vadd.f32 %v4515, %v848
    %v4540 = vmul.f32 %v4531, %v4539
    %v4541 = vadd.f32 %v4524, %v4540
    %v4542 = vtanh.pop %v4541
    %v4543 = vsub.f32 1.0, %v4538
    %v4544 = vmul.f32 %v4543, %v4542
    %v4545 = vmul.f32 %v4538, %v3629
    %v4546 = vadd.f32 %v4544, %v4545
    %v4547 = vpack.c.bf16 %v4546, %v4546
    %v4548 = vld [vmem:[#allocation10] sm:$0xff]
    %v4549 = vld [vmem:[#allocation10 + $0x8] sm:$0xf]
    %v4550 = vld [vmem:[#allocation10 + $0xc] sm:$0xff]
    %v4551 = vld [vmem:[#allocation10 + $0x14] sm:$0xf]
    %v4552 = vld [vmem:[#allocation10 + $0x18] sm:$0xff]
    %v4553 = vld [vmem:[#allocation10 + $0x20] sm:$0xf]
    %v4554 = vld [vmem:[#allocation10 + $0x24] sm:$0xff]
    %v4555 = vld [vmem:[#allocation10 + $0x2c] sm:$0xf]
    %v4556 = vld [vmem:[#allocation10 + $0x30] sm:$0xff]
    %v4557 = vld [vmem:[#allocation10 + $0x38] sm:$0xf]
    %v4558 = vld [vmem:[#allocation10 + $0x3c] sm:$0xff]
    %v4559 = vld [vmem:[#allocation10 + $0x44] sm:$0xf]
    %v4560 = vld [vmem:[#allocation10 + $0x48] sm:$0xff]
    %v4561 = vld [vmem:[#allocation10 + $0x50] sm:$0xf]
    %v4562 = vld [vmem:[#allocation10 + $0x54] sm:$0xff]
    %v4563 = vld [vmem:[#allocation10 + $0x5c] sm:$0xf]
    %v4564 = vld [vmem:[#allocation10 + $0x60] sm:$0xff]
    %v4565 = vld [vmem:[#allocation10 + $0x68] sm:$0xf]
    %v4566 = vld [vmem:[#allocation10 + $0x6c] sm:$0xff]
    %v4567 = vld [vmem:[#allocation10 + $0x74] sm:$0xf]
    %v4568 = vld [vmem:[#allocation10 + $0x78] sm:$0xff]
    %v4569 = vld [vmem:[#allocation10 + $0x80] sm:$0xf]
    %v4570 = vld [vmem:[#allocation10 + $0x84] sm:$0xff]
    %v4571 = vld [vmem:[#allocation10 + $0x8c] sm:$0xf]
    %v4572 = vld [vmem:[#allocation10 + $0x90] sm:$0xff]
    %v4573 = vld [vmem:[#allocation10 + $0x98] sm:$0xf]
    %v4574 = vld [vmem:[#allocation10 + $0x9c] sm:$0xff]
    %v4575 = vld [vmem:[#allocation10 + $0xa4] sm:$0xf]
    %v4576 = vld [vmem:[#allocation10 + $0xa8] sm:$0xff]
    %v4577 = vld [vmem:[#allocation10 + $0xb0] sm:$0xf]
    %v4578 = vld [vmem:[#allocation10 + $0xb4] sm:$0xff]
    %v4579 = vld [vmem:[#allocation10 + $0xbc] sm:$0xf]
    %v4580 = vld [vmem:[#allocation10 + $0xc0] sm:$0xff]
    %v4581 = vld [vmem:[#allocation10 + $0xc8] sm:$0xf]
    %v4582 = vld [vmem:[#allocation10 + $0xcc] sm:$0xff]
    %v4583 = vld [vmem:[#allocation10 + $0xd4] sm:$0xf]
    %v4584 = vld [vmem:[#allocation10 + $0xd8] sm:$0xff]
    %v4585 = vld [vmem:[#allocation10 + $0xe0] sm:$0xf]
    %v4586 = vld [vmem:[#allocation10 + $0xe4] sm:$0xff]
    %v4587 = vld [vmem:[#allocation10 + $0xec] sm:$0xf]
    %v4588 = vld [vmem:[#allocation10 + $0xf0] sm:$0xff]
    %v4589 = vld [vmem:[#allocation10 + $0xf8] sm:$0xf]
    %v4590 = vld [vmem:[#allocation10 + $0xfc] sm:$0xff]
    %v4591 = vld [vmem:[#allocation10 + $0x104] sm:$0xf]
    %v4592 = vld [vmem:[#allocation10 + $0x108] sm:$0xff]
    %v4593 = vld [vmem:[#allocation10 + $0x110] sm:$0xf]
    %v4594 = vld [vmem:[#allocation10 + $0x114] sm:$0xff]
    %v4595 = vld [vmem:[#allocation10 + $0x11c] sm:$0xf]
    %v4596 = vld [vmem:[#allocation10 + $0x120] sm:$0xff]
    %v4597 = vld [vmem:[#allocation10 + $0x128] sm:$0xf]
    %v4598 = vld [vmem:[#allocation10 + $0x12c] sm:$0xff]
    %v4599 = vld [vmem:[#allocation10 + $0x134] sm:$0xf]
    %v4600 = vld [vmem:[#allocation10 + $0x138] sm:$0xff]
    %v4601 = vld [vmem:[#allocation10 + $0x140] sm:$0xf]
    %v4602 = vld [vmem:[#allocation10 + $0x144] sm:$0xff]
    %v4603 = vld [vmem:[#allocation10 + $0x14c] sm:$0xf]
    %v4604 = vld [vmem:[#allocation10 + $0x150] sm:$0xff]
    %v4605 = vld [vmem:[#allocation10 + $0x158] sm:$0xf]
    %v4606 = vld [vmem:[#allocation10 + $0x15c] sm:$0xff]
    %v4607 = vld [vmem:[#allocation10 + $0x164] sm:$0xf]
    %v4608 = vld [vmem:[#allocation10 + $0x168] sm:$0xff]
    %v4609 = vld [vmem:[#allocation10 + $0x170] sm:$0xf]
    %v4610 = vld [vmem:[#allocation10 + $0x174] sm:$0xff]
    %v4611 = vld [vmem:[#allocation10 + $0x17c] sm:$0xf]
    %v4676 = vunpack.c.l.b16 %v4548
    %v4677 = vunpack.c.h.b16 %v4548
    %v4678 = vunpack.c.l.b16 %v4549
    %v4679 = vunpack.c.l.b16 %v4550
    %v4680 = vunpack.c.h.b16 %v4550
    %v4681 = vunpack.c.l.b16 %v4551
    %v4682 = vunpack.c.l.b16 %v4552
    %v4683 = vunpack.c.h.b16 %v4552
    %v4684 = vunpack.c.l.b16 %v4553
    %v4685 = vunpack.c.l.b16 %v4554
    %v4686 = vunpack.c.h.b16 %v4554
    %v4687 = vunpack.c.l.b16 %v4555
    %v4688 = vunpack.c.l.b16 %v4556
    %v4689 = vunpack.c.h.b16 %v4556
    %v4690 = vunpack.c.l.b16 %v4557
    %v4691 = vunpack.c.l.b16 %v4558
    %v4692 = vunpack.c.h.b16 %v4558
    %v4693 = vunpack.c.l.b16 %v4559
    %v4694 = vunpack.c.l.b16 %v4560
    %v4695 = vunpack.c.h.b16 %v4560
    %v4696 = vunpack.c.l.b16 %v4561
    %v4697 = vunpack.c.l.b16 %v4562
    %v4698 = vunpack.c.h.b16 %v4562
    %v4699 = vunpack.c.l.b16 %v4563
    %v4700 = vunpack.c.l.b16 %v4564
    %v4701 = vunpack.c.h.b16 %v4564
    %v4702 = vunpack.c.l.b16 %v4565
    %v4703 = vunpack.c.l.b16 %v4566
    %v4704 = vunpack.c.h.b16 %v4566
    %v4705 = vunpack.c.l.b16 %v4567
    %v4706 = vunpack.c.l.b16 %v4568
    %v4707 = vunpack.c.h.b16 %v4568
    %v4708 = vunpack.c.l.b16 %v4569
    %v4709 = vunpack.c.l.b16 %v4570
    %v4710 = vunpack.c.h.b16 %v4570
    %v4711 = vunpack.c.l.b16 %v4571
    %v4712 = vunpack.c.l.b16 %v4572
    %v4713 = vunpack.c.h.b16 %v4572
    %v4714 = vunpack.c.l.b16 %v4573
    %v4715 = vunpack.c.l.b16 %v4574
    %v4716 = vunpack.c.h.b16 %v4574
    %v4717 = vunpack.c.l.b16 %v4575
    %v4718 = vunpack.c.l.b16 %v4576
    %v4719 = vunpack.c.h.b16 %v4576
    %v4720 = vunpack.c.l.b16 %v4577
    %v4721 = vunpack.c.l.b16 %v4578
    %v4722 = vunpack.c.h.b16 %v4578
    %v4723 = vunpack.c.l.b16 %v4579
    %v4724 = vunpack.c.l.b16 %v4580
    %v4725 = vunpack.c.h.b16 %v4580
    %v4726 = vunpack.c.l.b16 %v4581
    %v4727 = vunpack.c.l.b16 %v4582
    %v4728 = vunpack.c.h.b16 %v4582
    %v4729 = vunpack.c.l.b16 %v4583
    %v4730 = vunpack.c.l.b16 %v4584
    %v4731 = vunpack.c.h.b16 %v4584
    %v4732 = vunpack.c.l.b16 %v4585
    %v4733 = vunpack.c.l.b16 %v4586
    %v4734 = vunpack.c.h.b16 %v4586
    %v4735 = vunpack.c.l.b16 %v4587
    %v4736 = vunpack.c.l.b16 %v4588
    %v4737 = vunpack.c.h.b16 %v4588
    %v4738 = vunpack.c.l.b16 %v4589
    %v4739 = vunpack.c.l.b16 %v4590
    %v4740 = vunpack.c.h.b16 %v4590
    %v4741 = vunpack.c.l.b16 %v4591
    %v4742 = vunpack.c.l.b16 %v4592
    %v4743 = vunpack.c.h.b16 %v4592
    %v4744 = vunpack.c.l.b16 %v4593
    %v4745 = vunpack.c.l.b16 %v4594
    %v4746 = vunpack.c.h.b16 %v4594
    %v4747 = vunpack.c.l.b16 %v4595
    %v4748 = vunpack.c.l.b16 %v4596
    %v4749 = vunpack.c.h.b16 %v4596
    %v4750 = vunpack.c.l.b16 %v4597
    %v4751 = vunpack.c.l.b16 %v4598
    %v4752 = vunpack.c.h.b16 %v4598
    %v4753 = vunpack.c.l.b16 %v4599
    %v4754 = vunpack.c.l.b16 %v4600
    %v4755 = vunpack.c.h.b16 %v4600
    %v4756 = vunpack.c.l.b16 %v4601
    %v4757 = vunpack.c.l.b16 %v4602
    %v4758 = vunpack.c.h.b16 %v4602
    %v4759 = vunpack.c.l.b16 %v4603
    %v4760 = vunpack.c.l.b16 %v4604
    %v4761 = vunpack.c.h.b16 %v4604
    %v4762 = vunpack.c.l.b16 %v4605
    %v4763 = vunpack.c.l.b16 %v4606
    %v4764 = vunpack.c.h.b16 %v4606
    %v4765 = vunpack.c.l.b16 %v4607
    %v4766 = vunpack.c.l.b16 %v4608
    %v4767 = vunpack.c.h.b16 %v4608
    %v4768 = vunpack.c.l.b16 %v4609
    %v4769 = vunpack.c.l.b16 %v4610
    %v4770 = vunpack.c.h.b16 %v4610
    %v4771 = vunpack.c.l.b16 %v4611
    %v4772 = vpack.c.b16 %v4679, %v4676
    %v4773 = vpack.c.b16 %v4680, %v4677
    %v4774 = vpack.c.b16 %v4681, %v4678
    %v4775 = vpack.c.b16 %v4685, %v4682
    %v4776 = vpack.c.b16 %v4686, %v4683
    %v4777 = vpack.c.b16 %v4687, %v4684
    %v4778 = vpack.c.b16 %v4691, %v4688
    %v4779 = vpack.c.b16 %v4692, %v4689
    %v4780 = vpack.c.b16 %v4693, %v4690
    %v4781 = vpack.c.b16 %v4697, %v4694
    %v4782 = vpack.c.b16 %v4698, %v4695
    %v4783 = vpack.c.b16 %v4699, %v4696
    %v4784 = vpack.c.b16 %v4703, %v4700
    %v4785 = vpack.c.b16 %v4704, %v4701
    %v4786 = vpack.c.b16 %v4705, %v4702
    %v4787 = vpack.c.b16 %v4709, %v4706
    %v4788 = vpack.c.b16 %v4710, %v4707
    %v4789 = vpack.c.b16 %v4711, %v4708
    %v4790 = vpack.c.b16 %v4715, %v4712
    %v4791 = vpack.c.b16 %v4716, %v4713
    %v4792 = vpack.c.b16 %v4717, %v4714
    %v4793 = vpack.c.b16 %v4721, %v4718
    %v4794 = vpack.c.b16 %v4722, %v4719
    %v4795 = vpack.c.b16 %v4723, %v4720
    %v4796 = vpack.c.b16 %v4727, %v4724
    %v4797 = vpack.c.b16 %v4728, %v4725
    %v4798 = vpack.c.b16 %v4729, %v4726
    %v4799 = vpack.c.b16 %v4733, %v4730
    %v4800 = vpack.c.b16 %v4734, %v4731
    %v4801 = vpack.c.b16 %v4735, %v4732
    %v4802 = vpack.c.b16 %v4739, %v4736
    %v4803 = vpack.c.b16 %v4740, %v4737
    %v4804 = vpack.c.b16 %v4741, %v4738
    %v4805 = vpack.c.b16 %v4745, %v4742
    %v4806 = vpack.c.b16 %v4746, %v4743
    %v4807 = vpack.c.b16 %v4747, %v4744
    %v4808 = vpack.c.b16 %v4751, %v4748
    %v4809 = vpack.c.b16 %v4752, %v4749
    %v4810 = vpack.c.b16 %v4753, %v4750
    %v4811 = vpack.c.b16 %v4757, %v4754
    %v4812 = vpack.c.b16 %v4758, %v4755
    %v4813 = vpack.c.b16 %v4759, %v4756
    %v4814 = vpack.c.b16 %v4763, %v4760
    %v4815 = vpack.c.b16 %v4764, %v4761
    %v4816 = vpack.c.b16 %v4765, %v4762
    %v4817 = vpack.c.b16 %v4769, %v4766
    %v4818 = vpack.c.b16 %v4770, %v4767
    %v4819 = vpack.c.b16 %v4771, %v4768
    %4868 = vmatprep.subr.bf16.mxu0 %v4773
    %4869 = vmatpush1.bf16.msra.mxu0 %v4772
    %4870 = vmatprep.subr.bf16.mxu0 %v4776
    %4871 = vmatpush1.bf16.msra.mxu0 %v4775
    %4872 = vmatprep.subr.bf16.mxu0 %v4779
    %4873 = vmatpush1.bf16.msra.mxu0 %v4778
    %4874 = vmatprep.subr.bf16.mxu0 %v4782
    %4875 = vmatpush1.bf16.msra.mxu0 %v4781
    %4876 = vmatprep.subr.bf16.mxu0 %v4785
    %4877 = vmatpush1.bf16.msra.mxu0 %v4784
    %4878 = vmatprep.subr.bf16.mxu0 %v4788
    %4879 = vmatpush1.bf16.msra.mxu0 %v4787
    %4880 = vmatprep.subr.bf16.mxu0 %v4791
    %4881 = vmatpush1.bf16.msra.mxu0 %v4790
    %4882 = vmatprep.subr.bf16.mxu0 %v4794
    %4883 = vmatpush1.bf16.msra.mxu0 %v4793
    %4884 = vmatprep.subr.bf16.mxu0 %v4797
    %4885 = vmatpush1.bf16.msra.mxu0 %v4796
    %4886 = vmatprep.subr.bf16.mxu0 %v4800
    %4887 = vmatpush1.bf16.msra.mxu0 %v4799
    %4888 = vmatprep.subr.bf16.mxu0 %v4803
    %4889 = vmatpush1.bf16.msra.mxu0 %v4802
    %4890 = vmatprep.subr.bf16.mxu0 %v4806
    %4891 = vmatpush1.bf16.msra.mxu0 %v4805
    %4892 = vmatprep.subr.bf16.mxu0 %v4809
    %4893 = vmatpush1.bf16.msra.mxu0 %v4808
    %4894 = vmatprep.subr.bf16.mxu0 %v4812
    %4895 = vmatpush1.bf16.msra.mxu0 %v4811
    %4896 = vmatprep.subr.bf16.mxu0 %v4815
    %4897 = vmatpush1.bf16.msra.mxu0 %v4814
    %4898 = vmatprep.subr.bf16.mxu0 %v4818
    %4899 = vmatpush1.bf16.msra.mxu0 %v4817
    %4900 = vmatprep.mubr.bf16.mxu0 %v4052
    %4901 = vmatmul.mubr.bf16.gmra.mrb[0].mxu0 %v4547
    %v4902 = vpop.f32.mrb[0].mxu0
    %v4903 = vadd.f32 %v927, %v4902
    %v4904 = vpop.f32.mrb[0].mxu0
    %v4905 = vadd.f32 %v931, %v4904
    %v4906 = vpop.f32.mrb[0].mxu0
    %v4907 = vpop.f32.mrb[0].mxu0
    %4908 = vdwg.mxu0
    %4909 = vmatprep.subr.bf16.mxu0 0
    %4910 = vmatpush1.bf16.msra.mxu0 %v4774
    %4911 = vmatprep.subr.bf16.mxu0 0
    %4912 = vmatpush1.bf16.msra.mxu0 %v4777
    %4913 = vmatprep.subr.bf16.mxu0 0
    %4914 = vmatpush1.bf16.msra.mxu0 %v4780
    %4915 = vmatprep.subr.bf16.mxu0 0
    %4916 = vmatpush1.bf16.msra.mxu0 %v4783
    %4917 = vmatprep.subr.bf16.mxu0 0
    %4918 = vmatpush1.bf16.msra.mxu0 %v4786
    %4919 = vmatprep.subr.bf16.mxu0 0
    %4920 = vmatpush1.bf16.msra.mxu0 %v4789
    %4921 = vmatprep.subr.bf16.mxu0 0
    %4922 = vmatpush1.bf16.msra.mxu0 %v4792
    %4923 = vmatprep.subr.bf16.mxu0 0
    %4924 = vmatpush1.bf16.msra.mxu0 %v4795
    %4925 = vmatprep.subr.bf16.mxu0 0
    %4926 = vmatpush1.bf16.msra.mxu0 %v4798
    %4927 = vmatprep.subr.bf16.mxu0 0
    %4928 = vmatpush1.bf16.msra.mxu0 %v4801
    %4929 = vmatprep.subr.bf16.mxu0 0
    %4930 = vmatpush1.bf16.msra.mxu0 %v4804
    %4931 = vmatprep.subr.bf16.mxu0 0
    %4932 = vmatpush1.bf16.msra.mxu0 %v4807
    %4933 = vmatprep.subr.bf16.mxu0 0
    %4934 = vmatpush1.bf16.msra.mxu0 %v4810
    %4935 = vmatprep.subr.bf16.mxu0 0
    %4936 = vmatpush1.bf16.msra.mxu0 %v4813
    %4937 = vmatprep.subr.bf16.mxu0 0
    %4938 = vmatpush1.bf16.msra.mxu0 %v4816
    %4939 = vmatprep.subr.bf16.mxu0 0
    %4940 = vmatpush1.bf16.msra.mxu0 %v4819
    %4941 = vmatprep.mubr.bf16.mxu0 %v4052
    %4942 = vmatmul.mubr.bf16.gmra.mrb[0].mxu0 %v4547
    %v4943 = vpop.f32.mrb[0].mxu0
    %v4944 = vadd.f32 %v935, %v4943
    %v4945 = vpop.f32.mrb[0].mxu0
    %v4946 = vpop.f32.mrb[0].mxu0
    %v4947 = vpop.f32.mrb[0].mxu0
    %4948 = vdwg.mxu0
    %v4949 = vxor.u32 %v4903, 2147483648
    %v4950 = vmul.f32 %v4949, 1.442695
    %v4951 = vpow.pop %v4950
    %v4952 = vadd.f32 %v4951, 1.0
    %v4953 = vrcp.pop %v4952
    %v4954 = vmul.f32 1.0, %v4953
    %v4955 = vxor.u32 %v4905, 2147483648
    %v4956 = vmul.f32 %v4955, 1.442695
    %v4957 = vpow.pop %v4956
    %v4958 = vadd.f32 %v4957, 1.0
    %v4959 = vrcp.pop %v4958
    %v4960 = vmul.f32 1.0, %v4959
    %v4961 = vadd.f32 %v4517, %v1292
    %v4962 = vmul.f32 %v4954, %v4961
    %v4963 = vadd.f32 %v4944, %v4962
    %v4964 = vtanh.pop %v4963
    %v4965 = vsub.f32 1.0, %v4960
    %v4966 = vmul.f32 %v4965, %v4964
    %v4967 = vmul.f32 %v4960, %v4051
    %v4968 = vadd.f32 %v4966, %v4967
    %v4969 = vpack.c.bf16 %v4968, %v4968
    %s4970 = scalar_lea.vmem [#allocation3], 16
    %4971 = vst [vmem:[%s4970] sm:$0xf] %v4969
    %v4972 = vld [vmem:[#allocation9] sm:$0xff]
    %v4973 = vld [vmem:[#allocation9 + $0x8] sm:$0xff]
    %v4974 = vld [vmem:[#allocation9 + $0x10] sm:$0xff]
    %v4975 = vld [vmem:[#allocation9 + $0x18] sm:$0xff]
    %v4976 = vld [vmem:[#allocation9 + $0x20] sm:$0xff]
    %v4977 = vld [vmem:[#allocation9 + $0x28] sm:$0xff]
    %v4978 = vld [vmem:[#allocation9 + $0x30] sm:$0xff]
    %v4979 = vld [vmem:[#allocation9 + $0x38] sm:$0xff]
    %v4980 = vld [vmem:[#allocation9 + $0x40] sm:$0xff]
    %v4981 = vld [vmem:[#allocation9 + $0x48] sm:$0xff]
    %v4982 = vld [vmem:[#allocation9 + $0x50] sm:$0xff]
    %v4983 = vld [vmem:[#allocation9 + $0x58] sm:$0xff]
    %v4984 = vld [vmem:[#allocation9 + $0x60] sm:$0xff]
    %v4985 = vld [vmem:[#allocation9 + $0x68] sm:$0xff]
    %v4986 = vld [vmem:[#allocation9 + $0x70] sm:$0xff]
    %v4987 = vld [vmem:[#allocation9 + $0x78] sm:$0xff]
    %v4988 = vld [vmem:[#allocation9 + $0x80] sm:$0xff]
    %v4989 = vld [vmem:[#allocation9 + $0x88] sm:$0xff]
    %v4990 = vld [vmem:[#allocation9 + $0x90] sm:$0xff]
    %v4991 = vld [vmem:[#allocation9 + $0x98] sm:$0xff]
    %v4992 = vld [vmem:[#allocation9 + $0xa0] sm:$0xff]
    %v4993 = vld [vmem:[#allocation9 + $0xa8] sm:$0xff]
    %v4994 = vld [vmem:[#allocation9 + $0xb0] sm:$0xff]
    %v4995 = vld [vmem:[#allocation9 + $0xb8] sm:$0xff]
    %v4996 = vld [vmem:[#allocation9 + $0xc0] sm:$0xff]
    %v4997 = vld [vmem:[#allocation9 + $0xc8] sm:$0xff]
    %v4998 = vld [vmem:[#allocation9 + $0xd0] sm:$0xff]
    %v4999 = vld [vmem:[#allocation9 + $0xd8] sm:$0xff]
    %v5000 = vld [vmem:[#allocation9 + $0xe0] sm:$0xff]
    %v5001 = vld [vmem:[#allocation9 + $0xe8] sm:$0xff]
    %v5002 = vld [vmem:[#allocation9 + $0xf0] sm:$0xff]
    %v5003 = vld [vmem:[#allocation9 + $0xf8] sm:$0xff]
    %v5004 = vld [vmem:[#allocation9 + $0x100] sm:$0xff]
    %v5005 = vld [vmem:[#allocation9 + $0x108] sm:$0xff]
    %v5006 = vld [vmem:[#allocation9 + $0x110] sm:$0xff]
    %v5007 = vld [vmem:[#allocation9 + $0x118] sm:$0xff]
    %v5008 = vld [vmem:[#allocation9 + $0x120] sm:$0xff]
    %v5009 = vld [vmem:[#allocation9 + $0x128] sm:$0xff]
    %v5010 = vld [vmem:[#allocation9 + $0x130] sm:$0xff]
    %v5011 = vld [vmem:[#allocation9 + $0x138] sm:$0xff]
    %v5012 = vld [vmem:[#allocation9 + $0x140] sm:$0xff]
    %v5013 = vld [vmem:[#allocation9 + $0x148] sm:$0xff]
    %v5014 = vld [vmem:[#allocation9 + $0x150] sm:$0xff]
    %v5015 = vld [vmem:[#allocation9 + $0x158] sm:$0xff]
    %v5016 = vld [vmem:[#allocation9 + $0x160] sm:$0xff]
    %v5017 = vld [vmem:[#allocation9 + $0x168] sm:$0xff]
    %v5018 = vld [vmem:[#allocation9 + $0x170] sm:$0xff]
    %v5019 = vld [vmem:[#allocation9 + $0x178] sm:$0xff]
    %v5020 = vld [vmem:[#allocation9 + $0x180] sm:$0xff]
    %v5021 = vld [vmem:[#allocation9 + $0x188] sm:$0xff]
    %v5022 = vld [vmem:[#allocation9 + $0x190] sm:$0xff]
    %v5023 = vld [vmem:[#allocation9 + $0x198] sm:$0xff]
    %v5024 = vld [vmem:[#allocation9 + $0x1a0] sm:$0xff]
    %v5025 = vld [vmem:[#allocation9 + $0x1a8] sm:$0xff]
    %v5026 = vld [vmem:[#allocation9 + $0x1b0] sm:$0xff]
    %v5027 = vld [vmem:[#allocation9 + $0x1b8] sm:$0xff]
    %v5028 = vld [vmem:[#allocation9 + $0x1c0] sm:$0xff]
    %v5029 = vld [vmem:[#allocation9 + $0x1c8] sm:$0xff]
    %v5030 = vld [vmem:[#allocation9 + $0x1d0] sm:$0xff]
    %v5031 = vld [vmem:[#allocation9 + $0x1d8] sm:$0xff]
    %v5032 = vld [vmem:[#allocation9 + $0x1e0] sm:$0xff]
    %v5033 = vld [vmem:[#allocation9 + $0x1e8] sm:$0xff]
    %v5034 = vld [vmem:[#allocation9 + $0x1f0] sm:$0xff]
    %v5035 = vld [vmem:[#allocation9 + $0x1f8] sm:$0xff]
    %v5100 = vunpack.c.l.b16 %v4972
    %v5101 = vunpack.c.h.b16 %v4972
    %v5102 = vunpack.c.l.b16 %v4973
    %v5103 = vunpack.c.h.b16 %v4973
    %v5104 = vunpack.c.l.b16 %v4974
    %v5105 = vunpack.c.h.b16 %v4974
    %v5106 = vunpack.c.l.b16 %v4975
    %v5107 = vunpack.c.h.b16 %v4975
    %v5108 = vunpack.c.l.b16 %v4976
    %v5109 = vunpack.c.h.b16 %v4976
    %v5110 = vunpack.c.l.b16 %v4977
    %v5111 = vunpack.c.h.b16 %v4977
    %v5112 = vunpack.c.l.b16 %v4978
    %v5113 = vunpack.c.h.b16 %v4978
    %v5114 = vunpack.c.l.b16 %v4979
    %v5115 = vunpack.c.h.b16 %v4979
    %v5116 = vunpack.c.l.b16 %v4980
    %v5117 = vunpack.c.h.b16 %v4980
    %v5118 = vunpack.c.l.b16 %v4981
    %v5119 = vunpack.c.h.b16 %v4981
    %v5120 = vunpack.c.l.b16 %v4982
    %v5121 = vunpack.c.h.b16 %v4982
    %v5122 = vunpack.c.l.b16 %v4983
    %v5123 = vunpack.c.h.b16 %v4983
    %v5124 = vunpack.c.l.b16 %v4984
    %v5125 = vunpack.c.h.b16 %v4984
    %v5126 = vunpack.c.l.b16 %v4985
    %v5127 = vunpack.c.h.b16 %v4985
    %v5128 = vunpack.c.l.b16 %v4986
    %v5129 = vunpack.c.h.b16 %v4986
    %v5130 = vunpack.c.l.b16 %v4987
    %v5131 = vunpack.c.h.b16 %v4987
    %v5132 = vunpack.c.l.b16 %v4988
    %v5133 = vunpack.c.h.b16 %v4988
    %v5134 = vunpack.c.l.b16 %v4989
    %v5135 = vunpack.c.h.b16 %v4989
    %v5136 = vunpack.c.l.b16 %v4990
    %v5137 = vunpack.c.h.b16 %v4990
    %v5138 = vunpack.c.l.b16 %v4991
    %v5139 = vunpack.c.h.b16 %v4991
    %v5140 = vunpack.c.l.b16 %v4992
    %v5141 = vunpack.c.h.b16 %v4992
    %v5142 = vunpack.c.l.b16 %v4993
    %v5143 = vunpack.c.h.b16 %v4993
    %v5144 = vunpack.c.l.b16 %v4994
    %v5145 = vunpack.c.h.b16 %v4994
    %v5146 = vunpack.c.l.b16 %v4995
    %v5147 = vunpack.c.h.b16 %v4995
    %v5148 = vunpack.c.l.b16 %v4996
    %v5149 = vunpack.c.h.b16 %v4996
    %v5150 = vunpack.c.l.b16 %v4997
    %v5151 = vunpack.c.h.b16 %v4997
    %v5152 = vunpack.c.l.b16 %v4998
    %v5153 = vunpack.c.h.b16 %v4998
    %v5154 = vunpack.c.l.b16 %v4999
    %v5155 = vunpack.c.h.b16 %v4999
    %v5156 = vunpack.c.l.b16 %v5000
    %v5157 = vunpack.c.h.b16 %v5000
    %v5158 = vunpack.c.l.b16 %v5001
    %v5159 = vunpack.c.h.b16 %v5001
    %v5160 = vunpack.c.l.b16 %v5002
    %v5161 = vunpack.c.h.b16 %v5002
    %v5162 = vunpack.c.l.b16 %v5003
    %v5163 = vunpack.c.h.b16 %v5003
    %v5164 = vunpack.c.l.b16 %v5004
    %v5165 = vunpack.c.h.b16 %v5004
    %v5166 = vunpack.c.l.b16 %v5005
    %v5167 = vunpack.c.h.b16 %v5005
    %v5168 = vunpack.c.l.b16 %v5006
    %v5169 = vunpack.c.h.b16 %v5006
    %v5170 = vunpack.c.l.b16 %v5007
    %v5171 = vunpack.c.h.b16 %v5007
    %v5172 = vunpack.c.l.b16 %v5008
    %v5173 = vunpack.c.h.b16 %v5008
    %v5174 = vunpack.c.l.b16 %v5009
    %v5175 = vunpack.c.h.b16 %v5009
    %v5176 = vunpack.c.l.b16 %v5010
    %v5177 = vunpack.c.h.b16 %v5010
    %v5178 = vunpack.c.l.b16 %v5011
    %v5179 = vunpack.c.h.b16 %v5011
    %v5180 = vunpack.c.l.b16 %v5012
    %v5181 = vunpack.c.h.b16 %v5012
    %v5182 = vunpack.c.l.b16 %v5013
    %v5183 = vunpack.c.h.b16 %v5013
    %v5184 = vunpack.c.l.b16 %v5014
    %v5185 = vunpack.c.h.b16 %v5014
    %v5186 = vunpack.c.l.b16 %v5015
    %v5187 = vunpack.c.h.b16 %v5015
    %v5188 = vunpack.c.l.b16 %v5016
    %v5189 = vunpack.c.h.b16 %v5016
    %v5190 = vunpack.c.l.b16 %v5017
    %v5191 = vunpack.c.h.b16 %v5017
    %v5192 = vunpack.c.l.b16 %v5018
    %v5193 = vunpack.c.h.b16 %v5018
    %v5194 = vunpack.c.l.b16 %v5019
    %v5195 = vunpack.c.h.b16 %v5019
    %v5196 = vunpack.c.l.b16 %v5020
    %v5197 = vunpack.c.h.b16 %v5020
    %v5198 = vunpack.c.l.b16 %v5021
    %v5199 = vunpack.c.h.b16 %v5021
    %v5200 = vunpack.c.l.b16 %v5022
    %v5201 = vunpack.c.h.b16 %v5022
    %v5202 = vunpack.c.l.b16 %v5023
    %v5203 = vunpack.c.h.b16 %v5023
    %v5204 = vunpack.c.l.b16 %v5024
    %v5205 = vunpack.c.h.b16 %v5024
    %v5206 = vunpack.c.l.b16 %v5025
    %v5207 = vunpack.c.h.b16 %v5025
    %v5208 = vunpack.c.l.b16 %v5026
    %v5209 = vunpack.c.h.b16 %v5026
    %v5210 = vunpack.c.l.b16 %v5027
    %v5211 = vunpack.c.h.b16 %v5027
    %v5212 = vunpack.c.l.b16 %v5028
    %v5213 = vunpack.c.h.b16 %v5028
    %v5214 = vunpack.c.l.b16 %v5029
    %v5215 = vunpack.c.h.b16 %v5029
    %v5216 = vunpack.c.l.b16 %v5030
    %v5217 = vunpack.c.h.b16 %v5030
    %v5218 = vunpack.c.l.b16 %v5031
    %v5219 = vunpack.c.h.b16 %v5031
    %v5220 = vunpack.c.l.b16 %v5032
    %v5221 = vunpack.c.h.b16 %v5032
    %v5222 = vunpack.c.l.b16 %v5033
    %v5223 = vunpack.c.h.b16 %v5033
    %v5224 = vunpack.c.l.b16 %v5034
    %v5225 = vunpack.c.h.b16 %v5034
    %v5226 = vunpack.c.l.b16 %v5035
    %v5227 = vunpack.c.h.b16 %v5035
    %v5228 = vpack.c.b16 %v5104, %v5100
    %v5229 = vpack.c.b16 %v5105, %v5101
    %v5230 = vpack.c.b16 %v5106, %v5102
    %v5231 = vpack.c.b16 %v5107, %v5103
    %v5232 = vpack.c.b16 %v5112, %v5108
    %v5233 = vpack.c.b16 %v5113, %v5109
    %v5234 = vpack.c.b16 %v5114, %v5110
    %v5235 = vpack.c.b16 %v5115, %v5111
    %v5236 = vpack.c.b16 %v5120, %v5116
    %v5237 = vpack.c.b16 %v5121, %v5117
    %v5238 = vpack.c.b16 %v5122, %v5118
    %v5239 = vpack.c.b16 %v5123, %v5119
    %v5240 = vpack.c.b16 %v5128, %v5124
    %v5241 = vpack.c.b16 %v5129, %v5125
    %v5242 = vpack.c.b16 %v5130, %v5126
    %v5243 = vpack.c.b16 %v5131, %v5127
    %v5244 = vpack.c.b16 %v5136, %v5132
    %v5245 = vpack.c.b16 %v5137, %v5133
    %v5246 = vpack.c.b16 %v5138, %v5134
    %v5247 = vpack.c.b16 %v5139, %v5135
    %v5248 = vpack.c.b16 %v5144, %v5140
    %v5249 = vpack.c.b16 %v5145, %v5141
    %v5250 = vpack.c.b16 %v5146, %v5142
    %v5251 = vpack.c.b16 %v5147, %v5143
    %v5252 = vpack.c.b16 %v5152, %v5148
    %v5253 = vpack.c.b16 %v5153, %v5149
    %v5254 = vpack.c.b16 %v5154, %v5150
    %v5255 = vpack.c.b16 %v5155, %v5151
    %v5256 = vpack.c.b16 %v5160, %v5156
    %v5257 = vpack.c.b16 %v5161, %v5157
    %v5258 = vpack.c.b16 %v5162, %v5158
    %v5259 = vpack.c.b16 %v5163, %v5159
    %v5260 = vpack.c.b16 %v5168, %v5164
    %v5261 = vpack.c.b16 %v5169, %v5165
    %v5262 = vpack.c.b16 %v5170, %v5166
    %v5263 = vpack.c.b16 %v5171, %v5167
    %v5264 = vpack.c.b16 %v5176, %v5172
    %v5265 = vpack.c.b16 %v5177, %v5173
    %v5266 = vpack.c.b16 %v5178, %v5174
    %v5267 = vpack.c.b16 %v5179, %v5175
    %v5268 = vpack.c.b16 %v5184, %v5180
    %v5269 = vpack.c.b16 %v5185, %v5181
    %v5270 = vpack.c.b16 %v5186, %v5182
    %v5271 = vpack.c.b16 %v5187, %v5183
    %v5272 = vpack.c.b16 %v5192, %v5188
    %v5273 = vpack.c.b16 %v5193, %v5189
    %v5274 = vpack.c.b16 %v5194, %v5190
    %v5275 = vpack.c.b16 %v5195, %v5191
    %v5276 = vpack.c.b16 %v5200, %v5196
    %v5277 = vpack.c.b16 %v5201, %v5197
    %v5278 = vpack.c.b16 %v5202, %v5198
    %v5279 = vpack.c.b16 %v5203, %v5199
    %v5280 = vpack.c.b16 %v5208, %v5204
    %v5281 = vpack.c.b16 %v5209, %v5205
    %v5282 = vpack.c.b16 %v5210, %v5206
    %v5283 = vpack.c.b16 %v5211, %v5207
    %v5284 = vpack.c.b16 %v5216, %v5212
    %v5285 = vpack.c.b16 %v5217, %v5213
    %v5286 = vpack.c.b16 %v5218, %v5214
    %v5287 = vpack.c.b16 %v5219, %v5215
    %v5288 = vpack.c.b16 %v5224, %v5220
    %v5289 = vpack.c.b16 %v5225, %v5221
    %v5290 = vpack.c.b16 %v5226, %v5222
    %v5291 = vpack.c.b16 %v5227, %v5223
    %5356 = vmatprep.subr.bf16.mxu0 %v5229
    %5357 = vmatpush1.bf16.msra.mxu0 %v5228
    %5358 = vmatprep.subr.bf16.mxu0 %v5233
    %5359 = vmatpush1.bf16.msra.mxu0 %v5232
    %5360 = vmatprep.subr.bf16.mxu0 %v5237
    %5361 = vmatpush1.bf16.msra.mxu0 %v5236
    %5362 = vmatprep.subr.bf16.mxu0 %v5241
    %5363 = vmatpush1.bf16.msra.mxu0 %v5240
    %5364 = vmatprep.subr.bf16.mxu0 %v5245
    %5365 = vmatpush1.bf16.msra.mxu0 %v5244
    %5366 = vmatprep.subr.bf16.mxu0 %v5249
    %5367 = vmatpush1.bf16.msra.mxu0 %v5248
    %5368 = vmatprep.subr.bf16.mxu0 %v5253
    %5369 = vmatpush1.bf16.msra.mxu0 %v5252
    %5370 = vmatprep.subr.bf16.mxu0 %v5257
    %5371 = vmatpush1.bf16.msra.mxu0 %v5256
    %5372 = vmatprep.subr.bf16.mxu0 %v5261
    %5373 = vmatpush1.bf16.msra.mxu0 %v5260
    %5374 = vmatprep.subr.bf16.mxu0 %v5265
    %5375 = vmatpush1.bf16.msra.mxu0 %v5264
    %5376 = vmatprep.subr.bf16.mxu0 %v5269
    %5377 = vmatpush1.bf16.msra.mxu0 %v5268
    %5378 = vmatprep.subr.bf16.mxu0 %v5273
    %5379 = vmatpush1.bf16.msra.mxu0 %v5272
    %5380 = vmatprep.subr.bf16.mxu0 %v5277
    %5381 = vmatpush1.bf16.msra.mxu0 %v5276
    %5382 = vmatprep.subr.bf16.mxu0 %v5281
    %5383 = vmatpush1.bf16.msra.mxu0 %v5280
    %5384 = vmatprep.subr.bf16.mxu0 %v5285
    %5385 = vmatpush1.bf16.msra.mxu0 %v5284
    %5386 = vmatprep.subr.bf16.mxu0 %v5289
    %5387 = vmatpush1.bf16.msra.mxu0 %v5288
    %5388 = vmatprep.mubr.bf16.mxu0 %v4969
    %5389 = vmatmul.mubr.bf16.gmra.mrb[0].mxu0 %v4547
    %v5390 = vpop.f32.mrb[0].mxu0
    %v5391 = vadd.f32 0.0, %v5390
    %v5392 = vpop.f32.mrb[0].mxu0
    %v5393 = vadd.f32 0.0, %v5392
    %v5394 = vpop.f32.mrb[0].mxu0
    %v5395 = vpop.f32.mrb[0].mxu0
    %5396 = vdwg.mxu0
    %5397 = vmatprep.subr.bf16.mxu0 %v5231
    %5398 = vmatpush1.bf16.msra.mxu0 %v5230
    %5399 = vmatprep.subr.bf16.mxu0 %v5235
    %5400 = vmatpush1.bf16.msra.mxu0 %v5234
    %5401 = vmatprep.subr.bf16.mxu0 %v5239
    %5402 = vmatpush1.bf16.msra.mxu0 %v5238
    %5403 = vmatprep.subr.bf16.mxu0 %v5243
    %5404 = vmatpush1.bf16.msra.mxu0 %v5242
    %5405 = vmatprep.subr.bf16.mxu0 %v5247
    %5406 = vmatpush1.bf16.msra.mxu0 %v5246
    %5407 = vmatprep.subr.bf16.mxu0 %v5251
    %5408 = vmatpush1.bf16.msra.mxu0 %v5250
    %5409 = vmatprep.subr.bf16.mxu0 %v5255
    %5410 = vmatpush1.bf16.msra.mxu0 %v5254
    %5411 = vmatprep.subr.bf16.mxu0 %v5259
    %5412 = vmatpush1.bf16.msra.mxu0 %v5258
    %5413 = vmatprep.subr.bf16.mxu0 %v5263
    %5414 = vmatpush1.bf16.msra.mxu0 %v5262
    %5415 = vmatprep.subr.bf16.mxu0 %v5267
    %5416 = vmatpush1.bf16.msra.mxu0 %v5266
    %5417 = vmatprep.subr.bf16.mxu0 %v5271
    %5418 = vmatpush1.bf16.msra.mxu0 %v5270
    %5419 = vmatprep.subr.bf16.mxu0 %v5275
    %5420 = vmatpush1.bf16.msra.mxu0 %v5274
    %5421 = vmatprep.subr.bf16.mxu0 %v5279
    %5422 = vmatpush1.bf16.msra.mxu0 %v5278
    %5423 = vmatprep.subr.bf16.mxu0 %v5283
    %5424 = vmatpush1.bf16.msra.mxu0 %v5282
    %5425 = vmatprep.subr.bf16.mxu0 %v5287
    %5426 = vmatpush1.bf16.msra.mxu0 %v5286
    %5427 = vmatprep.subr.bf16.mxu0 %v5291
    %5428 = vmatpush1.bf16.msra.mxu0 %v5290
    %5429 = vmatprep.mubr.bf16.mxu0 %v4969
    %5430 = vmatmul.mubr.bf16.gmra.mrb[0].mxu0 %v4547
    %v5431 = vpop.f32.mrb[0].mxu0
    %v5432 = vadd.f32 0.0, %v5431
    %v5433 = vpop.f32.mrb[0].mxu0
    %v5434 = vadd.f32 0.0, %v5433
    %v5435 = vpop.f32.mrb[0].mxu0
    %v5436 = vpop.f32.mrb[0].mxu0
    %5437 = vdwg.mxu0
    %s5438 = scalar_lea.vmem [#allocation2], 120
    %v5439 = vld [vmem:[%s5438] sm:$0xff]
    %v5440 = vld [vmem:[%s5438 + $0x8] sm:$0xff]
    %v5441 = vld [vmem:[%s5438 + $0x10] sm:$0xff]
    %v5442 = vadd.f32 %v5439, %v5391
    %v5443 = vxor.u32 %v5442, 2147483648
    %v5444 = vmul.f32 %v5443, 1.442695
    %v5445 = vpow.pop %v5444
    %v5446 = vadd.f32 %v5445, 1.0
    %v5447 = vrcp.pop %v5446
    %v5448 = vmul.f32 1.0, %v5447
    %v5449 = vadd.f32 %v5440, %v5393
    %v5450 = vxor.u32 %v5449, 2147483648
    %v5451 = vmul.f32 %v5450, 1.442695
    %v5452 = vpow.pop %v5451
    %v5453 = vadd.f32 %v5452, 1.0
    %v5454 = vrcp.pop %v5453
    %v5455 = vmul.f32 1.0, %v5454
    %v5456 = vadd.f32 %v5432, %v848
    %v5457 = vmul.f32 %v5448, %v5456
    %v5458 = vadd.f32 %v5441, %v5457
    %v5459 = vtanh.pop %v5458
    %v5460 = vsub.f32 1.0, %v5455
    %v5461 = vmul.f32 %v5460, %v5459
    %v5462 = vmul.f32 %v5455, %v4546
    %v5463 = vadd.f32 %v5461, %v5462
    %v5464 = vpack.c.bf16 %v5463, %v5463
    %v5465 = vld [vmem:[#allocation10] sm:$0xff]
    %v5466 = vld [vmem:[#allocation10 + $0x8] sm:$0xf]
    %v5467 = vld [vmem:[#allocation10 + $0xc] sm:$0xff]
    %v5468 = vld [vmem:[#allocation10 + $0x14] sm:$0xf]
    %v5469 = vld [vmem:[#allocation10 + $0x18] sm:$0xff]
    %v5470 = vld [vmem:[#allocation10 + $0x20] sm:$0xf]
    %v5471 = vld [vmem:[#allocation10 + $0x24] sm:$0xff]
    %v5472 = vld [vmem:[#allocation10 + $0x2c] sm:$0xf]
    %v5473 = vld [vmem:[#allocation10 + $0x30] sm:$0xff]
    %v5474 = vld [vmem:[#allocation10 + $0x38] sm:$0xf]
    %v5475 = vld [vmem:[#allocation10 + $0x3c] sm:$0xff]
    %v5476 = vld [vmem:[#allocation10 + $0x44] sm:$0xf]
    %v5477 = vld [vmem:[#allocation10 + $0x48] sm:$0xff]
    %v5478 = vld [vmem:[#allocation10 + $0x50] sm:$0xf]
    %v5479 = vld [vmem:[#allocation10 + $0x54] sm:$0xff]
    %v5480 = vld [vmem:[#allocation10 + $0x5c] sm:$0xf]
    %v5481 = vld [vmem:[#allocation10 + $0x60] sm:$0xff]
    %v5482 = vld [vmem:[#allocation10 + $0x68] sm:$0xf]
    %v5483 = vld [vmem:[#allocation10 + $0x6c] sm:$0xff]
    %v5484 = vld [vmem:[#allocation10 + $0x74] sm:$0xf]
    %v5485 = vld [vmem:[#allocation10 + $0x78] sm:$0xff]
    %v5486 = vld [vmem:[#allocation10 + $0x80] sm:$0xf]
    %v5487 = vld [vmem:[#allocation10 + $0x84] sm:$0xff]
    %v5488 = vld [vmem:[#allocation10 + $0x8c] sm:$0xf]
    %v5489 = vld [vmem:[#allocation10 + $0x90] sm:$0xff]
    %v5490 = vld [vmem:[#allocation10 + $0x98] sm:$0xf]
    %v5491 = vld [vmem:[#allocation10 + $0x9c] sm:$0xff]
    %v5492 = vld [vmem:[#allocation10 + $0xa4] sm:$0xf]
    %v5493 = vld [vmem:[#allocation10 + $0xa8] sm:$0xff]
    %v5494 = vld [vmem:[#allocation10 + $0xb0] sm:$0xf]
    %v5495 = vld [vmem:[#allocation10 + $0xb4] sm:$0xff]
    %v5496 = vld [vmem:[#allocation10 + $0xbc] sm:$0xf]
    %v5497 = vld [vmem:[#allocation10 + $0xc0] sm:$0xff]
    %v5498 = vld [vmem:[#allocation10 + $0xc8] sm:$0xf]
    %v5499 = vld [vmem:[#allocation10 + $0xcc] sm:$0xff]
    %v5500 = vld [vmem:[#allocation10 + $0xd4] sm:$0xf]
    %v5501 = vld [vmem:[#allocation10 + $0xd8] sm:$0xff]
    %v5502 = vld [vmem:[#allocation10 + $0xe0] sm:$0xf]
    %v5503 = vld [vmem:[#allocation10 + $0xe4] sm:$0xff]
    %v5504 = vld [vmem:[#allocation10 + $0xec] sm:$0xf]
    %v5505 = vld [vmem:[#allocation10 + $0xf0] sm:$0xff]
    %v5506 = vld [vmem:[#allocation10 + $0xf8] sm:$0xf]
    %v5507 = vld [vmem:[#allocation10 + $0xfc] sm:$0xff]
    %v5508 = vld [vmem:[#allocation10 + $0x104] sm:$0xf]
    %v5509 = vld [vmem:[#allocation10 + $0x108] sm:$0xff]
    %v5510 = vld [vmem:[#allocation10 + $0x110] sm:$0xf]
    %v5511 = vld [vmem:[#allocation10 + $0x114] sm:$0xff]
    %v5512 = vld [vmem:[#allocation10 + $0x11c] sm:$0xf]
    %v5513 = vld [vmem:[#allocation10 + $0x120] sm:$0xff]
    %v5514 = vld [vmem:[#allocation10 + $0x128] sm:$0xf]
    %v5515 = vld [vmem:[#allocation10 + $0x12c] sm:$0xff]
    %v5516 = vld [vmem:[#allocation10 + $0x134] sm:$0xf]
    %v5517 = vld [vmem:[#allocation10 + $0x138] sm:$0xff]
    %v5518 = vld [vmem:[#allocation10 + $0x140] sm:$0xf]
    %v5519 = vld [vmem:[#allocation10 + $0x144] sm:$0xff]
    %v5520 = vld [vmem:[#allocation10 + $0x14c] sm:$0xf]
    %v5521 = vld [vmem:[#allocation10 + $0x150] sm:$0xff]
    %v5522 = vld [vmem:[#allocation10 + $0x158] sm:$0xf]
    %v5523 = vld [vmem:[#allocation10 + $0x15c] sm:$0xff]
    %v5524 = vld [vmem:[#allocation10 + $0x164] sm:$0xf]
    %v5525 = vld [vmem:[#allocation10 + $0x168] sm:$0xff]
    %v5526 = vld [vmem:[#allocation10 + $0x170] sm:$0xf]
    %v5527 = vld [vmem:[#allocation10 + $0x174] sm:$0xff]
    %v5528 = vld [vmem:[#allocation10 + $0x17c] sm:$0xf]
    %v5593 = vunpack.c.l.b16 %v5465
    %v5594 = vunpack.c.h.b16 %v5465
    %v5595 = vunpack.c.l.b16 %v5466
    %v5596 = vunpack.c.l.b16 %v5467
    %v5597 = vunpack.c.h.b16 %v5467
    %v5598 = vunpack.c.l.b16 %v5468
    %v5599 = vunpack.c.l.b16 %v5469
    %v5600 = vunpack.c.h.b16 %v5469
    %v5601 = vunpack.c.l.b16 %v5470
    %v5602 = vunpack.c.l.b16 %v5471
    %v5603 = vunpack.c.h.b16 %v5471
    %v5604 = vunpack.c.l.b16 %v5472
    %v5605 = vunpack.c.l.b16 %v5473
    %v5606 = vunpack.c.h.b16 %v5473
    %v5607 = vunpack.c.l.b16 %v5474
    %v5608 = vunpack.c.l.b16 %v5475
    %v5609 = vunpack.c.h.b16 %v5475
    %v5610 = vunpack.c.l.b16 %v5476
    %v5611 = vunpack.c.l.b16 %v5477
    %v5612 = vunpack.c.h.b16 %v5477
    %v5613 = vunpack.c.l.b16 %v5478
    %v5614 = vunpack.c.l.b16 %v5479
    %v5615 = vunpack.c.h.b16 %v5479
    %v5616 = vunpack.c.l.b16 %v5480
    %v5617 = vunpack.c.l.b16 %v5481
    %v5618 = vunpack.c.h.b16 %v5481
    %v5619 = vunpack.c.l.b16 %v5482
    %v5620 = vunpack.c.l.b16 %v5483
    %v5621 = vunpack.c.h.b16 %v5483
    %v5622 = vunpack.c.l.b16 %v5484
    %v5623 = vunpack.c.l.b16 %v5485
    %v5624 = vunpack.c.h.b16 %v5485
    %v5625 = vunpack.c.l.b16 %v5486
    %v5626 = vunpack.c.l.b16 %v5487
    %v5627 = vunpack.c.h.b16 %v5487
    %v5628 = vunpack.c.l.b16 %v5488
    %v5629 = vunpack.c.l.b16 %v5489
    %v5630 = vunpack.c.h.b16 %v5489
    %v5631 = vunpack.c.l.b16 %v5490
    %v5632 = vunpack.c.l.b16 %v5491
    %v5633 = vunpack.c.h.b16 %v5491
    %v5634 = vunpack.c.l.b16 %v5492
    %v5635 = vunpack.c.l.b16 %v5493
    %v5636 = vunpack.c.h.b16 %v5493
    %v5637 = vunpack.c.l.b16 %v5494
    %v5638 = vunpack.c.l.b16 %v5495
    %v5639 = vunpack.c.h.b16 %v5495
    %v5640 = vunpack.c.l.b16 %v5496
    %v5641 = vunpack.c.l.b16 %v5497
    %v5642 = vunpack.c.h.b16 %v5497
    %v5643 = vunpack.c.l.b16 %v5498
    %v5644 = vunpack.c.l.b16 %v5499
    %v5645 = vunpack.c.h.b16 %v5499
    %v5646 = vunpack.c.l.b16 %v5500
    %v5647 = vunpack.c.l.b16 %v5501
    %v5648 = vunpack.c.h.b16 %v5501
    %v5649 = vunpack.c.l.b16 %v5502
    %v5650 = vunpack.c.l.b16 %v5503
    %v5651 = vunpack.c.h.b16 %v5503
    %v5652 = vunpack.c.l.b16 %v5504
    %v5653 = vunpack.c.l.b16 %v5505
    %v5654 = vunpack.c.h.b16 %v5505
    %v5655 = vunpack.c.l.b16 %v5506
    %v5656 = vunpack.c.l.b16 %v5507
    %v5657 = vunpack.c.h.b16 %v5507
    %v5658 = vunpack.c.l.b16 %v5508
    %v5659 = vunpack.c.l.b16 %v5509
    %v5660 = vunpack.c.h.b16 %v5509
    %v5661 = vunpack.c.l.b16 %v5510
    %v5662 = vunpack.c.l.b16 %v5511
    %v5663 = vunpack.c.h.b16 %v5511
    %v5664 = vunpack.c.l.b16 %v5512
    %v5665 = vunpack.c.l.b16 %v5513
    %v5666 = vunpack.c.h.b16 %v5513
    %v5667 = vunpack.c.l.b16 %v5514
    %v5668 = vunpack.c.l.b16 %v5515
    %v5669 = vunpack.c.h.b16 %v5515
    %v5670 = vunpack.c.l.b16 %v5516
    %v5671 = vunpack.c.l.b16 %v5517
    %v5672 = vunpack.c.h.b16 %v5517
    %v5673 = vunpack.c.l.b16 %v5518
    %v5674 = vunpack.c.l.b16 %v5519
    %v5675 = vunpack.c.h.b16 %v5519
    %v5676 = vunpack.c.l.b16 %v5520
    %v5677 = vunpack.c.l.b16 %v5521
    %v5678 = vunpack.c.h.b16 %v5521
    %v5679 = vunpack.c.l.b16 %v5522
    %v5680 = vunpack.c.l.b16 %v5523
    %v5681 = vunpack.c.h.b16 %v5523
    %v5682 = vunpack.c.l.b16 %v5524
    %v5683 = vunpack.c.l.b16 %v5525
    %v5684 = vunpack.c.h.b16 %v5525
    %v5685 = vunpack.c.l.b16 %v5526
    %v5686 = vunpack.c.l.b16 %v5527
    %v5687 = vunpack.c.h.b16 %v5527
    %v5688 = vunpack.c.l.b16 %v5528
    %v5689 = vpack.c.b16 %v5596, %v5593
    %v5690 = vpack.c.b16 %v5597, %v5594
    %v5691 = vpack.c.b16 %v5598, %v5595
    %v5692 = vpack.c.b16 %v5602, %v5599
    %v5693 = vpack.c.b16 %v5603, %v5600
    %v5694 = vpack.c.b16 %v5604, %v5601
    %v5695 = vpack.c.b16 %v5608, %v5605
    %v5696 = vpack.c.b16 %v5609, %v5606
    %v5697 = vpack.c.b16 %v5610, %v5607
    %v5698 = vpack.c.b16 %v5614, %v5611
    %v5699 = vpack.c.b16 %v5615, %v5612
    %v5700 = vpack.c.b16 %v5616, %v5613
    %v5701 = vpack.c.b16 %v5620, %v5617
    %v5702 = vpack.c.b16 %v5621, %v5618
    %v5703 = vpack.c.b16 %v5622, %v5619
    %v5704 = vpack.c.b16 %v5626, %v5623
    %v5705 = vpack.c.b16 %v5627, %v5624
    %v5706 = vpack.c.b16 %v5628, %v5625
    %v5707 = vpack.c.b16 %v5632, %v5629
    %v5708 = vpack.c.b16 %v5633, %v5630
    %v5709 = vpack.c.b16 %v5634, %v5631
    %v5710 = vpack.c.b16 %v5638, %v5635
    %v5711 = vpack.c.b16 %v5639, %v5636
    %v5712 = vpack.c.b16 %v5640, %v5637
    %v5713 = vpack.c.b16 %v5644, %v5641
    %v5714 = vpack.c.b16 %v5645, %v5642
    %v5715 = vpack.c.b16 %v5646, %v5643
    %v5716 = vpack.c.b16 %v5650, %v5647
    %v5717 = vpack.c.b16 %v5651, %v5648
    %v5718 = vpack.c.b16 %v5652, %v5649
    %v5719 = vpack.c.b16 %v5656, %v5653
    %v5720 = vpack.c.b16 %v5657, %v5654
    %v5721 = vpack.c.b16 %v5658, %v5655
    %v5722 = vpack.c.b16 %v5662, %v5659
    %v5723 = vpack.c.b16 %v5663, %v5660
    %v5724 = vpack.c.b16 %v5664, %v5661
    %v5725 = vpack.c.b16 %v5668, %v5665
    %v5726 = vpack.c.b16 %v5669, %v5666
    %v5727 = vpack.c.b16 %v5670, %v5667
    %v5728 = vpack.c.b16 %v5674, %v5671
    %v5729 = vpack.c.b16 %v5675, %v5672
    %v5730 = vpack.c.b16 %v5676, %v5673
    %v5731 = vpack.c.b16 %v5680, %v5677
    %v5732 = vpack.c.b16 %v5681, %v5678
    %v5733 = vpack.c.b16 %v5682, %v5679
    %v5734 = vpack.c.b16 %v5686, %v5683
    %v5735 = vpack.c.b16 %v5687, %v5684
    %v5736 = vpack.c.b16 %v5688, %v5685
    %5785 = vmatprep.subr.bf16.mxu0 %v5690
    %5786 = vmatpush1.bf16.msra.mxu0 %v5689
    %5787 = vmatprep.subr.bf16.mxu0 %v5693
    %5788 = vmatpush1.bf16.msra.mxu0 %v5692
    %5789 = vmatprep.subr.bf16.mxu0 %v5696
    %5790 = vmatpush1.bf16.msra.mxu0 %v5695
    %5791 = vmatprep.subr.bf16.mxu0 %v5699
    %5792 = vmatpush1.bf16.msra.mxu0 %v5698
    %5793 = vmatprep.subr.bf16.mxu0 %v5702
    %5794 = vmatpush1.bf16.msra.mxu0 %v5701
    %5795 = vmatprep.subr.bf16.mxu0 %v5705
    %5796 = vmatpush1.bf16.msra.mxu0 %v5704
    %5797 = vmatprep.subr.bf16.mxu0 %v5708
    %5798 = vmatpush1.bf16.msra.mxu0 %v5707
    %5799 = vmatprep.subr.bf16.mxu0 %v5711
    %5800 = vmatpush1.bf16.msra.mxu0 %v5710
    %5801 = vmatprep.subr.bf16.mxu0 %v5714
    %5802 = vmatpush1.bf16.msra.mxu0 %v5713
    %5803 = vmatprep.subr.bf16.mxu0 %v5717
    %5804 = vmatpush1.bf16.msra.mxu0 %v5716
    %5805 = vmatprep.subr.bf16.mxu0 %v5720
    %5806 = vmatpush1.bf16.msra.mxu0 %v5719
    %5807 = vmatprep.subr.bf16.mxu0 %v5723
    %5808 = vmatpush1.bf16.msra.mxu0 %v5722
    %5809 = vmatprep.subr.bf16.mxu0 %v5726
    %5810 = vmatpush1.bf16.msra.mxu0 %v5725
    %5811 = vmatprep.subr.bf16.mxu0 %v5729
    %5812 = vmatpush1.bf16.msra.mxu0 %v5728
    %5813 = vmatprep.subr.bf16.mxu0 %v5732
    %5814 = vmatpush1.bf16.msra.mxu0 %v5731
    %5815 = vmatprep.subr.bf16.mxu0 %v5735
    %5816 = vmatpush1.bf16.msra.mxu0 %v5734
    %5817 = vmatprep.mubr.bf16.mxu0 %v4969
    %5818 = vmatmul.mubr.bf16.gmra.mrb[0].mxu0 %v5464
    %v5819 = vpop.f32.mrb[0].mxu0
    %v5820 = vadd.f32 %v927, %v5819
    %v5821 = vpop.f32.mrb[0].mxu0
    %v5822 = vadd.f32 %v931, %v5821
    %v5823 = vpop.f32.mrb[0].mxu0
    %v5824 = vpop.f32.mrb[0].mxu0
    %5825 = vdwg.mxu0
    %5826 = vmatprep.subr.bf16.mxu0 0
    %5827 = vmatpush1.bf16.msra.mxu0 %v5691
    %5828 = vmatprep.subr.bf16.mxu0 0
    %5829 = vmatpush1.bf16.msra.mxu0 %v5694
    %5830 = vmatprep.subr.bf16.mxu0 0
    %5831 = vmatpush1.bf16.msra.mxu0 %v5697
    %5832 = vmatprep.subr.bf16.mxu0 0
    %5833 = vmatpush1.bf16.msra.mxu0 %v5700
    %5834 = vmatprep.subr.bf16.mxu0 0
    %5835 = vmatpush1.bf16.msra.mxu0 %v5703
    %5836 = vmatprep.subr.bf16.mxu0 0
    %5837 = vmatpush1.bf16.msra.mxu0 %v5706
    %5838 = vmatprep.subr.bf16.mxu0 0
    %5839 = vmatpush1.bf16.msra.mxu0 %v5709
    %5840 = vmatprep.subr.bf16.mxu0 0
    %5841 = vmatpush1.bf16.msra.mxu0 %v5712
    %5842 = vmatprep.subr.bf16.mxu0 0
    %5843 = vmatpush1.bf16.msra.mxu0 %v5715
    %5844 = vmatprep.subr.bf16.mxu0 0
    %5845 = vmatpush1.bf16.msra.mxu0 %v5718
    %5846 = vmatprep.subr.bf16.mxu0 0
    %5847 = vmatpush1.bf16.msra.mxu0 %v5721
    %5848 = vmatprep.subr.bf16.mxu0 0
    %5849 = vmatpush1.bf16.msra.mxu0 %v5724
    %5850 = vmatprep.subr.bf16.mxu0 0
    %5851 = vmatpush1.bf16.msra.mxu0 %v5727
    %5852 = vmatprep.subr.bf16.mxu0 0
    %5853 = vmatpush1.bf16.msra.mxu0 %v5730
    %5854 = vmatprep.subr.bf16.mxu0 0
    %5855 = vmatpush1.bf16.msra.mxu0 %v5733
    %5856 = vmatprep.subr.bf16.mxu0 0
    %5857 = vmatpush1.bf16.msra.mxu0 %v5736
    %5858 = vmatprep.mubr.bf16.mxu0 %v4969
    %5859 = vmatmul.mubr.bf16.gmra.mrb[0].mxu0 %v5464
    %v5860 = vpop.f32.mrb[0].mxu0
    %v5861 = vadd.f32 %v935, %v5860
    %v5862 = vpop.f32.mrb[0].mxu0
    %v5863 = vpop.f32.mrb[0].mxu0
    %v5864 = vpop.f32.mrb[0].mxu0
    %5865 = vdwg.mxu0
    %v5866 = vxor.u32 %v5820, 2147483648
    %v5867 = vmul.f32 %v5866, 1.442695
    %v5868 = vpow.pop %v5867
    %v5869 = vadd.f32 %v5868, 1.0
    %v5870 = vrcp.pop %v5869
    %v5871 = vmul.f32 1.0, %v5870
    %v5872 = vxor.u32 %v5822, 2147483648
    %v5873 = vmul.f32 %v5872, 1.442695
    %v5874 = vpow.pop %v5873
    %v5875 = vadd.f32 %v5874, 1.0
    %v5876 = vrcp.pop %v5875
    %v5877 = vmul.f32 1.0, %v5876
    %v5878 = vadd.f32 %v5434, %v1292
    %v5879 = vmul.f32 %v5871, %v5878
    %v5880 = vadd.f32 %v5861, %v5879
    %v5881 = vtanh.pop %v5880
    %v5882 = vsub.f32 1.0, %v5877
    %v5883 = vmul.f32 %v5882, %v5881
    %v5884 = vmul.f32 %v5877, %v4968
    %v5885 = vadd.f32 %v5883, %v5884
    %v5886 = vpack.c.bf16 %v5885, %v5885
    %s5887 = scalar_lea.vmem [#allocation3], 20
    %5888 = vst [vmem:[%s5887] sm:$0xf] %v5886
    %v5889 = vld [vmem:[#allocation9] sm:$0xff]
    %v5890 = vld [vmem:[#allocation9 + $0x8] sm:$0xff]
    %v5891 = vld [vmem:[#allocation9 + $0x10] sm:$0xff]
    %v5892 = vld [vmem:[#allocation9 + $0x18] sm:$0xff]
    %v5893 = vld [vmem:[#allocation9 + $0x20] sm:$0xff]
    %v5894 = vld [vmem:[#allocation9 + $0x28] sm:$0xff]
    %v5895 = vld [vmem:[#allocation9 + $0x30] sm:$0xff]
    %v5896 = vld [vmem:[#allocation9 + $0x38] sm:$0xff]
    %v5897 = vld [vmem:[#allocation9 + $0x40] sm:$0xff]
    %v5898 = vld [vmem:[#allocation9 + $0x48] sm:$0xff]
    %v5899 = vld [vmem:[#allocation9 + $0x50] sm:$0xff]
    %v5900 = vld [vmem:[#allocation9 + $0x58] sm:$0xff]
    %v5901 = vld [vmem:[#allocation9 + $0x60] sm:$0xff]
    %v5902 = vld [vmem:[#allocation9 + $0x68] sm:$0xff]
    %v5903 = vld [vmem:[#allocation9 + $0x70] sm:$0xff]
    %v5904 = vld [vmem:[#allocation9 + $0x78] sm:$0xff]
    %v5905 = vld [vmem:[#allocation9 + $0x80] sm:$0xff]
    %v5906 = vld [vmem:[#allocation9 + $0x88] sm:$0xff]
    %v5907 = vld [vmem:[#allocation9 + $0x90] sm:$0xff]
    %v5908 = vld [vmem:[#allocation9 + $0x98] sm:$0xff]
    %v5909 = vld [vmem:[#allocation9 + $0xa0] sm:$0xff]
    %v5910 = vld [vmem:[#allocation9 + $0xa8] sm:$0xff]
    %v5911 = vld [vmem:[#allocation9 + $0xb0] sm:$0xff]
    %v5912 = vld [vmem:[#allocation9 + $0xb8] sm:$0xff]
    %v5913 = vld [vmem:[#allocation9 + $0xc0] sm:$0xff]
    %v5914 = vld [vmem:[#allocation9 + $0xc8] sm:$0xff]
    %v5915 = vld [vmem:[#allocation9 + $0xd0] sm:$0xff]
    %v5916 = vld [vmem:[#allocation9 + $0xd8] sm:$0xff]
    %v5917 = vld [vmem:[#allocation9 + $0xe0] sm:$0xff]
    %v5918 = vld [vmem:[#allocation9 + $0xe8] sm:$0xff]
    %v5919 = vld [vmem:[#allocation9 + $0xf0] sm:$0xff]
    %v5920 = vld [vmem:[#allocation9 + $0xf8] sm:$0xff]
    %v5921 = vld [vmem:[#allocation9 + $0x100] sm:$0xff]
    %v5922 = vld [vmem:[#allocation9 + $0x108] sm:$0xff]
    %v5923 = vld [vmem:[#allocation9 + $0x110] sm:$0xff]
    %v5924 = vld [vmem:[#allocation9 + $0x118] sm:$0xff]
    %v5925 = vld [vmem:[#allocation9 + $0x120] sm:$0xff]
    %v5926 = vld [vmem:[#allocation9 + $0x128] sm:$0xff]
    %v5927 = vld [vmem:[#allocation9 + $0x130] sm:$0xff]
    %v5928 = vld [vmem:[#allocation9 + $0x138] sm:$0xff]
    %v5929 = vld [vmem:[#allocation9 + $0x140] sm:$0xff]
    %v5930 = vld [vmem:[#allocation9 + $0x148] sm:$0xff]
    %v5931 = vld [vmem:[#allocation9 + $0x150] sm:$0xff]
    %v5932 = vld [vmem:[#allocation9 + $0x158] sm:$0xff]
    %v5933 = vld [vmem:[#allocation9 + $0x160] sm:$0xff]
    %v5934 = vld [vmem:[#allocation9 + $0x168] sm:$0xff]
    %v5935 = vld [vmem:[#allocation9 + $0x170] sm:$0xff]
    %v5936 = vld [vmem:[#allocation9 + $0x178] sm:$0xff]
    %v5937 = vld [vmem:[#allocation9 + $0x180] sm:$0xff]
    %v5938 = vld [vmem:[#allocation9 + $0x188] sm:$0xff]
    %v5939 = vld [vmem:[#allocation9 + $0x190] sm:$0xff]
    %v5940 = vld [vmem:[#allocation9 + $0x198] sm:$0xff]
    %v5941 = vld [vmem:[#allocation9 + $0x1a0] sm:$0xff]
    %v5942 = vld [vmem:[#allocation9 + $0x1a8] sm:$0xff]
    %v5943 = vld [vmem:[#allocation9 + $0x1b0] sm:$0xff]
    %v5944 = vld [vmem:[#allocation9 + $0x1b8] sm:$0xff]
    %v5945 = vld [vmem:[#allocation9 + $0x1c0] sm:$0xff]
    %v5946 = vld [vmem:[#allocation9 + $0x1c8] sm:$0xff]
    %v5947 = vld [vmem:[#allocation9 + $0x1d0] sm:$0xff]
    %v5948 = vld [vmem:[#allocation9 + $0x1d8] sm:$0xff]
    %v5949 = vld [vmem:[#allocation9 + $0x1e0] sm:$0xff]
    %v5950 = vld [vmem:[#allocation9 + $0x1e8] sm:$0xff]
    %v5951 = vld [vmem:[#allocation9 + $0x1f0] sm:$0xff]
    %v5952 = vld [vmem:[#allocation9 + $0x1f8] sm:$0xff]
    %v6017 = vunpack.c.l.b16 %v5889
    %v6018 = vunpack.c.h.b16 %v5889
    %v6019 = vunpack.c.l.b16 %v5890
    %v6020 = vunpack.c.h.b16 %v5890
    %v6021 = vunpack.c.l.b16 %v5891
    %v6022 = vunpack.c.h.b16 %v5891
    %v6023 = vunpack.c.l.b16 %v5892
    %v6024 = vunpack.c.h.b16 %v5892
    %v6025 = vunpack.c.l.b16 %v5893
    %v6026 = vunpack.c.h.b16 %v5893
    %v6027 = vunpack.c.l.b16 %v5894
    %v6028 = vunpack.c.h.b16 %v5894
    %v6029 = vunpack.c.l.b16 %v5895
    %v6030 = vunpack.c.h.b16 %v5895
    %v6031 = vunpack.c.l.b16 %v5896
    %v6032 = vunpack.c.h.b16 %v5896
    %v6033 = vunpack.c.l.b16 %v5897
    %v6034 = vunpack.c.h.b16 %v5897
    %v6035 = vunpack.c.l.b16 %v5898
    %v6036 = vunpack.c.h.b16 %v5898
    %v6037 = vunpack.c.l.b16 %v5899
    %v6038 = vunpack.c.h.b16 %v5899
    %v6039 = vunpack.c.l.b16 %v5900
    %v6040 = vunpack.c.h.b16 %v5900
    %v6041 = vunpack.c.l.b16 %v5901
    %v6042 = vunpack.c.h.b16 %v5901
    %v6043 = vunpack.c.l.b16 %v5902
    %v6044 = vunpack.c.h.b16 %v5902
    %v6045 = vunpack.c.l.b16 %v5903
    %v6046 = vunpack.c.h.b16 %v5903
    %v6047 = vunpack.c.l.b16 %v5904
    %v6048 = vunpack.c.h.b16 %v5904
    %v6049 = vunpack.c.l.b16 %v5905
    %v6050 = vunpack.c.h.b16 %v5905
    %v6051 = vunpack.c.l.b16 %v5906
    %v6052 = vunpack.c.h.b16 %v5906
    %v6053 = vunpack.c.l.b16 %v5907
    %v6054 = vunpack.c.h.b16 %v5907
    %v6055 = vunpack.c.l.b16 %v5908
    %v6056 = vunpack.c.h.b16 %v5908
    %v6057 = vunpack.c.l.b16 %v5909
    %v6058 = vunpack.c.h.b16 %v5909
    %v6059 = vunpack.c.l.b16 %v5910
    %v6060 = vunpack.c.h.b16 %v5910
    %v6061 = vunpack.c.l.b16 %v5911
    %v6062 = vunpack.c.h.b16 %v5911
    %v6063 = vunpack.c.l.b16 %v5912
    %v6064 = vunpack.c.h.b16 %v5912
    %v6065 = vunpack.c.l.b16 %v5913
    %v6066 = vunpack.c.h.b16 %v5913
    %v6067 = vunpack.c.l.b16 %v5914
    %v6068 = vunpack.c.h.b16 %v5914
    %v6069 = vunpack.c.l.b16 %v5915
    %v6070 = vunpack.c.h.b16 %v5915
    %v6071 = vunpack.c.l.b16 %v5916
    %v6072 = vunpack.c.h.b16 %v5916
    %v6073 = vunpack.c.l.b16 %v5917
    %v6074 = vunpack.c.h.b16 %v5917
    %v6075 = vunpack.c.l.b16 %v5918
    %v6076 = vunpack.c.h.b16 %v5918
    %v6077 = vunpack.c.l.b16 %v5919
    %v6078 = vunpack.c.h.b16 %v5919
    %v6079 = vunpack.c.l.b16 %v5920
    %v6080 = vunpack.c.h.b16 %v5920
    %v6081 = vunpack.c.l.b16 %v5921
    %v6082 = vunpack.c.h.b16 %v5921
    %v6083 = vunpack.c.l.b16 %v5922
    %v6084 = vunpack.c.h.b16 %v5922
    %v6085 = vunpack.c.l.b16 %v5923
    %v6086 = vunpack.c.h.b16 %v5923
    %v6087 = vunpack.c.l.b16 %v5924
    %v6088 = vunpack.c.h.b16 %v5924
    %v6089 = vunpack.c.l.b16 %v5925
    %v6090 = vunpack.c.h.b16 %v5925
    %v6091 = vunpack.c.l.b16 %v5926
    %v6092 = vunpack.c.h.b16 %v5926
    %v6093 = vunpack.c.l.b16 %v5927
    %v6094 = vunpack.c.h.b16 %v5927
    %v6095 = vunpack.c.l.b16 %v5928
    %v6096 = vunpack.c.h.b16 %v5928
    %v6097 = vunpack.c.l.b16 %v5929
    %v6098 = vunpack.c.h.b16 %v5929
    %v6099 = vunpack.c.l.b16 %v5930
    %v6100 = vunpack.c.h.b16 %v5930
    %v6101 = vunpack.c.l.b16 %v5931
    %v6102 = vunpack.c.h.b16 %v5931
    %v6103 = vunpack.c.l.b16 %v5932
    %v6104 = vunpack.c.h.b16 %v5932
    %v6105 = vunpack.c.l.b16 %v5933
    %v6106 = vunpack.c.h.b16 %v5933
    %v6107 = vunpack.c.l.b16 %v5934
    %v6108 = vunpack.c.h.b16 %v5934
    %v6109 = vunpack.c.l.b16 %v5935
    %v6110 = vunpack.c.h.b16 %v5935
    %v6111 = vunpack.c.l.b16 %v5936
    %v6112 = vunpack.c.h.b16 %v5936
    %v6113 = vunpack.c.l.b16 %v5937
    %v6114 = vunpack.c.h.b16 %v5937
    %v6115 = vunpack.c.l.b16 %v5938
    %v6116 = vunpack.c.h.b16 %v5938
    %v6117 = vunpack.c.l.b16 %v5939
    %v6118 = vunpack.c.h.b16 %v5939
    %v6119 = vunpack.c.l.b16 %v5940
    %v6120 = vunpack.c.h.b16 %v5940
    %v6121 = vunpack.c.l.b16 %v5941
    %v6122 = vunpack.c.h.b16 %v5941
    %v6123 = vunpack.c.l.b16 %v5942
    %v6124 = vunpack.c.h.b16 %v5942
    %v6125 = vunpack.c.l.b16 %v5943
    %v6126 = vunpack.c.h.b16 %v5943
    %v6127 = vunpack.c.l.b16 %v5944
    %v6128 = vunpack.c.h.b16 %v5944
    %v6129 = vunpack.c.l.b16 %v5945
    %v6130 = vunpack.c.h.b16 %v5945
    %v6131 = vunpack.c.l.b16 %v5946
    %v6132 = vunpack.c.h.b16 %v5946
    %v6133 = vunpack.c.l.b16 %v5947
    %v6134 = vunpack.c.h.b16 %v5947
    %v6135 = vunpack.c.l.b16 %v5948
    %v6136 = vunpack.c.h.b16 %v5948
    %v6137 = vunpack.c.l.b16 %v5949
    %v6138 = vunpack.c.h.b16 %v5949
    %v6139 = vunpack.c.l.b16 %v5950
    %v6140 = vunpack.c.h.b16 %v5950
    %v6141 = vunpack.c.l.b16 %v5951
    %v6142 = vunpack.c.h.b16 %v5951
    %v6143 = vunpack.c.l.b16 %v5952
    %v6144 = vunpack.c.h.b16 %v5952
    %v6145 = vpack.c.b16 %v6021, %v6017
    %v6146 = vpack.c.b16 %v6022, %v6018
    %v6147 = vpack.c.b16 %v6023, %v6019
    %v6148 = vpack.c.b16 %v6024, %v6020
    %v6149 = vpack.c.b16 %v6029, %v6025
    %v6150 = vpack.c.b16 %v6030, %v6026
    %v6151 = vpack.c.b16 %v6031, %v6027
    %v6152 = vpack.c.b16 %v6032, %v6028
    %v6153 = vpack.c.b16 %v6037, %v6033
    %v6154 = vpack.c.b16 %v6038, %v6034
    %v6155 = vpack.c.b16 %v6039, %v6035
    %v6156 = vpack.c.b16 %v6040, %v6036
    %v6157 = vpack.c.b16 %v6045, %v6041
    %v6158 = vpack.c.b16 %v6046, %v6042
    %v6159 = vpack.c.b16 %v6047, %v6043
    %v6160 = vpack.c.b16 %v6048, %v6044
    %v6161 = vpack.c.b16 %v6053, %v6049
    %v6162 = vpack.c.b16 %v6054, %v6050
    %v6163 = vpack.c.b16 %v6055, %v6051
    %v6164 = vpack.c.b16 %v6056, %v6052
    %v6165 = vpack.c.b16 %v6061, %v6057
    %v6166 = vpack.c.b16 %v6062, %v6058
    %v6167 = vpack.c.b16 %v6063, %v6059
    %v6168 = vpack.c.b16 %v6064, %v6060
    %v6169 = vpack.c.b16 %v6069, %v6065
    %v6170 = vpack.c.b16 %v6070, %v6066
    %v6171 = vpack.c.b16 %v6071, %v6067
    %v6172 = vpack.c.b16 %v6072, %v6068
    %v6173 = vpack.c.b16 %v6077, %v6073
    %v6174 = vpack.c.b16 %v6078, %v6074
    %v6175 = vpack.c.b16 %v6079, %v6075
    %v6176 = vpack.c.b16 %v6080, %v6076
    %v6177 = vpack.c.b16 %v6085, %v6081
    %v6178 = vpack.c.b16 %v6086, %v6082
    %v6179 = vpack.c.b16 %v6087, %v6083
    %v6180 = vpack.c.b16 %v6088, %v6084
    %v6181 = vpack.c.b16 %v6093, %v6089
    %v6182 = vpack.c.b16 %v6094, %v6090
    %v6183 = vpack.c.b16 %v6095, %v6091
    %v6184 = vpack.c.b16 %v6096, %v6092
    %v6185 = vpack.c.b16 %v6101, %v6097
    %v6186 = vpack.c.b16 %v6102, %v6098
    %v6187 = vpack.c.b16 %v6103, %v6099
    %v6188 = vpack.c.b16 %v6104, %v6100
    %v6189 = vpack.c.b16 %v6109, %v6105
    %v6190 = vpack.c.b16 %v6110, %v6106
    %v6191 = vpack.c.b16 %v6111, %v6107
    %v6192 = vpack.c.b16 %v6112, %v6108
    %v6193 = vpack.c.b16 %v6117, %v6113
    %v6194 = vpack.c.b16 %v6118, %v6114
    %v6195 = vpack.c.b16 %v6119, %v6115
    %v6196 = vpack.c.b16 %v6120, %v6116
    %v6197 = vpack.c.b16 %v6125, %v6121
    %v6198 = vpack.c.b16 %v6126, %v6122
    %v6199 = vpack.c.b16 %v6127, %v6123
    %v6200 = vpack.c.b16 %v6128, %v6124
    %v6201 = vpack.c.b16 %v6133, %v6129
    %v6202 = vpack.c.b16 %v6134, %v6130
    %v6203 = vpack.c.b16 %v6135, %v6131
    %v6204 = vpack.c.b16 %v6136, %v6132
    %v6205 = vpack.c.b16 %v6141, %v6137
    %v6206 = vpack.c.b16 %v6142, %v6138
    %v6207 = vpack.c.b16 %v6143, %v6139
    %v6208 = vpack.c.b16 %v6144, %v6140
    %6273 = vmatprep.subr.bf16.mxu0 %v6146
    %6274 = vmatpush1.bf16.msra.mxu0 %v6145
    %6275 = vmatprep.subr.bf16.mxu0 %v6150
    %6276 = vmatpush1.bf16.msra.mxu0 %v6149
    %6277 = vmatprep.subr.bf16.mxu0 %v6154
    %6278 = vmatpush1.bf16.msra.mxu0 %v6153
    %6279 = vmatprep.subr.bf16.mxu0 %v6158
    %6280 = vmatpush1.bf16.msra.mxu0 %v6157
    %6281 = vmatprep.subr.bf16.mxu0 %v6162
    %6282 = vmatpush1.bf16.msra.mxu0 %v6161
    %6283 = vmatprep.subr.bf16.mxu0 %v6166
    %6284 = vmatpush1.bf16.msra.mxu0 %v6165
    %6285 = vmatprep.subr.bf16.mxu0 %v6170
    %6286 = vmatpush1.bf16.msra.mxu0 %v6169
    %6287 = vmatprep.subr.bf16.mxu0 %v6174
    %6288 = vmatpush1.bf16.msra.mxu0 %v6173
    %6289 = vmatprep.subr.bf16.mxu0 %v6178
    %6290 = vmatpush1.bf16.msra.mxu0 %v6177
    %6291 = vmatprep.subr.bf16.mxu0 %v6182
    %6292 = vmatpush1.bf16.msra.mxu0 %v6181
    %6293 = vmatprep.subr.bf16.mxu0 %v6186
    %6294 = vmatpush1.bf16.msra.mxu0 %v6185
    %6295 = vmatprep.subr.bf16.mxu0 %v6190
    %6296 = vmatpush1.bf16.msra.mxu0 %v6189
    %6297 = vmatprep.subr.bf16.mxu0 %v6194
    %6298 = vmatpush1.bf16.msra.mxu0 %v6193
    %6299 = vmatprep.subr.bf16.mxu0 %v6198
    %6300 = vmatpush1.bf16.msra.mxu0 %v6197
    %6301 = vmatprep.subr.bf16.mxu0 %v6202
    %6302 = vmatpush1.bf16.msra.mxu0 %v6201
    %6303 = vmatprep.subr.bf16.mxu0 %v6206
    %6304 = vmatpush1.bf16.msra.mxu0 %v6205
    %6305 = vmatprep.mubr.bf16.mxu0 %v5886
    %6306 = vmatmul.mubr.bf16.gmra.mrb[0].mxu0 %v5464
    %v6307 = vpop.f32.mrb[0].mxu0
    %v6308 = vadd.f32 0.0, %v6307
    %v6309 = vpop.f32.mrb[0].mxu0
    %v6310 = vadd.f32 0.0, %v6309
    %v6311 = vpop.f32.mrb[0].mxu0
    %v6312 = vpop.f32.mrb[0].mxu0
    %6313 = vdwg.mxu0
    %6314 = vmatprep.subr.bf16.mxu0 %v6148
    %6315 = vmatpush1.bf16.msra.mxu0 %v6147
    %6316 = vmatprep.subr.bf16.mxu0 %v6152
    %6317 = vmatpush1.bf16.msra.mxu0 %v6151
    %6318 = vmatprep.subr.bf16.mxu0 %v6156
    %6319 = vmatpush1.bf16.msra.mxu0 %v6155
    %6320 = vmatprep.subr.bf16.mxu0 %v6160
    %6321 = vmatpush1.bf16.msra.mxu0 %v6159
    %6322 = vmatprep.subr.bf16.mxu0 %v6164
    %6323 = vmatpush1.bf16.msra.mxu0 %v6163
    %6324 = vmatprep.subr.bf16.mxu0 %v6168
    %6325 = vmatpush1.bf16.msra.mxu0 %v6167
    %6326 = vmatprep.subr.bf16.mxu0 %v6172
    %6327 = vmatpush1.bf16.msra.mxu0 %v6171
    %6328 = vmatprep.subr.bf16.mxu0 %v6176
    %6329 = vmatpush1.bf16.msra.mxu0 %v6175
    %6330 = vmatprep.subr.bf16.mxu0 %v6180
    %6331 = vmatpush1.bf16.msra.mxu0 %v6179
    %6332 = vmatprep.subr.bf16.mxu0 %v6184
    %6333 = vmatpush1.bf16.msra.mxu0 %v6183
    %6334 = vmatprep.subr.bf16.mxu0 %v6188
    %6335 = vmatpush1.bf16.msra.mxu0 %v6187
    %6336 = vmatprep.subr.bf16.mxu0 %v6192
    %6337 = vmatpush1.bf16.msra.mxu0 %v6191
    %6338 = vmatprep.subr.bf16.mxu0 %v6196
    %6339 = vmatpush1.bf16.msra.mxu0 %v6195
    %6340 = vmatprep.subr.bf16.mxu0 %v6200
    %6341 = vmatpush1.bf16.msra.mxu0 %v6199
    %6342 = vmatprep.subr.bf16.mxu0 %v6204
    %6343 = vmatpush1.bf16.msra.mxu0 %v6203
    %6344 = vmatprep.subr.bf16.mxu0 %v6208
    %6345 = vmatpush1.bf16.msra.mxu0 %v6207
    %6346 = vmatprep.mubr.bf16.mxu0 %v5886
    %6347 = vmatmul.mubr.bf16.gmra.mrb[0].mxu0 %v5464
    %v6348 = vpop.f32.mrb[0].mxu0
    %v6349 = vadd.f32 0.0, %v6348
    %v6350 = vpop.f32.mrb[0].mxu0
    %v6351 = vadd.f32 0.0, %v6350
    %v6352 = vpop.f32.mrb[0].mxu0
    %v6353 = vpop.f32.mrb[0].mxu0
    %6354 = vdwg.mxu0
    %s6355 = scalar_lea.vmem [#allocation2], 144
    %v6356 = vld [vmem:[%s6355] sm:$0xff]
    %v6357 = vld [vmem:[%s6355 + $0x8] sm:$0xff]
    %v6358 = vld [vmem:[%s6355 + $0x10] sm:$0xff]
    %v6359 = vadd.f32 %v6356, %v6308
    %v6360 = vxor.u32 %v6359, 2147483648
    %v6361 = vmul.f32 %v6360, 1.442695
    %v6362 = vpow.pop %v6361
    %v6363 = vadd.f32 %v6362, 1.0
    %v6364 = vrcp.pop %v6363
    %v6365 = vmul.f32 1.0, %v6364
    %v6366 = vadd.f32 %v6357, %v6310
    %v6367 = vxor.u32 %v6366, 2147483648
    %v6368 = vmul.f32 %v6367, 1.442695
    %v6369 = vpow.pop %v6368
    %v6370 = vadd.f32 %v6369, 1.0
    %v6371 = vrcp.pop %v6370
    %v6372 = vmul.f32 1.0, %v6371
    %v6373 = vadd.f32 %v6349, %v848
    %v6374 = vmul.f32 %v6365, %v6373
    %v6375 = vadd.f32 %v6358, %v6374
    %v6376 = vtanh.pop %v6375
    %v6377 = vsub.f32 1.0, %v6372
    %v6378 = vmul.f32 %v6377, %v6376
    %v6379 = vmul.f32 %v6372, %v5463
    %v6380 = vadd.f32 %v6378, %v6379
    %v6381 = vpack.c.bf16 %v6380, %v6380
    %v6382 = vld [vmem:[#allocation10] sm:$0xff]
    %v6383 = vld [vmem:[#allocation10 + $0x8] sm:$0xf]
    %v6384 = vld [vmem:[#allocation10 + $0xc] sm:$0xff]
    %v6385 = vld [vmem:[#allocation10 + $0x14] sm:$0xf]
    %v6386 = vld [vmem:[#allocation10 + $0x18] sm:$0xff]
    %v6387 = vld [vmem:[#allocation10 + $0x20] sm:$0xf]
    %v6388 = vld [vmem:[#allocation10 + $0x24] sm:$0xff]
    %v6389 = vld [vmem:[#allocation10 + $0x2c] sm:$0xf]
    %v6390 = vld [vmem:[#allocation10 + $0x30] sm:$0xff]
    %v6391 = vld [vmem:[#allocation10 + $0x38] sm:$0xf]
    %v6392 = vld [vmem:[#allocation10 + $0x3c] sm:$0xff]
    %v6393 = vld [vmem:[#allocation10 + $0x44] sm:$0xf]
    %v6394 = vld [vmem:[#allocation10 + $0x48] sm:$0xff]
    %v6395 = vld [vmem:[#allocation10 + $0x50] sm:$0xf]
    %v6396 = vld [vmem:[#allocation10 + $0x54] sm:$0xff]
    %v6397 = vld [vmem:[#allocation10 + $0x5c] sm:$0xf]
    %v6398 = vld [vmem:[#allocation10 + $0x60] sm:$0xff]
    %v6399 = vld [vmem:[#allocation10 + $0x68] sm:$0xf]
    %v6400 = vld [vmem:[#allocation10 + $0x6c] sm:$0xff]
    %v6401 = vld [vmem:[#allocation10 + $0x74] sm:$0xf]
    %v6402 = vld [vmem:[#allocation10 + $0x78] sm:$0xff]
    %v6403 = vld [vmem:[#allocation10 + $0x80] sm:$0xf]
    %v6404 = vld [vmem:[#allocation10 + $0x84] sm:$0xff]
    %v6405 = vld [vmem:[#allocation10 + $0x8c] sm:$0xf]
    %v6406 = vld [vmem:[#allocation10 + $0x90] sm:$0xff]
    %v6407 = vld [vmem:[#allocation10 + $0x98] sm:$0xf]
    %v6408 = vld [vmem:[#allocation10 + $0x9c] sm:$0xff]
    %v6409 = vld [vmem:[#allocation10 + $0xa4] sm:$0xf]
    %v6410 = vld [vmem:[#allocation10 + $0xa8] sm:$0xff]
    %v6411 = vld [vmem:[#allocation10 + $0xb0] sm:$0xf]
    %v6412 = vld [vmem:[#allocation10 + $0xb4] sm:$0xff]
    %v6413 = vld [vmem:[#allocation10 + $0xbc] sm:$0xf]
    %v6414 = vld [vmem:[#allocation10 + $0xc0] sm:$0xff]
    %v6415 = vld [vmem:[#allocation10 + $0xc8] sm:$0xf]
    %v6416 = vld [vmem:[#allocation10 + $0xcc] sm:$0xff]
    %v6417 = vld [vmem:[#allocation10 + $0xd4] sm:$0xf]
    %v6418 = vld [vmem:[#allocation10 + $0xd8] sm:$0xff]
    %v6419 = vld [vmem:[#allocation10 + $0xe0] sm:$0xf]
    %v6420 = vld [vmem:[#allocation10 + $0xe4] sm:$0xff]
    %v6421 = vld [vmem:[#allocation10 + $0xec] sm:$0xf]
    %v6422 = vld [vmem:[#allocation10 + $0xf0] sm:$0xff]
    %v6423 = vld [vmem:[#allocation10 + $0xf8] sm:$0xf]
    %v6424 = vld [vmem:[#allocation10 + $0xfc] sm:$0xff]
    %v6425 = vld [vmem:[#allocation10 + $0x104] sm:$0xf]
    %v6426 = vld [vmem:[#allocation10 + $0x108] sm:$0xff]
    %v6427 = vld [vmem:[#allocation10 + $0x110] sm:$0xf]
    %v6428 = vld [vmem:[#allocation10 + $0x114] sm:$0xff]
    %v6429 = vld [vmem:[#allocation10 + $0x11c] sm:$0xf]
    %v6430 = vld [vmem:[#allocation10 + $0x120] sm:$0xff]
    %v6431 = vld [vmem:[#allocation10 + $0x128] sm:$0xf]
    %v6432 = vld [vmem:[#allocation10 + $0x12c] sm:$0xff]
    %v6433 = vld [vmem:[#allocation10 + $0x134] sm:$0xf]
    %v6434 = vld [vmem:[#allocation10 + $0x138] sm:$0xff]
    %v6435 = vld [vmem:[#allocation10 + $0x140] sm:$0xf]
    %v6436 = vld [vmem:[#allocation10 + $0x144] sm:$0xff]
    %v6437 = vld [vmem:[#allocation10 + $0x14c] sm:$0xf]
    %v6438 = vld [vmem:[#allocation10 + $0x150] sm:$0xff]
    %v6439 = vld [vmem:[#allocation10 + $0x158] sm:$0xf]
    %v6440 = vld [vmem:[#allocation10 + $0x15c] sm:$0xff]
    %v6441 = vld [vmem:[#allocation10 + $0x164] sm:$0xf]
    %v6442 = vld [vmem:[#allocation10 + $0x168] sm:$0xff]
    %v6443 = vld [vmem:[#allocation10 + $0x170] sm:$0xf]
    %v6444 = vld [vmem:[#allocation10 + $0x174] sm:$0xff]
    %v6445 = vld [vmem:[#allocation10 + $0x17c] sm:$0xf]
    %v6510 = vunpack.c.l.b16 %v6382
    %v6511 = vunpack.c.h.b16 %v6382
    %v6512 = vunpack.c.l.b16 %v6383
    %v6513 = vunpack.c.l.b16 %v6384
    %v6514 = vunpack.c.h.b16 %v6384
    %v6515 = vunpack.c.l.b16 %v6385
    %v6516 = vunpack.c.l.b16 %v6386
    %v6517 = vunpack.c.h.b16 %v6386
    %v6518 = vunpack.c.l.b16 %v6387
    %v6519 = vunpack.c.l.b16 %v6388
    %v6520 = vunpack.c.h.b16 %v6388
    %v6521 = vunpack.c.l.b16 %v6389
    %v6522 = vunpack.c.l.b16 %v6390
    %v6523 = vunpack.c.h.b16 %v6390
    %v6524 = vunpack.c.l.b16 %v6391
    %v6525 = vunpack.c.l.b16 %v6392
    %v6526 = vunpack.c.h.b16 %v6392
    %v6527 = vunpack.c.l.b16 %v6393
    %v6528 = vunpack.c.l.b16 %v6394
    %v6529 = vunpack.c.h.b16 %v6394
    %v6530 = vunpack.c.l.b16 %v6395
    %v6531 = vunpack.c.l.b16 %v6396
    %v6532 = vunpack.c.h.b16 %v6396
    %v6533 = vunpack.c.l.b16 %v6397
    %v6534 = vunpack.c.l.b16 %v6398
    %v6535 = vunpack.c.h.b16 %v6398
    %v6536 = vunpack.c.l.b16 %v6399
    %v6537 = vunpack.c.l.b16 %v6400
    %v6538 = vunpack.c.h.b16 %v6400
    %v6539 = vunpack.c.l.b16 %v6401
    %v6540 = vunpack.c.l.b16 %v6402
    %v6541 = vunpack.c.h.b16 %v6402
    %v6542 = vunpack.c.l.b16 %v6403
    %v6543 = vunpack.c.l.b16 %v6404
    %v6544 = vunpack.c.h.b16 %v6404
    %v6545 = vunpack.c.l.b16 %v6405
    %v6546 = vunpack.c.l.b16 %v6406
    %v6547 = vunpack.c.h.b16 %v6406
    %v6548 = vunpack.c.l.b16 %v6407
    %v6549 = vunpack.c.l.b16 %v6408
    %v6550 = vunpack.c.h.b16 %v6408
    %v6551 = vunpack.c.l.b16 %v6409
    %v6552 = vunpack.c.l.b16 %v6410
    %v6553 = vunpack.c.h.b16 %v6410
    %v6554 = vunpack.c.l.b16 %v6411
    %v6555 = vunpack.c.l.b16 %v6412
    %v6556 = vunpack.c.h.b16 %v6412
    %v6557 = vunpack.c.l.b16 %v6413
    %v6558 = vunpack.c.l.b16 %v6414
    %v6559 = vunpack.c.h.b16 %v6414
    %v6560 = vunpack.c.l.b16 %v6415
    %v6561 = vunpack.c.l.b16 %v6416
    %v6562 = vunpack.c.h.b16 %v6416
    %v6563 = vunpack.c.l.b16 %v6417
    %v6564 = vunpack.c.l.b16 %v6418
    %v6565 = vunpack.c.h.b16 %v6418
    %v6566 = vunpack.c.l.b16 %v6419
    %v6567 = vunpack.c.l.b16 %v6420
    %v6568 = vunpack.c.h.b16 %v6420
    %v6569 = vunpack.c.l.b16 %v6421
    %v6570 = vunpack.c.l.b16 %v6422
    %v6571 = vunpack.c.h.b16 %v6422
    %v6572 = vunpack.c.l.b16 %v6423
    %v6573 = vunpack.c.l.b16 %v6424
    %v6574 = vunpack.c.h.b16 %v6424
    %v6575 = vunpack.c.l.b16 %v6425
    %v6576 = vunpack.c.l.b16 %v6426
    %v6577 = vunpack.c.h.b16 %v6426
    %v6578 = vunpack.c.l.b16 %v6427
    %v6579 = vunpack.c.l.b16 %v6428
    %v6580 = vunpack.c.h.b16 %v6428
    %v6581 = vunpack.c.l.b16 %v6429
    %v6582 = vunpack.c.l.b16 %v6430
    %v6583 = vunpack.c.h.b16 %v6430
    %v6584 = vunpack.c.l.b16 %v6431
    %v6585 = vunpack.c.l.b16 %v6432
    %v6586 = vunpack.c.h.b16 %v6432
    %v6587 = vunpack.c.l.b16 %v6433
    %v6588 = vunpack.c.l.b16 %v6434
    %v6589 = vunpack.c.h.b16 %v6434
    %v6590 = vunpack.c.l.b16 %v6435
    %v6591 = vunpack.c.l.b16 %v6436
    %v6592 = vunpack.c.h.b16 %v6436
    %v6593 = vunpack.c.l.b16 %v6437
    %v6594 = vunpack.c.l.b16 %v6438
    %v6595 = vunpack.c.h.b16 %v6438
    %v6596 = vunpack.c.l.b16 %v6439
    %v6597 = vunpack.c.l.b16 %v6440
    %v6598 = vunpack.c.h.b16 %v6440
    %v6599 = vunpack.c.l.b16 %v6441
    %v6600 = vunpack.c.l.b16 %v6442
    %v6601 = vunpack.c.h.b16 %v6442
    %v6602 = vunpack.c.l.b16 %v6443
    %v6603 = vunpack.c.l.b16 %v6444
    %v6604 = vunpack.c.h.b16 %v6444
    %v6605 = vunpack.c.l.b16 %v6445
    %v6606 = vpack.c.b16 %v6513, %v6510
    %v6607 = vpack.c.b16 %v6514, %v6511
    %v6608 = vpack.c.b16 %v6515, %v6512
    %v6609 = vpack.c.b16 %v6519, %v6516
    %v6610 = vpack.c.b16 %v6520, %v6517
    %v6611 = vpack.c.b16 %v6521, %v6518
    %v6612 = vpack.c.b16 %v6525, %v6522
    %v6613 = vpack.c.b16 %v6526, %v6523
    %v6614 = vpack.c.b16 %v6527, %v6524
    %v6615 = vpack.c.b16 %v6531, %v6528
    %v6616 = vpack.c.b16 %v6532, %v6529
    %v6617 = vpack.c.b16 %v6533, %v6530
    %v6618 = vpack.c.b16 %v6537, %v6534
    %v6619 = vpack.c.b16 %v6538, %v6535
    %v6620 = vpack.c.b16 %v6539, %v6536
    %v6621 = vpack.c.b16 %v6543, %v6540
    %v6622 = vpack.c.b16 %v6544, %v6541
    %v6623 = vpack.c.b16 %v6545, %v6542
    %v6624 = vpack.c.b16 %v6549, %v6546
    %v6625 = vpack.c.b16 %v6550, %v6547
    %v6626 = vpack.c.b16 %v6551, %v6548
    %v6627 = vpack.c.b16 %v6555, %v6552
    %v6628 = vpack.c.b16 %v6556, %v6553
    %v6629 = vpack.c.b16 %v6557, %v6554
    %v6630 = vpack.c.b16 %v6561, %v6558
    %v6631 = vpack.c.b16 %v6562, %v6559
    %v6632 = vpack.c.b16 %v6563, %v6560
    %v6633 = vpack.c.b16 %v6567, %v6564
    %v6634 = vpack.c.b16 %v6568, %v6565
    %v6635 = vpack.c.b16 %v6569, %v6566
    %v6636 = vpack.c.b16 %v6573, %v6570
    %v6637 = vpack.c.b16 %v6574, %v6571
    %v6638 = vpack.c.b16 %v6575, %v6572
    %v6639 = vpack.c.b16 %v6579, %v6576
    %v6640 = vpack.c.b16 %v6580, %v6577
    %v6641 = vpack.c.b16 %v6581, %v6578
    %v6642 = vpack.c.b16 %v6585, %v6582
    %v6643 = vpack.c.b16 %v6586, %v6583
    %v6644 = vpack.c.b16 %v6587, %v6584
    %v6645 = vpack.c.b16 %v6591, %v6588
    %v6646 = vpack.c.b16 %v6592, %v6589
    %v6647 = vpack.c.b16 %v6593, %v6590
    %v6648 = vpack.c.b16 %v6597, %v6594
    %v6649 = vpack.c.b16 %v6598, %v6595
    %v6650 = vpack.c.b16 %v6599, %v6596
    %v6651 = vpack.c.b16 %v6603, %v6600
    %v6652 = vpack.c.b16 %v6604, %v6601
    %v6653 = vpack.c.b16 %v6605, %v6602
    %6702 = vmatprep.subr.bf16.mxu0 %v6607
    %6703 = vmatpush1.bf16.msra.mxu0 %v6606
    %6704 = vmatprep.subr.bf16.mxu0 %v6610
    %6705 = vmatpush1.bf16.msra.mxu0 %v6609
    %6706 = vmatprep.subr.bf16.mxu0 %v6613
    %6707 = vmatpush1.bf16.msra.mxu0 %v6612
    %6708 = vmatprep.subr.bf16.mxu0 %v6616
    %6709 = vmatpush1.bf16.msra.mxu0 %v6615
    %6710 = vmatprep.subr.bf16.mxu0 %v6619
    %6711 = vmatpush1.bf16.msra.mxu0 %v6618
    %6712 = vmatprep.subr.bf16.mxu0 %v6622
    %6713 = vmatpush1.bf16.msra.mxu0 %v6621
    %6714 = vmatprep.subr.bf16.mxu0 %v6625
    %6715 = vmatpush1.bf16.msra.mxu0 %v6624
    %6716 = vmatprep.subr.bf16.mxu0 %v6628
    %6717 = vmatpush1.bf16.msra.mxu0 %v6627
    %6718 = vmatprep.subr.bf16.mxu0 %v6631
    %6719 = vmatpush1.bf16.msra.mxu0 %v6630
    %6720 = vmatprep.subr.bf16.mxu0 %v6634
    %6721 = vmatpush1.bf16.msra.mxu0 %v6633
    %6722 = vmatprep.subr.bf16.mxu0 %v6637
    %6723 = vmatpush1.bf16.msra.mxu0 %v6636
    %6724 = vmatprep.subr.bf16.mxu0 %v6640
    %6725 = vmatpush1.bf16.msra.mxu0 %v6639
    %6726 = vmatprep.subr.bf16.mxu0 %v6643
    %6727 = vmatpush1.bf16.msra.mxu0 %v6642
    %6728 = vmatprep.subr.bf16.mxu0 %v6646
    %6729 = vmatpush1.bf16.msra.mxu0 %v6645
    %6730 = vmatprep.subr.bf16.mxu0 %v6649
    %6731 = vmatpush1.bf16.msra.mxu0 %v6648
    %6732 = vmatprep.subr.bf16.mxu0 %v6652
    %6733 = vmatpush1.bf16.msra.mxu0 %v6651
    %6734 = vmatprep.mubr.bf16.mxu0 %v5886
    %6735 = vmatmul.mubr.bf16.gmra.mrb[0].mxu0 %v6381
    %v6736 = vpop.f32.mrb[0].mxu0
    %v6737 = vadd.f32 %v927, %v6736
    %v6738 = vpop.f32.mrb[0].mxu0
    %v6739 = vadd.f32 %v931, %v6738
    %v6740 = vpop.f32.mrb[0].mxu0
    %v6741 = vpop.f32.mrb[0].mxu0
    %6742 = vdwg.mxu0
    %6743 = vmatprep.subr.bf16.mxu0 0
    %6744 = vmatpush1.bf16.msra.mxu0 %v6608
    %6745 = vmatprep.subr.bf16.mxu0 0
    %6746 = vmatpush1.bf16.msra.mxu0 %v6611
    %6747 = vmatprep.subr.bf16.mxu0 0
    %6748 = vmatpush1.bf16.msra.mxu0 %v6614
    %6749 = vmatprep.subr.bf16.mxu0 0
    %6750 = vmatpush1.bf16.msra.mxu0 %v6617
    %6751 = vmatprep.subr.bf16.mxu0 0
    %6752 = vmatpush1.bf16.msra.mxu0 %v6620
    %6753 = vmatprep.subr.bf16.mxu0 0
    %6754 = vmatpush1.bf16.msra.mxu0 %v6623
    %6755 = vmatprep.subr.bf16.mxu0 0
    %6756 = vmatpush1.bf16.msra.mxu0 %v6626
    %6757 = vmatprep.subr.bf16.mxu0 0
    %6758 = vmatpush1.bf16.msra.mxu0 %v6629
    %6759 = vmatprep.subr.bf16.mxu0 0
    %6760 = vmatpush1.bf16.msra.mxu0 %v6632
    %6761 = vmatprep.subr.bf16.mxu0 0
    %6762 = vmatpush1.bf16.msra.mxu0 %v6635
    %6763 = vmatprep.subr.bf16.mxu0 0
    %6764 = vmatpush1.bf16.msra.mxu0 %v6638
    %6765 = vmatprep.subr.bf16.mxu0 0
    %6766 = vmatpush1.bf16.msra.mxu0 %v6641
    %6767 = vmatprep.subr.bf16.mxu0 0
    %6768 = vmatpush1.bf16.msra.mxu0 %v6644
    %6769 = vmatprep.subr.bf16.mxu0 0
    %6770 = vmatpush1.bf16.msra.mxu0 %v6647
    %6771 = vmatprep.subr.bf16.mxu0 0
    %6772 = vmatpush1.bf16.msra.mxu0 %v6650
    %6773 = vmatprep.subr.bf16.mxu0 0
    %6774 = vmatpush1.bf16.msra.mxu0 %v6653
    %6775 = vmatprep.mubr.bf16.mxu0 %v5886
    %6776 = vmatmul.mubr.bf16.gmra.mrb[0].mxu0 %v6381
    %v6777 = vpop.f32.mrb[0].mxu0
    %v6778 = vadd.f32 %v935, %v6777
    %v6779 = vpop.f32.mrb[0].mxu0
    %v6780 = vpop.f32.mrb[0].mxu0
    %v6781 = vpop.f32.mrb[0].mxu0
    %6782 = vdwg.mxu0
    %v6783 = vxor.u32 %v6737, 2147483648
    %v6784 = vmul.f32 %v6783, 1.442695
    %v6785 = vpow.pop %v6784
    %v6786 = vadd.f32 %v6785, 1.0
    %v6787 = vrcp.pop %v6786
    %v6788 = vmul.f32 1.0, %v6787
    %v6789 = vxor.u32 %v6739, 2147483648
    %v6790 = vmul.f32 %v6789, 1.442695
    %v6791 = vpow.pop %v6790
    %v6792 = vadd.f32 %v6791, 1.0
    %v6793 = vrcp.pop %v6792
    %v6794 = vmul.f32 1.0, %v6793
    %v6795 = vadd.f32 %v6351, %v1292
    %v6796 = vmul.f32 %v6788, %v6795
    %v6797 = vadd.f32 %v6778, %v6796
    %v6798 = vtanh.pop %v6797
    %v6799 = vsub.f32 1.0, %v6794
    %v6800 = vmul.f32 %v6799, %v6798
    %v6801 = vmul.f32 %v6794, %v5885
    %v6802 = vadd.f32 %v6800, %v6801
    %v6803 = vpack.c.bf16 %v6802, %v6802
    %s6804 = scalar_lea.vmem [#allocation3], 24
    %6805 = vst [vmem:[%s6804] sm:$0xf] %v6803
    %v6806 = vld [vmem:[#allocation9] sm:$0xff]
    %v6807 = vld [vmem:[#allocation9 + $0x8] sm:$0xff]
    %v6808 = vld [vmem:[#allocation9 + $0x10] sm:$0xff]
    %v6809 = vld [vmem:[#allocation9 + $0x18] sm:$0xff]
    %v6810 = vld [vmem:[#allocation9 + $0x20] sm:$0xff]
    %v6811 = vld [vmem:[#allocation9 + $0x28] sm:$0xff]
    %v6812 = vld [vmem:[#allocation9 + $0x30] sm:$0xff]
    %v6813 = vld [vmem:[#allocation9 + $0x38] sm:$0xff]
    %v6814 = vld [vmem:[#allocation9 + $0x40] sm:$0xff]
    %v6815 = vld [vmem:[#allocation9 + $0x48] sm:$0xff]
    %v6816 = vld [vmem:[#allocation9 + $0x50] sm:$0xff]
    %v6817 = vld [vmem:[#allocation9 + $0x58] sm:$0xff]
    %v6818 = vld [vmem:[#allocation9 + $0x60] sm:$0xff]
    %v6819 = vld [vmem:[#allocation9 + $0x68] sm:$0xff]
    %v6820 = vld [vmem:[#allocation9 + $0x70] sm:$0xff]
    %v6821 = vld [vmem:[#allocation9 + $0x78] sm:$0xff]
    %v6822 = vld [vmem:[#allocation9 + $0x80] sm:$0xff]
    %v6823 = vld [vmem:[#allocation9 + $0x88] sm:$0xff]
    %v6824 = vld [vmem:[#allocation9 + $0x90] sm:$0xff]
    %v6825 = vld [vmem:[#allocation9 + $0x98] sm:$0xff]
    %v6826 = vld [vmem:[#allocation9 + $0xa0] sm:$0xff]
    %v6827 = vld [vmem:[#allocation9 + $0xa8] sm:$0xff]
    %v6828 = vld [vmem:[#allocation9 + $0xb0] sm:$0xff]
    %v6829 = vld [vmem:[#allocation9 + $0xb8] sm:$0xff]
    %v6830 = vld [vmem:[#allocation9 + $0xc0] sm:$0xff]
    %v6831 = vld [vmem:[#allocation9 + $0xc8] sm:$0xff]
    %v6832 = vld [vmem:[#allocation9 + $0xd0] sm:$0xff]
    %v6833 = vld [vmem:[#allocation9 + $0xd8] sm:$0xff]
    %v6834 = vld [vmem:[#allocation9 + $0xe0] sm:$0xff]
    %v6835 = vld [vmem:[#allocation9 + $0xe8] sm:$0xff]
    %v6836 = vld [vmem:[#allocation9 + $0xf0] sm:$0xff]
    %v6837 = vld [vmem:[#allocation9 + $0xf8] sm:$0xff]
    %v6838 = vld [vmem:[#allocation9 + $0x100] sm:$0xff]
    %v6839 = vld [vmem:[#allocation9 + $0x108] sm:$0xff]
    %v6840 = vld [vmem:[#allocation9 + $0x110] sm:$0xff]
    %v6841 = vld [vmem:[#allocation9 + $0x118] sm:$0xff]
    %v6842 = vld [vmem:[#allocation9 + $0x120] sm:$0xff]
    %v6843 = vld [vmem:[#allocation9 + $0x128] sm:$0xff]
    %v6844 = vld [vmem:[#allocation9 + $0x130] sm:$0xff]
    %v6845 = vld [vmem:[#allocation9 + $0x138] sm:$0xff]
    %v6846 = vld [vmem:[#allocation9 + $0x140] sm:$0xff]
    %v6847 = vld [vmem:[#allocation9 + $0x148] sm:$0xff]
    %v6848 = vld [vmem:[#allocation9 + $0x150] sm:$0xff]
    %v6849 = vld [vmem:[#allocation9 + $0x158] sm:$0xff]
    %v6850 = vld [vmem:[#allocation9 + $0x160] sm:$0xff]
    %v6851 = vld [vmem:[#allocation9 + $0x168] sm:$0xff]
    %v6852 = vld [vmem:[#allocation9 + $0x170] sm:$0xff]
    %v6853 = vld [vmem:[#allocation9 + $0x178] sm:$0xff]
    %v6854 = vld [vmem:[#allocation9 + $0x180] sm:$0xff]
    %v6855 = vld [vmem:[#allocation9 + $0x188] sm:$0xff]
    %v6856 = vld [vmem:[#allocation9 + $0x190] sm:$0xff]
    %v6857 = vld [vmem:[#allocation9 + $0x198] sm:$0xff]
    %v6858 = vld [vmem:[#allocation9 + $0x1a0] sm:$0xff]
    %v6859 = vld [vmem:[#allocation9 + $0x1a8] sm:$0xff]
    %v6860 = vld [vmem:[#allocation9 + $0x1b0] sm:$0xff]
    %v6861 = vld [vmem:[#allocation9 + $0x1b8] sm:$0xff]
    %v6862 = vld [vmem:[#allocation9 + $0x1c0] sm:$0xff]
    %v6863 = vld [vmem:[#allocation9 + $0x1c8] sm:$0xff]
    %v6864 = vld [vmem:[#allocation9 + $0x1d0] sm:$0xff]
    %v6865 = vld [vmem:[#allocation9 + $0x1d8] sm:$0xff]
    %v6866 = vld [vmem:[#allocation9 + $0x1e0] sm:$0xff]
    %v6867 = vld [vmem:[#allocation9 + $0x1e8] sm:$0xff]
    %v6868 = vld [vmem:[#allocation9 + $0x1f0] sm:$0xff]
    %v6869 = vld [vmem:[#allocation9 + $0x1f8] sm:$0xff]
    %v6934 = vunpack.c.l.b16 %v6806
    %v6935 = vunpack.c.h.b16 %v6806
    %v6936 = vunpack.c.l.b16 %v6807
    %v6937 = vunpack.c.h.b16 %v6807
    %v6938 = vunpack.c.l.b16 %v6808
    %v6939 = vunpack.c.h.b16 %v6808
    %v6940 = vunpack.c.l.b16 %v6809
    %v6941 = vunpack.c.h.b16 %v6809
    %v6942 = vunpack.c.l.b16 %v6810
    %v6943 = vunpack.c.h.b16 %v6810
    %v6944 = vunpack.c.l.b16 %v6811
    %v6945 = vunpack.c.h.b16 %v6811
    %v6946 = vunpack.c.l.b16 %v6812
    %v6947 = vunpack.c.h.b16 %v6812
    %v6948 = vunpack.c.l.b16 %v6813
    %v6949 = vunpack.c.h.b16 %v6813
    %v6950 = vunpack.c.l.b16 %v6814
    %v6951 = vunpack.c.h.b16 %v6814
    %v6952 = vunpack.c.l.b16 %v6815
    %v6953 = vunpack.c.h.b16 %v6815
    %v6954 = vunpack.c.l.b16 %v6816
    %v6955 = vunpack.c.h.b16 %v6816
    %v6956 = vunpack.c.l.b16 %v6817
    %v6957 = vunpack.c.h.b16 %v6817
    %v6958 = vunpack.c.l.b16 %v6818
    %v6959 = vunpack.c.h.b16 %v6818
    %v6960 = vunpack.c.l.b16 %v6819
    %v6961 = vunpack.c.h.b16 %v6819
    %v6962 = vunpack.c.l.b16 %v6820
    %v6963 = vunpack.c.h.b16 %v6820
    %v6964 = vunpack.c.l.b16 %v6821
    %v6965 = vunpack.c.h.b16 %v6821
    %v6966 = vunpack.c.l.b16 %v6822
    %v6967 = vunpack.c.h.b16 %v6822
    %v6968 = vunpack.c.l.b16 %v6823
    %v6969 = vunpack.c.h.b16 %v6823
    %v6970 = vunpack.c.l.b16 %v6824
    %v6971 = vunpack.c.h.b16 %v6824
    %v6972 = vunpack.c.l.b16 %v6825
    %v6973 = vunpack.c.h.b16 %v6825
    %v6974 = vunpack.c.l.b16 %v6826
    %v6975 = vunpack.c.h.b16 %v6826
    %v6976 = vunpack.c.l.b16 %v6827
    %v6977 = vunpack.c.h.b16 %v6827
    %v6978 = vunpack.c.l.b16 %v6828
    %v6979 = vunpack.c.h.b16 %v6828
    %v6980 = vunpack.c.l.b16 %v6829
    %v6981 = vunpack.c.h.b16 %v6829
    %v6982 = vunpack.c.l.b16 %v6830
    %v6983 = vunpack.c.h.b16 %v6830
    %v6984 = vunpack.c.l.b16 %v6831
    %v6985 = vunpack.c.h.b16 %v6831
    %v6986 = vunpack.c.l.b16 %v6832
    %v6987 = vunpack.c.h.b16 %v6832
    %v6988 = vunpack.c.l.b16 %v6833
    %v6989 = vunpack.c.h.b16 %v6833
    %v6990 = vunpack.c.l.b16 %v6834
    %v6991 = vunpack.c.h.b16 %v6834
    %v6992 = vunpack.c.l.b16 %v6835
    %v6993 = vunpack.c.h.b16 %v6835
    %v6994 = vunpack.c.l.b16 %v6836
    %v6995 = vunpack.c.h.b16 %v6836
    %v6996 = vunpack.c.l.b16 %v6837
    %v6997 = vunpack.c.h.b16 %v6837
    %v6998 = vunpack.c.l.b16 %v6838
    %v6999 = vunpack.c.h.b16 %v6838
    %v7000 = vunpack.c.l.b16 %v6839
    %v7001 = vunpack.c.h.b16 %v6839
    %v7002 = vunpack.c.l.b16 %v6840
    %v7003 = vunpack.c.h.b16 %v6840
    %v7004 = vunpack.c.l.b16 %v6841
    %v7005 = vunpack.c.h.b16 %v6841
    %v7006 = vunpack.c.l.b16 %v6842
    %v7007 = vunpack.c.h.b16 %v6842
    %v7008 = vunpack.c.l.b16 %v6843
    %v7009 = vunpack.c.h.b16 %v6843
    %v7010 = vunpack.c.l.b16 %v6844
    %v7011 = vunpack.c.h.b16 %v6844
    %v7012 = vunpack.c.l.b16 %v6845
    %v7013 = vunpack.c.h.b16 %v6845
    %v7014 = vunpack.c.l.b16 %v6846
    %v7015 = vunpack.c.h.b16 %v6846
    %v7016 = vunpack.c.l.b16 %v6847
    %v7017 = vunpack.c.h.b16 %v6847
    %v7018 = vunpack.c.l.b16 %v6848
    %v7019 = vunpack.c.h.b16 %v6848
    %v7020 = vunpack.c.l.b16 %v6849
    %v7021 = vunpack.c.h.b16 %v6849
    %v7022 = vunpack.c.l.b16 %v6850
    %v7023 = vunpack.c.h.b16 %v6850
    %v7024 = vunpack.c.l.b16 %v6851
    %v7025 = vunpack.c.h.b16 %v6851
    %v7026 = vunpack.c.l.b16 %v6852
    %v7027 = vunpack.c.h.b16 %v6852
    %v7028 = vunpack.c.l.b16 %v6853
    %v7029 = vunpack.c.h.b16 %v6853
    %v7030 = vunpack.c.l.b16 %v6854
    %v7031 = vunpack.c.h.b16 %v6854
    %v7032 = vunpack.c.l.b16 %v6855
    %v7033 = vunpack.c.h.b16 %v6855
    %v7034 = vunpack.c.l.b16 %v6856
    %v7035 = vunpack.c.h.b16 %v6856
    %v7036 = vunpack.c.l.b16 %v6857
    %v7037 = vunpack.c.h.b16 %v6857
    %v7038 = vunpack.c.l.b16 %v6858
    %v7039 = vunpack.c.h.b16 %v6858
    %v7040 = vunpack.c.l.b16 %v6859
    %v7041 = vunpack.c.h.b16 %v6859
    %v7042 = vunpack.c.l.b16 %v6860
    %v7043 = vunpack.c.h.b16 %v6860
    %v7044 = vunpack.c.l.b16 %v6861
    %v7045 = vunpack.c.h.b16 %v6861
    %v7046 = vunpack.c.l.b16 %v6862
    %v7047 = vunpack.c.h.b16 %v6862
    %v7048 = vunpack.c.l.b16 %v6863
    %v7049 = vunpack.c.h.b16 %v6863
    %v7050 = vunpack.c.l.b16 %v6864
    %v7051 = vunpack.c.h.b16 %v6864
    %v7052 = vunpack.c.l.b16 %v6865
    %v7053 = vunpack.c.h.b16 %v6865
    %v7054 = vunpack.c.l.b16 %v6866
    %v7055 = vunpack.c.h.b16 %v6866
    %v7056 = vunpack.c.l.b16 %v6867
    %v7057 = vunpack.c.h.b16 %v6867
    %v7058 = vunpack.c.l.b16 %v6868
    %v7059 = vunpack.c.h.b16 %v6868
    %v7060 = vunpack.c.l.b16 %v6869
    %v7061 = vunpack.c.h.b16 %v6869
    %v7062 = vpack.c.b16 %v6938, %v6934
    %v7063 = vpack.c.b16 %v6939, %v6935
    %v7064 = vpack.c.b16 %v6940, %v6936
    %v7065 = vpack.c.b16 %v6941, %v6937
    %v7066 = vpack.c.b16 %v6946, %v6942
    %v7067 = vpack.c.b16 %v6947, %v6943
    %v7068 = vpack.c.b16 %v6948, %v6944
    %v7069 = vpack.c.b16 %v6949, %v6945
    %v7070 = vpack.c.b16 %v6954, %v6950
    %v7071 = vpack.c.b16 %v6955, %v6951
    %v7072 = vpack.c.b16 %v6956, %v6952
    %v7073 = vpack.c.b16 %v6957, %v6953
    %v7074 = vpack.c.b16 %v6962, %v6958
    %v7075 = vpack.c.b16 %v6963, %v6959
    %v7076 = vpack.c.b16 %v6964, %v6960
    %v7077 = vpack.c.b16 %v6965, %v6961
    %v7078 = vpack.c.b16 %v6970, %v6966
    %v7079 = vpack.c.b16 %v6971, %v6967
    %v7080 = vpack.c.b16 %v6972, %v6968
    %v7081 = vpack.c.b16 %v6973, %v6969
    %v7082 = vpack.c.b16 %v6978, %v6974
    %v7083 = vpack.c.b16 %v6979, %v6975
    %v7084 = vpack.c.b16 %v6980, %v6976
    %v7085 = vpack.c.b16 %v6981, %v6977
    %v7086 = vpack.c.b16 %v6986, %v6982
    %v7087 = vpack.c.b16 %v6987, %v6983
    %v7088 = vpack.c.b16 %v6988, %v6984
    %v7089 = vpack.c.b16 %v6989, %v6985
    %v7090 = vpack.c.b16 %v6994, %v6990
    %v7091 = vpack.c.b16 %v6995, %v6991
    %v7092 = vpack.c.b16 %v6996, %v6992
    %v7093 = vpack.c.b16 %v6997, %v6993
    %v7094 = vpack.c.b16 %v7002, %v6998
    %v7095 = vpack.c.b16 %v7003, %v6999
    %v7096 = vpack.c.b16 %v7004, %v7000
    %v7097 = vpack.c.b16 %v7005, %v7001
    %v7098 = vpack.c.b16 %v7010, %v7006
    %v7099 = vpack.c.b16 %v7011, %v7007
    %v7100 = vpack.c.b16 %v7012, %v7008
    %v7101 = vpack.c.b16 %v7013, %v7009
    %v7102 = vpack.c.b16 %v7018, %v7014
    %v7103 = vpack.c.b16 %v7019, %v7015
    %v7104 = vpack.c.b16 %v7020, %v7016
    %v7105 = vpack.c.b16 %v7021, %v7017
    %v7106 = vpack.c.b16 %v7026, %v7022
    %v7107 = vpack.c.b16 %v7027, %v7023
    %v7108 = vpack.c.b16 %v7028, %v7024
    %v7109 = vpack.c.b16 %v7029, %v7025
    %v7110 = vpack.c.b16 %v7034, %v7030
    %v7111 = vpack.c.b16 %v7035, %v7031
    %v7112 = vpack.c.b16 %v7036, %v7032
    %v7113 = vpack.c.b16 %v7037, %v7033
    %v7114 = vpack.c.b16 %v7042, %v7038
    %v7115 = vpack.c.b16 %v7043, %v7039
    %v7116 = vpack.c.b16 %v7044, %v7040
    %v7117 = vpack.c.b16 %v7045, %v7041
    %v7118 = vpack.c.b16 %v7050, %v7046
    %v7119 = vpack.c.b16 %v7051, %v7047
    %v7120 = vpack.c.b16 %v7052, %v7048
    %v7121 = vpack.c.b16 %v7053, %v7049
    %v7122 = vpack.c.b16 %v7058, %v7054
    %v7123 = vpack.c.b16 %v7059, %v7055
    %v7124 = vpack.c.b16 %v7060, %v7056
    %v7125 = vpack.c.b16 %v7061, %v7057
    %7190 = vmatprep.subr.bf16.mxu0 %v7063
    %7191 = vmatpush1.bf16.msra.mxu0 %v7062
    %7192 = vmatprep.subr.bf16.mxu0 %v7067
    %7193 = vmatpush1.bf16.msra.mxu0 %v7066
    %7194 = vmatprep.subr.bf16.mxu0 %v7071
    %7195 = vmatpush1.bf16.msra.mxu0 %v7070
    %7196 = vmatprep.subr.bf16.mxu0 %v7075
    %7197 = vmatpush1.bf16.msra.mxu0 %v7074
    %7198 = vmatprep.subr.bf16.mxu0 %v7079
    %7199 = vmatpush1.bf16.msra.mxu0 %v7078
    %7200 = vmatprep.subr.bf16.mxu0 %v7083
    %7201 = vmatpush1.bf16.msra.mxu0 %v7082
    %7202 = vmatprep.subr.bf16.mxu0 %v7087
    %7203 = vmatpush1.bf16.msra.mxu0 %v7086
    %7204 = vmatprep.subr.bf16.mxu0 %v7091
    %7205 = vmatpush1.bf16.msra.mxu0 %v7090
    %7206 = vmatprep.subr.bf16.mxu0 %v7095
    %7207 = vmatpush1.bf16.msra.mxu0 %v7094
    %7208 = vmatprep.subr.bf16.mxu0 %v7099
    %7209 = vmatpush1.bf16.msra.mxu0 %v7098
    %7210 = vmatprep.subr.bf16.mxu0 %v7103
    %7211 = vmatpush1.bf16.msra.mxu0 %v7102
    %7212 = vmatprep.subr.bf16.mxu0 %v7107
    %7213 = vmatpush1.bf16.msra.mxu0 %v7106
    %7214 = vmatprep.subr.bf16.mxu0 %v7111
    %7215 = vmatpush1.bf16.msra.mxu0 %v7110
    %7216 = vmatprep.subr.bf16.mxu0 %v7115
    %7217 = vmatpush1.bf16.msra.mxu0 %v7114
    %7218 = vmatprep.subr.bf16.mxu0 %v7119
    %7219 = vmatpush1.bf16.msra.mxu0 %v7118
    %7220 = vmatprep.subr.bf16.mxu0 %v7123
    %7221 = vmatpush1.bf16.msra.mxu0 %v7122
    %7222 = vmatprep.mubr.bf16.mxu0 %v6803
    %7223 = vmatmul.mubr.bf16.gmra.mrb[0].mxu0 %v6381
    %v7224 = vpop.f32.mrb[0].mxu0
    %v7225 = vadd.f32 0.0, %v7224
    %v7226 = vpop.f32.mrb[0].mxu0
    %v7227 = vadd.f32 0.0, %v7226
    %v7228 = vpop.f32.mrb[0].mxu0
    %v7229 = vpop.f32.mrb[0].mxu0
    %7230 = vdwg.mxu0
    %7231 = vmatprep.subr.bf16.mxu0 %v7065
    %7232 = vmatpush1.bf16.msra.mxu0 %v7064
    %7233 = vmatprep.subr.bf16.mxu0 %v7069
    %7234 = vmatpush1.bf16.msra.mxu0 %v7068
    %7235 = vmatprep.subr.bf16.mxu0 %v7073
    %7236 = vmatpush1.bf16.msra.mxu0 %v7072
    %7237 = vmatprep.subr.bf16.mxu0 %v7077
    %7238 = vmatpush1.bf16.msra.mxu0 %v7076
    %7239 = vmatprep.subr.bf16.mxu0 %v7081
    %7240 = vmatpush1.bf16.msra.mxu0 %v7080
    %7241 = vmatprep.subr.bf16.mxu0 %v7085
    %7242 = vmatpush1.bf16.msra.mxu0 %v7084
    %7243 = vmatprep.subr.bf16.mxu0 %v7089
    %7244 = vmatpush1.bf16.msra.mxu0 %v7088
    %7245 = vmatprep.subr.bf16.mxu0 %v7093
    %7246 = vmatpush1.bf16.msra.mxu0 %v7092
    %7247 = vmatprep.subr.bf16.mxu0 %v7097
    %7248 = vmatpush1.bf16.msra.mxu0 %v7096
    %7249 = vmatprep.subr.bf16.mxu0 %v7101
    %7250 = vmatpush1.bf16.msra.mxu0 %v7100
    %7251 = vmatprep.subr.bf16.mxu0 %v7105
    %7252 = vmatpush1.bf16.msra.mxu0 %v7104
    %7253 = vmatprep.subr.bf16.mxu0 %v7109
    %7254 = vmatpush1.bf16.msra.mxu0 %v7108
    %7255 = vmatprep.subr.bf16.mxu0 %v7113
    %7256 = vmatpush1.bf16.msra.mxu0 %v7112
    %7257 = vmatprep.subr.bf16.mxu0 %v7117
    %7258 = vmatpush1.bf16.msra.mxu0 %v7116
    %7259 = vmatprep.subr.bf16.mxu0 %v7121
    %7260 = vmatpush1.bf16.msra.mxu0 %v7120
    %7261 = vmatprep.subr.bf16.mxu0 %v7125
    %7262 = vmatpush1.bf16.msra.mxu0 %v7124
    %7263 = vmatprep.mubr.bf16.mxu0 %v6803
    %7264 = vmatmul.mubr.bf16.gmra.mrb[0].mxu0 %v6381
    %v7265 = vpop.f32.mrb[0].mxu0
    %v7266 = vadd.f32 0.0, %v7265
    %v7267 = vpop.f32.mrb[0].mxu0
    %v7268 = vadd.f32 0.0, %v7267
    %v7269 = vpop.f32.mrb[0].mxu0
    %v7270 = vpop.f32.mrb[0].mxu0
    %7271 = vdwg.mxu0
    %s7272 = scalar_lea.vmem [#allocation2], 168
    %v7273 = vld [vmem:[%s7272] sm:$0xff]
    %v7274 = vld [vmem:[%s7272 + $0x8] sm:$0xff]
    %v7275 = vld [vmem:[%s7272 + $0x10] sm:$0xff]
    %v7276 = vadd.f32 %v7273, %v7225
    %v7277 = vxor.u32 %v7276, 2147483648
    %v7278 = vmul.f32 %v7277, 1.442695
    %v7279 = vpow.pop %v7278
    %v7280 = vadd.f32 %v7279, 1.0
    %v7281 = vrcp.pop %v7280
    %v7282 = vmul.f32 1.0, %v7281
    %v7283 = vadd.f32 %v7274, %v7227
    %v7284 = vxor.u32 %v7283, 2147483648
    %v7285 = vmul.f32 %v7284, 1.442695
    %v7286 = vpow.pop %v7285
    %v7287 = vadd.f32 %v7286, 1.0
    %v7288 = vrcp.pop %v7287
    %v7289 = vmul.f32 1.0, %v7288
    %v7290 = vadd.f32 %v7266, %v848
    %v7291 = vmul.f32 %v7282, %v7290
    %v7292 = vadd.f32 %v7275, %v7291
    %v7293 = vtanh.pop %v7292
    %v7294 = vsub.f32 1.0, %v7289
    %v7295 = vmul.f32 %v7294, %v7293
    %v7296 = vmul.f32 %v7289, %v6380
    %v7297 = vadd.f32 %v7295, %v7296
    %v7298 = vpack.c.bf16 %v7297, %v7297
    %v7299 = vld [vmem:[#allocation10] sm:$0xff]
    %v7300 = vld [vmem:[#allocation10 + $0x8] sm:$0xf]
    %v7301 = vld [vmem:[#allocation10 + $0xc] sm:$0xff]
    %v7302 = vld [vmem:[#allocation10 + $0x14] sm:$0xf]
    %v7303 = vld [vmem:[#allocation10 + $0x18] sm:$0xff]
    %v7304 = vld [vmem:[#allocation10 + $0x20] sm:$0xf]
    %v7305 = vld [vmem:[#allocation10 + $0x24] sm:$0xff]
    %v7306 = vld [vmem:[#allocation10 + $0x2c] sm:$0xf]
    %v7307 = vld [vmem:[#allocation10 + $0x30] sm:$0xff]
    %v7308 = vld [vmem:[#allocation10 + $0x38] sm:$0xf]
    %v7309 = vld [vmem:[#allocation10 + $0x3c] sm:$0xff]
    %v7310 = vld [vmem:[#allocation10 + $0x44] sm:$0xf]
    %v7311 = vld [vmem:[#allocation10 + $0x48] sm:$0xff]
    %v7312 = vld [vmem:[#allocation10 + $0x50] sm:$0xf]
    %v7313 = vld [vmem:[#allocation10 + $0x54] sm:$0xff]
    %v7314 = vld [vmem:[#allocation10 + $0x5c] sm:$0xf]
    %v7315 = vld [vmem:[#allocation10 + $0x60] sm:$0xff]
    %v7316 = vld [vmem:[#allocation10 + $0x68] sm:$0xf]
    %v7317 = vld [vmem:[#allocation10 + $0x6c] sm:$0xff]
    %v7318 = vld [vmem:[#allocation10 + $0x74] sm:$0xf]
    %v7319 = vld [vmem:[#allocation10 + $0x78] sm:$0xff]
    %v7320 = vld [vmem:[#allocation10 + $0x80] sm:$0xf]
    %v7321 = vld [vmem:[#allocation10 + $0x84] sm:$0xff]
    %v7322 = vld [vmem:[#allocation10 + $0x8c] sm:$0xf]
    %v7323 = vld [vmem:[#allocation10 + $0x90] sm:$0xff]
    %v7324 = vld [vmem:[#allocation10 + $0x98] sm:$0xf]
    %v7325 = vld [vmem:[#allocation10 + $0x9c] sm:$0xff]
    %v7326 = vld [vmem:[#allocation10 + $0xa4] sm:$0xf]
    %v7327 = vld [vmem:[#allocation10 + $0xa8] sm:$0xff]
    %v7328 = vld [vmem:[#allocation10 + $0xb0] sm:$0xf]
    %v7329 = vld [vmem:[#allocation10 + $0xb4] sm:$0xff]
    %v7330 = vld [vmem:[#allocation10 + $0xbc] sm:$0xf]
    %v7331 = vld [vmem:[#allocation10 + $0xc0] sm:$0xff]
    %v7332 = vld [vmem:[#allocation10 + $0xc8] sm:$0xf]
    %v7333 = vld [vmem:[#allocation10 + $0xcc] sm:$0xff]
    %v7334 = vld [vmem:[#allocation10 + $0xd4] sm:$0xf]
    %v7335 = vld [vmem:[#allocation10 + $0xd8] sm:$0xff]
    %v7336 = vld [vmem:[#allocation10 + $0xe0] sm:$0xf]
    %v7337 = vld [vmem:[#allocation10 + $0xe4] sm:$0xff]
    %v7338 = vld [vmem:[#allocation10 + $0xec] sm:$0xf]
    %v7339 = vld [vmem:[#allocation10 + $0xf0] sm:$0xff]
    %v7340 = vld [vmem:[#allocation10 + $0xf8] sm:$0xf]
    %v7341 = vld [vmem:[#allocation10 + $0xfc] sm:$0xff]
    %v7342 = vld [vmem:[#allocation10 + $0x104] sm:$0xf]
    %v7343 = vld [vmem:[#allocation10 + $0x108] sm:$0xff]
    %v7344 = vld [vmem:[#allocation10 + $0x110] sm:$0xf]
    %v7345 = vld [vmem:[#allocation10 + $0x114] sm:$0xff]
    %v7346 = vld [vmem:[#allocation10 + $0x11c] sm:$0xf]
    %v7347 = vld [vmem:[#allocation10 + $0x120] sm:$0xff]
    %v7348 = vld [vmem:[#allocation10 + $0x128] sm:$0xf]
    %v7349 = vld [vmem:[#allocation10 + $0x12c] sm:$0xff]
    %v7350 = vld [vmem:[#allocation10 + $0x134] sm:$0xf]
    %v7351 = vld [vmem:[#allocation10 + $0x138] sm:$0xff]
    %v7352 = vld [vmem:[#allocation10 + $0x140] sm:$0xf]
    %v7353 = vld [vmem:[#allocation10 + $0x144] sm:$0xff]
    %v7354 = vld [vmem:[#allocation10 + $0x14c] sm:$0xf]
    %v7355 = vld [vmem:[#allocation10 + $0x150] sm:$0xff]
    %v7356 = vld [vmem:[#allocation10 + $0x158] sm:$0xf]
    %v7357 = vld [vmem:[#allocation10 + $0x15c] sm:$0xff]
    %v7358 = vld [vmem:[#allocation10 + $0x164] sm:$0xf]
    %v7359 = vld [vmem:[#allocation10 + $0x168] sm:$0xff]
    %v7360 = vld [vmem:[#allocation10 + $0x170] sm:$0xf]
    %v7361 = vld [vmem:[#allocation10 + $0x174] sm:$0xff]
    %v7362 = vld [vmem:[#allocation10 + $0x17c] sm:$0xf]
    %v7427 = vunpack.c.l.b16 %v7299
    %v7428 = vunpack.c.h.b16 %v7299
    %v7429 = vunpack.c.l.b16 %v7300
    %v7430 = vunpack.c.l.b16 %v7301
    %v7431 = vunpack.c.h.b16 %v7301
    %v7432 = vunpack.c.l.b16 %v7302
    %v7433 = vunpack.c.l.b16 %v7303
    %v7434 = vunpack.c.h.b16 %v7303
    %v7435 = vunpack.c.l.b16 %v7304
    %v7436 = vunpack.c.l.b16 %v7305
    %v7437 = vunpack.c.h.b16 %v7305
    %v7438 = vunpack.c.l.b16 %v7306
    %v7439 = vunpack.c.l.b16 %v7307
    %v7440 = vunpack.c.h.b16 %v7307
    %v7441 = vunpack.c.l.b16 %v7308
    %v7442 = vunpack.c.l.b16 %v7309
    %v7443 = vunpack.c.h.b16 %v7309
    %v7444 = vunpack.c.l.b16 %v7310
    %v7445 = vunpack.c.l.b16 %v7311
    %v7446 = vunpack.c.h.b16 %v7311
    %v7447 = vunpack.c.l.b16 %v7312
    %v7448 = vunpack.c.l.b16 %v7313
    %v7449 = vunpack.c.h.b16 %v7313
    %v7450 = vunpack.c.l.b16 %v7314
    %v7451 = vunpack.c.l.b16 %v7315
    %v7452 = vunpack.c.h.b16 %v7315
    %v7453 = vunpack.c.l.b16 %v7316
    %v7454 = vunpack.c.l.b16 %v7317
    %v7455 = vunpack.c.h.b16 %v7317
    %v7456 = vunpack.c.l.b16 %v7318
    %v7457 = vunpack.c.l.b16 %v7319
    %v7458 = vunpack.c.h.b16 %v7319
    %v7459 = vunpack.c.l.b16 %v7320
    %v7460 = vunpack.c.l.b16 %v7321
    %v7461 = vunpack.c.h.b16 %v7321
    %v7462 = vunpack.c.l.b16 %v7322
    %v7463 = vunpack.c.l.b16 %v7323
    %v7464 = vunpack.c.h.b16 %v7323
    %v7465 = vunpack.c.l.b16 %v7324
    %v7466 = vunpack.c.l.b16 %v7325
    %v7467 = vunpack.c.h.b16 %v7325
    %v7468 = vunpack.c.l.b16 %v7326
    %v7469 = vunpack.c.l.b16 %v7327
    %v7470 = vunpack.c.h.b16 %v7327
    %v7471 = vunpack.c.l.b16 %v7328
    %v7472 = vunpack.c.l.b16 %v7329
    %v7473 = vunpack.c.h.b16 %v7329
    %v7474 = vunpack.c.l.b16 %v7330
    %v7475 = vunpack.c.l.b16 %v7331
    %v7476 = vunpack.c.h.b16 %v7331
    %v7477 = vunpack.c.l.b16 %v7332
    %v7478 = vunpack.c.l.b16 %v7333
    %v7479 = vunpack.c.h.b16 %v7333
    %v7480 = vunpack.c.l.b16 %v7334
    %v7481 = vunpack.c.l.b16 %v7335
    %v7482 = vunpack.c.h.b16 %v7335
    %v7483 = vunpack.c.l.b16 %v7336
    %v7484 = vunpack.c.l.b16 %v7337
    %v7485 = vunpack.c.h.b16 %v7337
    %v7486 = vunpack.c.l.b16 %v7338
    %v7487 = vunpack.c.l.b16 %v7339
    %v7488 = vunpack.c.h.b16 %v7339
    %v7489 = vunpack.c.l.b16 %v7340
    %v7490 = vunpack.c.l.b16 %v7341
    %v7491 = vunpack.c.h.b16 %v7341
    %v7492 = vunpack.c.l.b16 %v7342
    %v7493 = vunpack.c.l.b16 %v7343
    %v7494 = vunpack.c.h.b16 %v7343
    %v7495 = vunpack.c.l.b16 %v7344
    %v7496 = vunpack.c.l.b16 %v7345
    %v7497 = vunpack.c.h.b16 %v7345
    %v7498 = vunpack.c.l.b16 %v7346
    %v7499 = vunpack.c.l.b16 %v7347
    %v7500 = vunpack.c.h.b16 %v7347
    %v7501 = vunpack.c.l.b16 %v7348
    %v7502 = vunpack.c.l.b16 %v7349
    %v7503 = vunpack.c.h.b16 %v7349
    %v7504 = vunpack.c.l.b16 %v7350
    %v7505 = vunpack.c.l.b16 %v7351
    %v7506 = vunpack.c.h.b16 %v7351
    %v7507 = vunpack.c.l.b16 %v7352
    %v7508 = vunpack.c.l.b16 %v7353
    %v7509 = vunpack.c.h.b16 %v7353
    %v7510 = vunpack.c.l.b16 %v7354
    %v7511 = vunpack.c.l.b16 %v7355
    %v7512 = vunpack.c.h.b16 %v7355
    %v7513 = vunpack.c.l.b16 %v7356
    %v7514 = vunpack.c.l.b16 %v7357
    %v7515 = vunpack.c.h.b16 %v7357
    %v7516 = vunpack.c.l.b16 %v7358
    %v7517 = vunpack.c.l.b16 %v7359
    %v7518 = vunpack.c.h.b16 %v7359
    %v7519 = vunpack.c.l.b16 %v7360
    %v7520 = vunpack.c.l.b16 %v7361
    %v7521 = vunpack.c.h.b16 %v7361
    %v7522 = vunpack.c.l.b16 %v7362
    %v7523 = vpack.c.b16 %v7430, %v7427
    %v7524 = vpack.c.b16 %v7431, %v7428
    %v7525 = vpack.c.b16 %v7432, %v7429
    %v7526 = vpack.c.b16 %v7436, %v7433
    %v7527 = vpack.c.b16 %v7437, %v7434
    %v7528 = vpack.c.b16 %v7438, %v7435
    %v7529 = vpack.c.b16 %v7442, %v7439
    %v7530 = vpack.c.b16 %v7443, %v7440
    %v7531 = vpack.c.b16 %v7444, %v7441
    %v7532 = vpack.c.b16 %v7448, %v7445
    %v7533 = vpack.c.b16 %v7449, %v7446
    %v7534 = vpack.c.b16 %v7450, %v7447
    %v7535 = vpack.c.b16 %v7454, %v7451
    %v7536 = vpack.c.b16 %v7455, %v7452
    %v7537 = vpack.c.b16 %v7456, %v7453
    %v7538 = vpack.c.b16 %v7460, %v7457
    %v7539 = vpack.c.b16 %v7461, %v7458
    %v7540 = vpack.c.b16 %v7462, %v7459
    %v7541 = vpack.c.b16 %v7466, %v7463
    %v7542 = vpack.c.b16 %v7467, %v7464
    %v7543 = vpack.c.b16 %v7468, %v7465
    %v7544 = vpack.c.b16 %v7472, %v7469
    %v7545 = vpack.c.b16 %v7473, %v7470
    %v7546 = vpack.c.b16 %v7474, %v7471
    %v7547 = vpack.c.b16 %v7478, %v7475
    %v7548 = vpack.c.b16 %v7479, %v7476
    %v7549 = vpack.c.b16 %v7480, %v7477
    %v7550 = vpack.c.b16 %v7484, %v7481
    %v7551 = vpack.c.b16 %v7485, %v7482
    %v7552 = vpack.c.b16 %v7486, %v7483
    %v7553 = vpack.c.b16 %v7490, %v7487
    %v7554 = vpack.c.b16 %v7491, %v7488
    %v7555 = vpack.c.b16 %v7492, %v7489
    %v7556 = vpack.c.b16 %v7496, %v7493
    %v7557 = vpack.c.b16 %v7497, %v7494
    %v7558 = vpack.c.b16 %v7498, %v7495
    %v7559 = vpack.c.b16 %v7502, %v7499
    %v7560 = vpack.c.b16 %v7503, %v7500
    %v7561 = vpack.c.b16 %v7504, %v7501
    %v7562 = vpack.c.b16 %v7508, %v7505
    %v7563 = vpack.c.b16 %v7509, %v7506
    %v7564 = vpack.c.b16 %v7510, %v7507
    %v7565 = vpack.c.b16 %v7514, %v7511
    %v7566 = vpack.c.b16 %v7515, %v7512
    %v7567 = vpack.c.b16 %v7516, %v7513
    %v7568 = vpack.c.b16 %v7520, %v7517
    %v7569 = vpack.c.b16 %v7521, %v7518
    %v7570 = vpack.c.b16 %v7522, %v7519
    %7619 = vmatprep.subr.bf16.mxu0 %v7524
    %7620 = vmatpush1.bf16.msra.mxu0 %v7523
    %7621 = vmatprep.subr.bf16.mxu0 %v7527
    %7622 = vmatpush1.bf16.msra.mxu0 %v7526
    %7623 = vmatprep.subr.bf16.mxu0 %v7530
    %7624 = vmatpush1.bf16.msra.mxu0 %v7529
    %7625 = vmatprep.subr.bf16.mxu0 %v7533
    %7626 = vmatpush1.bf16.msra.mxu0 %v7532
    %7627 = vmatprep.subr.bf16.mxu0 %v7536
    %7628 = vmatpush1.bf16.msra.mxu0 %v7535
    %7629 = vmatprep.subr.bf16.mxu0 %v7539
    %7630 = vmatpush1.bf16.msra.mxu0 %v7538
    %7631 = vmatprep.subr.bf16.mxu0 %v7542
    %7632 = vmatpush1.bf16.msra.mxu0 %v7541
    %7633 = vmatprep.subr.bf16.mxu0 %v7545
    %7634 = vmatpush1.bf16.msra.mxu0 %v7544
    %7635 = vmatprep.subr.bf16.mxu0 %v7548
    %7636 = vmatpush1.bf16.msra.mxu0 %v7547
    %7637 = vmatprep.subr.bf16.mxu0 %v7551
    %7638 = vmatpush1.bf16.msra.mxu0 %v7550
    %7639 = vmatprep.subr.bf16.mxu0 %v7554
    %7640 = vmatpush1.bf16.msra.mxu0 %v7553
    %7641 = vmatprep.subr.bf16.mxu0 %v7557
    %7642 = vmatpush1.bf16.msra.mxu0 %v7556
    %7643 = vmatprep.subr.bf16.mxu0 %v7560
    %7644 = vmatpush1.bf16.msra.mxu0 %v7559
    %7645 = vmatprep.subr.bf16.mxu0 %v7563
    %7646 = vmatpush1.bf16.msra.mxu0 %v7562
    %7647 = vmatprep.subr.bf16.mxu0 %v7566
    %7648 = vmatpush1.bf16.msra.mxu0 %v7565
    %7649 = vmatprep.subr.bf16.mxu0 %v7569
    %7650 = vmatpush1.bf16.msra.mxu0 %v7568
    %7651 = vmatprep.mubr.bf16.mxu0 %v6803
    %7652 = vmatmul.mubr.bf16.gmra.mrb[0].mxu0 %v7298
    %v7653 = vpop.f32.mrb[0].mxu0
    %v7654 = vadd.f32 %v927, %v7653
    %v7655 = vpop.f32.mrb[0].mxu0
    %v7656 = vadd.f32 %v931, %v7655
    %v7657 = vpop.f32.mrb[0].mxu0
    %v7658 = vpop.f32.mrb[0].mxu0
    %7659 = vdwg.mxu0
    %7660 = vmatprep.subr.bf16.mxu0 0
    %7661 = vmatpush1.bf16.msra.mxu0 %v7525
    %7662 = vmatprep.subr.bf16.mxu0 0
    %7663 = vmatpush1.bf16.msra.mxu0 %v7528
    %7664 = vmatprep.subr.bf16.mxu0 0
    %7665 = vmatpush1.bf16.msra.mxu0 %v7531
    %7666 = vmatprep.subr.bf16.mxu0 0
    %7667 = vmatpush1.bf16.msra.mxu0 %v7534
    %7668 = vmatprep.subr.bf16.mxu0 0
    %7669 = vmatpush1.bf16.msra.mxu0 %v7537
    %7670 = vmatprep.subr.bf16.mxu0 0
    %7671 = vmatpush1.bf16.msra.mxu0 %v7540
    %7672 = vmatprep.subr.bf16.mxu0 0
    %7673 = vmatpush1.bf16.msra.mxu0 %v7543
    %7674 = vmatprep.subr.bf16.mxu0 0
    %7675 = vmatpush1.bf16.msra.mxu0 %v7546
    %7676 = vmatprep.subr.bf16.mxu0 0
    %7677 = vmatpush1.bf16.msra.mxu0 %v7549
    %7678 = vmatprep.subr.bf16.mxu0 0
    %7679 = vmatpush1.bf16.msra.mxu0 %v7552
    %7680 = vmatprep.subr.bf16.mxu0 0
    %7681 = vmatpush1.bf16.msra.mxu0 %v7555
    %7682 = vmatprep.subr.bf16.mxu0 0
    %7683 = vmatpush1.bf16.msra.mxu0 %v7558
    %7684 = vmatprep.subr.bf16.mxu0 0
    %7685 = vmatpush1.bf16.msra.mxu0 %v7561
    %7686 = vmatprep.subr.bf16.mxu0 0
    %7687 = vmatpush1.bf16.msra.mxu0 %v7564
    %7688 = vmatprep.subr.bf16.mxu0 0
    %7689 = vmatpush1.bf16.msra.mxu0 %v7567
    %7690 = vmatprep.subr.bf16.mxu0 0
    %7691 = vmatpush1.bf16.msra.mxu0 %v7570
    %7692 = vmatprep.mubr.bf16.mxu0 %v6803
    %7693 = vmatmul.mubr.bf16.gmra.mrb[0].mxu0 %v7298
    %v7694 = vpop.f32.mrb[0].mxu0
    %v7695 = vadd.f32 %v935, %v7694
    %v7696 = vpop.f32.mrb[0].mxu0
    %v7697 = vpop.f32.mrb[0].mxu0
    %v7698 = vpop.f32.mrb[0].mxu0
    %7699 = vdwg.mxu0
    %v7700 = vxor.u32 %v7654, 2147483648
    %v7701 = vmul.f32 %v7700, 1.442695
    %v7702 = vpow.pop %v7701
    %v7703 = vadd.f32 %v7702, 1.0
    %v7704 = vrcp.pop %v7703
    %v7705 = vmul.f32 1.0, %v7704
    %v7706 = vxor.u32 %v7656, 2147483648
    %v7707 = vmul.f32 %v7706, 1.442695
    %v7708 = vpow.pop %v7707
    %v7709 = vadd.f32 %v7708, 1.0
    %v7710 = vrcp.pop %v7709
    %v7711 = vmul.f32 1.0, %v7710
    %v7712 = vadd.f32 %v7268, %v1292
    %v7713 = vmul.f32 %v7705, %v7712
    %v7714 = vadd.f32 %v7695, %v7713
    %v7715 = vtanh.pop %v7714
    %v7716 = vsub.f32 1.0, %v7711
    %v7717 = vmul.f32 %v7716, %v7715
    %v7718 = vmul.f32 %v7711, %v6802
    %v7719 = vadd.f32 %v7717, %v7718
    %v7720 = vpack.c.bf16 %v7719, %v7719
    %s7721 = scalar_lea.vmem [#allocation3], 28
    %7722 = vst [vmem:[%s7721] sm:$0xf] %v7720
    %v7723 = vld [vmem:[%s1] sm:$0xff]
    %vm7724 = vcmp.gt.s32.totalorder %v7723, 0
    %vm7725 = vcmp.gt.s32.totalorder %v7723, 1
    %vm7726 = vcmp.gt.s32.totalorder %v7723, 2
    %vm7727 = vcmp.gt.s32.totalorder %v7723, 3
    %vm7728 = vcmp.gt.s32.totalorder %v7723, 4
    %vm7729 = vcmp.gt.s32.totalorder %v7723, 5
    %vm7730 = vcmp.gt.s32.totalorder %v7723, 6
    %vm7731 = vcmp.gt.s32.totalorder %v7723, 7
    %v7732 = vld [vmem:[#allocation3] sm:$0xf]
    %v7733 = vld [vmem:[#allocation3 + $0x4] sm:$0xf]
    %v7734 = vld [vmem:[#allocation3 + $0x8] sm:$0xf]
    %v7735 = vld [vmem:[#allocation3 + $0xc] sm:$0xf]
    %v7736 = vld [vmem:[#allocation3 + $0x10] sm:$0xf]
    %v7737 = vld [vmem:[#allocation3 + $0x14] sm:$0xf]
    %v7738 = vld [vmem:[#allocation3 + $0x18] sm:$0xf]
    %v7739 = vld [vmem:[#allocation3 + $0x1c] sm:$0xf]
    %v7740 = vsel %vm7724, 1, 0
    %v7741 = vsel %vm7725, 1, 0
    %v7742 = vsel %vm7726, 1, 0
    %v7743 = vsel %vm7727, 1, 0
    %v7744 = vsel %vm7728, 1, 0
    %v7745 = vsel %vm7729, 1, 0
    %v7746 = vsel %vm7730, 1, 0
    %v7747 = vsel %vm7731, 1, 0
    %7748 = vset.pattern.permute.xlu0 0
    %7749 = vperm.xlu0 %7748, %v7740
    %v7750 = vpop.permute.xlu0 %7749
    %7751 = vset.pattern.permute.xlu0 0
    %7752 = vperm.xlu0 %7751, %v7741
    %v7753 = vpop.permute.xlu0 %7752
    %7754 = vset.pattern.permute.xlu0 0
    %7755 = vperm.xlu0 %7754, %v7742
    %v7756 = vpop.permute.xlu0 %7755
    %7757 = vset.pattern.permute.xlu0 0
    %7758 = vperm.xlu0 %7757, %v7743
    %v7759 = vpop.permute.xlu0 %7758
    %7760 = vset.pattern.permute.xlu0 0
    %7761 = vperm.xlu0 %7760, %v7744
    %v7762 = vpop.permute.xlu0 %7761
    %7763 = vset.pattern.permute.xlu0 0
    %7764 = vperm.xlu0 %7763, %v7745
    %v7765 = vpop.permute.xlu0 %7764
    %7766 = vset.pattern.permute.xlu0 0
    %7767 = vperm.xlu0 %7766, %v7746
    %v7768 = vpop.permute.xlu0 %7767
    %7769 = vset.pattern.permute.xlu0 0
    %7770 = vperm.xlu0 %7769, %v7747
    %v7771 = vpop.permute.xlu0 %7770
    %vm7772 = vcmp.eq.s32.totalorder %v7750, 1
    %vm7773 = vcmp.eq.s32.totalorder %v7753, 1
    %vm7774 = vcmp.eq.s32.totalorder %v7756, 1
    %vm7775 = vcmp.eq.s32.totalorder %v7759, 1
    %vm7776 = vcmp.eq.s32.totalorder %v7762, 1
    %vm7777 = vcmp.eq.s32.totalorder %v7765, 1
    %vm7778 = vcmp.eq.s32.totalorder %v7768, 1
    %vm7779 = vcmp.eq.s32.totalorder %v7771, 1
    %vm7780 = vmpackc.low %vm7772, %vm7772
    %vm7781 = vmpackc.low %vm7773, %vm7773
    %vm7782 = vmpackc.low %vm7774, %vm7774
    %vm7783 = vmpackc.low %vm7775, %vm7775
    %vm7784 = vmpackc.low %vm7776, %vm7776
    %vm7785 = vmpackc.low %vm7777, %vm7777
    %vm7786 = vmpackc.low %vm7778, %vm7778
    %vm7787 = vmpackc.low %vm7779, %vm7779
    %v7788 = vsel %vm7780, %v7732, 0
    %v7789 = vsel %vm7781, %v7733, 0
    %v7790 = vsel %vm7782, %v7734, 0
    %v7791 = vsel %vm7783, %v7735, 0
    %v7792 = vsel %vm7784, %v7736, 0
    %v7793 = vsel %vm7785, %v7737, 0
    %v7794 = vsel %vm7786, %v7738, 0
    %v7795 = vsel %vm7787, %v7739, 0
    %v7796 = vld [vmem:[#allocation12] sm:$0xf]
    %v7797 = vld [vmem:[#allocation12 + $0x4] sm:$0xf]
    %v7798 = vld [vmem:[#allocation12 + $0x8] sm:$0xf]
    %v7799 = vld [vmem:[#allocation12 + $0xc] sm:$0xf]
    %v7800 = vld [vmem:[#allocation12 + $0x10] sm:$0xf]
    %v7801 = vld [vmem:[#allocation12 + $0x14] sm:$0xf]
    %v7802 = vld [vmem:[#allocation12 + $0x18] sm:$0xf]
    %v7803 = vld [vmem:[#allocation12 + $0x1c] sm:$0xf]
    %v7804 = vld [vmem:[#allocation12 + $0x20] sm:$0xf]
    %v7805 = vld [vmem:[#allocation12 + $0x24] sm:$0xf]
    %v7806 = vld [vmem:[#allocation12 + $0x28] sm:$0xf]
    %v7807 = vld [vmem:[#allocation12 + $0x2c] sm:$0xf]
    %v7808 = vld [vmem:[#allocation12 + $0x30] sm:$0xf]
    %v7809 = vld [vmem:[#allocation12 + $0x34] sm:$0xf]
    %v7810 = vld [vmem:[#allocation12 + $0x38] sm:$0xf]
    %v7811 = vld [vmem:[#allocation12 + $0x3c] sm:$0xf]
    %v7813 = vlaneseq
    %v7814 = vshrl.u32 %v7813, 7
    %v7815 = vsub.s32 0, %v7814
    %v7816 = vrot.slane %v100, %v7815
    %v7826 = vunpack.c.l.b16 %v7788
    %v7827 = vunpack.c.l.b16 %v7789
    %v7828 = vunpack.c.l.b16 %v7790
    %v7829 = vunpack.c.l.b16 %v7791
    %v7830 = vunpack.c.l.b16 %v7792
    %v7831 = vunpack.c.l.b16 %v7793
    %v7832 = vunpack.c.l.b16 %v7794
    %v7833 = vunpack.c.l.b16 %v7795
    %v7834 = vpack.c.b16 %v7827, %v7826
    %v7835 = vpack.c.b16 %v7829, %v7828
    %v7836 = vpack.c.b16 %v7831, %v7830
    %v7837 = vpack.c.b16 %v7833, %v7832
    %v7858 = vunpack.c.l.b16 %v7796
    %v7859 = vunpack.c.l.b16 %v7797
    %v7860 = vunpack.c.l.b16 %v7798
    %v7861 = vunpack.c.l.b16 %v7799
    %v7862 = vunpack.c.l.b16 %v7800
    %v7863 = vunpack.c.l.b16 %v7801
    %v7864 = vunpack.c.l.b16 %v7802
    %v7865 = vunpack.c.l.b16 %v7803
    %v7866 = vunpack.c.l.b16 %v7804
    %v7867 = vunpack.c.l.b16 %v7805
    %v7868 = vunpack.c.l.b16 %v7806
    %v7869 = vunpack.c.l.b16 %v7807
    %v7870 = vunpack.c.l.b16 %v7808
    %v7871 = vunpack.c.l.b16 %v7809
    %v7872 = vunpack.c.l.b16 %v7810
    %v7873 = vunpack.c.l.b16 %v7811
    %v7874 = vpack.c.b16 %v7859, %v7858
    %v7875 = vpack.c.b16 %v7861, %v7860
    %v7876 = vpack.c.b16 %v7863, %v7862
    %v7877 = vpack.c.b16 %v7865, %v7864
    %v7878 = vpack.c.b16 %v7867, %v7866
    %v7879 = vpack.c.b16 %v7869, %v7868
    %v7880 = vpack.c.b16 %v7871, %v7870
    %v7881 = vpack.c.b16 %v7873, %v7872
    %7890 = vmatprep.subr.bf16.mxu0 0
    %7891 = vmatpush1.bf16.msra.mxu0 %v7874
    %7892 = vmatprep.subr.bf16.mxu0 0
    %7893 = vmatpush1.bf16.msra.mxu0 %v7875
    %7894 = vmatprep.subr.bf16.mxu0 0
    %7895 = vmatpush1.bf16.msra.mxu0 %v7876
    %7896 = vmatprep.subr.bf16.mxu0 0
    %7897 = vmatpush1.bf16.msra.mxu0 %v7877
    %7898 = vmatprep.subr.bf16.mxu0 0
    %7899 = vmatpush1.bf16.msra.mxu0 %v7878
    %7900 = vmatprep.subr.bf16.mxu0 0
    %7901 = vmatpush1.bf16.msra.mxu0 %v7879
    %7902 = vmatprep.subr.bf16.mxu0 0
    %7903 = vmatpush1.bf16.msra.mxu0 %v7880
    %7904 = vmatprep.subr.bf16.mxu0 0
    %7905 = vmatpush1.bf16.msra.mxu0 %v7881
    %7906 = vmatprep.subr.bf16.mxu0 0
    %7907 = vmatpush1.bf16.msra.mxu0 0
    %7908 = vmatprep.subr.bf16.mxu0 0
    %7909 = vmatpush1.bf16.msra.mxu0 0
    %7910 = vmatprep.subr.bf16.mxu0 0
    %7911 = vmatpush1.bf16.msra.mxu0 0
    %7912 = vmatprep.subr.bf16.mxu0 0
    %7913 = vmatpush1.bf16.msra.mxu0 0
    %7914 = vmatprep.subr.bf16.mxu0 0
    %7915 = vmatpush1.bf16.msra.mxu0 0
    %7916 = vmatprep.subr.bf16.mxu0 0
    %7917 = vmatpush1.bf16.msra.mxu0 0
    %7918 = vmatprep.subr.bf16.mxu0 0
    %7919 = vmatpush1.bf16.msra.mxu0 0
    %7920 = vmatprep.subr.bf16.mxu0 0
    %7921 = vmatpush1.bf16.msra.mxu0 0
    %7922 = vmatprep.mubr.bf16.mxu0 0
    %7923 = vmatmul.mubr.bf16.gmra.mrb[0].mxu0 %v7834
    %v7924 = vpop.f32.mrb[0].mxu0
    %v7925 = vadd.f32 %v7816, %v7924
    %v7926 = vpop.f32.mrb[0].mxu0
    %v7927 = vpop.f32.mrb[0].mxu0
    %v7928 = vadd.f32 %v7816, %v7927
    %v7929 = vpop.f32.mrb[0].mxu0
    %7930 = vmatprep.mubr.bf16.mxu0 0
    %7931 = vmatmul.mubr.bf16.gmra.mrb[0].mxu0 %v7835
    %v7932 = vpop.f32.mrb[0].mxu0
    %v7933 = vadd.f32 %v7816, %v7932
    %v7934 = vpop.f32.mrb[0].mxu0
    %v7935 = vpop.f32.mrb[0].mxu0
    %v7936 = vadd.f32 %v7816, %v7935
    %v7937 = vpop.f32.mrb[0].mxu0
    %7938 = vmatprep.mubr.bf16.mxu0 0
    %7939 = vmatmul.mubr.bf16.gmra.mrb[0].mxu0 %v7836
    %v7940 = vpop.f32.mrb[0].mxu0
    %v7941 = vadd.f32 %v7816, %v7940
    %v7942 = vpop.f32.mrb[0].mxu0
    %v7943 = vpop.f32.mrb[0].mxu0
    %v7944 = vadd.f32 %v7816, %v7943
    %v7945 = vpop.f32.mrb[0].mxu0
    %7946 = vmatprep.mubr.bf16.mxu0 0
    %7947 = vmatmul.mubr.bf16.gmra.mrb[0].mxu0 %v7837
    %v7948 = vpop.f32.mrb[0].mxu0
    %v7949 = vadd.f32 %v7816, %v7948
    %v7950 = vpop.f32.mrb[0].mxu0
    %v7951 = vpop.f32.mrb[0].mxu0
    %v7952 = vadd.f32 %v7816, %v7951
    %v7953 = vpop.f32.mrb[0].mxu0
    %7954 = vdwg.mxu0
    %7955 = vst [vmem:[#allocation13] sm:$0xff] %v7925
    %7956 = vst [vmem:[#allocation13 + $0x8] sm:$0xff] %v7928
    %7957 = vst [vmem:[#allocation13 + $0x10] sm:$0xff] %v7933
    %7958 = vst [vmem:[#allocation13 + $0x18] sm:$0xff] %v7936
    %7959 = vst [vmem:[#allocation13 + $0x20] sm:$0xff] %v7941
    %7960 = vst [vmem:[#allocation13 + $0x28] sm:$0xff] %v7944
    %7961 = vst [vmem:[#allocation13 + $0x30] sm:$0xff] %v7949
    %7962 = vst [vmem:[#allocation13 + $0x38] sm:$0xff] %v7952
    // Predicated region
    $region50: #{tpu_custom_call.1} parent=1 // pred_check
      _
    $region51: #{tpu_custom_call.1} parent=1 // pred_check_branch
      %7964 = sbr.rel (0) target = $region53
    $region52: #{tpu_custom_call.1} parent=1 // pred_region
      %s7966 = ssub.s32 1024, 1024
      %7967 = vsyncadd [#allocation6], %s7966
      %s7968 = sshll.u32 [#allocation13], 4
      %s7969 = int_to_ptr.vmem [resolvable:$true] %s7968
      %7974 = dma.vmem_to_hbm [thread:$0]  %s7969, 1024, %s7, [#allocation6], 128, 128, 8
    $region53: #{tpu_custom_call.1} parent=1 // pred_fallthru
      _
    // Predicated region
    $region54: #{tpu_custom_call.1} parent=1 // pred_check
      _
    $region55: #{tpu_custom_call.1} parent=1 // pred_check_branch
      %7976 = sbr.rel (0) target = $region57
    $region56: #{tpu_custom_call.1} parent=1 // pred_region
      %7977 = dma.done [#allocation6], 1024
    $region57: #{tpu_custom_call.1} parent=1 // pred_fallthru
      _
    %7978 = vsyncpa [#allocation5], 1
    %7979 = vsyncpa [#allocation8], 1
    %7980 = vsyncpa [#allocation11], 1
    %7981 = vsyncpa [#allocation6], 1

</llo_original>
